<compile_context>
chip_gen: v5e
topology: v5e:2x2
jax: 0.10.0
libtpu: 0.0.40
codegen_flags: <defaults>
</compile_context>

<pallas_src>
import numpy as np
import jax
import jax.numpy as jnp
from jax.experimental import pallas as pl
from jax.experimental.pallas import tpu as pltpu


# ------------------------------ helpers ----------------------------------------
def _margin(W):
    """Zero margin rows around each grid slab: >= Wp+1, multiple of 16."""
    Wp = W + 2
    return ((Wp + 1 + 15) // 16) * 16


def _vmem_bytes_per_step(nb, H, W):
    Hp, Wp = H + 2, W + 2
    MGN = _margin(W)
    L = nb * Hp * Wp
    Mtot = L + 2 * MGN
    io = 2 * (Mtot * (64 * 4 + 32 * 2) + L * 64 * 4)            # dbl-buffered x/c/out blocks
    scratch = Mtot * (64 + 128) * 2                              # bf16 padded scratches
    live = L * (2 * 128 * 4 + 4 * 64 * 4)                        # scales/shifts + f32 temps
    weights = 2 * 2 * 9 * (32 * 64 + 64 * 128 + 2 * 128 * 64 + 2 * 64 * 64)
    return io + scratch + live + weights


def _choose_nb(N, H, W, budget=48 * 2**20):
    divs = [d for d in range(1, N + 1) if N % d == 0]
    ok = [d for d in divs if _vmem_bytes_per_step(d, H, W) <= budget] or [1]
    # prefer >= 2 grid steps when N allows (keeps both v7x TensorCores busy)
    pref = [d for d in ok if N < 2 or N // d >= 2]
    return max(pref) if pref else max(ok)


# ------------------------------ fused kernel ------------------------------------
def _make_resblock_kernel(L, MGN, Wp):
    # tap index kh*3+kw  <->  flat row offset (kh-1)*Wp + (kw-1)
    taps = [(kh - 1) * Wp + (kw - 1) for kh in range(3) for kw in range(3)]

    def leaky(v, slope):
        return jnp.where(v >= 0.0, v, slope * v)

    def kernel(x_ref, c_ref, mask_ref,
               sc0_w, sc0_b, sc1_w, sc1_b,          # fused scale0 / block-diag scale1
               sh0_w, sh0_b, sh1_w, sh1_b,          # fused shift0 / block-diag shift1
               s2a_w, s2a_b, s2b_w, s2b_b,          # SFT2 of layer0 / layer1 (K=128)
               cv0_w, cv0_b, cv1_w, cv1_b,          # conv0 / conv1
               o_ref, buf64, buf128):
        # Keep the small zero margins valid every step (tiny, and safe under
        # "parallel" grid semantics -- the slab interiors are fully overwritten
        # by every conv below, the margins are never dirtied).
        buf64[0:MGN, :] = jnp.zeros((MGN, 64), jnp.bfloat16)
        buf64[MGN + L:MGN + L + MGN, :] = jnp.zeros((MGN, 64), jnp.bfloat16)
        buf128[0:MGN, :] = jnp.zeros((MGN, 128), jnp.bfloat16)
        buf128[MGN + L:MGN + L + MGN, :] = jnp.zeros((MGN, 128), jnp.bfloat16)

        mask = mask_ref[...]                        # (L,1) f32: 1=interior, 0=pad ring

        def conv3x3(read_tap, w_ref, b_ref):
            """3x3/s1/p1 conv as 9 row-shifted MXU matmuls on the flat layout."""
            acc = None
            for t, d in enumerate(taps):
                p = jnp.dot(read_tap(d), w_ref[t],
                            preferred_element_type=jnp.float32)
                acc = (p + b_ref[...]) if acc is None else (acc + p)
            return acc                               # (L, Cout) f32

        c_tap = lambda d: c_ref[0, MGN + d:MGN + d + L, :]        # bf16 (L,32)
        b64_tap = lambda d: buf64[MGN + d:MGN + d + L, :]
        b128_tap = lambda d: buf128[MGN + d:MGN + d + L, :]

        # ---- shift branches of BOTH SFT layers (1x1 convs, fused) --------------
        c_slab = c_ref[0, MGN:MGN + L, :]
        s = leaky(jnp.dot(c_slab, sh0_w[...],
                          preferred_element_type=jnp.float32) + sh0_b[...], 0.1)
        shifts = jnp.dot(s.astype(jnp.bfloat16), sh1_w[...],
                         preferred_element_type=jnp.float32) + sh1_b[...]   # (L,128)

        # ---- scale branches of BOTH SFT layers (3x3 convs, fused) --------------
        t0 = leaky(conv3x3(c_tap, sc0_w, sc0_b), 0.1)                       # (L,64)
        buf64[MGN:MGN + L, :] = (t0 * mask).astype(jnp.bfloat16)
        scales = (conv3x3(b64_tap, sc1_w, sc1_b) * mask).astype(jnp.bfloat16)  # (L,128)

        # ---- SFT layer 0: leaky(SFT2(cat[x, scale0])) + shift0 -----------------
        buf128[MGN:MGN + L, 0:64] = x_ref[0, MGN:MGN + L, :].astype(jnp.bfloat16)
        buf128[MGN:MGN + L, 64:128] = scales[:, 0:64]
        fea = leaky(conv3x3(b128_tap, s2a_w, s2a_b), 0.01) + shifts[:, 0:64]

        # ---- conv0 + relu -------------------------------------------------------
        buf64[MGN:MGN + L, :] = (fea * mask).astype(jnp.bfloat16)
        fea = jnp.maximum(conv3x3(b64_tap, cv0_w, cv0_b), 0.0)

        # ---- SFT layer 1 --------------------------------------------------------
        buf128[MGN:MGN + L, 0:64] = (fea * mask).astype(jnp.bfloat16)
        buf128[MGN:MGN + L, 64:128] = scales[:, 64:128]
        fea = leaky(conv3x3(b128_tap, s2b_w, s2b_b), 0.01) + shifts[:, 64:128]

        # ---- conv1 + residual ---------------------------------------------------
        buf64[MGN:MGN + L, :] = (fea * mask).astype(jnp.bfloat16)
        fea = conv3x3(b64_tap, cv1_w, cv1_b)
        o_ref[0, :, :] = x_ref[0, MGN:MGN + L, :] + fea      # residual re-reads x

    return kernel


# ------------------------------ weight packing -----------------------------------
def _pack3x3(w):   # (Cout,Cin,3,3) -> (9, Cin, Cout) bf16
    cout, cin = w.shape[0], w.shape[1]
    return jnp.transpose(w, (2, 3, 1, 0)).reshape(9, cin, cout).astype(jnp.bfloat16)


def _pack1x1(w):   # (Cout,Cin,1,1) -> (Cin, Cout) bf16
    return jnp.transpose(w[:, :, 0, 0], (1, 0)).astype(jnp.bfloat16)


def _packb(*bs):
    return jnp.concatenate([b.reshape(-1) for b in bs]).reshape(1, -1).astype(jnp.float32)


def _cat_cout(wa, wb, pack):
    return jnp.concatenate([pack(wa), pack(wb)], axis=-1)


def _blockdiag(wa, wb, pack):
    A, B = pack(wa), pack(wb)                       # (..., Ci, Co)
    za = jnp.zeros(A.shape[:-1] + (B.shape[-1],), A.dtype)
    zb = jnp.zeros(B.shape[:-1] + (A.shape[-1],), B.dtype)
    top = jnp.concatenate([A, za], axis=-1)
    bot = jnp.concatenate([zb, B], axis=-1)
    return jnp.concatenate([top, bot], axis=-2)


def _pack_params(P):
    p0, p1 = P["sft0"], P["sft1"]
    return [
        _cat_cout(p0["scale0_w"], p1["scale0_w"], _pack3x3),      # (9,32,64)
        _packb(p0["scale0_b"], p1["scale0_b"]),
        _blockdiag(p0["scale1_w"], p1["scale1_w"], _pack3x3),     # (9,64,128)
        _packb(p0["scale1_b"], p1["scale1_b"]),
        _cat_cout(p0["shift0_w"], p1["shift0_w"], _pack1x1),      # (32,64)
        _packb(p0["shift0_b"], p1["shift0_b"]),
        _blockdiag(p0["shift1_w"], p1["shift1_w"], _pack1x1),     # (64,128)
        _packb(p0["shift1_b"], p1["shift1_b"]),
        _pack3x3(p0["sft2_w"]), _packb(p0["sft2_b"]),             # (9,128,64)
        _pack3x3(p1["sft2_w"]), _packb(p1["sft2_b"]),
        _pack3x3(P["conv0_w"]), _packb(P["conv0_b"]),             # (9,64,64)
        _pack3x3(P["conv1_w"]), _packb(P["conv1_b"]),
    ]


# ------------------------------ wrapper -------------------------------------------
def resblock_sft(x, c, P):
    """x: (N,H,W,64) f32, c: (N,H,W,32) f32 (NHWC). Returns (N,H,W,64) f32."""
    N, H, W, Cx = x.shape
    Cc = c.shape[-1]
    Hp, Wp = H + 2, W + 2
    MGN = _margin(W)

    NB = _choose_nb(N, H, W)
    G = N // NB
    L = NB * Hp * Wp
    Mtot = L + 2 * MGN

    # Zero-bordered padded-flat layout (built in the wrapper, outside the hot loop).
    xp = jnp.pad(x, ((0, 0), (1, 1), (1, 1), (0, 0))).reshape(G, L, Cx)
    xp = jnp.pad(xp, ((0, 0), (MGN, MGN), (0, 0)))
    cp = jnp.pad(c, ((0, 0), (1, 1), (1, 1), (0, 0))).astype(jnp.bfloat16).reshape(G, L, Cc)
    cp = jnp.pad(cp, ((0, 0), (MGN, MGN), (0, 0)))

    msk = np.zeros((NB, Hp, Wp, 1), np.float32)
    msk[:, 1:H + 1, 1:W + 1, :] = 1.0
    msk = jnp.asarray(msk.reshape(L, 1))

    params = _pack_params(P)
    args = [xp, cp, msk] + params

    def _const_spec(a):
        nd = a.ndim
        return pl.BlockSpec(a.shape, lambda i, _nd=nd: (0,) * _nd)

    in_specs = ([pl.BlockSpec((1, Mtot, Cx), lambda i: (i, 0, 0)),
                 pl.BlockSpec((1, Mtot, Cc), lambda i: (i, 0, 0)),
                 _const_spec(msk)]
                + [_const_spec(a) for a in params])

    per_row_macs = 9 * (32 * 64 + 64 * 128 + 2 * 128 * 64 + 2 * 64 * 64) + 32 * 64 + 64 * 128
    flops = 2 * per_row_macs * L * G
    bytes_accessed = (xp.size * 4 + cp.size * 2 + msk.size * 4 + G * L * Cx * 4
                      + sum(int(a.size) * a.dtype.itemsize for a in params))
    est = _vmem_bytes_per_step(NB, H, W)
    vmem_lim = int(min(60 * 2**20, max(32 * 2**20, 2 * est)))

    out = pl.pallas_call(
        _make_resblock_kernel(L, MGN, Wp),
        out_shape=jax.ShapeDtypeStruct((G, L, Cx), jnp.float32),
        grid_spec=pltpu.PrefetchScalarGridSpec(
            num_scalar_prefetch=0,
            grid=(G,),
            in_specs=in_specs,
            out_specs=pl.BlockSpec((1, L, Cx), lambda i: (i, 0, 0)),
            scratch_shapes=[
                pltpu.VMEM((Mtot, 64), jnp.bfloat16),
                pltpu.VMEM((Mtot, 128), jnp.bfloat16),
            ],
        ),
        compiler_params=pltpu.CompilerParams(
            dimension_semantics=("parallel",),
            vmem_limit_bytes=vmem_lim),
        cost_estimate=pl.CostEstimate(flops=int(flops), transcendentals=0,
                                      bytes_accessed=int(bytes_accessed)),
    )(*args)

    # Extract interior pixels back to dense NHWC.
    return out.reshape(N, Hp, Wp, Cx)[:, 1:H + 1, 1:W + 1, :]


# ------------------------------ pure-JAX reference --------------------------------
def _conv_ref(x, w, b, pad):
    wk = jnp.transpose(w, (2, 3, 1, 0))
    out = jax.lax.conv_general_dilated(
        x, wk, window_strides=(1, 1), padding=[(pad, pad), (pad, pad)],
        dimension_numbers=("NHWC", "HWIO", "NHWC"))
    return out + b.reshape(1, 1, 1, -1)


def _leaky(x, s):
    return jnp.where(x >= 0, x, s * x)


def _sft_ref(x, c, p):
    scale = _conv_ref(_leaky(_conv_ref(c, p["scale0_w"], p["scale0_b"], 1), 0.1),
                      p["scale1_w"], p["scale1_b"], 1)
    shift = _conv_ref(_leaky(_conv_ref(c, p["shift0_w"], p["shift0_b"], 0), 0.1),
                      p["shift1_w"], p["shift1_b"], 0)
    m = _leaky(_conv_ref(jnp.concatenate([x, scale], -1), p["sft2_w"], p["sft2_b"], 1), 0.01)
    return m + shift


def _resblock_ref(x, c, P):
    fea = _sft_ref(x, c, P["sft0"])
    fea = jnp.maximum(_conv_ref(fea, P["conv0_w"], P["conv0_b"], 1), 0.0)
    fea = _sft_ref(fea, c, P["sft1"])
    fea = _conv_ref(fea, P["conv1_w"], P["conv1_b"], 1)
    return x + fea


# ------------------------------ deterministic params ------------------------------
def _init_conv(key, cout, cin, k):
    kw, kb = jax.random.split(key)
    w = jax.random.normal(kw, (cout, cin, k, k), jnp.float32) / float(cin * k * k) ** 0.5
    b = 0.1 * jax.random.normal(kb, (cout,), jnp.float32)
    return w, b


def _init_sft(key):
    ks = jax.random.split(key, 5)
    p = {}
    p["scale0_w"], p["scale0_b"] = _init_conv(ks[0], 32, 32, 3)
    p["scale1_w"], p["scale1_b"] = _init_conv(ks[1], 64, 32, 3)
    p["shift0_w"], p["shift0_b"] = _init_conv(ks[2], 32, 32, 1)
    p["shift1_w"], p["shift1_b"] = _init_conv(ks[3], 64, 32, 1)
    p["sft2_w"], p["sft2_b"] = _init_conv(ks[4], 64, 128, 3)
    return p


if __name__ == "__main__":
    key = jax.random.PRNGKey(0)
    k_params, kx, kc = jax.random.split(key, 3)
    kp = jax.random.split(k_params, 4)

    params = {"sft0": _init_sft(kp[0]), "sft1": _init_sft(kp[1])}
    params["conv0_w"], params["conv0_b"] = _init_conv(kp[2], 64, 64, 3)
    params["conv1_w"], params["conv1_b"] = _init_conv(kp[3], 64, 64, 3)

    # PyTorch-convention NCHW inputs: x (N,64,H,W), c (N,32,H,W)
    N, H, W = 2, 8, 8
    x_nchw = jax.random.normal(kx, (N, 64, H, W), jnp.float32)
    c_nchw = jax.random.normal(kc, (N, 32, H, W), jnp.float32)

    # NHWC for the kernel
    x = jnp.transpose(x_nchw, (0, 2, 3, 1))
    c = jnp.transpose(c_nchw, (0, 2, 3, 1))

    out = jax.jit(resblock_sft)(x, c, params)
    out = jax.block_until_ready(out)

    ref = _resblock_ref(x, c, params)
    # bf16 matmul operands vs f32 reference -> relaxed tolerance.
    np.testing.assert_allclose(np.asarray(out), np.asarray(ref), rtol=5e-2, atol=1e-1)

    # final output in PyTorch NCHW convention
    out_nchw = jnp.transpose(out, (0, 3, 1, 2))
    jax.block_until_ready(out_nchw)
    print("KERNEL_OK")
</pallas_src>

<mosaic_0001>
module attributes {stable_mosaic.version = 11 : i64} {
  func.func @kernel(%arg0: i32, %arg1: memref<1x132x64xf32, #tpu.memory_space<vmem>>, %arg2: memref<1x132x32xbf16, #tpu.memory_space<vmem>>, %arg3: memref<100x1xf32, #tpu.memory_space<vmem>>, %arg4: memref<9x32x64xbf16, #tpu.memory_space<vmem>>, %arg5: memref<1x64xf32, #tpu.memory_space<vmem>>, %arg6: memref<9x64x128xbf16, #tpu.memory_space<vmem>>, %arg7: memref<1x128xf32, #tpu.memory_space<vmem>>, %arg8: memref<32x64xbf16, #tpu.memory_space<vmem>>, %arg9: memref<1x64xf32, #tpu.memory_space<vmem>>, %arg10: memref<64x128xbf16, #tpu.memory_space<vmem>>, %arg11: memref<1x128xf32, #tpu.memory_space<vmem>>, %arg12: memref<9x128x64xbf16, #tpu.memory_space<vmem>>, %arg13: memref<1x64xf32, #tpu.memory_space<vmem>>, %arg14: memref<9x128x64xbf16, #tpu.memory_space<vmem>>, %arg15: memref<1x64xf32, #tpu.memory_space<vmem>>, %arg16: memref<9x64x64xbf16, #tpu.memory_space<vmem>>, %arg17: memref<1x64xf32, #tpu.memory_space<vmem>>, %arg18: memref<9x64x64xbf16, #tpu.memory_space<vmem>>, %arg19: memref<1x64xf32, #tpu.memory_space<vmem>>, %arg20: memref<1x100x64xf32, #tpu.memory_space<vmem>>, %arg21: memref<132x64xbf16, #tpu.memory_space<vmem>>, %arg22: memref<132x128xbf16, #tpu.memory_space<vmem>>) attributes {dimension_semantics = [#tpu.dimension_semantics<parallel>], iteration_bounds = array<i64: 2>, scalar_prefetch = 0 : i64, scratch_operands = 2 : i64, tpu.core_type = #tpu.core_type<tc>, window_params = [{transform_indices = @transform_0, window_bounds = array<i64: 1, 132, 64>}, {transform_indices = @transform_1, window_bounds = array<i64: 1, 132, 32>}, {pipeline_mode = #tpu.pipeline_mode<synchronous>, transform_indices = @transform_2, window_bounds = array<i64: 100, 1>}, {pipeline_mode = #tpu.pipeline_mode<synchronous>, transform_indices = @transform_3, window_bounds = array<i64: 9, 32, 64>}, {pipeline_mode = #tpu.pipeline_mode<synchronous>, transform_indices = @transform_4, window_bounds = array<i64: 1, 64>}, {pipeline_mode = #tpu.pipeline_mode<synchronous>, transform_indices = @transform_5, window_bounds = array<i64: 9, 64, 128>}, {pipeline_mode = #tpu.pipeline_mode<synchronous>, transform_indices = @transform_6, window_bounds = array<i64: 1, 128>}, {pipeline_mode = #tpu.pipeline_mode<synchronous>, transform_indices = @transform_7, window_bounds = array<i64: 32, 64>}, {pipeline_mode = #tpu.pipeline_mode<synchronous>, transform_indices = @transform_8, window_bounds = array<i64: 1, 64>}, {pipeline_mode = #tpu.pipeline_mode<synchronous>, transform_indices = @transform_9, window_bounds = array<i64: 64, 128>}, {pipeline_mode = #tpu.pipeline_mode<synchronous>, transform_indices = @transform_10, window_bounds = array<i64: 1, 128>}, {pipeline_mode = #tpu.pipeline_mode<synchronous>, transform_indices = @transform_11, window_bounds = array<i64: 9, 128, 64>}, {pipeline_mode = #tpu.pipeline_mode<synchronous>, transform_indices = @transform_12, window_bounds = array<i64: 1, 64>}, {pipeline_mode = #tpu.pipeline_mode<synchronous>, transform_indices = @transform_13, window_bounds = array<i64: 9, 128, 64>}, {pipeline_mode = #tpu.pipeline_mode<synchronous>, transform_indices = @transform_14, window_bounds = array<i64: 1, 64>}, {pipeline_mode = #tpu.pipeline_mode<synchronous>, transform_indices = @transform_15, window_bounds = array<i64: 9, 64, 64>}, {pipeline_mode = #tpu.pipeline_mode<synchronous>, transform_indices = @transform_16, window_bounds = array<i64: 1, 64>}, {pipeline_mode = #tpu.pipeline_mode<synchronous>, transform_indices = @transform_17, window_bounds = array<i64: 9, 64, 64>}, {pipeline_mode = #tpu.pipeline_mode<synchronous>, transform_indices = @transform_18, window_bounds = array<i64: 1, 64>}, {transform_indices = @transform_19, window_bounds = array<i64: 1, 100, 64>}]} {
    %cst = arith.constant 0.000000e+00 : bf16
    %0 = vector.broadcast %cst : bf16 to vector<16x64xbf16>
    %c0 = arith.constant 0 : index
    %c0_0 = arith.constant 0 : index
    %1 = vector.load %arg21[%c0, %c0_0] : memref<132x64xbf16, #tpu.memory_space<vmem>>, vector<16x64xbf16>
    tpu.vector_store %arg21[%c0, %c0_0], %0 {strides = array<i32>} : memref<132x64xbf16, #tpu.memory_space<vmem>>, vector<16x64xbf16>,
    %cst_1 = arith.constant 0.000000e+00 : bf16
    %2 = vector.broadcast %cst_1 : bf16 to vector<16x64xbf16>
    %c116 = arith.constant 116 : index
    %c0_2 = arith.constant 0 : index
    %3 = vector.load %arg21[%c116, %c0_2] : memref<132x64xbf16, #tpu.memory_space<vmem>>, vector<16x64xbf16>
    tpu.vector_store %arg21[%c116, %c0_2], %2 {strides = array<i32>} : memref<132x64xbf16, #tpu.memory_space<vmem>>, vector<16x64xbf16>,
    %cst_3 = arith.constant 0.000000e+00 : bf16
    %4 = vector.broadcast %cst_3 : bf16 to vector<16x128xbf16>
    %c0_4 = arith.constant 0 : index
    %c0_5 = arith.constant 0 : index
    %5 = vector.load %arg22[%c0_4, %c0_5] : memref<132x128xbf16, #tpu.memory_space<vmem>>, vector<16x128xbf16>
    tpu.vector_store %arg22[%c0_4, %c0_5], %4 {strides = array<i32>} : memref<132x128xbf16, #tpu.memory_space<vmem>>, vector<16x128xbf16>,
    %cst_6 = arith.constant 0.000000e+00 : bf16
    %6 = vector.broadcast %cst_6 : bf16 to vector<16x128xbf16>
    %c116_7 = arith.constant 116 : index
    %c0_8 = arith.constant 0 : index
    %7 = vector.load %arg22[%c116_7, %c0_8] : memref<132x128xbf16, #tpu.memory_space<vmem>>, vector<16x128xbf16>
    tpu.vector_store %arg22[%c116_7, %c0_8], %6 {strides = array<i32>} : memref<132x128xbf16, #tpu.memory_space<vmem>>, vector<16x128xbf16>,
    %c0_9 = arith.constant 0 : index
    %c0_10 = arith.constant 0 : index
    %8 = vector.load %arg3[%c0_9, %c0_10] : memref<100x1xf32, #tpu.memory_space<vmem>>, vector<100x1xf32>
    %c0_11 = arith.constant 0 : index
    %c16 = arith.constant 16 : index
    %c0_12 = arith.constant 0 : index
    %9 = vector.load %arg2[%c0_11, %c16, %c0_12] : memref<1x132x32xbf16, #tpu.memory_space<vmem>>, vector<1x100x32xbf16>
    %10 = vector.shape_cast %9 : vector<1x100x32xbf16> to vector<100x32xbf16>
    %c0_13 = arith.constant 0 : index
    %c0_14 = arith.constant 0 : index
    %11 = vector.load %arg8[%c0_13, %c0_14] : memref<32x64xbf16, #tpu.memory_space<vmem>>, vector<32x64xbf16>
    %cst_15 = arith.constant dense<0.000000e+00> : vector<100x64xf32>
    %12 = tpu.matmul %10, %11, %cst_15 {dimension_numbers = #tpu.dot_dimension_numbers<[1], [0], [0], [1], [0, 0, 1, 1], [], []>} : vector<100x32xbf16>, vector<32x64xbf16>, vector<100x64xf32> -> vector<100x64xf32>
    %c0_16 = arith.constant 0 : index
    %c0_17 = arith.constant 0 : index
    %13 = vector.load %arg9[%c0_16, %c0_17] : memref<1x64xf32, #tpu.memory_space<vmem>>, vector<1x64xf32>
    %14 = vector.broadcast %13 : vector<1x64xf32> to vector<100x64xf32>
    %15 = arith.addf %12, %14 : vector<100x64xf32>
    %cst_18 = arith.constant 0.000000e+00 : f32
    %16 = vector.broadcast %cst_18 : f32 to vector<100x64xf32>
    %17 = arith.cmpf oge, %15, %16 : vector<100x64xf32>
    %cst_19 = arith.constant 1.000000e-01 : f32
    %18 = vector.broadcast %cst_19 : f32 to vector<100x64xf32>
    %19 = arith.mulf %18, %15 : vector<100x64xf32>
    %20 = arith.select %17, %15, %19 : vector<100x64xi1>, vector<100x64xf32>
    %21 = arith.truncf %20 : vector<100x64xf32> to vector<100x64xbf16>
    %c0_20 = arith.constant 0 : index
    %c0_21 = arith.constant 0 : index
    %22 = vector.load %arg10[%c0_20, %c0_21] : memref<64x128xbf16, #tpu.memory_space<vmem>>, vector<64x128xbf16>
    %cst_22 = arith.constant dense<0.000000e+00> : vector<100x128xf32>
    %23 = tpu.matmul %21, %22, %cst_22 {dimension_numbers = #tpu.dot_dimension_numbers<[1], [0], [0], [1], [0, 0, 1, 1], [], []>} : vector<100x64xbf16>, vector<64x128xbf16>, vector<100x128xf32> -> vector<100x128xf32>
    %c0_23 = arith.constant 0 : index
    %c0_24 = arith.constant 0 : index
    %24 = vector.load %arg11[%c0_23, %c0_24] : memref<1x128xf32, #tpu.memory_space<vmem>>, vector<1x128xf32>
    %25 = vector.broadcast %24 : vector<1x128xf32> to vector<100x128xf32>
    %26 = arith.addf %23, %25 : vector<100x128xf32>
    %c0_25 = arith.constant 0 : index
    %c5 = arith.constant 5 : index
    %c0_26 = arith.constant 0 : index
    %27 = vector.load %arg2[%c0_25, %c5, %c0_26] : memref<1x132x32xbf16, #tpu.memory_space<vmem>>, vector<1x100x32xbf16>
    %28 = vector.shape_cast %27 : vector<1x100x32xbf16> to vector<100x32xbf16>
    %c0_27 = arith.constant 0 : index
    %c0_28 = arith.constant 0 : index
    %c0_29 = arith.constant 0 : index
    %29 = vector.load %arg4[%c0_27, %c0_28, %c0_29] : memref<9x32x64xbf16, #tpu.memory_space<vmem>>, vector<1x32x64xbf16>
    %30 = vector.shape_cast %29 : vector<1x32x64xbf16> to vector<32x64xbf16>
    %cst_30 = arith.constant dense<0.000000e+00> : vector<100x64xf32>
    %31 = tpu.matmul %28, %30, %cst_30 {dimension_numbers = #tpu.dot_dimension_numbers<[1], [0], [0], [1], [0, 0, 1, 1], [], []>} : vector<100x32xbf16>, vector<32x64xbf16>, vector<100x64xf32> -> vector<100x64xf32>
    %c0_31 = arith.constant 0 : index
    %c0_32 = arith.constant 0 : index
    %32 = vector.load %arg5[%c0_31, %c0_32] : memref<1x64xf32, #tpu.memory_space<vmem>>, vector<1x64xf32>
    %33 = vector.broadcast %32 : vector<1x64xf32> to vector<100x64xf32>
    %34 = arith.addf %31, %33 : vector<100x64xf32>
    %c0_33 = arith.constant 0 : index
    %c6 = arith.constant 6 : index
    %c0_34 = arith.constant 0 : index
    %35 = vector.load %arg2[%c0_33, %c6, %c0_34] : memref<1x132x32xbf16, #tpu.memory_space<vmem>>, vector<1x100x32xbf16>
    %36 = vector.shape_cast %35 : vector<1x100x32xbf16> to vector<100x32xbf16>
    %c1 = arith.constant 1 : index
    %c0_35 = arith.constant 0 : index
    %c0_36 = arith.constant 0 : index
    %37 = vector.load %arg4[%c1, %c0_35, %c0_36] : memref<9x32x64xbf16, #tpu.memory_space<vmem>>, vector<1x32x64xbf16>
    %38 = vector.shape_cast %37 : vector<1x32x64xbf16> to vector<32x64xbf16>
    %cst_37 = arith.constant dense<0.000000e+00> : vector<100x64xf32>
    %39 = tpu.matmul %36, %38, %cst_37 {dimension_numbers = #tpu.dot_dimension_numbers<[1], [0], [0], [1], [0, 0, 1, 1], [], []>} : vector<100x32xbf16>, vector<32x64xbf16>, vector<100x64xf32> -> vector<100x64xf32>
    %40 = arith.addf %34, %39 : vector<100x64xf32>
    %c0_38 = arith.constant 0 : index
    %c7 = arith.constant 7 : index
    %c0_39 = arith.constant 0 : index
    %41 = vector.load %arg2[%c0_38, %c7, %c0_39] : memref<1x132x32xbf16, #tpu.memory_space<vmem>>, vector<1x100x32xbf16>
    %42 = vector.shape_cast %41 : vector<1x100x32xbf16> to vector<100x32xbf16>
    %c2 = arith.constant 2 : index
    %c0_40 = arith.constant 0 : index
    %c0_41 = arith.constant 0 : index
    %43 = vector.load %arg4[%c2, %c0_40, %c0_41] : memref<9x32x64xbf16, #tpu.memory_space<vmem>>, vector<1x32x64xbf16>
    %44 = vector.shape_cast %43 : vector<1x32x64xbf16> to vector<32x64xbf16>
    %cst_42 = arith.constant dense<0.000000e+00> : vector<100x64xf32>
    %45 = tpu.matmul %42, %44, %cst_42 {dimension_numbers = #tpu.dot_dimension_numbers<[1], [0], [0], [1], [0, 0, 1, 1], [], []>} : vector<100x32xbf16>, vector<32x64xbf16>, vector<100x64xf32> -> vector<100x64xf32>
    %46 = arith.addf %40, %45 : vector<100x64xf32>
    %c0_43 = arith.constant 0 : index
    %c15 = arith.constant 15 : index
    %c0_44 = arith.constant 0 : index
    %47 = vector.load %arg2[%c0_43, %c15, %c0_44] : memref<1x132x32xbf16, #tpu.memory_space<vmem>>, vector<1x100x32xbf16>
    %48 = vector.shape_cast %47 : vector<1x100x32xbf16> to vector<100x32xbf16>
    %c3 = arith.constant 3 : index
    %c0_45 = arith.constant 0 : index
    %c0_46 = arith.constant 0 : index
    %49 = vector.load %arg4[%c3, %c0_45, %c0_46] : memref<9x32x64xbf16, #tpu.memory_space<vmem>>, vector<1x32x64xbf16>
    %50 = vector.shape_cast %49 : vector<1x32x64xbf16> to vector<32x64xbf16>
    %cst_47 = arith.constant dense<0.000000e+00> : vector<100x64xf32>
    %51 = tpu.matmul %48, %50, %cst_47 {dimension_numbers = #tpu.dot_dimension_numbers<[1], [0], [0], [1], [0, 0, 1, 1], [], []>} : vector<100x32xbf16>, vector<32x64xbf16>, vector<100x64xf32> -> vector<100x64xf32>
    %52 = arith.addf %46, %51 : vector<100x64xf32>
    %c0_48 = arith.constant 0 : index
    %c16_49 = arith.constant 16 : index
    %c0_50 = arith.constant 0 : index
    %53 = vector.load %arg2[%c0_48, %c16_49, %c0_50] : memref<1x132x32xbf16, #tpu.memory_space<vmem>>, vector<1x100x32xbf16>
    %54 = vector.shape_cast %53 : vector<1x100x32xbf16> to vector<100x32xbf16>
    %c4 = arith.constant 4 : index
    %c0_51 = arith.constant 0 : index
    %c0_52 = arith.constant 0 : index
    %55 = vector.load %arg4[%c4, %c0_51, %c0_52] : memref<9x32x64xbf16, #tpu.memory_space<vmem>>, vector<1x32x64xbf16>
    %56 = vector.shape_cast %55 : vector<1x32x64xbf16> to vector<32x64xbf16>
    %cst_53 = arith.constant dense<0.000000e+00> : vector<100x64xf32>
    %57 = tpu.matmul %54, %56, %cst_53 {dimension_numbers = #tpu.dot_dimension_numbers<[1], [0], [0], [1], [0, 0, 1, 1], [], []>} : vector<100x32xbf16>, vector<32x64xbf16>, vector<100x64xf32> -> vector<100x64xf32>
    %58 = arith.addf %52, %57 : vector<100x64xf32>
    %c0_54 = arith.constant 0 : index
    %c17 = arith.constant 17 : index
    %c0_55 = arith.constant 0 : index
    %59 = vector.load %arg2[%c0_54, %c17, %c0_55] : memref<1x132x32xbf16, #tpu.memory_space<vmem>>, vector<1x100x32xbf16>
    %60 = vector.shape_cast %59 : vector<1x100x32xbf16> to vector<100x32xbf16>
    %c5_56 = arith.constant 5 : index
    %c0_57 = arith.constant 0 : index
    %c0_58 = arith.constant 0 : index
    %61 = vector.load %arg4[%c5_56, %c0_57, %c0_58] : memref<9x32x64xbf16, #tpu.memory_space<vmem>>, vector<1x32x64xbf16>
    %62 = vector.shape_cast %61 : vector<1x32x64xbf16> to vector<32x64xbf16>
    %cst_59 = arith.constant dense<0.000000e+00> : vector<100x64xf32>
    %63 = tpu.matmul %60, %62, %cst_59 {dimension_numbers = #tpu.dot_dimension_numbers<[1], [0], [0], [1], [0, 0, 1, 1], [], []>} : vector<100x32xbf16>, vector<32x64xbf16>, vector<100x64xf32> -> vector<100x64xf32>
    %64 = arith.addf %58, %63 : vector<100x64xf32>
    %c0_60 = arith.constant 0 : index
    %c25 = arith.constant 25 : index
    %c0_61 = arith.constant 0 : index
    %65 = vector.load %arg2[%c0_60, %c25, %c0_61] : memref<1x132x32xbf16, #tpu.memory_space<vmem>>, vector<1x100x32xbf16>
    %66 = vector.shape_cast %65 : vector<1x100x32xbf16> to vector<100x32xbf16>
    %c6_62 = arith.constant 6 : index
    %c0_63 = arith.constant 0 : index
    %c0_64 = arith.constant 0 : index
    %67 = vector.load %arg4[%c6_62, %c0_63, %c0_64] : memref<9x32x64xbf16, #tpu.memory_space<vmem>>, vector<1x32x64xbf16>
    %68 = vector.shape_cast %67 : vector<1x32x64xbf16> to vector<32x64xbf16>
    %cst_65 = arith.constant dense<0.000000e+00> : vector<100x64xf32>
    %69 = tpu.matmul %66, %68, %cst_65 {dimension_numbers = #tpu.dot_dimension_numbers<[1], [0], [0], [1], [0, 0, 1, 1], [], []>} : vector<100x32xbf16>, vector<32x64xbf16>, vector<100x64xf32> -> vector<100x64xf32>
    %70 = arith.addf %64, %69 : vector<100x64xf32>
    %c0_66 = arith.constant 0 : index
    %c26 = arith.constant 26 : index
    %c0_67 = arith.constant 0 : index
    %71 = vector.load %arg2[%c0_66, %c26, %c0_67] : memref<1x132x32xbf16, #tpu.memory_space<vmem>>, vector<1x100x32xbf16>
    %72 = vector.shape_cast %71 : vector<1x100x32xbf16> to vector<100x32xbf16>
    %c7_68 = arith.constant 7 : index
    %c0_69 = arith.constant 0 : index
    %c0_70 = arith.constant 0 : index
    %73 = vector.load %arg4[%c7_68, %c0_69, %c0_70] : memref<9x32x64xbf16, #tpu.memory_space<vmem>>, vector<1x32x64xbf16>
    %74 = vector.shape_cast %73 : vector<1x32x64xbf16> to vector<32x64xbf16>
    %cst_71 = arith.constant dense<0.000000e+00> : vector<100x64xf32>
    %75 = tpu.matmul %72, %74, %cst_71 {dimension_numbers = #tpu.dot_dimension_numbers<[1], [0], [0], [1], [0, 0, 1, 1], [], []>} : vector<100x32xbf16>, vector<32x64xbf16>, vector<100x64xf32> -> vector<100x64xf32>
    %76 = arith.addf %70, %75 : vector<100x64xf32>
    %c0_72 = arith.constant 0 : index
    %c27 = arith.constant 27 : index
    %c0_73 = arith.constant 0 : index
    %77 = vector.load %arg2[%c0_72, %c27, %c0_73] : memref<1x132x32xbf16, #tpu.memory_space<vmem>>, vector<1x100x32xbf16>
    %78 = vector.shape_cast %77 : vector<1x100x32xbf16> to vector<100x32xbf16>
    %c8 = arith.constant 8 : index
    %c0_74 = arith.constant 0 : index
    %c0_75 = arith.constant 0 : index
    %79 = vector.load %arg4[%c8, %c0_74, %c0_75] : memref<9x32x64xbf16, #tpu.memory_space<vmem>>, vector<1x32x64xbf16>
    %80 = vector.shape_cast %79 : vector<1x32x64xbf16> to vector<32x64xbf16>
    %cst_76 = arith.constant dense<0.000000e+00> : vector<100x64xf32>
    %81 = tpu.matmul %78, %80, %cst_76 {dimension_numbers = #tpu.dot_dimension_numbers<[1], [0], [0], [1], [0, 0, 1, 1], [], []>} : vector<100x32xbf16>, vector<32x64xbf16>, vector<100x64xf32> -> vector<100x64xf32>
    %82 = arith.addf %76, %81 : vector<100x64xf32>
    %cst_77 = arith.constant 0.000000e+00 : f32
    %83 = vector.broadcast %cst_77 : f32 to vector<100x64xf32>
    %84 = arith.cmpf oge, %82, %83 : vector<100x64xf32>
    %cst_78 = arith.constant 1.000000e-01 : f32
    %85 = vector.broadcast %cst_78 : f32 to vector<100x64xf32>
    %86 = arith.mulf %85, %82 : vector<100x64xf32>
    %87 = arith.select %84, %82, %86 : vector<100x64xi1>, vector<100x64xf32>
    %88 = vector.broadcast %8 : vector<100x1xf32> to vector<100x64xf32>
    %89 = arith.mulf %87, %88 : vector<100x64xf32>
    %90 = arith.truncf %89 : vector<100x64xf32> to vector<100x64xbf16>
    %c16_79 = arith.constant 16 : index
    %c0_80 = arith.constant 0 : index
    %91 = vector.load %arg21[%c16_79, %c0_80] : memref<132x64xbf16, #tpu.memory_space<vmem>>, vector<100x64xbf16>
    tpu.vector_store %arg21[%c16_79, %c0_80], %90 {strides = array<i32>} : memref<132x64xbf16, #tpu.memory_space<vmem>>, vector<100x64xbf16>,
    %c5_81 = arith.constant 5 : index
    %c0_82 = arith.constant 0 : index
    %92 = vector.load %arg21[%c5_81, %c0_82] : memref<132x64xbf16, #tpu.memory_space<vmem>>, vector<100x64xbf16>
    %c0_83 = arith.constant 0 : index
    %c0_84 = arith.constant 0 : index
    %c0_85 = arith.constant 0 : index
    %93 = vector.load %arg6[%c0_83, %c0_84, %c0_85] : memref<9x64x128xbf16, #tpu.memory_space<vmem>>, vector<1x64x128xbf16>
    %94 = vector.shape_cast %93 : vector<1x64x128xbf16> to vector<64x128xbf16>
    %cst_86 = arith.constant dense<0.000000e+00> : vector<100x128xf32>
    %95 = tpu.matmul %92, %94, %cst_86 {dimension_numbers = #tpu.dot_dimension_numbers<[1], [0], [0], [1], [0, 0, 1, 1], [], []>} : vector<100x64xbf16>, vector<64x128xbf16>, vector<100x128xf32> -> vector<100x128xf32>
    %c0_87 = arith.constant 0 : index
    %c0_88 = arith.constant 0 : index
    %96 = vector.load %arg7[%c0_87, %c0_88] : memref<1x128xf32, #tpu.memory_space<vmem>>, vector<1x128xf32>
    %97 = vector.broadcast %96 : vector<1x128xf32> to vector<100x128xf32>
    %98 = arith.addf %95, %97 : vector<100x128xf32>
    %c6_89 = arith.constant 6 : index
    %c0_90 = arith.constant 0 : index
    %99 = vector.load %arg21[%c6_89, %c0_90] : memref<132x64xbf16, #tpu.memory_space<vmem>>, vector<100x64xbf16>
    %c1_91 = arith.constant 1 : index
    %c0_92 = arith.constant 0 : index
    %c0_93 = arith.constant 0 : index
    %100 = vector.load %arg6[%c1_91, %c0_92, %c0_93] : memref<9x64x128xbf16, #tpu.memory_space<vmem>>, vector<1x64x128xbf16>
    %101 = vector.shape_cast %100 : vector<1x64x128xbf16> to vector<64x128xbf16>
    %cst_94 = arith.constant dense<0.000000e+00> : vector<100x128xf32>
    %102 = tpu.matmul %99, %101, %cst_94 {dimension_numbers = #tpu.dot_dimension_numbers<[1], [0], [0], [1], [0, 0, 1, 1], [], []>} : vector<100x64xbf16>, vector<64x128xbf16>, vector<100x128xf32> -> vector<100x128xf32>
    %103 = arith.addf %98, %102 : vector<100x128xf32>
    %c7_95 = arith.constant 7 : index
    %c0_96 = arith.constant 0 : index
    %104 = vector.load %arg21[%c7_95, %c0_96] : memref<132x64xbf16, #tpu.memory_space<vmem>>, vector<100x64xbf16>
    %c2_97 = arith.constant 2 : index
    %c0_98 = arith.constant 0 : index
    %c0_99 = arith.constant 0 : index
    %105 = vector.load %arg6[%c2_97, %c0_98, %c0_99] : memref<9x64x128xbf16, #tpu.memory_space<vmem>>, vector<1x64x128xbf16>
    %106 = vector.shape_cast %105 : vector<1x64x128xbf16> to vector<64x128xbf16>
    %cst_100 = arith.constant dense<0.000000e+00> : vector<100x128xf32>
    %107 = tpu.matmul %104, %106, %cst_100 {dimension_numbers = #tpu.dot_dimension_numbers<[1], [0], [0], [1], [0, 0, 1, 1], [], []>} : vector<100x64xbf16>, vector<64x128xbf16>, vector<100x128xf32> -> vector<100x128xf32>
    %108 = arith.addf %103, %107 : vector<100x128xf32>
    %c15_101 = arith.constant 15 : index
    %c0_102 = arith.constant 0 : index
    %109 = vector.load %arg21[%c15_101, %c0_102] : memref<132x64xbf16, #tpu.memory_space<vmem>>, vector<100x64xbf16>
    %c3_103 = arith.constant 3 : index
    %c0_104 = arith.constant 0 : index
    %c0_105 = arith.constant 0 : index
    %110 = vector.load %arg6[%c3_103, %c0_104, %c0_105] : memref<9x64x128xbf16, #tpu.memory_space<vmem>>, vector<1x64x128xbf16>
    %111 = vector.shape_cast %110 : vector<1x64x128xbf16> to vector<64x128xbf16>
    %cst_106 = arith.constant dense<0.000000e+00> : vector<100x128xf32>
    %112 = tpu.matmul %109, %111, %cst_106 {dimension_numbers = #tpu.dot_dimension_numbers<[1], [0], [0], [1], [0, 0, 1, 1], [], []>} : vector<100x64xbf16>, vector<64x128xbf16>, vector<100x128xf32> -> vector<100x128xf32>
    %113 = arith.addf %108, %112 : vector<100x128xf32>
    %c16_107 = arith.constant 16 : index
    %c0_108 = arith.constant 0 : index
    %114 = vector.load %arg21[%c16_107, %c0_108] : memref<132x64xbf16, #tpu.memory_space<vmem>>, vector<100x64xbf16>
    %c4_109 = arith.constant 4 : index
    %c0_110 = arith.constant 0 : index
    %c0_111 = arith.constant 0 : index
    %115 = vector.load %arg6[%c4_109, %c0_110, %c0_111] : memref<9x64x128xbf16, #tpu.memory_space<vmem>>, vector<1x64x128xbf16>
    %116 = vector.shape_cast %115 : vector<1x64x128xbf16> to vector<64x128xbf16>
    %cst_112 = arith.constant dense<0.000000e+00> : vector<100x128xf32>
    %117 = tpu.matmul %114, %116, %cst_112 {dimension_numbers = #tpu.dot_dimension_numbers<[1], [0], [0], [1], [0, 0, 1, 1], [], []>} : vector<100x64xbf16>, vector<64x128xbf16>, vector<100x128xf32> -> vector<100x128xf32>
    %118 = arith.addf %113, %117 : vector<100x128xf32>
    %c17_113 = arith.constant 17 : index
    %c0_114 = arith.constant 0 : index
    %119 = vector.load %arg21[%c17_113, %c0_114] : memref<132x64xbf16, #tpu.memory_space<vmem>>, vector<100x64xbf16>
    %c5_115 = arith.constant 5 : index
    %c0_116 = arith.constant 0 : index
    %c0_117 = arith.constant 0 : index
    %120 = vector.load %arg6[%c5_115, %c0_116, %c0_117] : memref<9x64x128xbf16, #tpu.memory_space<vmem>>, vector<1x64x128xbf16>
    %121 = vector.shape_cast %120 : vector<1x64x128xbf16> to vector<64x128xbf16>
    %cst_118 = arith.constant dense<0.000000e+00> : vector<100x128xf32>
    %122 = tpu.matmul %119, %121, %cst_118 {dimension_numbers = #tpu.dot_dimension_numbers<[1], [0], [0], [1], [0, 0, 1, 1], [], []>} : vector<100x64xbf16>, vector<64x128xbf16>, vector<100x128xf32> -> vector<100x128xf32>
    %123 = arith.addf %118, %122 : vector<100x128xf32>
    %c25_119 = arith.constant 25 : index
    %c0_120 = arith.constant 0 : index
    %124 = vector.load %arg21[%c25_119, %c0_120] : memref<132x64xbf16, #tpu.memory_space<vmem>>, vector<100x64xbf16>
    %c6_121 = arith.constant 6 : index
    %c0_122 = arith.constant 0 : index
    %c0_123 = arith.constant 0 : index
    %125 = vector.load %arg6[%c6_121, %c0_122, %c0_123] : memref<9x64x128xbf16, #tpu.memory_space<vmem>>, vector<1x64x128xbf16>
    %126 = vector.shape_cast %125 : vector<1x64x128xbf16> to vector<64x128xbf16>
    %cst_124 = arith.constant dense<0.000000e+00> : vector<100x128xf32>
    %127 = tpu.matmul %124, %126, %cst_124 {dimension_numbers = #tpu.dot_dimension_numbers<[1], [0], [0], [1], [0, 0, 1, 1], [], []>} : vector<100x64xbf16>, vector<64x128xbf16>, vector<100x128xf32> -> vector<100x128xf32>
    %128 = arith.addf %123, %127 : vector<100x128xf32>
    %c26_125 = arith.constant 26 : index
    %c0_126 = arith.constant 0 : index
    %129 = vector.load %arg21[%c26_125, %c0_126] : memref<132x64xbf16, #tpu.memory_space<vmem>>, vector<100x64xbf16>
    %c7_127 = arith.constant 7 : index
    %c0_128 = arith.constant 0 : index
    %c0_129 = arith.constant 0 : index
    %130 = vector.load %arg6[%c7_127, %c0_128, %c0_129] : memref<9x64x128xbf16, #tpu.memory_space<vmem>>, vector<1x64x128xbf16>
    %131 = vector.shape_cast %130 : vector<1x64x128xbf16> to vector<64x128xbf16>
    %cst_130 = arith.constant dense<0.000000e+00> : vector<100x128xf32>
    %132 = tpu.matmul %129, %131, %cst_130 {dimension_numbers = #tpu.dot_dimension_numbers<[1], [0], [0], [1], [0, 0, 1, 1], [], []>} : vector<100x64xbf16>, vector<64x128xbf16>, vector<100x128xf32> -> vector<100x128xf32>
    %133 = arith.addf %128, %132 : vector<100x128xf32>
    %c27_131 = arith.constant 27 : index
    %c0_132 = arith.constant 0 : index
    %134 = vector.load %arg21[%c27_131, %c0_132] : memref<132x64xbf16, #tpu.memory_space<vmem>>, vector<100x64xbf16>
    %c8_133 = arith.constant 8 : index
    %c0_134 = arith.constant 0 : index
    %c0_135 = arith.constant 0 : index
    %135 = vector.load %arg6[%c8_133, %c0_134, %c0_135] : memref<9x64x128xbf16, #tpu.memory_space<vmem>>, vector<1x64x128xbf16>
    %136 = vector.shape_cast %135 : vector<1x64x128xbf16> to vector<64x128xbf16>
    %cst_136 = arith.constant dense<0.000000e+00> : vector<100x128xf32>
    %137 = tpu.matmul %134, %136, %cst_136 {dimension_numbers = #tpu.dot_dimension_numbers<[1], [0], [0], [1], [0, 0, 1, 1], [], []>} : vector<100x64xbf16>, vector<64x128xbf16>, vector<100x128xf32> -> vector<100x128xf32>
    %138 = arith.addf %133, %137 : vector<100x128xf32>
    %139 = vector.broadcast %8 : vector<100x1xf32> to vector<100x128xf32>
    %140 = arith.mulf %138, %139 : vector<100x128xf32>
    %141 = arith.truncf %140 : vector<100x128xf32> to vector<100x128xbf16>
    %c0_137 = arith.constant 0 : index
    %c16_138 = arith.constant 16 : index
    %c0_139 = arith.constant 0 : index
    %142 = vector.load %arg1[%c0_137, %c16_138, %c0_139] : memref<1x132x64xf32, #tpu.memory_space<vmem>>, vector<1x100x64xf32>
    %143 = vector.shape_cast %142 : vector<1x100x64xf32> to vector<100x64xf32>
    %144 = arith.truncf %143 : vector<100x64xf32> to vector<100x64xbf16>
    %c16_140 = arith.constant 16 : index
    %c0_141 = arith.constant 0 : index
    %145 = vector.load %arg22[%c16_140, %c0_141] : memref<132x128xbf16, #tpu.memory_space<vmem>>, vector<100x64xbf16>
    tpu.vector_store %arg22[%c16_140, %c0_141], %144 {strides = array<i32>} : memref<132x128xbf16, #tpu.memory_space<vmem>>, vector<100x64xbf16>,
    %146 = vector.extract_strided_slice %141 {offsets = [0, 0], sizes = [100, 64], strides = [1, 1]} : vector<100x128xbf16> to vector<100x64xbf16>
    %c16_142 = arith.constant 16 : index
    %c64 = arith.constant 64 : index
    %147 = vector.load %arg22[%c16_142, %c64] : memref<132x128xbf16, #tpu.memory_space<vmem>>, vector<100x64xbf16>
    tpu.vector_store %arg22[%c16_142, %c64], %146 {strides = array<i32>} : memref<132x128xbf16, #tpu.memory_space<vmem>>, vector<100x64xbf16>,
    %c5_143 = arith.constant 5 : index
    %c0_144 = arith.constant 0 : index
    %148 = vector.load %arg22[%c5_143, %c0_144] : memref<132x128xbf16, #tpu.memory_space<vmem>>, vector<100x128xbf16>
    %c0_145 = arith.constant 0 : index
    %c0_146 = arith.constant 0 : index
    %c0_147 = arith.constant 0 : index
    %149 = vector.load %arg12[%c0_145, %c0_146, %c0_147] : memref<9x128x64xbf16, #tpu.memory_space<vmem>>, vector<1x128x64xbf16>
    %150 = vector.shape_cast %149 : vector<1x128x64xbf16> to vector<128x64xbf16>
    %cst_148 = arith.constant dense<0.000000e+00> : vector<100x64xf32>
    %151 = tpu.matmul %148, %150, %cst_148 {dimension_numbers = #tpu.dot_dimension_numbers<[1], [0], [0], [1], [0, 0, 1, 1], [], []>} : vector<100x128xbf16>, vector<128x64xbf16>, vector<100x64xf32> -> vector<100x64xf32>
    %c0_149 = arith.constant 0 : index
    %c0_150 = arith.constant 0 : index
    %152 = vector.load %arg13[%c0_149, %c0_150] : memref<1x64xf32, #tpu.memory_space<vmem>>, vector<1x64xf32>
    %153 = vector.broadcast %152 : vector<1x64xf32> to vector<100x64xf32>
    %154 = arith.addf %151, %153 : vector<100x64xf32>
    %c6_151 = arith.constant 6 : index
    %c0_152 = arith.constant 0 : index
    %155 = vector.load %arg22[%c6_151, %c0_152] : memref<132x128xbf16, #tpu.memory_space<vmem>>, vector<100x128xbf16>
    %c1_153 = arith.constant 1 : index
    %c0_154 = arith.constant 0 : index
    %c0_155 = arith.constant 0 : index
    %156 = vector.load %arg12[%c1_153, %c0_154, %c0_155] : memref<9x128x64xbf16, #tpu.memory_space<vmem>>, vector<1x128x64xbf16>
    %157 = vector.shape_cast %156 : vector<1x128x64xbf16> to vector<128x64xbf16>
    %cst_156 = arith.constant dense<0.000000e+00> : vector<100x64xf32>
    %158 = tpu.matmul %155, %157, %cst_156 {dimension_numbers = #tpu.dot_dimension_numbers<[1], [0], [0], [1], [0, 0, 1, 1], [], []>} : vector<100x128xbf16>, vector<128x64xbf16>, vector<100x64xf32> -> vector<100x64xf32>
    %159 = arith.addf %154, %158 : vector<100x64xf32>
    %c7_157 = arith.constant 7 : index
    %c0_158 = arith.constant 0 : index
    %160 = vector.load %arg22[%c7_157, %c0_158] : memref<132x128xbf16, #tpu.memory_space<vmem>>, vector<100x128xbf16>
    %c2_159 = arith.constant 2 : index
    %c0_160 = arith.constant 0 : index
    %c0_161 = arith.constant 0 : index
    %161 = vector.load %arg12[%c2_159, %c0_160, %c0_161] : memref<9x128x64xbf16, #tpu.memory_space<vmem>>, vector<1x128x64xbf16>
    %162 = vector.shape_cast %161 : vector<1x128x64xbf16> to vector<128x64xbf16>
    %cst_162 = arith.constant dense<0.000000e+00> : vector<100x64xf32>
    %163 = tpu.matmul %160, %162, %cst_162 {dimension_numbers = #tpu.dot_dimension_numbers<[1], [0], [0], [1], [0, 0, 1, 1], [], []>} : vector<100x128xbf16>, vector<128x64xbf16>, vector<100x64xf32> -> vector<100x64xf32>
    %164 = arith.addf %159, %163 : vector<100x64xf32>
    %c15_163 = arith.constant 15 : index
    %c0_164 = arith.constant 0 : index
    %165 = vector.load %arg22[%c15_163, %c0_164] : memref<132x128xbf16, #tpu.memory_space<vmem>>, vector<100x128xbf16>
    %c3_165 = arith.constant 3 : index
    %c0_166 = arith.constant 0 : index
    %c0_167 = arith.constant 0 : index
    %166 = vector.load %arg12[%c3_165, %c0_166, %c0_167] : memref<9x128x64xbf16, #tpu.memory_space<vmem>>, vector<1x128x64xbf16>
    %167 = vector.shape_cast %166 : vector<1x128x64xbf16> to vector<128x64xbf16>
    %cst_168 = arith.constant dense<0.000000e+00> : vector<100x64xf32>
    %168 = tpu.matmul %165, %167, %cst_168 {dimension_numbers = #tpu.dot_dimension_numbers<[1], [0], [0], [1], [0, 0, 1, 1], [], []>} : vector<100x128xbf16>, vector<128x64xbf16>, vector<100x64xf32> -> vector<100x64xf32>
    %169 = arith.addf %164, %168 : vector<100x64xf32>
    %c16_169 = arith.constant 16 : index
    %c0_170 = arith.constant 0 : index
    %170 = vector.load %arg22[%c16_169, %c0_170] : memref<132x128xbf16, #tpu.memory_space<vmem>>, vector<100x128xbf16>
    %c4_171 = arith.constant 4 : index
    %c0_172 = arith.constant 0 : index
    %c0_173 = arith.constant 0 : index
    %171 = vector.load %arg12[%c4_171, %c0_172, %c0_173] : memref<9x128x64xbf16, #tpu.memory_space<vmem>>, vector<1x128x64xbf16>
    %172 = vector.shape_cast %171 : vector<1x128x64xbf16> to vector<128x64xbf16>
    %cst_174 = arith.constant dense<0.000000e+00> : vector<100x64xf32>
    %173 = tpu.matmul %170, %172, %cst_174 {dimension_numbers = #tpu.dot_dimension_numbers<[1], [0], [0], [1], [0, 0, 1, 1], [], []>} : vector<100x128xbf16>, vector<128x64xbf16>, vector<100x64xf32> -> vector<100x64xf32>
    %174 = arith.addf %169, %173 : vector<100x64xf32>
    %c17_175 = arith.constant 17 : index
    %c0_176 = arith.constant 0 : index
    %175 = vector.load %arg22[%c17_175, %c0_176] : memref<132x128xbf16, #tpu.memory_space<vmem>>, vector<100x128xbf16>
    %c5_177 = arith.constant 5 : index
    %c0_178 = arith.constant 0 : index
    %c0_179 = arith.constant 0 : index
    %176 = vector.load %arg12[%c5_177, %c0_178, %c0_179] : memref<9x128x64xbf16, #tpu.memory_space<vmem>>, vector<1x128x64xbf16>
    %177 = vector.shape_cast %176 : vector<1x128x64xbf16> to vector<128x64xbf16>
    %cst_180 = arith.constant dense<0.000000e+00> : vector<100x64xf32>
    %178 = tpu.matmul %175, %177, %cst_180 {dimension_numbers = #tpu.dot_dimension_numbers<[1], [0], [0], [1], [0, 0, 1, 1], [], []>} : vector<100x128xbf16>, vector<128x64xbf16>, vector<100x64xf32> -> vector<100x64xf32>
    %179 = arith.addf %174, %178 : vector<100x64xf32>
    %c25_181 = arith.constant 25 : index
    %c0_182 = arith.constant 0 : index
    %180 = vector.load %arg22[%c25_181, %c0_182] : memref<132x128xbf16, #tpu.memory_space<vmem>>, vector<100x128xbf16>
    %c6_183 = arith.constant 6 : index
    %c0_184 = arith.constant 0 : index
    %c0_185 = arith.constant 0 : index
    %181 = vector.load %arg12[%c6_183, %c0_184, %c0_185] : memref<9x128x64xbf16, #tpu.memory_space<vmem>>, vector<1x128x64xbf16>
    %182 = vector.shape_cast %181 : vector<1x128x64xbf16> to vector<128x64xbf16>
    %cst_186 = arith.constant dense<0.000000e+00> : vector<100x64xf32>
    %183 = tpu.matmul %180, %182, %cst_186 {dimension_numbers = #tpu.dot_dimension_numbers<[1], [0], [0], [1], [0, 0, 1, 1], [], []>} : vector<100x128xbf16>, vector<128x64xbf16>, vector<100x64xf32> -> vector<100x64xf32>
    %184 = arith.addf %179, %183 : vector<100x64xf32>
    %c26_187 = arith.constant 26 : index
    %c0_188 = arith.constant 0 : index
    %185 = vector.load %arg22[%c26_187, %c0_188] : memref<132x128xbf16, #tpu.memory_space<vmem>>, vector<100x128xbf16>
    %c7_189 = arith.constant 7 : index
    %c0_190 = arith.constant 0 : index
    %c0_191 = arith.constant 0 : index
    %186 = vector.load %arg12[%c7_189, %c0_190, %c0_191] : memref<9x128x64xbf16, #tpu.memory_space<vmem>>, vector<1x128x64xbf16>
    %187 = vector.shape_cast %186 : vector<1x128x64xbf16> to vector<128x64xbf16>
    %cst_192 = arith.constant dense<0.000000e+00> : vector<100x64xf32>
    %188 = tpu.matmul %185, %187, %cst_192 {dimension_numbers = #tpu.dot_dimension_numbers<[1], [0], [0], [1], [0, 0, 1, 1], [], []>} : vector<100x128xbf16>, vector<128x64xbf16>, vector<100x64xf32> -> vector<100x64xf32>
    %189 = arith.addf %184, %188 : vector<100x64xf32>
    %c27_193 = arith.constant 27 : index
    %c0_194 = arith.constant 0 : index
    %190 = vector.load %arg22[%c27_193, %c0_194] : memref<132x128xbf16, #tpu.memory_space<vmem>>, vector<100x128xbf16>
    %c8_195 = arith.constant 8 : index
    %c0_196 = arith.constant 0 : index
    %c0_197 = arith.constant 0 : index
    %191 = vector.load %arg12[%c8_195, %c0_196, %c0_197] : memref<9x128x64xbf16, #tpu.memory_space<vmem>>, vector<1x128x64xbf16>
    %192 = vector.shape_cast %191 : vector<1x128x64xbf16> to vector<128x64xbf16>
    %cst_198 = arith.constant dense<0.000000e+00> : vector<100x64xf32>
    %193 = tpu.matmul %190, %192, %cst_198 {dimension_numbers = #tpu.dot_dimension_numbers<[1], [0], [0], [1], [0, 0, 1, 1], [], []>} : vector<100x128xbf16>, vector<128x64xbf16>, vector<100x64xf32> -> vector<100x64xf32>
    %194 = arith.addf %189, %193 : vector<100x64xf32>
    %cst_199 = arith.constant 0.000000e+00 : f32
    %195 = vector.broadcast %cst_199 : f32 to vector<100x64xf32>
    %196 = arith.cmpf oge, %194, %195 : vector<100x64xf32>
    %cst_200 = arith.constant 0.00999999977 : f32
    %197 = vector.broadcast %cst_200 : f32 to vector<100x64xf32>
    %198 = arith.mulf %197, %194 : vector<100x64xf32>
    %199 = arith.select %196, %194, %198 : vector<100x64xi1>, vector<100x64xf32>
    %200 = vector.extract_strided_slice %26 {offsets = [0, 0], sizes = [100, 64], strides = [1, 1]} : vector<100x128xf32> to vector<100x64xf32>
    %201 = arith.addf %199, %200 : vector<100x64xf32>
    %202 = vector.broadcast %8 : vector<100x1xf32> to vector<100x64xf32>
    %203 = arith.mulf %201, %202 : vector<100x64xf32>
    %204 = arith.truncf %203 : vector<100x64xf32> to vector<100x64xbf16>
    %c16_201 = arith.constant 16 : index
    %c0_202 = arith.constant 0 : index
    %205 = vector.load %arg21[%c16_201, %c0_202] : memref<132x64xbf16, #tpu.memory_space<vmem>>, vector<100x64xbf16>
    tpu.vector_store %arg21[%c16_201, %c0_202], %204 {strides = array<i32>} : memref<132x64xbf16, #tpu.memory_space<vmem>>, vector<100x64xbf16>,
    %c5_203 = arith.constant 5 : index
    %c0_204 = arith.constant 0 : index
    %206 = vector.load %arg21[%c5_203, %c0_204] : memref<132x64xbf16, #tpu.memory_space<vmem>>, vector<100x64xbf16>
    %c0_205 = arith.constant 0 : index
    %c0_206 = arith.constant 0 : index
    %c0_207 = arith.constant 0 : index
    %207 = vector.load %arg16[%c0_205, %c0_206, %c0_207] : memref<9x64x64xbf16, #tpu.memory_space<vmem>>, vector<1x64x64xbf16>
    %208 = vector.shape_cast %207 : vector<1x64x64xbf16> to vector<64x64xbf16>
    %cst_208 = arith.constant dense<0.000000e+00> : vector<100x64xf32>
    %209 = tpu.matmul %206, %208, %cst_208 {dimension_numbers = #tpu.dot_dimension_numbers<[1], [0], [0], [1], [0, 0, 1, 1], [], []>} : vector<100x64xbf16>, vector<64x64xbf16>, vector<100x64xf32> -> vector<100x64xf32>
    %c0_209 = arith.constant 0 : index
    %c0_210 = arith.constant 0 : index
    %210 = vector.load %arg17[%c0_209, %c0_210] : memref<1x64xf32, #tpu.memory_space<vmem>>, vector<1x64xf32>
    %211 = vector.broadcast %210 : vector<1x64xf32> to vector<100x64xf32>
    %212 = arith.addf %209, %211 : vector<100x64xf32>
    %c6_211 = arith.constant 6 : index
    %c0_212 = arith.constant 0 : index
    %213 = vector.load %arg21[%c6_211, %c0_212] : memref<132x64xbf16, #tpu.memory_space<vmem>>, vector<100x64xbf16>
    %c1_213 = arith.constant 1 : index
    %c0_214 = arith.constant 0 : index
    %c0_215 = arith.constant 0 : index
    %214 = vector.load %arg16[%c1_213, %c0_214, %c0_215] : memref<9x64x64xbf16, #tpu.memory_space<vmem>>, vector<1x64x64xbf16>
    %215 = vector.shape_cast %214 : vector<1x64x64xbf16> to vector<64x64xbf16>
    %cst_216 = arith.constant dense<0.000000e+00> : vector<100x64xf32>
    %216 = tpu.matmul %213, %215, %cst_216 {dimension_numbers = #tpu.dot_dimension_numbers<[1], [0], [0], [1], [0, 0, 1, 1], [], []>} : vector<100x64xbf16>, vector<64x64xbf16>, vector<100x64xf32> -> vector<100x64xf32>
    %217 = arith.addf %212, %216 : vector<100x64xf32>
    %c7_217 = arith.constant 7 : index
    %c0_218 = arith.constant 0 : index
    %218 = vector.load %arg21[%c7_217, %c0_218] : memref<132x64xbf16, #tpu.memory_space<vmem>>, vector<100x64xbf16>
    %c2_219 = arith.constant 2 : index
    %c0_220 = arith.constant 0 : index
    %c0_221 = arith.constant 0 : index
    %219 = vector.load %arg16[%c2_219, %c0_220, %c0_221] : memref<9x64x64xbf16, #tpu.memory_space<vmem>>, vector<1x64x64xbf16>
    %220 = vector.shape_cast %219 : vector<1x64x64xbf16> to vector<64x64xbf16>
    %cst_222 = arith.constant dense<0.000000e+00> : vector<100x64xf32>
    %221 = tpu.matmul %218, %220, %cst_222 {dimension_numbers = #tpu.dot_dimension_numbers<[1], [0], [0], [1], [0, 0, 1, 1], [], []>} : vector<100x64xbf16>, vector<64x64xbf16>, vector<100x64xf32> -> vector<100x64xf32>
    %222 = arith.addf %217, %221 : vector<100x64xf32>
    %c15_223 = arith.constant 15 : index
    %c0_224 = arith.constant 0 : index
    %223 = vector.load %arg21[%c15_223, %c0_224] : memref<132x64xbf16, #tpu.memory_space<vmem>>, vector<100x64xbf16>
    %c3_225 = arith.constant 3 : index
    %c0_226 = arith.constant 0 : index
    %c0_227 = arith.constant 0 : index
    %224 = vector.load %arg16[%c3_225, %c0_226, %c0_227] : memref<9x64x64xbf16, #tpu.memory_space<vmem>>, vector<1x64x64xbf16>
    %225 = vector.shape_cast %224 : vector<1x64x64xbf16> to vector<64x64xbf16>
    %cst_228 = arith.constant dense<0.000000e+00> : vector<100x64xf32>
    %226 = tpu.matmul %223, %225, %cst_228 {dimension_numbers = #tpu.dot_dimension_numbers<[1], [0], [0], [1], [0, 0, 1, 1], [], []>} : vector<100x64xbf16>, vector<64x64xbf16>, vector<100x64xf32> -> vector<100x64xf32>
    %227 = arith.addf %222, %226 : vector<100x64xf32>
    %c16_229 = arith.constant 16 : index
    %c0_230 = arith.constant 0 : index
    %228 = vector.load %arg21[%c16_229, %c0_230] : memref<132x64xbf16, #tpu.memory_space<vmem>>, vector<100x64xbf16>
    %c4_231 = arith.constant 4 : index
    %c0_232 = arith.constant 0 : index
    %c0_233 = arith.constant 0 : index
    %229 = vector.load %arg16[%c4_231, %c0_232, %c0_233] : memref<9x64x64xbf16, #tpu.memory_space<vmem>>, vector<1x64x64xbf16>
    %230 = vector.shape_cast %229 : vector<1x64x64xbf16> to vector<64x64xbf16>
    %cst_234 = arith.constant dense<0.000000e+00> : vector<100x64xf32>
    %231 = tpu.matmul %228, %230, %cst_234 {dimension_numbers = #tpu.dot_dimension_numbers<[1], [0], [0], [1], [0, 0, 1, 1], [], []>} : vector<100x64xbf16>, vector<64x64xbf16>, vector<100x64xf32> -> vector<100x64xf32>
    %232 = arith.addf %227, %231 : vector<100x64xf32>
    %c17_235 = arith.constant 17 : index
    %c0_236 = arith.constant 0 : index
    %233 = vector.load %arg21[%c17_235, %c0_236] : memref<132x64xbf16, #tpu.memory_space<vmem>>, vector<100x64xbf16>
    %c5_237 = arith.constant 5 : index
    %c0_238 = arith.constant 0 : index
    %c0_239 = arith.constant 0 : index
    %234 = vector.load %arg16[%c5_237, %c0_238, %c0_239] : memref<9x64x64xbf16, #tpu.memory_space<vmem>>, vector<1x64x64xbf16>
    %235 = vector.shape_cast %234 : vector<1x64x64xbf16> to vector<64x64xbf16>
    %cst_240 = arith.constant dense<0.000000e+00> : vector<100x64xf32>
    %236 = tpu.matmul %233, %235, %cst_240 {dimension_numbers = #tpu.dot_dimension_numbers<[1], [0], [0], [1], [0, 0, 1, 1], [], []>} : vector<100x64xbf16>, vector<64x64xbf16>, vector<100x64xf32> -> vector<100x64xf32>
    %237 = arith.addf %232, %236 : vector<100x64xf32>
    %c25_241 = arith.constant 25 : index
    %c0_242 = arith.constant 0 : index
    %238 = vector.load %arg21[%c25_241, %c0_242] : memref<132x64xbf16, #tpu.memory_space<vmem>>, vector<100x64xbf16>
    %c6_243 = arith.constant 6 : index
    %c0_244 = arith.constant 0 : index
    %c0_245 = arith.constant 0 : index
    %239 = vector.load %arg16[%c6_243, %c0_244, %c0_245] : memref<9x64x64xbf16, #tpu.memory_space<vmem>>, vector<1x64x64xbf16>
    %240 = vector.shape_cast %239 : vector<1x64x64xbf16> to vector<64x64xbf16>
    %cst_246 = arith.constant dense<0.000000e+00> : vector<100x64xf32>
    %241 = tpu.matmul %238, %240, %cst_246 {dimension_numbers = #tpu.dot_dimension_numbers<[1], [0], [0], [1], [0, 0, 1, 1], [], []>} : vector<100x64xbf16>, vector<64x64xbf16>, vector<100x64xf32> -> vector<100x64xf32>
    %242 = arith.addf %237, %241 : vector<100x64xf32>
    %c26_247 = arith.constant 26 : index
    %c0_248 = arith.constant 0 : index
    %243 = vector.load %arg21[%c26_247, %c0_248] : memref<132x64xbf16, #tpu.memory_space<vmem>>, vector<100x64xbf16>
    %c7_249 = arith.constant 7 : index
    %c0_250 = arith.constant 0 : index
    %c0_251 = arith.constant 0 : index
    %244 = vector.load %arg16[%c7_249, %c0_250, %c0_251] : memref<9x64x64xbf16, #tpu.memory_space<vmem>>, vector<1x64x64xbf16>
    %245 = vector.shape_cast %244 : vector<1x64x64xbf16> to vector<64x64xbf16>
    %cst_252 = arith.constant dense<0.000000e+00> : vector<100x64xf32>
    %246 = tpu.matmul %243, %245, %cst_252 {dimension_numbers = #tpu.dot_dimension_numbers<[1], [0], [0], [1], [0, 0, 1, 1], [], []>} : vector<100x64xbf16>, vector<64x64xbf16>, vector<100x64xf32> -> vector<100x64xf32>
    %247 = arith.addf %242, %246 : vector<100x64xf32>
    %c27_253 = arith.constant 27 : index
    %c0_254 = arith.constant 0 : index
    %248 = vector.load %arg21[%c27_253, %c0_254] : memref<132x64xbf16, #tpu.memory_space<vmem>>, vector<100x64xbf16>
    %c8_255 = arith.constant 8 : index
    %c0_256 = arith.constant 0 : index
    %c0_257 = arith.constant 0 : index
    %249 = vector.load %arg16[%c8_255, %c0_256, %c0_257] : memref<9x64x64xbf16, #tpu.memory_space<vmem>>, vector<1x64x64xbf16>
    %250 = vector.shape_cast %249 : vector<1x64x64xbf16> to vector<64x64xbf16>
    %cst_258 = arith.constant dense<0.000000e+00> : vector<100x64xf32>
    %251 = tpu.matmul %248, %250, %cst_258 {dimension_numbers = #tpu.dot_dimension_numbers<[1], [0], [0], [1], [0, 0, 1, 1], [], []>} : vector<100x64xbf16>, vector<64x64xbf16>, vector<100x64xf32> -> vector<100x64xf32>
    %252 = arith.addf %247, %251 : vector<100x64xf32>
    %cst_259 = arith.constant 0.000000e+00 : f32
    %253 = vector.broadcast %cst_259 : f32 to vector<100x64xf32>
    %254 = arith.maximumf %252, %253 : vector<100x64xf32>
    %255 = vector.broadcast %8 : vector<100x1xf32> to vector<100x64xf32>
    %256 = arith.mulf %254, %255 : vector<100x64xf32>
    %257 = arith.truncf %256 : vector<100x64xf32> to vector<100x64xbf16>
    %c16_260 = arith.constant 16 : index
    %c0_261 = arith.constant 0 : index
    %258 = vector.load %arg22[%c16_260, %c0_261] : memref<132x128xbf16, #tpu.memory_space<vmem>>, vector<100x64xbf16>
    tpu.vector_store %arg22[%c16_260, %c0_261], %257 {strides = array<i32>} : memref<132x128xbf16, #tpu.memory_space<vmem>>, vector<100x64xbf16>,
    %259 = vector.extract_strided_slice %141 {offsets = [0, 64], sizes = [100, 64], strides = [1, 1]} : vector<100x128xbf16> to vector<100x64xbf16>
    %c16_262 = arith.constant 16 : index
    %c64_263 = arith.constant 64 : index
    %260 = vector.load %arg22[%c16_262, %c64_263] : memref<132x128xbf16, #tpu.memory_space<vmem>>, vector<100x64xbf16>
    tpu.vector_store %arg22[%c16_262, %c64_263], %259 {strides = array<i32>} : memref<132x128xbf16, #tpu.memory_space<vmem>>, vector<100x64xbf16>,
    %c5_264 = arith.constant 5 : index
    %c0_265 = arith.constant 0 : index
    %261 = vector.load %arg22[%c5_264, %c0_265] : memref<132x128xbf16, #tpu.memory_space<vmem>>, vector<100x128xbf16>
    %c0_266 = arith.constant 0 : index
    %c0_267 = arith.constant 0 : index
    %c0_268 = arith.constant 0 : index
    %262 = vector.load %arg14[%c0_266, %c0_267, %c0_268] : memref<9x128x64xbf16, #tpu.memory_space<vmem>>, vector<1x128x64xbf16>
    %263 = vector.shape_cast %262 : vector<1x128x64xbf16> to vector<128x64xbf16>
    %cst_269 = arith.constant dense<0.000000e+00> : vector<100x64xf32>
    %264 = tpu.matmul %261, %263, %cst_269 {dimension_numbers = #tpu.dot_dimension_numbers<[1], [0], [0], [1], [0, 0, 1, 1], [], []>} : vector<100x128xbf16>, vector<128x64xbf16>, vector<100x64xf32> -> vector<100x64xf32>
    %c0_270 = arith.constant 0 : index
    %c0_271 = arith.constant 0 : index
    %265 = vector.load %arg15[%c0_270, %c0_271] : memref<1x64xf32, #tpu.memory_space<vmem>>, vector<1x64xf32>
    %266 = vector.broadcast %265 : vector<1x64xf32> to vector<100x64xf32>
    %267 = arith.addf %264, %266 : vector<100x64xf32>
    %c6_272 = arith.constant 6 : index
    %c0_273 = arith.constant 0 : index
    %268 = vector.load %arg22[%c6_272, %c0_273] : memref<132x128xbf16, #tpu.memory_space<vmem>>, vector<100x128xbf16>
    %c1_274 = arith.constant 1 : index
    %c0_275 = arith.constant 0 : index
    %c0_276 = arith.constant 0 : index
    %269 = vector.load %arg14[%c1_274, %c0_275, %c0_276] : memref<9x128x64xbf16, #tpu.memory_space<vmem>>, vector<1x128x64xbf16>
    %270 = vector.shape_cast %269 : vector<1x128x64xbf16> to vector<128x64xbf16>
    %cst_277 = arith.constant dense<0.000000e+00> : vector<100x64xf32>
    %271 = tpu.matmul %268, %270, %cst_277 {dimension_numbers = #tpu.dot_dimension_numbers<[1], [0], [0], [1], [0, 0, 1, 1], [], []>} : vector<100x128xbf16>, vector<128x64xbf16>, vector<100x64xf32> -> vector<100x64xf32>
    %272 = arith.addf %267, %271 : vector<100x64xf32>
    %c7_278 = arith.constant 7 : index
    %c0_279 = arith.constant 0 : index
    %273 = vector.load %arg22[%c7_278, %c0_279] : memref<132x128xbf16, #tpu.memory_space<vmem>>, vector<100x128xbf16>
    %c2_280 = arith.constant 2 : index
    %c0_281 = arith.constant 0 : index
    %c0_282 = arith.constant 0 : index
    %274 = vector.load %arg14[%c2_280, %c0_281, %c0_282] : memref<9x128x64xbf16, #tpu.memory_space<vmem>>, vector<1x128x64xbf16>
    %275 = vector.shape_cast %274 : vector<1x128x64xbf16> to vector<128x64xbf16>
    %cst_283 = arith.constant dense<0.000000e+00> : vector<100x64xf32>
    %276 = tpu.matmul %273, %275, %cst_283 {dimension_numbers = #tpu.dot_dimension_numbers<[1], [0], [0], [1], [0, 0, 1, 1], [], []>} : vector<100x128xbf16>, vector<128x64xbf16>, vector<100x64xf32> -> vector<100x64xf32>
    %277 = arith.addf %272, %276 : vector<100x64xf32>
    %c15_284 = arith.constant 15 : index
    %c0_285 = arith.constant 0 : index
    %278 = vector.load %arg22[%c15_284, %c0_285] : memref<132x128xbf16, #tpu.memory_space<vmem>>, vector<100x128xbf16>
    %c3_286 = arith.constant 3 : index
    %c0_287 = arith.constant 0 : index
    %c0_288 = arith.constant 0 : index
    %279 = vector.load %arg14[%c3_286, %c0_287, %c0_288] : memref<9x128x64xbf16, #tpu.memory_space<vmem>>, vector<1x128x64xbf16>
    %280 = vector.shape_cast %279 : vector<1x128x64xbf16> to vector<128x64xbf16>
    %cst_289 = arith.constant dense<0.000000e+00> : vector<100x64xf32>
    %281 = tpu.matmul %278, %280, %cst_289 {dimension_numbers = #tpu.dot_dimension_numbers<[1], [0], [0], [1], [0, 0, 1, 1], [], []>} : vector<100x128xbf16>, vector<128x64xbf16>, vector<100x64xf32> -> vector<100x64xf32>
    %282 = arith.addf %277, %281 : vector<100x64xf32>
    %c16_290 = arith.constant 16 : index
    %c0_291 = arith.constant 0 : index
    %283 = vector.load %arg22[%c16_290, %c0_291] : memref<132x128xbf16, #tpu.memory_space<vmem>>, vector<100x128xbf16>
    %c4_292 = arith.constant 4 : index
    %c0_293 = arith.constant 0 : index
    %c0_294 = arith.constant 0 : index
    %284 = vector.load %arg14[%c4_292, %c0_293, %c0_294] : memref<9x128x64xbf16, #tpu.memory_space<vmem>>, vector<1x128x64xbf16>
    %285 = vector.shape_cast %284 : vector<1x128x64xbf16> to vector<128x64xbf16>
    %cst_295 = arith.constant dense<0.000000e+00> : vector<100x64xf32>
    %286 = tpu.matmul %283, %285, %cst_295 {dimension_numbers = #tpu.dot_dimension_numbers<[1], [0], [0], [1], [0, 0, 1, 1], [], []>} : vector<100x128xbf16>, vector<128x64xbf16>, vector<100x64xf32> -> vector<100x64xf32>
    %287 = arith.addf %282, %286 : vector<100x64xf32>
    %c17_296 = arith.constant 17 : index
    %c0_297 = arith.constant 0 : index
    %288 = vector.load %arg22[%c17_296, %c0_297] : memref<132x128xbf16, #tpu.memory_space<vmem>>, vector<100x128xbf16>
    %c5_298 = arith.constant 5 : index
    %c0_299 = arith.constant 0 : index
    %c0_300 = arith.constant 0 : index
    %289 = vector.load %arg14[%c5_298, %c0_299, %c0_300] : memref<9x128x64xbf16, #tpu.memory_space<vmem>>, vector<1x128x64xbf16>
    %290 = vector.shape_cast %289 : vector<1x128x64xbf16> to vector<128x64xbf16>
    %cst_301 = arith.constant dense<0.000000e+00> : vector<100x64xf32>
    %291 = tpu.matmul %288, %290, %cst_301 {dimension_numbers = #tpu.dot_dimension_numbers<[1], [0], [0], [1], [0, 0, 1, 1], [], []>} : vector<100x128xbf16>, vector<128x64xbf16>, vector<100x64xf32> -> vector<100x64xf32>
    %292 = arith.addf %287, %291 : vector<100x64xf32>
    %c25_302 = arith.constant 25 : index
    %c0_303 = arith.constant 0 : index
    %293 = vector.load %arg22[%c25_302, %c0_303] : memref<132x128xbf16, #tpu.memory_space<vmem>>, vector<100x128xbf16>
    %c6_304 = arith.constant 6 : index
    %c0_305 = arith.constant 0 : index
    %c0_306 = arith.constant 0 : index
    %294 = vector.load %arg14[%c6_304, %c0_305, %c0_306] : memref<9x128x64xbf16, #tpu.memory_space<vmem>>, vector<1x128x64xbf16>
    %295 = vector.shape_cast %294 : vector<1x128x64xbf16> to vector<128x64xbf16>
    %cst_307 = arith.constant dense<0.000000e+00> : vector<100x64xf32>
    %296 = tpu.matmul %293, %295, %cst_307 {dimension_numbers = #tpu.dot_dimension_numbers<[1], [0], [0], [1], [0, 0, 1, 1], [], []>} : vector<100x128xbf16>, vector<128x64xbf16>, vector<100x64xf32> -> vector<100x64xf32>
    %297 = arith.addf %292, %296 : vector<100x64xf32>
    %c26_308 = arith.constant 26 : index
    %c0_309 = arith.constant 0 : index
    %298 = vector.load %arg22[%c26_308, %c0_309] : memref<132x128xbf16, #tpu.memory_space<vmem>>, vector<100x128xbf16>
    %c7_310 = arith.constant 7 : index
    %c0_311 = arith.constant 0 : index
    %c0_312 = arith.constant 0 : index
    %299 = vector.load %arg14[%c7_310, %c0_311, %c0_312] : memref<9x128x64xbf16, #tpu.memory_space<vmem>>, vector<1x128x64xbf16>
    %300 = vector.shape_cast %299 : vector<1x128x64xbf16> to vector<128x64xbf16>
    %cst_313 = arith.constant dense<0.000000e+00> : vector<100x64xf32>
    %301 = tpu.matmul %298, %300, %cst_313 {dimension_numbers = #tpu.dot_dimension_numbers<[1], [0], [0], [1], [0, 0, 1, 1], [], []>} : vector<100x128xbf16>, vector<128x64xbf16>, vector<100x64xf32> -> vector<100x64xf32>
    %302 = arith.addf %297, %301 : vector<100x64xf32>
    %c27_314 = arith.constant 27 : index
    %c0_315 = arith.constant 0 : index
    %303 = vector.load %arg22[%c27_314, %c0_315] : memref<132x128xbf16, #tpu.memory_space<vmem>>, vector<100x128xbf16>
    %c8_316 = arith.constant 8 : index
    %c0_317 = arith.constant 0 : index
    %c0_318 = arith.constant 0 : index
    %304 = vector.load %arg14[%c8_316, %c0_317, %c0_318] : memref<9x128x64xbf16, #tpu.memory_space<vmem>>, vector<1x128x64xbf16>
    %305 = vector.shape_cast %304 : vector<1x128x64xbf16> to vector<128x64xbf16>
    %cst_319 = arith.constant dense<0.000000e+00> : vector<100x64xf32>
    %306 = tpu.matmul %303, %305, %cst_319 {dimension_numbers = #tpu.dot_dimension_numbers<[1], [0], [0], [1], [0, 0, 1, 1], [], []>} : vector<100x128xbf16>, vector<128x64xbf16>, vector<100x64xf32> -> vector<100x64xf32>
    %307 = arith.addf %302, %306 : vector<100x64xf32>
    %cst_320 = arith.constant 0.000000e+00 : f32
    %308 = vector.broadcast %cst_320 : f32 to vector<100x64xf32>
    %309 = arith.cmpf oge, %307, %308 : vector<100x64xf32>
    %cst_321 = arith.constant 0.00999999977 : f32
    %310 = vector.broadcast %cst_321 : f32 to vector<100x64xf32>
    %311 = arith.mulf %310, %307 : vector<100x64xf32>
    %312 = arith.select %309, %307, %311 : vector<100x64xi1>, vector<100x64xf32>
    %313 = vector.extract_strided_slice %26 {offsets = [0, 64], sizes = [100, 64], strides = [1, 1]} : vector<100x128xf32> to vector<100x64xf32>
    %314 = arith.addf %312, %313 : vector<100x64xf32>
    %315 = vector.broadcast %8 : vector<100x1xf32> to vector<100x64xf32>
    %316 = arith.mulf %314, %315 : vector<100x64xf32>
    %317 = arith.truncf %316 : vector<100x64xf32> to vector<100x64xbf16>
    %c16_322 = arith.constant 16 : index
    %c0_323 = arith.constant 0 : index
    %318 = vector.load %arg21[%c16_322, %c0_323] : memref<132x64xbf16, #tpu.memory_space<vmem>>, vector<100x64xbf16>
    tpu.vector_store %arg21[%c16_322, %c0_323], %317 {strides = array<i32>} : memref<132x64xbf16, #tpu.memory_space<vmem>>, vector<100x64xbf16>,
    %c5_324 = arith.constant 5 : index
    %c0_325 = arith.constant 0 : index
    %319 = vector.load %arg21[%c5_324, %c0_325] : memref<132x64xbf16, #tpu.memory_space<vmem>>, vector<100x64xbf16>
    %c0_326 = arith.constant 0 : index
    %c0_327 = arith.constant 0 : index
    %c0_328 = arith.constant 0 : index
    %320 = vector.load %arg18[%c0_326, %c0_327, %c0_328] : memref<9x64x64xbf16, #tpu.memory_space<vmem>>, vector<1x64x64xbf16>
    %321 = vector.shape_cast %320 : vector<1x64x64xbf16> to vector<64x64xbf16>
    %cst_329 = arith.constant dense<0.000000e+00> : vector<100x64xf32>
    %322 = tpu.matmul %319, %321, %cst_329 {dimension_numbers = #tpu.dot_dimension_numbers<[1], [0], [0], [1], [0, 0, 1, 1], [], []>} : vector<100x64xbf16>, vector<64x64xbf16>, vector<100x64xf32> -> vector<100x64xf32>
    %c0_330 = arith.constant 0 : index
    %c0_331 = arith.constant 0 : index
    %323 = vector.load %arg19[%c0_330, %c0_331] : memref<1x64xf32, #tpu.memory_space<vmem>>, vector<1x64xf32>
    %324 = vector.broadcast %323 : vector<1x64xf32> to vector<100x64xf32>
    %325 = arith.addf %322, %324 : vector<100x64xf32>
    %c6_332 = arith.constant 6 : index
    %c0_333 = arith.constant 0 : index
    %326 = vector.load %arg21[%c6_332, %c0_333] : memref<132x64xbf16, #tpu.memory_space<vmem>>, vector<100x64xbf16>
    %c1_334 = arith.constant 1 : index
    %c0_335 = arith.constant 0 : index
    %c0_336 = arith.constant 0 : index
    %327 = vector.load %arg18[%c1_334, %c0_335, %c0_336] : memref<9x64x64xbf16, #tpu.memory_space<vmem>>, vector<1x64x64xbf16>
    %328 = vector.shape_cast %327 : vector<1x64x64xbf16> to vector<64x64xbf16>
    %cst_337 = arith.constant dense<0.000000e+00> : vector<100x64xf32>
    %329 = tpu.matmul %326, %328, %cst_337 {dimension_numbers = #tpu.dot_dimension_numbers<[1], [0], [0], [1], [0, 0, 1, 1], [], []>} : vector<100x64xbf16>, vector<64x64xbf16>, vector<100x64xf32> -> vector<100x64xf32>
    %330 = arith.addf %325, %329 : vector<100x64xf32>
    %c7_338 = arith.constant 7 : index
    %c0_339 = arith.constant 0 : index
    %331 = vector.load %arg21[%c7_338, %c0_339] : memref<132x64xbf16, #tpu.memory_space<vmem>>, vector<100x64xbf16>
    %c2_340 = arith.constant 2 : index
    %c0_341 = arith.constant 0 : index
    %c0_342 = arith.constant 0 : index
    %332 = vector.load %arg18[%c2_340, %c0_341, %c0_342] : memref<9x64x64xbf16, #tpu.memory_space<vmem>>, vector<1x64x64xbf16>
    %333 = vector.shape_cast %332 : vector<1x64x64xbf16> to vector<64x64xbf16>
    %cst_343 = arith.constant dense<0.000000e+00> : vector<100x64xf32>
    %334 = tpu.matmul %331, %333, %cst_343 {dimension_numbers = #tpu.dot_dimension_numbers<[1], [0], [0], [1], [0, 0, 1, 1], [], []>} : vector<100x64xbf16>, vector<64x64xbf16>, vector<100x64xf32> -> vector<100x64xf32>
    %335 = arith.addf %330, %334 : vector<100x64xf32>
    %c15_344 = arith.constant 15 : index
    %c0_345 = arith.constant 0 : index
    %336 = vector.load %arg21[%c15_344, %c0_345] : memref<132x64xbf16, #tpu.memory_space<vmem>>, vector<100x64xbf16>
    %c3_346 = arith.constant 3 : index
    %c0_347 = arith.constant 0 : index
    %c0_348 = arith.constant 0 : index
    %337 = vector.load %arg18[%c3_346, %c0_347, %c0_348] : memref<9x64x64xbf16, #tpu.memory_space<vmem>>, vector<1x64x64xbf16>
    %338 = vector.shape_cast %337 : vector<1x64x64xbf16> to vector<64x64xbf16>
    %cst_349 = arith.constant dense<0.000000e+00> : vector<100x64xf32>
    %339 = tpu.matmul %336, %338, %cst_349 {dimension_numbers = #tpu.dot_dimension_numbers<[1], [0], [0], [1], [0, 0, 1, 1], [], []>} : vector<100x64xbf16>, vector<64x64xbf16>, vector<100x64xf32> -> vector<100x64xf32>
    %340 = arith.addf %335, %339 : vector<100x64xf32>
    %c16_350 = arith.constant 16 : index
    %c0_351 = arith.constant 0 : index
    %341 = vector.load %arg21[%c16_350, %c0_351] : memref<132x64xbf16, #tpu.memory_space<vmem>>, vector<100x64xbf16>
    %c4_352 = arith.constant 4 : index
    %c0_353 = arith.constant 0 : index
    %c0_354 = arith.constant 0 : index
    %342 = vector.load %arg18[%c4_352, %c0_353, %c0_354] : memref<9x64x64xbf16, #tpu.memory_space<vmem>>, vector<1x64x64xbf16>
    %343 = vector.shape_cast %342 : vector<1x64x64xbf16> to vector<64x64xbf16>
    %cst_355 = arith.constant dense<0.000000e+00> : vector<100x64xf32>
    %344 = tpu.matmul %341, %343, %cst_355 {dimension_numbers = #tpu.dot_dimension_numbers<[1], [0], [0], [1], [0, 0, 1, 1], [], []>} : vector<100x64xbf16>, vector<64x64xbf16>, vector<100x64xf32> -> vector<100x64xf32>
    %345 = arith.addf %340, %344 : vector<100x64xf32>
    %c17_356 = arith.constant 17 : index
    %c0_357 = arith.constant 0 : index
    %346 = vector.load %arg21[%c17_356, %c0_357] : memref<132x64xbf16, #tpu.memory_space<vmem>>, vector<100x64xbf16>
    %c5_358 = arith.constant 5 : index
    %c0_359 = arith.constant 0 : index
    %c0_360 = arith.constant 0 : index
    %347 = vector.load %arg18[%c5_358, %c0_359, %c0_360] : memref<9x64x64xbf16, #tpu.memory_space<vmem>>, vector<1x64x64xbf16>
    %348 = vector.shape_cast %347 : vector<1x64x64xbf16> to vector<64x64xbf16>
    %cst_361 = arith.constant dense<0.000000e+00> : vector<100x64xf32>
    %349 = tpu.matmul %346, %348, %cst_361 {dimension_numbers = #tpu.dot_dimension_numbers<[1], [0], [0], [1], [0, 0, 1, 1], [], []>} : vector<100x64xbf16>, vector<64x64xbf16>, vector<100x64xf32> -> vector<100x64xf32>
    %350 = arith.addf %345, %349 : vector<100x64xf32>
    %c25_362 = arith.constant 25 : index
    %c0_363 = arith.constant 0 : index
    %351 = vector.load %arg21[%c25_362, %c0_363] : memref<132x64xbf16, #tpu.memory_space<vmem>>, vector<100x64xbf16>
    %c6_364 = arith.constant 6 : index
    %c0_365 = arith.constant 0 : index
    %c0_366 = arith.constant 0 : index
    %352 = vector.load %arg18[%c6_364, %c0_365, %c0_366] : memref<9x64x64xbf16, #tpu.memory_space<vmem>>, vector<1x64x64xbf16>
    %353 = vector.shape_cast %352 : vector<1x64x64xbf16> to vector<64x64xbf16>
    %cst_367 = arith.constant dense<0.000000e+00> : vector<100x64xf32>
    %354 = tpu.matmul %351, %353, %cst_367 {dimension_numbers = #tpu.dot_dimension_numbers<[1], [0], [0], [1], [0, 0, 1, 1], [], []>} : vector<100x64xbf16>, vector<64x64xbf16>, vector<100x64xf32> -> vector<100x64xf32>
    %355 = arith.addf %350, %354 : vector<100x64xf32>
    %c26_368 = arith.constant 26 : index
    %c0_369 = arith.constant 0 : index
    %356 = vector.load %arg21[%c26_368, %c0_369] : memref<132x64xbf16, #tpu.memory_space<vmem>>, vector<100x64xbf16>
    %c7_370 = arith.constant 7 : index
    %c0_371 = arith.constant 0 : index
    %c0_372 = arith.constant 0 : index
    %357 = vector.load %arg18[%c7_370, %c0_371, %c0_372] : memref<9x64x64xbf16, #tpu.memory_space<vmem>>, vector<1x64x64xbf16>
    %358 = vector.shape_cast %357 : vector<1x64x64xbf16> to vector<64x64xbf16>
    %cst_373 = arith.constant dense<0.000000e+00> : vector<100x64xf32>
    %359 = tpu.matmul %356, %358, %cst_373 {dimension_numbers = #tpu.dot_dimension_numbers<[1], [0], [0], [1], [0, 0, 1, 1], [], []>} : vector<100x64xbf16>, vector<64x64xbf16>, vector<100x64xf32> -> vector<100x64xf32>
    %360 = arith.addf %355, %359 : vector<100x64xf32>
    %c27_374 = arith.constant 27 : index
    %c0_375 = arith.constant 0 : index
    %361 = vector.load %arg21[%c27_374, %c0_375] : memref<132x64xbf16, #tpu.memory_space<vmem>>, vector<100x64xbf16>
    %c8_376 = arith.constant 8 : index
    %c0_377 = arith.constant 0 : index
    %c0_378 = arith.constant 0 : index
    %362 = vector.load %arg18[%c8_376, %c0_377, %c0_378] : memref<9x64x64xbf16, #tpu.memory_space<vmem>>, vector<1x64x64xbf16>
    %363 = vector.shape_cast %362 : vector<1x64x64xbf16> to vector<64x64xbf16>
    %cst_379 = arith.constant dense<0.000000e+00> : vector<100x64xf32>
    %364 = tpu.matmul %361, %363, %cst_379 {dimension_numbers = #tpu.dot_dimension_numbers<[1], [0], [0], [1], [0, 0, 1, 1], [], []>} : vector<100x64xbf16>, vector<64x64xbf16>, vector<100x64xf32> -> vector<100x64xf32>
    %365 = arith.addf %360, %364 : vector<100x64xf32>
    %c0_380 = arith.constant 0 : index
    %c16_381 = arith.constant 16 : index
    %c0_382 = arith.constant 0 : index
    %366 = vector.load %arg1[%c0_380, %c16_381, %c0_382] : memref<1x132x64xf32, #tpu.memory_space<vmem>>, vector<1x100x64xf32>
    %367 = vector.shape_cast %366 : vector<1x100x64xf32> to vector<100x64xf32>
    %368 = arith.addf %367, %365 : vector<100x64xf32>
    %c0_383 = arith.constant 0 : index
    %c0_384 = arith.constant 0 : index
    %c0_385 = arith.constant 0 : index
    %369 = vector.load %arg20[%c0_383, %c0_384, %c0_385] : memref<1x100x64xf32, #tpu.memory_space<vmem>>, vector<1x100x64xf32>
    %370 = vector.shape_cast %369 : vector<1x100x64xf32> to vector<100x64xf32>
    %371 = vector.shape_cast %368 : vector<100x64xf32> to vector<1x100x64xf32>
    tpu.vector_store %arg20[%c0_383, %c0_384, %c0_385], %371 {strides = array<i32>} : memref<1x100x64xf32, #tpu.memory_space<vmem>>, vector<1x100x64xf32>,
    return
  }
  func.func @transform_0(%arg0: i32) -> (i32, i32, i32) {
    %c0_i32 = arith.constant 0 : i32
    %c0_i32_0 = arith.constant 0 : i32
    %c0_i32_1 = arith.constant 0 : i32
    return %arg0, %c0_i32, %c0_i32_0 : i32, i32, i32
  }
  func.func @transform_1(%arg0: i32) -> (i32, i32, i32) {
    %c0_i32 = arith.constant 0 : i32
    %c0_i32_0 = arith.constant 0 : i32
    %c0_i32_1 = arith.constant 0 : i32
    return %arg0, %c0_i32, %c0_i32_0 : i32, i32, i32
  }
  func.func @transform_2(%arg0: i32) -> (i32, i32) {
    %c0_i32 = arith.constant 0 : i32
    %c0_i32_0 = arith.constant 0 : i32
    %c0_i32_1 = arith.constant 0 : i32
    return %c0_i32, %c0_i32_0 : i32, i32
  }
  func.func @transform_3(%arg0: i32) -> (i32, i32, i32) {
    %c0_i32 = arith.constant 0 : i32
    %c0_i32_0 = arith.constant 0 : i32
    %c0_i32_1 = arith.constant 0 : i32
    %c0_i32_2 = arith.constant 0 : i32
    return %c0_i32, %c0_i32_0, %c0_i32_1 : i32, i32, i32
  }
  func.func @transform_4(%arg0: i32) -> (i32, i32) {
    %c0_i32 = arith.constant 0 : i32
    %c0_i32_0 = arith.constant 0 : i32
    %c0_i32_1 = arith.constant 0 : i32
    return %c0_i32, %c0_i32_0 : i32, i32
  }
  func.func @transform_5(%arg0: i32) -> (i32, i32, i32) {
    %c0_i32 = arith.constant 0 : i32
    %c0_i32_0 = arith.constant 0 : i32
    %c0_i32_1 = arith.constant 0 : i32
    %c0_i32_2 = arith.constant 0 : i32
    return %c0_i32, %c0_i32_0, %c0_i32_1 : i32, i32, i32
  }
  func.func @transform_6(%arg0: i32) -> (i32, i32) {
    %c0_i32 = arith.constant 0 : i32
    %c0_i32_0 = arith.constant 0 : i32
    %c0_i32_1 = arith.constant 0 : i32
    return %c0_i32, %c0_i32_0 : i32, i32
  }
  func.func @transform_7(%arg0: i32) -> (i32, i32) {
    %c0_i32 = arith.constant 0 : i32
    %c0_i32_0 = arith.constant 0 : i32
    %c0_i32_1 = arith.constant 0 : i32
    return %c0_i32, %c0_i32_0 : i32, i32
  }
  func.func @transform_8(%arg0: i32) -> (i32, i32) {
    %c0_i32 = arith.constant 0 : i32
    %c0_i32_0 = arith.constant 0 : i32
    %c0_i32_1 = arith.constant 0 : i32
    return %c0_i32, %c0_i32_0 : i32, i32
  }
  func.func @transform_9(%arg0: i32) -> (i32, i32) {
    %c0_i32 = arith.constant 0 : i32
    %c0_i32_0 = arith.constant 0 : i32
    %c0_i32_1 = arith.constant 0 : i32
    return %c0_i32, %c0_i32_0 : i32, i32
  }
  func.func @transform_10(%arg0: i32) -> (i32, i32) {
    %c0_i32 = arith.constant 0 : i32
    %c0_i32_0 = arith.constant 0 : i32
    %c0_i32_1 = arith.constant 0 : i32
    return %c0_i32, %c0_i32_0 : i32, i32
  }
  func.func @transform_11(%arg0: i32) -> (i32, i32, i32) {
    %c0_i32 = arith.constant 0 : i32
    %c0_i32_0 = arith.constant 0 : i32
    %c0_i32_1 = arith.constant 0 : i32
    %c0_i32_2 = arith.constant 0 : i32
    return %c0_i32, %c0_i32_0, %c0_i32_1 : i32, i32, i32
  }
  func.func @transform_12(%arg0: i32) -> (i32, i32) {
    %c0_i32 = arith.constant 0 : i32
    %c0_i32_0 = arith.constant 0 : i32
    %c0_i32_1 = arith.constant 0 : i32
    return %c0_i32, %c0_i32_0 : i32, i32
  }
  func.func @transform_13(%arg0: i32) -> (i32, i32, i32) {
    %c0_i32 = arith.constant 0 : i32
    %c0_i32_0 = arith.constant 0 : i32
    %c0_i32_1 = arith.constant 0 : i32
    %c0_i32_2 = arith.constant 0 : i32
    return %c0_i32, %c0_i32_0, %c0_i32_1 : i32, i32, i32
  }
  func.func @transform_14(%arg0: i32) -> (i32, i32) {
    %c0_i32 = arith.constant 0 : i32
    %c0_i32_0 = arith.constant 0 : i32
    %c0_i32_1 = arith.constant 0 : i32
    return %c0_i32, %c0_i32_0 : i32, i32
  }
  func.func @transform_15(%arg0: i32) -> (i32, i32, i32) {
    %c0_i32 = arith.constant 0 : i32
    %c0_i32_0 = arith.constant 0 : i32
    %c0_i32_1 = arith.constant 0 : i32
    %c0_i32_2 = arith.constant 0 : i32
    return %c0_i32, %c0_i32_0, %c0_i32_1 : i32, i32, i32
  }
  func.func @transform_16(%arg0: i32) -> (i32, i32) {
    %c0_i32 = arith.constant 0 : i32
    %c0_i32_0 = arith.constant 0 : i32
    %c0_i32_1 = arith.constant 0 : i32
    return %c0_i32, %c0_i32_0 : i32, i32
  }
  func.func @transform_17(%arg0: i32) -> (i32, i32, i32) {
    %c0_i32 = arith.constant 0 : i32
    %c0_i32_0 = arith.constant 0 : i32
    %c0_i32_1 = arith.constant 0 : i32
    %c0_i32_2 = arith.constant 0 : i32
    return %c0_i32, %c0_i32_0, %c0_i32_1 : i32, i32, i32
  }
  func.func @transform_18(%arg0: i32) -> (i32, i32) {
    %c0_i32 = arith.constant 0 : i32
    %c0_i32_0 = arith.constant 0 : i32
    %c0_i32_1 = arith.constant 0 : i32
    return %c0_i32, %c0_i32_0 : i32, i32
  }
  func.func @transform_19(%arg0: i32) -> (i32, i32, i32) {
    %c0_i32 = arith.constant 0 : i32
    %c0_i32_0 = arith.constant 0 : i32
    %c0_i32_1 = arith.constant 0 : i32
    return %arg0, %c0_i32, %c0_i32_0 : i32, i32, i32
  }
}

</mosaic_0001>

<llo_original>
// kernel: resblock_sft.1
$region0: #{resblock_sft.1}
  #allocation0 [shape = 'u32[]', space=smem, size = 0x4, offset = 0x4, fixed_abs, tag = 'smem constant byte address 0x4 - core index']
  #allocation1 [shape = 'u32[72,128]{1,0:T(1,128)}', space=vmem, size = 0x9000, scoped, tag = 'internal scratch']
  #allocation2 [shape = 'bf16[132,64]{1,0:T(8,128)(2,1)}', space=vmem, size = 0x8800, scoped, tag = 'scratch operand']
  #allocation3 [shape = 'bf16[132,128]{1,0:T(8,128)(2,1)}', space=vmem, size = 0x8800, scoped, tag = 'scratch operand']
  %s0 = inlined_call_operand.vmem [shape: f32[2,132,64], index: 0, kind: input, shape index: {}]
  %s1 = inlined_call_operand.vmem [shape: bf16[2,132,32], index: 1, kind: input, shape index: {}]
  %s2 = inlined_call_operand.vmem [shape: f32[100,1], index: 2, kind: input, shape index: {}]
  %s3 = inlined_call_operand.vmem [shape: bf16[9,32,64], index: 3, kind: input, shape index: {}]
  %s4 = inlined_call_operand.vmem [shape: f32[1,64], index: 4, kind: input, shape index: {}]
  %s5 = inlined_call_operand.vmem [shape: bf16[9,64,128], index: 5, kind: input, shape index: {}]
  %s6 = inlined_call_operand.vmem [shape: f32[1,128], index: 6, kind: input, shape index: {}]
  %s7 = inlined_call_operand.vmem [shape: bf16[32,64], index: 7, kind: input, shape index: {}]
  %s8 = inlined_call_operand.vmem [shape: f32[1,64], index: 8, kind: input, shape index: {}]
  %s9 = inlined_call_operand.vmem [shape: bf16[64,128], index: 9, kind: input, shape index: {}]
  %s10 = inlined_call_operand.vmem [shape: f32[1,128], index: 10, kind: input, shape index: {}]
  %s11 = inlined_call_operand.vmem [shape: bf16[9,128,64], index: 11, kind: input, shape index: {}]
  %s12 = inlined_call_operand.vmem [shape: f32[1,64], index: 12, kind: input, shape index: {}]
  %s13 = inlined_call_operand.vmem [shape: bf16[9,128,64], index: 13, kind: input, shape index: {}]
  %s14 = inlined_call_operand.vmem [shape: f32[1,64], index: 14, kind: input, shape index: {}]
  %s15 = inlined_call_operand.vmem [shape: bf16[9,64,64], index: 15, kind: input, shape index: {}]
  %s16 = inlined_call_operand.vmem [shape: f32[1,64], index: 16, kind: input, shape index: {}]
  %s17 = inlined_call_operand.vmem [shape: bf16[9,64,64], index: 17, kind: input, shape index: {}]
  %s18 = inlined_call_operand.vmem [shape: f32[1,64], index: 18, kind: input, shape index: {}]
  %s19 = inlined_call_operand.vmem [shape: f32[2,100,64], index: 19, kind: output, shape index: {}]
  %s20 = sld [smem:[#allocation0]]
  $region109: #{resblock_sft.1} parent=0
    _
  %s22 = ssub.s32 1, %s20
  %s23 = scalar_select 0, %s22, %s20
  loop: start=0, step=1, limit=4
  $region2: #{resblock_sft.1} parent=0 // loop_pre_header
    _
  $region3: #{resblock_sft.1} parent=0 // loop_header
    %s25 = sphi 0, %s29
    %p26 = scmp.ge.s32.totalorder %s25, 4
    %s35 = sphi 0, %s37
    %s38 = sphi 0, %s35
    %s39 = sphi 0, %s38
    %s55 = sphi 0, %s39
    %s61 = sphi 0, %s63
    %s64 = sphi 0, %s61
    %s65 = sphi 0, %s64
    %s81 = sphi 0, %s65
    %s85 = sphi 0, %s85
    %s87 = sphi 0, %s85
    %s88 = sphi 0, %s87
    %s102 = sphi 0, %s88
    %s106 = sphi 0, %s106
    %s108 = sphi 0, %s106
    %s109 = sphi 0, %s108
    %s123 = sphi 0, %s109
    %s127 = sphi 0, %s127
    %s129 = sphi 0, %s127
    %s130 = sphi 0, %s129
    %s144 = sphi 0, %s130
    %s148 = sphi 0, %s148
    %s150 = sphi 0, %s148
    %s151 = sphi 0, %s150
    %s165 = sphi 0, %s151
    %s169 = sphi 0, %s169
    %s171 = sphi 0, %s169
    %s172 = sphi 0, %s171
    %s186 = sphi 0, %s172
    %s190 = sphi 0, %s190
    %s192 = sphi 0, %s190
    %s193 = sphi 0, %s192
    %s207 = sphi 0, %s193
    %s211 = sphi 0, %s211
    %s213 = sphi 0, %s211
    %s214 = sphi 0, %s213
    %s228 = sphi 0, %s214
    %s232 = sphi 0, %s232
    %s234 = sphi 0, %s232
    %s235 = sphi 0, %s234
    %s249 = sphi 0, %s235
    %s253 = sphi 0, %s253
    %s255 = sphi 0, %s253
    %s256 = sphi 0, %s255
    %s270 = sphi 0, %s256
    %s274 = sphi 0, %s274
    %s276 = sphi 0, %s274
    %s277 = sphi 0, %s276
    %s291 = sphi 0, %s277
    %s295 = sphi 0, %s295
    %s297 = sphi 0, %s295
    %s298 = sphi 0, %s297
    %s312 = sphi 0, %s298
    %s316 = sphi 0, %s316
    %s318 = sphi 0, %s316
    %s319 = sphi 0, %s318
    %s333 = sphi 0, %s319
    %s337 = sphi 0, %s337
    %s339 = sphi 0, %s337
    %s340 = sphi 0, %s339
    %s354 = sphi 0, %s340
    %s358 = sphi 0, %s358
    %s360 = sphi 0, %s358
    %s361 = sphi 0, %s360
    %s375 = sphi 0, %s361
    %s379 = sphi 0, %s379
    %s381 = sphi 0, %s379
    %s382 = sphi 0, %s381
    %s396 = sphi 0, %s382
    %s400 = sphi 0, %s400
    %s402 = sphi 0, %s400
    %s403 = sphi 0, %s402
    %s417 = sphi 0, %s403
    %s421 = sphi 0, %s421
    %s423 = sphi 0, %s421
    %s424 = sphi 0, %s423
    %s438 = sphi 0, %s424
    %s444 = sphi 0, %s446
    %s447 = sphi 0, %s444
    %s448 = sphi 0, %s447
    %s464 = sphi 0, %s448
  $region4: #{resblock_sft.1} parent=0 // loop_header_branch
    %28 = sbr.rel (%p26) target = $region8
  $region5: #{resblock_sft.1} parent=0 // loop_body
    %s30 = ssub.s32 %s25, 1
    %s31 = ssub.s32 %s25, 2
    %s32 = sadd.s32 %s25, 1
    %s33 = ssub.s32 %s25, %s32
    %p34 = scmp.eq.s32.totalorder %s33, 0
    %s36 = sadd.s32 %s35, 1
    %s37 = scalar_select %p34, %s35, %s36
    %p40 = pneg %p34
    %p41 = scmp.eq.s32.totalorder %s25, 1
    %p42 = por %p40, %p41
    %p43 = scmp.ne.s32.totalorder %s35, %s38
    %p44 = scmp.eq.s32.totalorder %s25, 0
    %p45 = por %p43, %p44
    %p46 = scmp.ne.s32.totalorder %s35, %s38
    %p47 = scmp.eq.s32.totalorder %s30, 1
    %p48 = por %p46, %p47
    %p49 = scmp.ne.s32.totalorder %s38, %s39
    %p50 = scmp.eq.s32.totalorder %s30, 0
    %p51 = por %p49, %p50
    %p52 = scmp.ne.s32.totalorder %s38, %s39
    %p53 = scmp.eq.s32.totalorder %s31, 1
    %p54 = por %p52, %p53
    %p56 = scmp.ne.s32.totalorder %s39, %s55
    %p57 = scmp.eq.s32.totalorder %s31, 0
    %p58 = por %p56, %p57
    %s59 = ssub.s32 %s25, %s32
    %p60 = scmp.eq.s32.totalorder %s59, 0
    %s62 = sadd.s32 %s61, 1
    %s63 = scalar_select %p60, %s61, %s62
    %p66 = pneg %p60
    %p67 = scmp.eq.s32.totalorder %s25, 1
    %p68 = por %p66, %p67
    %p69 = scmp.ne.s32.totalorder %s61, %s64
    %p70 = scmp.eq.s32.totalorder %s25, 0
    %p71 = por %p69, %p70
    %p72 = scmp.ne.s32.totalorder %s61, %s64
    %p73 = scmp.eq.s32.totalorder %s30, 1
    %p74 = por %p72, %p73
    %p75 = scmp.ne.s32.totalorder %s64, %s65
    %p76 = scmp.eq.s32.totalorder %s30, 0
    %p77 = por %p75, %p76
    %p78 = scmp.ne.s32.totalorder %s64, %s65
    %p79 = scmp.eq.s32.totalorder %s31, 1
    %p80 = por %p78, %p79
    %p82 = scmp.ne.s32.totalorder %s65, %s81
    %p83 = scmp.eq.s32.totalorder %s31, 0
    %p84 = por %p82, %p83
    %s86 = sadd.s32 %s85, 1
    %p89 = scmp.eq.s32.totalorder %s25, 1
    %p90 = scmp.ne.s32.totalorder %s85, %s87
    %p91 = scmp.eq.s32.totalorder %s25, 0
    %p92 = por %p90, %p91
    %p93 = scmp.ne.s32.totalorder %s85, %s87
    %p94 = scmp.eq.s32.totalorder %s30, 1
    %p95 = por %p93, %p94
    %p96 = scmp.ne.s32.totalorder %s87, %s88
    %p97 = scmp.eq.s32.totalorder %s30, 0
    %p98 = por %p96, %p97
    %p99 = scmp.ne.s32.totalorder %s87, %s88
    %p100 = scmp.eq.s32.totalorder %s31, 1
    %p101 = por %p99, %p100
    %p103 = scmp.ne.s32.totalorder %s88, %s102
    %p104 = scmp.eq.s32.totalorder %s31, 0
    %p105 = por %p103, %p104
    %s107 = sadd.s32 %s106, 1
    %p110 = scmp.eq.s32.totalorder %s25, 1
    %p111 = scmp.ne.s32.totalorder %s106, %s108
    %p112 = scmp.eq.s32.totalorder %s25, 0
    %p113 = por %p111, %p112
    %p114 = scmp.ne.s32.totalorder %s106, %s108
    %p115 = scmp.eq.s32.totalorder %s30, 1
    %p116 = por %p114, %p115
    %p117 = scmp.ne.s32.totalorder %s108, %s109
    %p118 = scmp.eq.s32.totalorder %s30, 0
    %p119 = por %p117, %p118
    %p120 = scmp.ne.s32.totalorder %s108, %s109
    %p121 = scmp.eq.s32.totalorder %s31, 1
    %p122 = por %p120, %p121
    %p124 = scmp.ne.s32.totalorder %s109, %s123
    %p125 = scmp.eq.s32.totalorder %s31, 0
    %p126 = por %p124, %p125
    %s128 = sadd.s32 %s127, 1
    %p131 = scmp.eq.s32.totalorder %s25, 1
    %p132 = scmp.ne.s32.totalorder %s127, %s129
    %p133 = scmp.eq.s32.totalorder %s25, 0
    %p134 = por %p132, %p133
    %p135 = scmp.ne.s32.totalorder %s127, %s129
    %p136 = scmp.eq.s32.totalorder %s30, 1
    %p137 = por %p135, %p136
    %p138 = scmp.ne.s32.totalorder %s129, %s130
    %p139 = scmp.eq.s32.totalorder %s30, 0
    %p140 = por %p138, %p139
    %p141 = scmp.ne.s32.totalorder %s129, %s130
    %p142 = scmp.eq.s32.totalorder %s31, 1
    %p143 = por %p141, %p142
    %p145 = scmp.ne.s32.totalorder %s130, %s144
    %p146 = scmp.eq.s32.totalorder %s31, 0
    %p147 = por %p145, %p146
    %s149 = sadd.s32 %s148, 1
    %p152 = scmp.eq.s32.totalorder %s25, 1
    %p153 = scmp.ne.s32.totalorder %s148, %s150
    %p154 = scmp.eq.s32.totalorder %s25, 0
    %p155 = por %p153, %p154
    %p156 = scmp.ne.s32.totalorder %s148, %s150
    %p157 = scmp.eq.s32.totalorder %s30, 1
    %p158 = por %p156, %p157
    %p159 = scmp.ne.s32.totalorder %s150, %s151
    %p160 = scmp.eq.s32.totalorder %s30, 0
    %p161 = por %p159, %p160
    %p162 = scmp.ne.s32.totalorder %s150, %s151
    %p163 = scmp.eq.s32.totalorder %s31, 1
    %p164 = por %p162, %p163
    %p166 = scmp.ne.s32.totalorder %s151, %s165
    %p167 = scmp.eq.s32.totalorder %s31, 0
    %p168 = por %p166, %p167
    %s170 = sadd.s32 %s169, 1
    %p173 = scmp.eq.s32.totalorder %s25, 1
    %p174 = scmp.ne.s32.totalorder %s169, %s171
    %p175 = scmp.eq.s32.totalorder %s25, 0
    %p176 = por %p174, %p175
    %p177 = scmp.ne.s32.totalorder %s169, %s171
    %p178 = scmp.eq.s32.totalorder %s30, 1
    %p179 = por %p177, %p178
    %p180 = scmp.ne.s32.totalorder %s171, %s172
    %p181 = scmp.eq.s32.totalorder %s30, 0
    %p182 = por %p180, %p181
    %p183 = scmp.ne.s32.totalorder %s171, %s172
    %p184 = scmp.eq.s32.totalorder %s31, 1
    %p185 = por %p183, %p184
    %p187 = scmp.ne.s32.totalorder %s172, %s186
    %p188 = scmp.eq.s32.totalorder %s31, 0
    %p189 = por %p187, %p188
    %s191 = sadd.s32 %s190, 1
    %p194 = scmp.eq.s32.totalorder %s25, 1
    %p195 = scmp.ne.s32.totalorder %s190, %s192
    %p196 = scmp.eq.s32.totalorder %s25, 0
    %p197 = por %p195, %p196
    %p198 = scmp.ne.s32.totalorder %s190, %s192
    %p199 = scmp.eq.s32.totalorder %s30, 1
    %p200 = por %p198, %p199
    %p201 = scmp.ne.s32.totalorder %s192, %s193
    %p202 = scmp.eq.s32.totalorder %s30, 0
    %p203 = por %p201, %p202
    %p204 = scmp.ne.s32.totalorder %s192, %s193
    %p205 = scmp.eq.s32.totalorder %s31, 1
    %p206 = por %p204, %p205
    %p208 = scmp.ne.s32.totalorder %s193, %s207
    %p209 = scmp.eq.s32.totalorder %s31, 0
    %p210 = por %p208, %p209
    %s212 = sadd.s32 %s211, 1
    %p215 = scmp.eq.s32.totalorder %s25, 1
    %p216 = scmp.ne.s32.totalorder %s211, %s213
    %p217 = scmp.eq.s32.totalorder %s25, 0
    %p218 = por %p216, %p217
    %p219 = scmp.ne.s32.totalorder %s211, %s213
    %p220 = scmp.eq.s32.totalorder %s30, 1
    %p221 = por %p219, %p220
    %p222 = scmp.ne.s32.totalorder %s213, %s214
    %p223 = scmp.eq.s32.totalorder %s30, 0
    %p224 = por %p222, %p223
    %p225 = scmp.ne.s32.totalorder %s213, %s214
    %p226 = scmp.eq.s32.totalorder %s31, 1
    %p227 = por %p225, %p226
    %p229 = scmp.ne.s32.totalorder %s214, %s228
    %p230 = scmp.eq.s32.totalorder %s31, 0
    %p231 = por %p229, %p230
    %s233 = sadd.s32 %s232, 1
    %p236 = scmp.eq.s32.totalorder %s25, 1
    %p237 = scmp.ne.s32.totalorder %s232, %s234
    %p238 = scmp.eq.s32.totalorder %s25, 0
    %p239 = por %p237, %p238
    %p240 = scmp.ne.s32.totalorder %s232, %s234
    %p241 = scmp.eq.s32.totalorder %s30, 1
    %p242 = por %p240, %p241
    %p243 = scmp.ne.s32.totalorder %s234, %s235
    %p244 = scmp.eq.s32.totalorder %s30, 0
    %p245 = por %p243, %p244
    %p246 = scmp.ne.s32.totalorder %s234, %s235
    %p247 = scmp.eq.s32.totalorder %s31, 1
    %p248 = por %p246, %p247
    %p250 = scmp.ne.s32.totalorder %s235, %s249
    %p251 = scmp.eq.s32.totalorder %s31, 0
    %p252 = por %p250, %p251
    %s254 = sadd.s32 %s253, 1
    %p257 = scmp.eq.s32.totalorder %s25, 1
    %p258 = scmp.ne.s32.totalorder %s253, %s255
    %p259 = scmp.eq.s32.totalorder %s25, 0
    %p260 = por %p258, %p259
    %p261 = scmp.ne.s32.totalorder %s253, %s255
    %p262 = scmp.eq.s32.totalorder %s30, 1
    %p263 = por %p261, %p262
    %p264 = scmp.ne.s32.totalorder %s255, %s256
    %p265 = scmp.eq.s32.totalorder %s30, 0
    %p266 = por %p264, %p265
    %p267 = scmp.ne.s32.totalorder %s255, %s256
    %p268 = scmp.eq.s32.totalorder %s31, 1
    %p269 = por %p267, %p268
    %p271 = scmp.ne.s32.totalorder %s256, %s270
    %p272 = scmp.eq.s32.totalorder %s31, 0
    %p273 = por %p271, %p272
    %s275 = sadd.s32 %s274, 1
    %p278 = scmp.eq.s32.totalorder %s25, 1
    %p279 = scmp.ne.s32.totalorder %s274, %s276
    %p280 = scmp.eq.s32.totalorder %s25, 0
    %p281 = por %p279, %p280
    %p282 = scmp.ne.s32.totalorder %s274, %s276
    %p283 = scmp.eq.s32.totalorder %s30, 1
    %p284 = por %p282, %p283
    %p285 = scmp.ne.s32.totalorder %s276, %s277
    %p286 = scmp.eq.s32.totalorder %s30, 0
    %p287 = por %p285, %p286
    %p288 = scmp.ne.s32.totalorder %s276, %s277
    %p289 = scmp.eq.s32.totalorder %s31, 1
    %p290 = por %p288, %p289
    %p292 = scmp.ne.s32.totalorder %s277, %s291
    %p293 = scmp.eq.s32.totalorder %s31, 0
    %p294 = por %p292, %p293
    %s296 = sadd.s32 %s295, 1
    %p299 = scmp.eq.s32.totalorder %s25, 1
    %p300 = scmp.ne.s32.totalorder %s295, %s297
    %p301 = scmp.eq.s32.totalorder %s25, 0
    %p302 = por %p300, %p301
    %p303 = scmp.ne.s32.totalorder %s295, %s297
    %p304 = scmp.eq.s32.totalorder %s30, 1
    %p305 = por %p303, %p304
    %p306 = scmp.ne.s32.totalorder %s297, %s298
    %p307 = scmp.eq.s32.totalorder %s30, 0
    %p308 = por %p306, %p307
    %p309 = scmp.ne.s32.totalorder %s297, %s298
    %p310 = scmp.eq.s32.totalorder %s31, 1
    %p311 = por %p309, %p310
    %p313 = scmp.ne.s32.totalorder %s298, %s312
    %p314 = scmp.eq.s32.totalorder %s31, 0
    %p315 = por %p313, %p314
    %s317 = sadd.s32 %s316, 1
    %p320 = scmp.eq.s32.totalorder %s25, 1
    %p321 = scmp.ne.s32.totalorder %s316, %s318
    %p322 = scmp.eq.s32.totalorder %s25, 0
    %p323 = por %p321, %p322
    %p324 = scmp.ne.s32.totalorder %s316, %s318
    %p325 = scmp.eq.s32.totalorder %s30, 1
    %p326 = por %p324, %p325
    %p327 = scmp.ne.s32.totalorder %s318, %s319
    %p328 = scmp.eq.s32.totalorder %s30, 0
    %p329 = por %p327, %p328
    %p330 = scmp.ne.s32.totalorder %s318, %s319
    %p331 = scmp.eq.s32.totalorder %s31, 1
    %p332 = por %p330, %p331
    %p334 = scmp.ne.s32.totalorder %s319, %s333
    %p335 = scmp.eq.s32.totalorder %s31, 0
    %p336 = por %p334, %p335
    %s338 = sadd.s32 %s337, 1
    %p341 = scmp.eq.s32.totalorder %s25, 1
    %p342 = scmp.ne.s32.totalorder %s337, %s339
    %p343 = scmp.eq.s32.totalorder %s25, 0
    %p344 = por %p342, %p343
    %p345 = scmp.ne.s32.totalorder %s337, %s339
    %p346 = scmp.eq.s32.totalorder %s30, 1
    %p347 = por %p345, %p346
    %p348 = scmp.ne.s32.totalorder %s339, %s340
    %p349 = scmp.eq.s32.totalorder %s30, 0
    %p350 = por %p348, %p349
    %p351 = scmp.ne.s32.totalorder %s339, %s340
    %p352 = scmp.eq.s32.totalorder %s31, 1
    %p353 = por %p351, %p352
    %p355 = scmp.ne.s32.totalorder %s340, %s354
    %p356 = scmp.eq.s32.totalorder %s31, 0
    %p357 = por %p355, %p356
    %s359 = sadd.s32 %s358, 1
    %p362 = scmp.eq.s32.totalorder %s25, 1
    %p363 = scmp.ne.s32.totalorder %s358, %s360
    %p364 = scmp.eq.s32.totalorder %s25, 0
    %p365 = por %p363, %p364
    %p366 = scmp.ne.s32.totalorder %s358, %s360
    %p367 = scmp.eq.s32.totalorder %s30, 1
    %p368 = por %p366, %p367
    %p369 = scmp.ne.s32.totalorder %s360, %s361
    %p370 = scmp.eq.s32.totalorder %s30, 0
    %p371 = por %p369, %p370
    %p372 = scmp.ne.s32.totalorder %s360, %s361
    %p373 = scmp.eq.s32.totalorder %s31, 1
    %p374 = por %p372, %p373
    %p376 = scmp.ne.s32.totalorder %s361, %s375
    %p377 = scmp.eq.s32.totalorder %s31, 0
    %p378 = por %p376, %p377
    %s380 = sadd.s32 %s379, 1
    %p383 = scmp.eq.s32.totalorder %s25, 1
    %p384 = scmp.ne.s32.totalorder %s379, %s381
    %p385 = scmp.eq.s32.totalorder %s25, 0
    %p386 = por %p384, %p385
    %p387 = scmp.ne.s32.totalorder %s379, %s381
    %p388 = scmp.eq.s32.totalorder %s30, 1
    %p389 = por %p387, %p388
    %p390 = scmp.ne.s32.totalorder %s381, %s382
    %p391 = scmp.eq.s32.totalorder %s30, 0
    %p392 = por %p390, %p391
    %p393 = scmp.ne.s32.totalorder %s381, %s382
    %p394 = scmp.eq.s32.totalorder %s31, 1
    %p395 = por %p393, %p394
    %p397 = scmp.ne.s32.totalorder %s382, %s396
    %p398 = scmp.eq.s32.totalorder %s31, 0
    %p399 = por %p397, %p398
    %s401 = sadd.s32 %s400, 1
    %p404 = scmp.eq.s32.totalorder %s25, 1
    %p405 = scmp.ne.s32.totalorder %s400, %s402
    %p406 = scmp.eq.s32.totalorder %s25, 0
    %p407 = por %p405, %p406
    %p408 = scmp.ne.s32.totalorder %s400, %s402
    %p409 = scmp.eq.s32.totalorder %s30, 1
    %p410 = por %p408, %p409
    %p411 = scmp.ne.s32.totalorder %s402, %s403
    %p412 = scmp.eq.s32.totalorder %s30, 0
    %p413 = por %p411, %p412
    %p414 = scmp.ne.s32.totalorder %s402, %s403
    %p415 = scmp.eq.s32.totalorder %s31, 1
    %p416 = por %p414, %p415
    %p418 = scmp.ne.s32.totalorder %s403, %s417
    %p419 = scmp.eq.s32.totalorder %s31, 0
    %p420 = por %p418, %p419
    %s422 = sadd.s32 %s421, 1
    %p425 = scmp.eq.s32.totalorder %s25, 1
    %p426 = scmp.ne.s32.totalorder %s421, %s423
    %p427 = scmp.eq.s32.totalorder %s25, 0
    %p428 = por %p426, %p427
    %p429 = scmp.ne.s32.totalorder %s421, %s423
    %p430 = scmp.eq.s32.totalorder %s30, 1
    %p431 = por %p429, %p430
    %p432 = scmp.ne.s32.totalorder %s423, %s424
    %p433 = scmp.eq.s32.totalorder %s30, 0
    %p434 = por %p432, %p433
    %p435 = scmp.ne.s32.totalorder %s423, %s424
    %p436 = scmp.eq.s32.totalorder %s31, 1
    %p437 = por %p435, %p436
    %p439 = scmp.ne.s32.totalorder %s424, %s438
    %p440 = scmp.eq.s32.totalorder %s31, 0
    %p441 = por %p439, %p440
    %s442 = ssub.s32 %s25, %s32
    %p443 = scmp.eq.s32.totalorder %s442, 0
    %s445 = sadd.s32 %s444, 1
    %s446 = scalar_select %p443, %s444, %s445
    %p449 = pneg %p443
    %p450 = scmp.eq.s32.totalorder %s25, 1
    %p451 = por %p449, %p450
    %p452 = scmp.ne.s32.totalorder %s444, %s447
    %p453 = scmp.eq.s32.totalorder %s25, 0
    %p454 = por %p452, %p453
    %p455 = scmp.ne.s32.totalorder %s444, %s447
    %p456 = scmp.eq.s32.totalorder %s30, 1
    %p457 = por %p455, %p456
    %p458 = scmp.ne.s32.totalorder %s447, %s448
    %p459 = scmp.eq.s32.totalorder %s30, 0
    %p460 = por %p458, %p459
    %p461 = scmp.ne.s32.totalorder %s447, %s448
    %p462 = scmp.eq.s32.totalorder %s31, 1
    %p463 = por %p461, %p462
    %p465 = scmp.ne.s32.totalorder %s448, %s464
    %p466 = scmp.eq.s32.totalorder %s31, 0
    %p467 = por %p465, %p466
    %p468 = scmp.le.s32.totalorder 1, %s25
    %p469 = scmp.lt.s32.totalorder %s25, 3
    %p470 = pnand %p468, %p469
    %p471 = pneg %p470
    // Predicated region
    $region9: #{resblock_sft.1} parent=5 // pred_check
      _
    $region10: #{resblock_sft.1} parent=5 // pred_check_branch
      %473 = sbr.rel (%p470) target = $region12
    $region11: #{resblock_sft.1} parent=5 // pred_region
      %s474 = ssub.s32 %s25, 1
      // Predicated region
      $region13: #{resblock_sft.1} parent=11 // pred_check
        %p475 = pneg %p98
      $region14: #{resblock_sft.1} parent=11 // pred_check_branch
        %477 = sbr.rel (%p475) target = $region16
      $region15: #{resblock_sft.1} parent=11 // pred_region
        _
      $region16: #{resblock_sft.1} parent=11 // pred_fallthru
        _
      // Predicated region
      $region17: #{resblock_sft.1} parent=11 // pred_check
        %p478 = pneg %p119
      $region18: #{resblock_sft.1} parent=11 // pred_check_branch
        %480 = sbr.rel (%p478) target = $region20
      $region19: #{resblock_sft.1} parent=11 // pred_region
        _
      $region20: #{resblock_sft.1} parent=11 // pred_fallthru
        _
      // Predicated region
      $region21: #{resblock_sft.1} parent=11 // pred_check
        %p481 = pneg %p140
      $region22: #{resblock_sft.1} parent=11 // pred_check_branch
        %483 = sbr.rel (%p481) target = $region24
      $region23: #{resblock_sft.1} parent=11 // pred_region
        _
      $region24: #{resblock_sft.1} parent=11 // pred_fallthru
        _
      // Predicated region
      $region25: #{resblock_sft.1} parent=11 // pred_check
        %p484 = pneg %p161
      $region26: #{resblock_sft.1} parent=11 // pred_check_branch
        %486 = sbr.rel (%p484) target = $region28
      $region27: #{resblock_sft.1} parent=11 // pred_region
        _
      $region28: #{resblock_sft.1} parent=11 // pred_fallthru
        _
      // Predicated region
      $region29: #{resblock_sft.1} parent=11 // pred_check
        %p487 = pneg %p182
      $region30: #{resblock_sft.1} parent=11 // pred_check_branch
        %489 = sbr.rel (%p487) target = $region32
      $region31: #{resblock_sft.1} parent=11 // pred_region
        _
      $region32: #{resblock_sft.1} parent=11 // pred_fallthru
        _
      // Predicated region
      $region33: #{resblock_sft.1} parent=11 // pred_check
        %p490 = pneg %p203
      $region34: #{resblock_sft.1} parent=11 // pred_check_branch
        %492 = sbr.rel (%p490) target = $region36
      $region35: #{resblock_sft.1} parent=11 // pred_region
        _
      $region36: #{resblock_sft.1} parent=11 // pred_fallthru
        _
      // Predicated region
      $region37: #{resblock_sft.1} parent=11 // pred_check
        %p493 = pneg %p224
      $region38: #{resblock_sft.1} parent=11 // pred_check_branch
        %495 = sbr.rel (%p493) target = $region40
      $region39: #{resblock_sft.1} parent=11 // pred_region
        _
      $region40: #{resblock_sft.1} parent=11 // pred_fallthru
        _
      // Predicated region
      $region41: #{resblock_sft.1} parent=11 // pred_check
        %p496 = pneg %p245
      $region42: #{resblock_sft.1} parent=11 // pred_check_branch
        %498 = sbr.rel (%p496) target = $region44
      $region43: #{resblock_sft.1} parent=11 // pred_region
        _
      $region44: #{resblock_sft.1} parent=11 // pred_fallthru
        _
      // Predicated region
      $region45: #{resblock_sft.1} parent=11 // pred_check
        %p499 = pneg %p266
      $region46: #{resblock_sft.1} parent=11 // pred_check_branch
        %501 = sbr.rel (%p499) target = $region48
      $region47: #{resblock_sft.1} parent=11 // pred_region
        _
      $region48: #{resblock_sft.1} parent=11 // pred_fallthru
        _
      // Predicated region
      $region49: #{resblock_sft.1} parent=11 // pred_check
        %p502 = pneg %p287
      $region50: #{resblock_sft.1} parent=11 // pred_check_branch
        %504 = sbr.rel (%p502) target = $region52
      $region51: #{resblock_sft.1} parent=11 // pred_region
        _
      $region52: #{resblock_sft.1} parent=11 // pred_fallthru
        _
      // Predicated region
      $region53: #{resblock_sft.1} parent=11 // pred_check
        %p505 = pneg %p308
      $region54: #{resblock_sft.1} parent=11 // pred_check_branch
        %507 = sbr.rel (%p505) target = $region56
      $region55: #{resblock_sft.1} parent=11 // pred_region
        _
      $region56: #{resblock_sft.1} parent=11 // pred_fallthru
        _
      // Predicated region
      $region57: #{resblock_sft.1} parent=11 // pred_check
        %p508 = pneg %p329
      $region58: #{resblock_sft.1} parent=11 // pred_check_branch
        %510 = sbr.rel (%p508) target = $region60
      $region59: #{resblock_sft.1} parent=11 // pred_region
        _
      $region60: #{resblock_sft.1} parent=11 // pred_fallthru
        _
      // Predicated region
      $region61: #{resblock_sft.1} parent=11 // pred_check
        %p511 = pneg %p350
      $region62: #{resblock_sft.1} parent=11 // pred_check_branch
        %513 = sbr.rel (%p511) target = $region64
      $region63: #{resblock_sft.1} parent=11 // pred_region
        _
      $region64: #{resblock_sft.1} parent=11 // pred_fallthru
        _
      // Predicated region
      $region65: #{resblock_sft.1} parent=11 // pred_check
        %p514 = pneg %p371
      $region66: #{resblock_sft.1} parent=11 // pred_check_branch
        %516 = sbr.rel (%p514) target = $region68
      $region67: #{resblock_sft.1} parent=11 // pred_region
        _
      $region68: #{resblock_sft.1} parent=11 // pred_fallthru
        _
      // Predicated region
      $region69: #{resblock_sft.1} parent=11 // pred_check
        %p517 = pneg %p392
      $region70: #{resblock_sft.1} parent=11 // pred_check_branch
        %519 = sbr.rel (%p517) target = $region72
      $region71: #{resblock_sft.1} parent=11 // pred_region
        _
      $region72: #{resblock_sft.1} parent=11 // pred_fallthru
        _
      // Predicated region
      $region73: #{resblock_sft.1} parent=11 // pred_check
        %p520 = pneg %p413
      $region74: #{resblock_sft.1} parent=11 // pred_check_branch
        %522 = sbr.rel (%p520) target = $region76
      $region75: #{resblock_sft.1} parent=11 // pred_region
        _
      $region76: #{resblock_sft.1} parent=11 // pred_fallthru
        _
      // Predicated region
      $region77: #{resblock_sft.1} parent=11 // pred_check
        %p523 = pneg %p434
      $region78: #{resblock_sft.1} parent=11 // pred_check_branch
        %525 = sbr.rel (%p523) target = $region80
      $region79: #{resblock_sft.1} parent=11 // pred_region
        _
      $region80: #{resblock_sft.1} parent=11 // pred_fallthru
        _
    $region12: #{resblock_sft.1} parent=5 // pred_fallthru
      _
    %p526 = scmp.lt.s32.totalorder %s25, 2
    // Predicated region
    $region81: #{resblock_sft.1} parent=5 // pred_check
      %p527 = pneg %p526
    $region82: #{resblock_sft.1} parent=5 // pred_check_branch
      %529 = sbr.rel (%p527) target = $region84
    $region83: #{resblock_sft.1} parent=5 // pred_region
      // Predicated region
      $region85: #{resblock_sft.1} parent=83 // pred_check
        %p530 = pneg %p45
      $region86: #{resblock_sft.1} parent=83 // pred_check_branch
        %532 = sbr.rel (%p530) target = $region88
      $region87: #{resblock_sft.1} parent=83 // pred_region
        %p533 = scmp.lt.s32.totalorder %s25, 1
        %s534 = scalar_select %p533, %s25, 1
        %s535 = smul.addr %s534, 17
        %s536 = smul.addr %s535, 8
        %s537 = scalar_lea.vmem %s0, %s536
      $region88: #{resblock_sft.1} parent=83 // pred_fallthru
        _
      // Predicated region
      $region89: #{resblock_sft.1} parent=83 // pred_check
        %p538 = pneg %p71
      $region90: #{resblock_sft.1} parent=83 // pred_check_branch
        %540 = sbr.rel (%p538) target = $region92
      $region91: #{resblock_sft.1} parent=83 // pred_region
        %p541 = scmp.lt.s32.totalorder %s25, 1
        %s542 = scalar_select %p541, %s25, 1
        %s543 = smul.addr %s542, 17
        %s544 = smul.addr %s543, 4
        %s545 = scalar_lea.vmem %s1, %s544
      $region92: #{resblock_sft.1} parent=83 // pred_fallthru
        _
    $region84: #{resblock_sft.1} parent=5 // pred_fallthru
      _
    %p546 = scmp.le.s32.totalorder 1, %s25
    %p547 = scmp.lt.s32.totalorder %s25, 3
    %p548 = pnand %p546, %p547
    %p549 = pneg %p548
    // Predicated region
    $region93: #{resblock_sft.1} parent=5 // pred_check
      _
    $region94: #{resblock_sft.1} parent=5 // pred_check_branch
      %551 = sbr.rel (%p548) target = $region96
    $region95: #{resblock_sft.1} parent=5 // pred_region
      %s552 = ssub.s32 %s25, 1
      %p553 = scmp.lt.s32.totalorder %s30, 1
      %s554 = scalar_select %p553, %s30, 1
      %s555 = smul.addr %s554, 17
      %s556 = smul.addr %s555, 8
      %s557 = scalar_lea.vmem %s0, %s556
      %p558 = pneg %p51
      %p559 = pneg %p48
      %p560 = scmp.lt.s32.totalorder %s30, 1
      %s561 = scalar_select %p560, %s30, 1
      %s562 = smul.addr %s561, 17
      %s563 = smul.addr %s562, 4
      %s564 = scalar_lea.vmem %s1, %s563
      %p565 = pneg %p77
      %p566 = pneg %p74
      %p567 = pneg %p98
      %p568 = pneg %p95
      %p569 = pneg %p119
      %p570 = pneg %p116
      %p571 = pneg %p140
      %p572 = pneg %p137
      %p573 = pneg %p161
      %p574 = pneg %p158
      %p575 = pneg %p182
      %p576 = pneg %p179
      %p577 = pneg %p203
      %p578 = pneg %p200
      %p579 = pneg %p224
      %p580 = pneg %p221
      %p581 = pneg %p245
      %p582 = pneg %p242
      %p583 = pneg %p266
      %p584 = pneg %p263
      %p585 = pneg %p287
      %p586 = pneg %p284
      %p587 = pneg %p308
      %p588 = pneg %p305
      %p589 = pneg %p329
      %p590 = pneg %p326
      %p591 = pneg %p350
      %p592 = pneg %p347
      %p593 = pneg %p371
      %p594 = pneg %p368
      %p595 = pneg %p392
      %p596 = pneg %p389
      %p597 = pneg %p413
      %p598 = pneg %p410
      %p599 = pneg %p434
      %p600 = pneg %p431
      %p601 = pneg %p460
      %p602 = pneg %p457
      %p603 = scmp.lt.s32.totalorder %s30, 1
      %s604 = scalar_select %p603, %s30, 1
      %s605 = smul.addr %s604, 13
      %s606 = smul.addr %s605, 8
      %s607 = scalar_lea.vmem %s19, %s606
      %p608 = scmp.lt.s32.totalorder %s30, 1
      %s609 = scalar_select %p608, %s30, 1
      %s610 = smul.addr %s609, 17
      %s611 = smul.addr %s610, 8
      %s612 = scalar_lea.vmem %s0, %s611
      %p613 = scmp.lt.s32.totalorder %s30, 1
      %s614 = scalar_select %p613, %s30, 1
      %s615 = smul.addr %s614, 17
      %s616 = smul.addr %s615, 4
      %s617 = scalar_lea.vmem %s1, %s616
      %p618 = scmp.lt.s32.totalorder %s30, 1
      %s619 = scalar_select %p618, %s30, 1
      %s620 = smul.addr %s619, 13
      %s621 = smul.addr %s620, 8
      %s622 = scalar_lea.vmem %s19, %s621
      %vm624 = vcmask 519168
      %625 = vst.msk [vmem:[#allocation2] sm:$0xf] %vm624, 0
      %626 = vst.msk [vmem:[#allocation2 + $0x4] sm:$0xf] %vm624, 0
      %vm627 = vcmask 519170
      %628 = vst.msk [vmem:[#allocation2 + $0x38] sm:$0xc] %vm627, 0
      %629 = vst.msk [vmem:[#allocation2 + $0x3c] sm:$0xf] %vm624, 0
      %vm630 = vcmask 517120
      %631 = vst.msk [vmem:[#allocation2 + $0x40] sm:$0x3] %vm630, 0
      %632 = vst [vmem:[#allocation3] sm:$0xf] 0
      %633 = vst [vmem:[#allocation3 + $0x4] sm:$0xf] 0
      %634 = vst [vmem:[#allocation3 + $0x38] sm:$0xc] 0
      %635 = vst [vmem:[#allocation3 + $0x3c] sm:$0xf] 0
      %636 = vst [vmem:[#allocation3 + $0x40] sm:$0x3] 0
      %v637 = vld [vmem:[%s2] sm:$0xff]
      %v638 = vld [vmem:[%s2 + $0x8] sm:$0xff]
      %v639 = vld [vmem:[%s2 + $0x10] sm:$0xff]
      %v640 = vld [vmem:[%s2 + $0x18] sm:$0xff]
      %v641 = vld [vmem:[%s2 + $0x20] sm:$0xff]
      %v642 = vld [vmem:[%s2 + $0x28] sm:$0xff]
      %v643 = vld [vmem:[%s2 + $0x30] sm:$0xff]
      %v644 = vld [vmem:[%s2 + $0x38] sm:$0xff]
      %v645 = vld [vmem:[%s2 + $0x40] sm:$0xff]
      %v646 = vld [vmem:[%s2 + $0x48] sm:$0xff]
      %v647 = vld [vmem:[%s2 + $0x50] sm:$0xff]
      %v648 = vld [vmem:[%s2 + $0x58] sm:$0xff]
      %v649 = vld [vmem:[%s2 + $0x60] sm:$0xf]
      %v650 = vld [vmem:[%s617 + $0x8] sm:$0xf]
      %v651 = vld [vmem:[%s617 + $0xc] sm:$0xf]
      %v652 = vld [vmem:[%s617 + $0x10] sm:$0xf]
      %v653 = vld [vmem:[%s617 + $0x14] sm:$0xf]
      %v654 = vld [vmem:[%s617 + $0x18] sm:$0xf]
      %v655 = vld [vmem:[%s617 + $0x1c] sm:$0xf]
      %v656 = vld [vmem:[%s617 + $0x20] sm:$0xf]
      %v657 = vld [vmem:[%s617 + $0x24] sm:$0xf]
      %v658 = vld [vmem:[%s617 + $0x28] sm:$0xf]
      %v659 = vld [vmem:[%s617 + $0x2c] sm:$0xf]
      %v660 = vld [vmem:[%s617 + $0x30] sm:$0xf]
      %v661 = vld [vmem:[%s617 + $0x34] sm:$0xf]
      %v662 = vld [vmem:[%s617 + $0x38] sm:$0x3]
      %v663 = vld [vmem:[%s7] sm:$0xf]
      %v664 = vld [vmem:[%s7 + $0x4] sm:$0xf]
      %v665 = vld [vmem:[%s7 + $0x8] sm:$0xf]
      %v666 = vld [vmem:[%s7 + $0xc] sm:$0xf]
      %v667 = vld [vmem:[%s8] sm:$0x1]
      %v669 = vperm.slane %v667, 0
      %v684 = vunpack.c.l.b16 %v650
      %v685 = vunpack.c.l.b16 %v651
      %v686 = vunpack.c.l.b16 %v652
      %v687 = vunpack.c.l.b16 %v653
      %v688 = vunpack.c.l.b16 %v654
      %v689 = vunpack.c.l.b16 %v655
      %v690 = vunpack.c.l.b16 %v656
      %v691 = vunpack.c.l.b16 %v657
      %v692 = vunpack.c.l.b16 %v658
      %v693 = vunpack.c.l.b16 %v659
      %v694 = vunpack.c.l.b16 %v660
      %v695 = vunpack.c.l.b16 %v661
      %v696 = vunpack.c.l.b16 %v662
      %v697 = vpack.c.b16 %v685, %v684
      %v698 = vpack.c.b16 %v687, %v686
      %v699 = vpack.c.b16 %v689, %v688
      %v700 = vpack.c.b16 %v691, %v690
      %v701 = vpack.c.b16 %v693, %v692
      %v702 = vpack.c.b16 %v695, %v694
      %v703 = vpack.c.b16 %v696, %v696
      %v708 = vunpack.c.l.b16 %v663
      %v709 = vunpack.c.l.b16 %v664
      %v710 = vunpack.c.l.b16 %v665
      %v711 = vunpack.c.l.b16 %v666
      %v712 = vpack.c.b16 %v709, %v708
      %v713 = vpack.c.b16 %v711, %v710
      %vm716 = vcmask 261120
      %v718 = vsel %vm716, %v697, 0
      %v721 = vsel %vm716, %v698, 0
      %v724 = vsel %vm716, %v699, 0
      %v727 = vsel %vm716, %v700, 0
      %v730 = vsel %vm716, %v701, 0
      %v733 = vsel %vm716, %v702, 0
      %v736 = vsel %vm716, %v703, 0
      %738 = vmatpush.bf16.msra.mxu0 0
      %739 = vmatpush.bf16.msra.mxu0 0
      %740 = vmatpush.bf16.msra.mxu0 0
      %741 = vmatpush.bf16.msra.mxu0 0
      %742 = vmatpush.bf16.msra.mxu0 0
      %743 = vmatpush.bf16.msra.mxu0 0
      %744 = vmatpush.bf16.msra.mxu0 %v713
      %745 = vmatpush.bf16.msra.mxu0 %v712
      %746 = vmatmul.bf16.gmra.mxu0 %v718
      %v747 = vpop.f32.mrf.mxu0
      %v748 = vadd.f32 %v669, %v747
      %v749 = vpop.f32.mrf.mxu0
      %v750 = vadd.f32 %v669, %v749
      %751 = vmatmul.bf16.gmra.mxu0 %v721
      %v752 = vpop.f32.mrf.mxu0
      %v753 = vadd.f32 %v669, %v752
      %v754 = vpop.f32.mrf.mxu0
      %v755 = vadd.f32 %v669, %v754
      %756 = vmatmul.bf16.gmra.mxu0 %v724
      %v757 = vpop.f32.mrf.mxu0
      %v758 = vadd.f32 %v669, %v757
      %v759 = vpop.f32.mrf.mxu0
      %v760 = vadd.f32 %v669, %v759
      %761 = vmatmul.bf16.gmra.mxu0 %v727
      %v762 = vpop.f32.mrf.mxu0
      %v763 = vadd.f32 %v669, %v762
      %v764 = vpop.f32.mrf.mxu0
      %v765 = vadd.f32 %v669, %v764
      %766 = vmatmul.bf16.gmra.mxu0 %v730
      %v767 = vpop.f32.mrf.mxu0
      %v768 = vadd.f32 %v669, %v767
      %v769 = vpop.f32.mrf.mxu0
      %v770 = vadd.f32 %v669, %v769
      %771 = vmatmul.bf16.gmra.mxu0 %v733
      %v772 = vpop.f32.mrf.mxu0
      %v773 = vadd.f32 %v669, %v772
      %v774 = vpop.f32.mrf.mxu0
      %v775 = vadd.f32 %v669, %v774
      %776 = vmatmul.bf16.gmra.mxu0 %v736
      %v777 = vpop.f32.mrf.mxu0
      %v778 = vadd.f32 %v669, %v777
      %v779 = vpop.f32.mrf.mxu0
      %780 = vdwg.mxu0
      %vm781 = vcmp.ge.f32.partialorder %v748, 0.0
      %vm782 = vcmp.ge.f32.partialorder %v750, 0.0
      %vm783 = vcmp.ge.f32.partialorder %v753, 0.0
      %vm784 = vcmp.ge.f32.partialorder %v755, 0.0
      %vm785 = vcmp.ge.f32.partialorder %v758, 0.0
      %vm786 = vcmp.ge.f32.partialorder %v760, 0.0
      %vm787 = vcmp.ge.f32.partialorder %v763, 0.0
      %vm788 = vcmp.ge.f32.partialorder %v765, 0.0
      %vm789 = vcmp.ge.f32.partialorder %v768, 0.0
      %vm790 = vcmp.ge.f32.partialorder %v770, 0.0
      %vm791 = vcmp.ge.f32.partialorder %v773, 0.0
      %vm792 = vcmp.ge.f32.partialorder %v775, 0.0
      %vm793 = vcmp.ge.f32.partialorder %v778, 0.0
      %v794 = vmul.f32 %v748, 0.1
      %v795 = vmul.f32 %v750, 0.1
      %v796 = vmul.f32 %v753, 0.1
      %v797 = vmul.f32 %v755, 0.1
      %v798 = vmul.f32 %v758, 0.1
      %v799 = vmul.f32 %v760, 0.1
      %v800 = vmul.f32 %v763, 0.1
      %v801 = vmul.f32 %v765, 0.1
      %v802 = vmul.f32 %v768, 0.1
      %v803 = vmul.f32 %v770, 0.1
      %v804 = vmul.f32 %v773, 0.1
      %v805 = vmul.f32 %v775, 0.1
      %v806 = vmul.f32 %v778, 0.1
      %v807 = vsel %vm781, %v748, %v794
      %v808 = vsel %vm782, %v750, %v795
      %v809 = vsel %vm783, %v753, %v796
      %v810 = vsel %vm784, %v755, %v797
      %v811 = vsel %vm785, %v758, %v798
      %v812 = vsel %vm786, %v760, %v799
      %v813 = vsel %vm787, %v763, %v800
      %v814 = vsel %vm788, %v765, %v801
      %v815 = vsel %vm789, %v768, %v802
      %v816 = vsel %vm790, %v770, %v803
      %v817 = vsel %vm791, %v773, %v804
      %v818 = vsel %vm792, %v775, %v805
      %v819 = vsel %vm793, %v778, %v806
      %v820 = vpack.c.bf16 %v808, %v807
      %v821 = vpack.c.bf16 %v810, %v809
      %v822 = vpack.c.bf16 %v812, %v811
      %v823 = vpack.c.bf16 %v814, %v813
      %v824 = vpack.c.bf16 %v816, %v815
      %v825 = vpack.c.bf16 %v818, %v817
      %v826 = vpack.c.bf16 %v819, %v819
      %v827 = vld [vmem:[%s9] sm:$0xf]
      %v828 = vld [vmem:[%s9 + $0x4] sm:$0xf]
      %v829 = vld [vmem:[%s9 + $0x8] sm:$0xf]
      %v830 = vld [vmem:[%s9 + $0xc] sm:$0xf]
      %v831 = vld [vmem:[%s9 + $0x10] sm:$0xf]
      %v832 = vld [vmem:[%s9 + $0x14] sm:$0xf]
      %v833 = vld [vmem:[%s9 + $0x18] sm:$0xf]
      %v834 = vld [vmem:[%s9 + $0x1c] sm:$0xf]
      %v835 = vld [vmem:[%s10] sm:$0x1]
      %v837 = vperm.slane %v835, 0
      %v847 = vunpack.c.l.b16 %v827
      %v848 = vunpack.c.l.b16 %v828
      %v849 = vunpack.c.l.b16 %v829
      %v850 = vunpack.c.l.b16 %v830
      %v851 = vunpack.c.l.b16 %v831
      %v852 = vunpack.c.l.b16 %v832
      %v853 = vunpack.c.l.b16 %v833
      %v854 = vunpack.c.l.b16 %v834
      %v855 = vpack.c.b16 %v848, %v847
      %v856 = vpack.c.b16 %v850, %v849
      %v857 = vpack.c.b16 %v852, %v851
      %v858 = vpack.c.b16 %v854, %v853
      %vm863 = vcmask 523264
      %v865 = vsel %vm863, %v820, 0
      %v868 = vsel %vm863, %v821, 0
      %v871 = vsel %vm863, %v822, 0
      %v874 = vsel %vm863, %v823, 0
      %v877 = vsel %vm863, %v824, 0
      %v880 = vsel %vm863, %v825, 0
      %v883 = vsel %vm863, %v826, 0
      %885 = vmatpush.bf16.msra.mxu0 0
      %886 = vmatpush.bf16.msra.mxu0 0
      %887 = vmatpush.bf16.msra.mxu0 0
      %888 = vmatpush.bf16.msra.mxu0 0
      %889 = vmatpush.bf16.msra.mxu0 %v858
      %890 = vmatpush.bf16.msra.mxu0 %v857
      %891 = vmatpush.bf16.msra.mxu0 %v856
      %892 = vmatpush.bf16.msra.mxu0 %v855
      %893 = vmatmul.bf16.gmra.mxu0 %v865
      %v894 = vpop.f32.mrf.mxu0
      %v895 = vadd.f32 %v837, %v894
      %v896 = vpop.f32.mrf.mxu0
      %v897 = vadd.f32 %v837, %v896
      %898 = vmatmul.bf16.gmra.mxu0 %v868
      %v899 = vpop.f32.mrf.mxu0
      %v900 = vadd.f32 %v837, %v899
      %v901 = vpop.f32.mrf.mxu0
      %v902 = vadd.f32 %v837, %v901
      %903 = vmatmul.bf16.gmra.mxu0 %v871
      %v904 = vpop.f32.mrf.mxu0
      %v905 = vadd.f32 %v837, %v904
      %v906 = vpop.f32.mrf.mxu0
      %v907 = vadd.f32 %v837, %v906
      %908 = vmatmul.bf16.gmra.mxu0 %v874
      %v909 = vpop.f32.mrf.mxu0
      %v910 = vadd.f32 %v837, %v909
      %v911 = vpop.f32.mrf.mxu0
      %v912 = vadd.f32 %v837, %v911
      %913 = vmatmul.bf16.gmra.mxu0 %v877
      %v914 = vpop.f32.mrf.mxu0
      %v915 = vadd.f32 %v837, %v914
      %v916 = vpop.f32.mrf.mxu0
      %v917 = vadd.f32 %v837, %v916
      %918 = vmatmul.bf16.gmra.mxu0 %v880
      %v919 = vpop.f32.mrf.mxu0
      %v920 = vadd.f32 %v837, %v919
      %v921 = vpop.f32.mrf.mxu0
      %v922 = vadd.f32 %v837, %v921
      %923 = vmatmul.bf16.gmra.mxu0 %v883
      %v924 = vpop.f32.mrf.mxu0
      %v925 = vadd.f32 %v837, %v924
      %v926 = vpop.f32.mrf.mxu0
      %927 = vdwg.mxu0
      %v928 = vld [vmem:[%s617] sm:$0xc]
      %v929 = vld [vmem:[%s617 + $0x4] sm:$0xf]
      %v930 = vld [vmem:[%s617 + $0x8] sm:$0xf]
      %v931 = vld [vmem:[%s617 + $0xc] sm:$0xf]
      %v932 = vld [vmem:[%s617 + $0x10] sm:$0xf]
      %v933 = vld [vmem:[%s617 + $0x14] sm:$0xf]
      %v934 = vld [vmem:[%s617 + $0x18] sm:$0xf]
      %v935 = vld [vmem:[%s617 + $0x1c] sm:$0xf]
      %v936 = vld [vmem:[%s617 + $0x20] sm:$0xf]
      %v937 = vld [vmem:[%s617 + $0x24] sm:$0xf]
      %v938 = vld [vmem:[%s617 + $0x28] sm:$0xf]
      %v939 = vld [vmem:[%s617 + $0x2c] sm:$0xf]
      %v940 = vld [vmem:[%s617 + $0x30] sm:$0xf]
      %v941 = vld [vmem:[%s617 + $0x34] sm:$0x1]
      %v942 = vld [vmem:[%s3] sm:$0xf]
      %v943 = vld [vmem:[%s3 + $0x4] sm:$0xf]
      %v944 = vld [vmem:[%s3 + $0x8] sm:$0xf]
      %v945 = vld [vmem:[%s3 + $0xc] sm:$0xf]
      %v946 = vld [vmem:[%s4] sm:$0x1]
      %v948 = vperm.slane %v946, 0
      %v964 = vunpack.c.l.b16 %v928
      %v965 = vunpack.c.l.b16 %v929
      %v966 = vunpack.c.l.b16 %v930
      %v967 = vunpack.c.l.b16 %v931
      %v968 = vunpack.c.l.b16 %v932
      %v969 = vunpack.c.l.b16 %v933
      %v970 = vunpack.c.l.b16 %v934
      %v971 = vunpack.c.l.b16 %v935
      %v972 = vunpack.c.l.b16 %v936
      %v973 = vunpack.c.l.b16 %v937
      %v974 = vunpack.c.l.b16 %v938
      %v975 = vunpack.c.l.b16 %v939
      %v976 = vunpack.c.l.b16 %v940
      %v977 = vunpack.c.l.b16 %v941
      %v978 = vpack.c.b16 %v965, %v964
      %v979 = vpack.c.b16 %v967, %v966
      %v980 = vpack.c.b16 %v969, %v968
      %v981 = vpack.c.b16 %v971, %v970
      %v982 = vpack.c.b16 %v973, %v972
      %v983 = vpack.c.b16 %v975, %v974
      %v984 = vpack.c.b16 %v977, %v976
      %vm985 = vsmask.f32 5376
      %v987 = vshrl.u32 %v978, 16
      %v989 = vrot.slane %v987, 2
      %v990 = vshll.u32 %v978, 16
      %v992 = vrot.slane %v990, 3
      %v993 = vor.u32 %v989, %v992
      %v995 = vshrl.u32 %v979, 16
      %v997 = vrot.slane %v995, 2
      %v998 = vshll.u32 %v979, 16
      %v1000 = vrot.slane %v998, 3
      %v1001 = vor.u32 %v997, %v1000
      %v1002 = vsel %vm985, %v993, %v1001
      %v1004 = vshrl.u32 %v980, 16
      %v1006 = vrot.slane %v1004, 2
      %v1007 = vshll.u32 %v980, 16
      %v1009 = vrot.slane %v1007, 3
      %v1010 = vor.u32 %v1006, %v1009
      %v1011 = vsel %vm985, %v1001, %v1010
      %v1013 = vshrl.u32 %v981, 16
      %v1015 = vrot.slane %v1013, 2
      %v1016 = vshll.u32 %v981, 16
      %v1018 = vrot.slane %v1016, 3
      %v1019 = vor.u32 %v1015, %v1018
      %v1020 = vsel %vm985, %v1010, %v1019
      %v1022 = vshrl.u32 %v982, 16
      %v1024 = vrot.slane %v1022, 2
      %v1025 = vshll.u32 %v982, 16
      %v1027 = vrot.slane %v1025, 3
      %v1028 = vor.u32 %v1024, %v1027
      %v1029 = vsel %vm985, %v1019, %v1028
      %v1031 = vshrl.u32 %v983, 16
      %v1033 = vrot.slane %v1031, 2
      %v1034 = vshll.u32 %v983, 16
      %v1036 = vrot.slane %v1034, 3
      %v1037 = vor.u32 %v1033, %v1036
      %v1038 = vsel %vm985, %v1028, %v1037
      %v1040 = vshrl.u32 %v984, 16
      %v1042 = vrot.slane %v1040, 2
      %v1043 = vshll.u32 %v984, 16
      %v1045 = vrot.slane %v1043, 3
      %v1046 = vor.u32 %v1042, %v1045
      %v1047 = vsel %vm985, %v1037, %v1046
      %v1052 = vunpack.c.l.b16 %v942
      %v1053 = vunpack.c.l.b16 %v943
      %v1054 = vunpack.c.l.b16 %v944
      %v1055 = vunpack.c.l.b16 %v945
      %v1056 = vpack.c.b16 %v1053, %v1052
      %v1057 = vpack.c.b16 %v1055, %v1054
      %v1061 = vsel %vm716, %v1002, 0
      %v1064 = vsel %vm716, %v1011, 0
      %v1067 = vsel %vm716, %v1020, 0
      %v1070 = vsel %vm716, %v1029, 0
      %v1073 = vsel %vm716, %v1038, 0
      %v1076 = vsel %vm716, %v1047, 0
      %v1079 = vsel %vm716, %v1046, 0
      %1081 = vmatpush.bf16.msra.mxu0 0
      %1082 = vmatpush.bf16.msra.mxu0 0
      %1083 = vmatpush.bf16.msra.mxu0 0
      %1084 = vmatpush.bf16.msra.mxu0 0
      %1085 = vmatpush.bf16.msra.mxu0 0
      %1086 = vmatpush.bf16.msra.mxu0 0
      %1087 = vmatpush.bf16.msra.mxu0 %v1057
      %1088 = vmatpush.bf16.msra.mxu0 %v1056
      %1089 = vmatmul.bf16.gmra.mxu0 %v1061
      %v1090 = vpop.f32.mrf.mxu0
      %v1091 = vadd.f32 %v948, %v1090
      %v1092 = vpop.f32.mrf.mxu0
      %v1093 = vadd.f32 %v948, %v1092
      %1094 = vmatmul.bf16.gmra.mxu0 %v1064
      %v1095 = vpop.f32.mrf.mxu0
      %v1096 = vadd.f32 %v948, %v1095
      %v1097 = vpop.f32.mrf.mxu0
      %v1098 = vadd.f32 %v948, %v1097
      %1099 = vmatmul.bf16.gmra.mxu0 %v1067
      %v1100 = vpop.f32.mrf.mxu0
      %v1101 = vadd.f32 %v948, %v1100
      %v1102 = vpop.f32.mrf.mxu0
      %v1103 = vadd.f32 %v948, %v1102
      %1104 = vmatmul.bf16.gmra.mxu0 %v1070
      %v1105 = vpop.f32.mrf.mxu0
      %v1106 = vadd.f32 %v948, %v1105
      %v1107 = vpop.f32.mrf.mxu0
      %v1108 = vadd.f32 %v948, %v1107
      %1109 = vmatmul.bf16.gmra.mxu0 %v1073
      %v1110 = vpop.f32.mrf.mxu0
      %v1111 = vadd.f32 %v948, %v1110
      %v1112 = vpop.f32.mrf.mxu0
      %v1113 = vadd.f32 %v948, %v1112
      %1114 = vmatmul.bf16.gmra.mxu0 %v1076
      %v1115 = vpop.f32.mrf.mxu0
      %v1116 = vadd.f32 %v948, %v1115
      %v1117 = vpop.f32.mrf.mxu0
      %v1118 = vadd.f32 %v948, %v1117
      %1119 = vmatmul.bf16.gmra.mxu0 %v1079
      %v1120 = vpop.f32.mrf.mxu0
      %v1121 = vadd.f32 %v948, %v1120
      %v1122 = vpop.f32.mrf.mxu0
      %1123 = vdwg.mxu0
      %v1124 = vld [vmem:[%s617] sm:$0x8]
      %s1125 = scalar_lea.vmem %s3, 16
      %v1126 = vld [vmem:[%s1125] sm:$0xf]
      %v1127 = vld [vmem:[%s1125 + $0x4] sm:$0xf]
      %v1128 = vld [vmem:[%s1125 + $0x8] sm:$0xf]
      %v1129 = vld [vmem:[%s1125 + $0xc] sm:$0xf]
      %v1131 = vunpack.c.l.b16 %v1124
      %v1132 = vpack.c.b16 %v965, %v1131
      %vm1133 = vcmask 1044480
      %v1134 = vrot.slane %v1132, 3
      %v1135 = vrot.slane %v979, 3
      %v1136 = vsel %vm1133, %v1134, %v1135
      %v1137 = vrot.slane %v980, 3
      %v1138 = vsel %vm1133, %v1135, %v1137
      %v1139 = vrot.slane %v981, 3
      %v1140 = vsel %vm1133, %v1137, %v1139
      %v1141 = vrot.slane %v982, 3
      %v1142 = vsel %vm1133, %v1139, %v1141
      %v1143 = vrot.slane %v983, 3
      %v1144 = vsel %vm1133, %v1141, %v1143
      %v1145 = vrot.slane %v984, 3
      %v1146 = vsel %vm1133, %v1143, %v1145
      %v1151 = vunpack.c.l.b16 %v1126
      %v1152 = vunpack.c.l.b16 %v1127
      %v1153 = vunpack.c.l.b16 %v1128
      %v1154 = vunpack.c.l.b16 %v1129
      %v1155 = vpack.c.b16 %v1152, %v1151
      %v1156 = vpack.c.b16 %v1154, %v1153
      %v1160 = vsel %vm716, %v1136, 0
      %v1163 = vsel %vm716, %v1138, 0
      %v1166 = vsel %vm716, %v1140, 0
      %v1169 = vsel %vm716, %v1142, 0
      %v1172 = vsel %vm716, %v1144, 0
      %v1175 = vsel %vm716, %v1146, 0
      %v1178 = vsel %vm716, %v1145, 0
      %1180 = vmatpush.bf16.msra.mxu0 0
      %1181 = vmatpush.bf16.msra.mxu0 0
      %1182 = vmatpush.bf16.msra.mxu0 0
      %1183 = vmatpush.bf16.msra.mxu0 0
      %1184 = vmatpush.bf16.msra.mxu0 0
      %1185 = vmatpush.bf16.msra.mxu0 0
      %1186 = vmatpush.bf16.msra.mxu0 %v1156
      %1187 = vmatpush.bf16.msra.mxu0 %v1155
      %1188 = vmatmul.bf16.gmra.mxu0 %v1160
      %v1189 = vpop.f32.mrf.mxu0
      %v1190 = vadd.f32 0.0, %v1189
      %v1191 = vpop.f32.mrf.mxu0
      %v1192 = vadd.f32 0.0, %v1191
      %1193 = vmatmul.bf16.gmra.mxu0 %v1163
      %v1194 = vpop.f32.mrf.mxu0
      %v1195 = vadd.f32 0.0, %v1194
      %v1196 = vpop.f32.mrf.mxu0
      %v1197 = vadd.f32 0.0, %v1196
      %1198 = vmatmul.bf16.gmra.mxu0 %v1166
      %v1199 = vpop.f32.mrf.mxu0
      %v1200 = vadd.f32 0.0, %v1199
      %v1201 = vpop.f32.mrf.mxu0
      %v1202 = vadd.f32 0.0, %v1201
      %1203 = vmatmul.bf16.gmra.mxu0 %v1169
      %v1204 = vpop.f32.mrf.mxu0
      %v1205 = vadd.f32 0.0, %v1204
      %v1206 = vpop.f32.mrf.mxu0
      %v1207 = vadd.f32 0.0, %v1206
      %1208 = vmatmul.bf16.gmra.mxu0 %v1172
      %v1209 = vpop.f32.mrf.mxu0
      %v1210 = vadd.f32 0.0, %v1209
      %v1211 = vpop.f32.mrf.mxu0
      %v1212 = vadd.f32 0.0, %v1211
      %1213 = vmatmul.bf16.gmra.mxu0 %v1175
      %v1214 = vpop.f32.mrf.mxu0
      %v1215 = vadd.f32 0.0, %v1214
      %v1216 = vpop.f32.mrf.mxu0
      %v1217 = vadd.f32 0.0, %v1216
      %1218 = vmatmul.bf16.gmra.mxu0 %v1178
      %v1219 = vpop.f32.mrf.mxu0
      %v1220 = vadd.f32 0.0, %v1219
      %v1221 = vpop.f32.mrf.mxu0
      %1222 = vdwg.mxu0
      %v1223 = vadd.f32 %v1091, %v1190
      %v1224 = vadd.f32 %v1093, %v1192
      %v1225 = vadd.f32 %v1096, %v1195
      %v1226 = vadd.f32 %v1098, %v1197
      %v1227 = vadd.f32 %v1101, %v1200
      %v1228 = vadd.f32 %v1103, %v1202
      %v1229 = vadd.f32 %v1106, %v1205
      %v1230 = vadd.f32 %v1108, %v1207
      %v1231 = vadd.f32 %v1111, %v1210
      %v1232 = vadd.f32 %v1113, %v1212
      %v1233 = vadd.f32 %v1116, %v1215
      %v1234 = vadd.f32 %v1118, %v1217
      %v1235 = vadd.f32 %v1121, %v1220
      %v1236 = vld [vmem:[%s617 + $0x34] sm:$0x3]
      %s1237 = scalar_lea.vmem %s3, 32
      %v1238 = vld [vmem:[%s1237] sm:$0xf]
      %v1239 = vld [vmem:[%s1237 + $0x4] sm:$0xf]
      %v1240 = vld [vmem:[%s1237 + $0x8] sm:$0xf]
      %v1241 = vld [vmem:[%s1237 + $0xc] sm:$0xf]
      %v1243 = vunpack.c.l.b16 %v1236
      %v1244 = vpack.c.b16 %v1243, %v976
      %vm1245 = vsmask.f32 4352
      %v1247 = vshrl.u32 %v1132, 16
      %v1249 = vrot.slane %v1247, 3
      %v1250 = vshll.u32 %v1132, 16
      %v1252 = vrot.slane %v1250, 4
      %v1253 = vor.u32 %v1249, %v1252
      %v1254 = vrot.slane %v995, 3
      %v1255 = vrot.slane %v998, 4
      %v1256 = vor.u32 %v1254, %v1255
      %v1257 = vsel %vm1245, %v1253, %v1256
      %v1258 = vrot.slane %v1004, 3
      %v1259 = vrot.slane %v1007, 4
      %v1260 = vor.u32 %v1258, %v1259
      %v1261 = vsel %vm1245, %v1256, %v1260
      %v1262 = vrot.slane %v1013, 3
      %v1263 = vrot.slane %v1016, 4
      %v1264 = vor.u32 %v1262, %v1263
      %v1265 = vsel %vm1245, %v1260, %v1264
      %v1266 = vrot.slane %v1022, 3
      %v1267 = vrot.slane %v1025, 4
      %v1268 = vor.u32 %v1266, %v1267
      %v1269 = vsel %vm1245, %v1264, %v1268
      %v1270 = vrot.slane %v1031, 3
      %v1271 = vrot.slane %v1034, 4
      %v1272 = vor.u32 %v1270, %v1271
      %v1273 = vsel %vm1245, %v1268, %v1272
      %v1275 = vshrl.u32 %v1244, 16
      %v1277 = vrot.slane %v1275, 3
      %v1278 = vshll.u32 %v1244, 16
      %v1280 = vrot.slane %v1278, 4
      %v1281 = vor.u32 %v1277, %v1280
      %v1282 = vsel %vm1245, %v1272, %v1281
      %v1287 = vunpack.c.l.b16 %v1238
      %v1288 = vunpack.c.l.b16 %v1239
      %v1289 = vunpack.c.l.b16 %v1240
      %v1290 = vunpack.c.l.b16 %v1241
      %v1291 = vpack.c.b16 %v1288, %v1287
      %v1292 = vpack.c.b16 %v1290, %v1289
      %v1296 = vsel %vm716, %v1257, 0
      %v1299 = vsel %vm716, %v1261, 0
      %v1302 = vsel %vm716, %v1265, 0
      %v1305 = vsel %vm716, %v1269, 0
      %v1308 = vsel %vm716, %v1273, 0
      %v1311 = vsel %vm716, %v1282, 0
      %v1314 = vsel %vm716, %v1281, 0
      %1316 = vmatpush.bf16.msra.mxu0 0
      %1317 = vmatpush.bf16.msra.mxu0 0
      %1318 = vmatpush.bf16.msra.mxu0 0
      %1319 = vmatpush.bf16.msra.mxu0 0
      %1320 = vmatpush.bf16.msra.mxu0 0
      %1321 = vmatpush.bf16.msra.mxu0 0
      %1322 = vmatpush.bf16.msra.mxu0 %v1292
      %1323 = vmatpush.bf16.msra.mxu0 %v1291
      %1324 = vmatmul.bf16.gmra.mxu0 %v1296
      %v1325 = vpop.f32.mrf.mxu0
      %v1326 = vadd.f32 0.0, %v1325
      %v1327 = vpop.f32.mrf.mxu0
      %v1328 = vadd.f32 0.0, %v1327
      %1329 = vmatmul.bf16.gmra.mxu0 %v1299
      %v1330 = vpop.f32.mrf.mxu0
      %v1331 = vadd.f32 0.0, %v1330
      %v1332 = vpop.f32.mrf.mxu0
      %v1333 = vadd.f32 0.0, %v1332
      %1334 = vmatmul.bf16.gmra.mxu0 %v1302
      %v1335 = vpop.f32.mrf.mxu0
      %v1336 = vadd.f32 0.0, %v1335
      %v1337 = vpop.f32.mrf.mxu0
      %v1338 = vadd.f32 0.0, %v1337
      %1339 = vmatmul.bf16.gmra.mxu0 %v1305
      %v1340 = vpop.f32.mrf.mxu0
      %v1341 = vadd.f32 0.0, %v1340
      %v1342 = vpop.f32.mrf.mxu0
      %v1343 = vadd.f32 0.0, %v1342
      %1344 = vmatmul.bf16.gmra.mxu0 %v1308
      %v1345 = vpop.f32.mrf.mxu0
      %v1346 = vadd.f32 0.0, %v1345
      %v1347 = vpop.f32.mrf.mxu0
      %v1348 = vadd.f32 0.0, %v1347
      %1349 = vmatmul.bf16.gmra.mxu0 %v1311
      %v1350 = vpop.f32.mrf.mxu0
      %v1351 = vadd.f32 0.0, %v1350
      %v1352 = vpop.f32.mrf.mxu0
      %v1353 = vadd.f32 0.0, %v1352
      %1354 = vmatmul.bf16.gmra.mxu0 %v1314
      %v1355 = vpop.f32.mrf.mxu0
      %v1356 = vadd.f32 0.0, %v1355
      %v1357 = vpop.f32.mrf.mxu0
      %1358 = vdwg.mxu0
      %v1359 = vadd.f32 %v1223, %v1326
      %v1360 = vadd.f32 %v1224, %v1328
      %v1361 = vadd.f32 %v1225, %v1331
      %v1362 = vadd.f32 %v1226, %v1333
      %v1363 = vadd.f32 %v1227, %v1336
      %v1364 = vadd.f32 %v1228, %v1338
      %v1365 = vadd.f32 %v1229, %v1341
      %v1366 = vadd.f32 %v1230, %v1343
      %v1367 = vadd.f32 %v1231, %v1346
      %v1368 = vadd.f32 %v1232, %v1348
      %v1369 = vadd.f32 %v1233, %v1351
      %v1370 = vadd.f32 %v1234, %v1353
      %v1371 = vadd.f32 %v1235, %v1356
      %v1372 = vld [vmem:[%s617 + $0x4] sm:$0x8]
      %s1373 = scalar_lea.vmem %s3, 48
      %v1374 = vld [vmem:[%s1373] sm:$0xf]
      %v1375 = vld [vmem:[%s1373 + $0x4] sm:$0xf]
      %v1376 = vld [vmem:[%s1373 + $0x8] sm:$0xf]
      %v1377 = vld [vmem:[%s1373 + $0xc] sm:$0xf]
      %v1379 = vunpack.c.l.b16 %v1372
      %v1380 = vpack.c.b16 %v684, %v1379
      %v1381 = vpack.c.b16 %v686, %v685
      %v1382 = vpack.c.b16 %v688, %v687
      %v1383 = vpack.c.b16 %v690, %v689
      %v1384 = vpack.c.b16 %v692, %v691
      %v1385 = vpack.c.b16 %v694, %v693
      %v1386 = vpack.c.b16 %v696, %v695
      %v1388 = vshrl.u32 %v1380, 16
      %v1390 = vrot.slane %v1388, 3
      %v1391 = vshll.u32 %v1380, 16
      %v1393 = vrot.slane %v1391, 4
      %v1394 = vor.u32 %v1390, %v1393
      %v1396 = vshrl.u32 %v1381, 16
      %v1398 = vrot.slane %v1396, 3
      %v1399 = vshll.u32 %v1381, 16
      %v1401 = vrot.slane %v1399, 4
      %v1402 = vor.u32 %v1398, %v1401
      %v1403 = vsel %vm1245, %v1394, %v1402
      %v1405 = vshrl.u32 %v1382, 16
      %v1407 = vrot.slane %v1405, 3
      %v1408 = vshll.u32 %v1382, 16
      %v1410 = vrot.slane %v1408, 4
      %v1411 = vor.u32 %v1407, %v1410
      %v1412 = vsel %vm1245, %v1402, %v1411
      %v1414 = vshrl.u32 %v1383, 16
      %v1416 = vrot.slane %v1414, 3
      %v1417 = vshll.u32 %v1383, 16
      %v1419 = vrot.slane %v1417, 4
      %v1420 = vor.u32 %v1416, %v1419
      %v1421 = vsel %vm1245, %v1411, %v1420
      %v1423 = vshrl.u32 %v1384, 16
      %v1425 = vrot.slane %v1423, 3
      %v1426 = vshll.u32 %v1384, 16
      %v1428 = vrot.slane %v1426, 4
      %v1429 = vor.u32 %v1425, %v1428
      %v1430 = vsel %vm1245, %v1420, %v1429
      %v1432 = vshrl.u32 %v1385, 16
      %v1434 = vrot.slane %v1432, 3
      %v1435 = vshll.u32 %v1385, 16
      %v1437 = vrot.slane %v1435, 4
      %v1438 = vor.u32 %v1434, %v1437
      %v1439 = vsel %vm1245, %v1429, %v1438
      %v1441 = vshrl.u32 %v1386, 16
      %v1443 = vrot.slane %v1441, 3
      %v1444 = vshll.u32 %v1386, 16
      %v1446 = vrot.slane %v1444, 4
      %v1447 = vor.u32 %v1443, %v1446
      %v1448 = vsel %vm1245, %v1438, %v1447
      %v1453 = vunpack.c.l.b16 %v1374
      %v1454 = vunpack.c.l.b16 %v1375
      %v1455 = vunpack.c.l.b16 %v1376
      %v1456 = vunpack.c.l.b16 %v1377
      %v1457 = vpack.c.b16 %v1454, %v1453
      %v1458 = vpack.c.b16 %v1456, %v1455
      %v1462 = vsel %vm716, %v1403, 0
      %v1465 = vsel %vm716, %v1412, 0
      %v1468 = vsel %vm716, %v1421, 0
      %v1471 = vsel %vm716, %v1430, 0
      %v1474 = vsel %vm716, %v1439, 0
      %v1477 = vsel %vm716, %v1448, 0
      %v1480 = vsel %vm716, %v1447, 0
      %1482 = vmatpush.bf16.msra.mxu0 0
      %1483 = vmatpush.bf16.msra.mxu0 0
      %1484 = vmatpush.bf16.msra.mxu0 0
      %1485 = vmatpush.bf16.msra.mxu0 0
      %1486 = vmatpush.bf16.msra.mxu0 0
      %1487 = vmatpush.bf16.msra.mxu0 0
      %1488 = vmatpush.bf16.msra.mxu0 %v1458
      %1489 = vmatpush.bf16.msra.mxu0 %v1457
      %1490 = vmatmul.bf16.gmra.mxu0 %v1462
      %v1491 = vpop.f32.mrf.mxu0
      %v1492 = vadd.f32 0.0, %v1491
      %v1493 = vpop.f32.mrf.mxu0
      %v1494 = vadd.f32 0.0, %v1493
      %1495 = vmatmul.bf16.gmra.mxu0 %v1465
      %v1496 = vpop.f32.mrf.mxu0
      %v1497 = vadd.f32 0.0, %v1496
      %v1498 = vpop.f32.mrf.mxu0
      %v1499 = vadd.f32 0.0, %v1498
      %1500 = vmatmul.bf16.gmra.mxu0 %v1468
      %v1501 = vpop.f32.mrf.mxu0
      %v1502 = vadd.f32 0.0, %v1501
      %v1503 = vpop.f32.mrf.mxu0
      %v1504 = vadd.f32 0.0, %v1503
      %1505 = vmatmul.bf16.gmra.mxu0 %v1471
      %v1506 = vpop.f32.mrf.mxu0
      %v1507 = vadd.f32 0.0, %v1506
      %v1508 = vpop.f32.mrf.mxu0
      %v1509 = vadd.f32 0.0, %v1508
      %1510 = vmatmul.bf16.gmra.mxu0 %v1474
      %v1511 = vpop.f32.mrf.mxu0
      %v1512 = vadd.f32 0.0, %v1511
      %v1513 = vpop.f32.mrf.mxu0
      %v1514 = vadd.f32 0.0, %v1513
      %1515 = vmatmul.bf16.gmra.mxu0 %v1477
      %v1516 = vpop.f32.mrf.mxu0
      %v1517 = vadd.f32 0.0, %v1516
      %v1518 = vpop.f32.mrf.mxu0
      %v1519 = vadd.f32 0.0, %v1518
      %1520 = vmatmul.bf16.gmra.mxu0 %v1480
      %v1521 = vpop.f32.mrf.mxu0
      %v1522 = vadd.f32 0.0, %v1521
      %v1523 = vpop.f32.mrf.mxu0
      %1524 = vdwg.mxu0
      %v1525 = vadd.f32 %v1359, %v1492
      %v1526 = vadd.f32 %v1360, %v1494
      %v1527 = vadd.f32 %v1361, %v1497
      %v1528 = vadd.f32 %v1362, %v1499
      %v1529 = vadd.f32 %v1363, %v1502
      %v1530 = vadd.f32 %v1364, %v1504
      %v1531 = vadd.f32 %v1365, %v1507
      %v1532 = vadd.f32 %v1366, %v1509
      %v1533 = vadd.f32 %v1367, %v1512
      %v1534 = vadd.f32 %v1368, %v1514
      %v1535 = vadd.f32 %v1369, %v1517
      %v1536 = vadd.f32 %v1370, %v1519
      %v1537 = vadd.f32 %v1371, %v1522
      %s1538 = scalar_lea.vmem %s3, 64
      %v1539 = vld [vmem:[%s1538] sm:$0xf]
      %v1540 = vld [vmem:[%s1538 + $0x4] sm:$0xf]
      %v1541 = vld [vmem:[%s1538 + $0x8] sm:$0xf]
      %v1542 = vld [vmem:[%s1538 + $0xc] sm:$0xf]
      %v1547 = vunpack.c.l.b16 %v1539
      %v1548 = vunpack.c.l.b16 %v1540
      %v1549 = vunpack.c.l.b16 %v1541
      %v1550 = vunpack.c.l.b16 %v1542
      %v1551 = vpack.c.b16 %v1548, %v1547
      %v1552 = vpack.c.b16 %v1550, %v1549
      %1555 = vmatpush.bf16.msra.mxu0 0
      %1556 = vmatpush.bf16.msra.mxu0 0
      %1557 = vmatpush.bf16.msra.mxu0 0
      %1558 = vmatpush.bf16.msra.mxu0 0
      %1559 = vmatpush.bf16.msra.mxu0 0
      %1560 = vmatpush.bf16.msra.mxu0 0
      %1561 = vmatpush.bf16.msra.mxu0 %v1552
      %1562 = vmatpush.bf16.msra.mxu0 %v1551
      %1563 = vmatmul.bf16.gmra.mxu0 %v718
      %v1564 = vpop.f32.mrf.mxu0
      %v1565 = vadd.f32 0.0, %v1564
      %v1566 = vpop.f32.mrf.mxu0
      %v1567 = vadd.f32 0.0, %v1566
      %1568 = vmatmul.bf16.gmra.mxu0 %v721
      %v1569 = vpop.f32.mrf.mxu0
      %v1570 = vadd.f32 0.0, %v1569
      %v1571 = vpop.f32.mrf.mxu0
      %v1572 = vadd.f32 0.0, %v1571
      %1573 = vmatmul.bf16.gmra.mxu0 %v724
      %v1574 = vpop.f32.mrf.mxu0
      %v1575 = vadd.f32 0.0, %v1574
      %v1576 = vpop.f32.mrf.mxu0
      %v1577 = vadd.f32 0.0, %v1576
      %1578 = vmatmul.bf16.gmra.mxu0 %v727
      %v1579 = vpop.f32.mrf.mxu0
      %v1580 = vadd.f32 0.0, %v1579
      %v1581 = vpop.f32.mrf.mxu0
      %v1582 = vadd.f32 0.0, %v1581
      %1583 = vmatmul.bf16.gmra.mxu0 %v730
      %v1584 = vpop.f32.mrf.mxu0
      %v1585 = vadd.f32 0.0, %v1584
      %v1586 = vpop.f32.mrf.mxu0
      %v1587 = vadd.f32 0.0, %v1586
      %1588 = vmatmul.bf16.gmra.mxu0 %v733
      %v1589 = vpop.f32.mrf.mxu0
      %v1590 = vadd.f32 0.0, %v1589
      %v1591 = vpop.f32.mrf.mxu0
      %v1592 = vadd.f32 0.0, %v1591
      %1593 = vmatmul.bf16.gmra.mxu0 %v736
      %v1594 = vpop.f32.mrf.mxu0
      %v1595 = vadd.f32 0.0, %v1594
      %v1596 = vpop.f32.mrf.mxu0
      %1597 = vdwg.mxu0
      %v1598 = vadd.f32 %v1525, %v1565
      %v1599 = vadd.f32 %v1526, %v1567
      %v1600 = vadd.f32 %v1527, %v1570
      %v1601 = vadd.f32 %v1528, %v1572
      %v1602 = vadd.f32 %v1529, %v1575
      %v1603 = vadd.f32 %v1530, %v1577
      %v1604 = vadd.f32 %v1531, %v1580
      %v1605 = vadd.f32 %v1532, %v1582
      %v1606 = vadd.f32 %v1533, %v1585
      %v1607 = vadd.f32 %v1534, %v1587
      %v1608 = vadd.f32 %v1535, %v1590
      %v1609 = vadd.f32 %v1536, %v1592
      %v1610 = vadd.f32 %v1537, %v1595
      %v1611 = vld [vmem:[%s617 + $0x38] sm:$0x7]
      %s1612 = scalar_lea.vmem %s3, 80
      %v1613 = vld [vmem:[%s1612] sm:$0xf]
      %v1614 = vld [vmem:[%s1612 + $0x4] sm:$0xf]
      %v1615 = vld [vmem:[%s1612 + $0x8] sm:$0xf]
      %v1616 = vld [vmem:[%s1612 + $0xc] sm:$0xf]
      %v1618 = vunpack.c.l.b16 %v1611
      %v1619 = vpack.c.b16 %v1618, %v1618
      %vm1620 = vsmask.f32 7424
      %v1621 = vshrl.u32 %v697, 16
      %v1623 = vshll.u32 %v697, 16
      %v1625 = vrot.slane %v1623, 1
      %v1626 = vor.u32 %v1621, %v1625
      %v1627 = vshll.u32 %v698, 16
      %v1629 = vrot.slane %v1627, 1
      %v1630 = vsel %vm1620, %v1626, %v1629
      %v1631 = vshrl.u32 %v698, 16
      %v1633 = vor.u32 %v1631, %v1629
      %v1634 = vshll.u32 %v699, 16
      %v1636 = vrot.slane %v1634, 1
      %v1637 = vsel %vm1620, %v1633, %v1636
      %v1638 = vshrl.u32 %v699, 16
      %v1640 = vor.u32 %v1638, %v1636
      %v1641 = vshll.u32 %v700, 16
      %v1643 = vrot.slane %v1641, 1
      %v1644 = vsel %vm1620, %v1640, %v1643
      %v1645 = vshrl.u32 %v700, 16
      %v1647 = vor.u32 %v1645, %v1643
      %v1648 = vshll.u32 %v701, 16
      %v1650 = vrot.slane %v1648, 1
      %v1651 = vsel %vm1620, %v1647, %v1650
      %v1652 = vshrl.u32 %v701, 16
      %v1654 = vor.u32 %v1652, %v1650
      %v1655 = vshll.u32 %v702, 16
      %v1657 = vrot.slane %v1655, 1
      %v1658 = vsel %vm1620, %v1654, %v1657
      %v1659 = vshrl.u32 %v702, 16
      %v1661 = vor.u32 %v1659, %v1657
      %v1663 = vshll.u32 %v1619, 16
      %v1665 = vrot.slane %v1663, 1
      %v1666 = vsel %vm1620, %v1661, %v1665
      %v1667 = vshrl.u32 %v1619, 16
      %v1669 = vor.u32 %v1667, %v1665
      %v1674 = vunpack.c.l.b16 %v1613
      %v1675 = vunpack.c.l.b16 %v1614
      %v1676 = vunpack.c.l.b16 %v1615
      %v1677 = vunpack.c.l.b16 %v1616
      %v1678 = vpack.c.b16 %v1675, %v1674
      %v1679 = vpack.c.b16 %v1677, %v1676
      %v1683 = vsel %vm716, %v1630, 0
      %v1686 = vsel %vm716, %v1637, 0
      %v1689 = vsel %vm716, %v1644, 0
      %v1692 = vsel %vm716, %v1651, 0
      %v1695 = vsel %vm716, %v1658, 0
      %v1698 = vsel %vm716, %v1666, 0
      %v1701 = vsel %vm716, %v1669, 0
      %1703 = vmatpush.bf16.msra.mxu0 0
      %1704 = vmatpush.bf16.msra.mxu0 0
      %1705 = vmatpush.bf16.msra.mxu0 0
      %1706 = vmatpush.bf16.msra.mxu0 0
      %1707 = vmatpush.bf16.msra.mxu0 0
      %1708 = vmatpush.bf16.msra.mxu0 0
      %1709 = vmatpush.bf16.msra.mxu0 %v1679
      %1710 = vmatpush.bf16.msra.mxu0 %v1678
      %1711 = vmatmul.bf16.gmra.mxu0 %v1683
      %v1712 = vpop.f32.mrf.mxu0
      %v1713 = vadd.f32 0.0, %v1712
      %v1714 = vpop.f32.mrf.mxu0
      %v1715 = vadd.f32 0.0, %v1714
      %1716 = vmatmul.bf16.gmra.mxu0 %v1686
      %v1717 = vpop.f32.mrf.mxu0
      %v1718 = vadd.f32 0.0, %v1717
      %v1719 = vpop.f32.mrf.mxu0
      %v1720 = vadd.f32 0.0, %v1719
      %1721 = vmatmul.bf16.gmra.mxu0 %v1689
      %v1722 = vpop.f32.mrf.mxu0
      %v1723 = vadd.f32 0.0, %v1722
      %v1724 = vpop.f32.mrf.mxu0
      %v1725 = vadd.f32 0.0, %v1724
      %1726 = vmatmul.bf16.gmra.mxu0 %v1692
      %v1727 = vpop.f32.mrf.mxu0
      %v1728 = vadd.f32 0.0, %v1727
      %v1729 = vpop.f32.mrf.mxu0
      %v1730 = vadd.f32 0.0, %v1729
      %1731 = vmatmul.bf16.gmra.mxu0 %v1695
      %v1732 = vpop.f32.mrf.mxu0
      %v1733 = vadd.f32 0.0, %v1732
      %v1734 = vpop.f32.mrf.mxu0
      %v1735 = vadd.f32 0.0, %v1734
      %1736 = vmatmul.bf16.gmra.mxu0 %v1698
      %v1737 = vpop.f32.mrf.mxu0
      %v1738 = vadd.f32 0.0, %v1737
      %v1739 = vpop.f32.mrf.mxu0
      %v1740 = vadd.f32 0.0, %v1739
      %1741 = vmatmul.bf16.gmra.mxu0 %v1701
      %v1742 = vpop.f32.mrf.mxu0
      %v1743 = vadd.f32 0.0, %v1742
      %v1744 = vpop.f32.mrf.mxu0
      %1745 = vdwg.mxu0
      %v1746 = vadd.f32 %v1598, %v1713
      %v1747 = vadd.f32 %v1599, %v1715
      %v1748 = vadd.f32 %v1600, %v1718
      %v1749 = vadd.f32 %v1601, %v1720
      %v1750 = vadd.f32 %v1602, %v1723
      %v1751 = vadd.f32 %v1603, %v1725
      %v1752 = vadd.f32 %v1604, %v1728
      %v1753 = vadd.f32 %v1605, %v1730
      %v1754 = vadd.f32 %v1606, %v1733
      %v1755 = vadd.f32 %v1607, %v1735
      %v1756 = vadd.f32 %v1608, %v1738
      %v1757 = vadd.f32 %v1609, %v1740
      %v1758 = vadd.f32 %v1610, %v1743
      %v1759 = vld [vmem:[%s617 + $0xc] sm:$0xf]
      %v1760 = vld [vmem:[%s617 + $0x10] sm:$0xf]
      %v1761 = vld [vmem:[%s617 + $0x14] sm:$0xf]
      %v1762 = vld [vmem:[%s617 + $0x18] sm:$0xf]
      %v1763 = vld [vmem:[%s617 + $0x1c] sm:$0xf]
      %v1764 = vld [vmem:[%s617 + $0x20] sm:$0xf]
      %v1765 = vld [vmem:[%s617 + $0x24] sm:$0xf]
      %v1766 = vld [vmem:[%s617 + $0x28] sm:$0xf]
      %v1767 = vld [vmem:[%s617 + $0x2c] sm:$0xf]
      %v1768 = vld [vmem:[%s617 + $0x30] sm:$0xf]
      %v1769 = vld [vmem:[%s617 + $0x34] sm:$0xf]
      %v1770 = vld [vmem:[%s617 + $0x38] sm:$0xf]
      %v1771 = vld [vmem:[%s617 + $0x3c] sm:$0x7]
      %s1772 = scalar_lea.vmem %s3, 96
      %v1773 = vld [vmem:[%s1772] sm:$0xf]
      %v1774 = vld [vmem:[%s1772 + $0x4] sm:$0xf]
      %v1775 = vld [vmem:[%s1772 + $0x8] sm:$0xf]
      %v1776 = vld [vmem:[%s1772 + $0xc] sm:$0xf]
      %v1790 = vunpack.c.l.b16 %v1759
      %v1791 = vunpack.c.l.b16 %v1760
      %v1792 = vunpack.c.l.b16 %v1761
      %v1793 = vunpack.c.l.b16 %v1762
      %v1794 = vunpack.c.l.b16 %v1763
      %v1795 = vunpack.c.l.b16 %v1764
      %v1796 = vunpack.c.l.b16 %v1765
      %v1797 = vunpack.c.l.b16 %v1766
      %v1798 = vunpack.c.l.b16 %v1767
      %v1799 = vunpack.c.l.b16 %v1768
      %v1800 = vunpack.c.l.b16 %v1769
      %v1801 = vunpack.c.l.b16 %v1770
      %v1802 = vunpack.c.l.b16 %v1771
      %v1803 = vpack.c.b16 %v1791, %v1790
      %v1804 = vpack.c.b16 %v1793, %v1792
      %v1805 = vpack.c.b16 %v1795, %v1794
      %v1806 = vpack.c.b16 %v1797, %v1796
      %v1807 = vpack.c.b16 %v1799, %v1798
      %v1808 = vpack.c.b16 %v1801, %v1800
      %v1809 = vpack.c.b16 %v1802, %v1802
      %v1811 = vshrl.u32 %v1803, 16
      %v1813 = vshll.u32 %v1803, 16
      %v1815 = vrot.slane %v1813, 1
      %v1816 = vor.u32 %v1811, %v1815
      %v1818 = vshll.u32 %v1804, 16
      %v1820 = vrot.slane %v1818, 1
      %v1821 = vsel %vm1620, %v1816, %v1820
      %v1822 = vshrl.u32 %v1804, 16
      %v1824 = vor.u32 %v1822, %v1820
      %v1826 = vshll.u32 %v1805, 16
      %v1828 = vrot.slane %v1826, 1
      %v1829 = vsel %vm1620, %v1824, %v1828
      %v1830 = vshrl.u32 %v1805, 16
      %v1832 = vor.u32 %v1830, %v1828
      %v1834 = vshll.u32 %v1806, 16
      %v1836 = vrot.slane %v1834, 1
      %v1837 = vsel %vm1620, %v1832, %v1836
      %v1838 = vshrl.u32 %v1806, 16
      %v1840 = vor.u32 %v1838, %v1836
      %v1842 = vshll.u32 %v1807, 16
      %v1844 = vrot.slane %v1842, 1
      %v1845 = vsel %vm1620, %v1840, %v1844
      %v1846 = vshrl.u32 %v1807, 16
      %v1848 = vor.u32 %v1846, %v1844
      %v1850 = vshll.u32 %v1808, 16
      %v1852 = vrot.slane %v1850, 1
      %v1853 = vsel %vm1620, %v1848, %v1852
      %v1854 = vshrl.u32 %v1808, 16
      %v1856 = vor.u32 %v1854, %v1852
      %v1858 = vshll.u32 %v1809, 16
      %v1860 = vrot.slane %v1858, 1
      %v1861 = vsel %vm1620, %v1856, %v1860
      %v1862 = vshrl.u32 %v1809, 16
      %v1864 = vor.u32 %v1862, %v1860
      %v1869 = vunpack.c.l.b16 %v1773
      %v1870 = vunpack.c.l.b16 %v1774
      %v1871 = vunpack.c.l.b16 %v1775
      %v1872 = vunpack.c.l.b16 %v1776
      %v1873 = vpack.c.b16 %v1870, %v1869
      %v1874 = vpack.c.b16 %v1872, %v1871
      %v1878 = vsel %vm716, %v1821, 0
      %v1881 = vsel %vm716, %v1829, 0
      %v1884 = vsel %vm716, %v1837, 0
      %v1887 = vsel %vm716, %v1845, 0
      %v1890 = vsel %vm716, %v1853, 0
      %v1893 = vsel %vm716, %v1861, 0
      %v1896 = vsel %vm716, %v1864, 0
      %1898 = vmatpush.bf16.msra.mxu0 0
      %1899 = vmatpush.bf16.msra.mxu0 0
      %1900 = vmatpush.bf16.msra.mxu0 0
      %1901 = vmatpush.bf16.msra.mxu0 0
      %1902 = vmatpush.bf16.msra.mxu0 0
      %1903 = vmatpush.bf16.msra.mxu0 0
      %1904 = vmatpush.bf16.msra.mxu0 %v1874
      %1905 = vmatpush.bf16.msra.mxu0 %v1873
      %1906 = vmatmul.bf16.gmra.mxu0 %v1878
      %v1907 = vpop.f32.mrf.mxu0
      %v1908 = vadd.f32 0.0, %v1907
      %v1909 = vpop.f32.mrf.mxu0
      %v1910 = vadd.f32 0.0, %v1909
      %1911 = vmatmul.bf16.gmra.mxu0 %v1881
      %v1912 = vpop.f32.mrf.mxu0
      %v1913 = vadd.f32 0.0, %v1912
      %v1914 = vpop.f32.mrf.mxu0
      %v1915 = vadd.f32 0.0, %v1914
      %1916 = vmatmul.bf16.gmra.mxu0 %v1884
      %v1917 = vpop.f32.mrf.mxu0
      %v1918 = vadd.f32 0.0, %v1917
      %v1919 = vpop.f32.mrf.mxu0
      %v1920 = vadd.f32 0.0, %v1919
      %1921 = vmatmul.bf16.gmra.mxu0 %v1887
      %v1922 = vpop.f32.mrf.mxu0
      %v1923 = vadd.f32 0.0, %v1922
      %v1924 = vpop.f32.mrf.mxu0
      %v1925 = vadd.f32 0.0, %v1924
      %1926 = vmatmul.bf16.gmra.mxu0 %v1890
      %v1927 = vpop.f32.mrf.mxu0
      %v1928 = vadd.f32 0.0, %v1927
      %v1929 = vpop.f32.mrf.mxu0
      %v1930 = vadd.f32 0.0, %v1929
      %1931 = vmatmul.bf16.gmra.mxu0 %v1893
      %v1932 = vpop.f32.mrf.mxu0
      %v1933 = vadd.f32 0.0, %v1932
      %v1934 = vpop.f32.mrf.mxu0
      %v1935 = vadd.f32 0.0, %v1934
      %1936 = vmatmul.bf16.gmra.mxu0 %v1896
      %v1937 = vpop.f32.mrf.mxu0
      %v1938 = vadd.f32 0.0, %v1937
      %v1939 = vpop.f32.mrf.mxu0
      %1940 = vdwg.mxu0
      %v1941 = vadd.f32 %v1746, %v1908
      %v1942 = vadd.f32 %v1747, %v1910
      %v1943 = vadd.f32 %v1748, %v1913
      %v1944 = vadd.f32 %v1749, %v1915
      %v1945 = vadd.f32 %v1750, %v1918
      %v1946 = vadd.f32 %v1751, %v1920
      %v1947 = vadd.f32 %v1752, %v1923
      %v1948 = vadd.f32 %v1753, %v1925
      %v1949 = vadd.f32 %v1754, %v1928
      %v1950 = vadd.f32 %v1755, %v1930
      %v1951 = vadd.f32 %v1756, %v1933
      %v1952 = vadd.f32 %v1757, %v1935
      %v1953 = vadd.f32 %v1758, %v1938
      %v1954 = vld [vmem:[%s617 + $0xc] sm:$0xe]
      %s1955 = scalar_lea.vmem %s3, 112
      %v1956 = vld [vmem:[%s1955] sm:$0xf]
      %v1957 = vld [vmem:[%s1955 + $0x4] sm:$0xf]
      %v1958 = vld [vmem:[%s1955 + $0x8] sm:$0xf]
      %v1959 = vld [vmem:[%s1955 + $0xc] sm:$0xf]
      %v1961 = vunpack.c.l.b16 %v1954
      %v1962 = vpack.c.b16 %v1791, %v1961
      %vm1963 = vcmask 1046528
      %v1964 = vrot.slane %v1962, 1
      %v1965 = vrot.slane %v1804, 1
      %v1966 = vsel %vm1963, %v1964, %v1965
      %v1967 = vrot.slane %v1805, 1
      %v1968 = vsel %vm1963, %v1965, %v1967
      %v1969 = vrot.slane %v1806, 1
      %v1970 = vsel %vm1963, %v1967, %v1969
      %v1971 = vrot.slane %v1807, 1
      %v1972 = vsel %vm1963, %v1969, %v1971
      %v1973 = vrot.slane %v1808, 1
      %v1974 = vsel %vm1963, %v1971, %v1973
      %v1975 = vrot.slane %v1809, 1
      %v1976 = vsel %vm1963, %v1973, %v1975
      %v1981 = vunpack.c.l.b16 %v1956
      %v1982 = vunpack.c.l.b16 %v1957
      %v1983 = vunpack.c.l.b16 %v1958
      %v1984 = vunpack.c.l.b16 %v1959
      %v1985 = vpack.c.b16 %v1982, %v1981
      %v1986 = vpack.c.b16 %v1984, %v1983
      %v1990 = vsel %vm716, %v1966, 0
      %v1993 = vsel %vm716, %v1968, 0
      %v1996 = vsel %vm716, %v1970, 0
      %v1999 = vsel %vm716, %v1972, 0
      %v2002 = vsel %vm716, %v1974, 0
      %v2005 = vsel %vm716, %v1976, 0
      %v2008 = vsel %vm716, %v1975, 0
      %2010 = vmatpush.bf16.msra.mxu0 0
      %2011 = vmatpush.bf16.msra.mxu0 0
      %2012 = vmatpush.bf16.msra.mxu0 0
      %2013 = vmatpush.bf16.msra.mxu0 0
      %2014 = vmatpush.bf16.msra.mxu0 0
      %2015 = vmatpush.bf16.msra.mxu0 0
      %2016 = vmatpush.bf16.msra.mxu0 %v1986
      %2017 = vmatpush.bf16.msra.mxu0 %v1985
      %2018 = vmatmul.bf16.gmra.mxu0 %v1990
      %v2019 = vpop.f32.mrf.mxu0
      %v2020 = vadd.f32 0.0, %v2019
      %v2021 = vpop.f32.mrf.mxu0
      %v2022 = vadd.f32 0.0, %v2021
      %2023 = vmatmul.bf16.gmra.mxu0 %v1993
      %v2024 = vpop.f32.mrf.mxu0
      %v2025 = vadd.f32 0.0, %v2024
      %v2026 = vpop.f32.mrf.mxu0
      %v2027 = vadd.f32 0.0, %v2026
      %2028 = vmatmul.bf16.gmra.mxu0 %v1996
      %v2029 = vpop.f32.mrf.mxu0
      %v2030 = vadd.f32 0.0, %v2029
      %v2031 = vpop.f32.mrf.mxu0
      %v2032 = vadd.f32 0.0, %v2031
      %2033 = vmatmul.bf16.gmra.mxu0 %v1999
      %v2034 = vpop.f32.mrf.mxu0
      %v2035 = vadd.f32 0.0, %v2034
      %v2036 = vpop.f32.mrf.mxu0
      %v2037 = vadd.f32 0.0, %v2036
      %2038 = vmatmul.bf16.gmra.mxu0 %v2002
      %v2039 = vpop.f32.mrf.mxu0
      %v2040 = vadd.f32 0.0, %v2039
      %v2041 = vpop.f32.mrf.mxu0
      %v2042 = vadd.f32 0.0, %v2041
      %2043 = vmatmul.bf16.gmra.mxu0 %v2005
      %v2044 = vpop.f32.mrf.mxu0
      %v2045 = vadd.f32 0.0, %v2044
      %v2046 = vpop.f32.mrf.mxu0
      %v2047 = vadd.f32 0.0, %v2046
      %2048 = vmatmul.bf16.gmra.mxu0 %v2008
      %v2049 = vpop.f32.mrf.mxu0
      %v2050 = vadd.f32 0.0, %v2049
      %v2051 = vpop.f32.mrf.mxu0
      %2052 = vdwg.mxu0
      %v2053 = vadd.f32 %v1941, %v2020
      %v2054 = vadd.f32 %v1942, %v2022
      %v2055 = vadd.f32 %v1943, %v2025
      %v2056 = vadd.f32 %v1944, %v2027
      %v2057 = vadd.f32 %v1945, %v2030
      %v2058 = vadd.f32 %v1946, %v2032
      %v2059 = vadd.f32 %v1947, %v2035
      %v2060 = vadd.f32 %v1948, %v2037
      %v2061 = vadd.f32 %v1949, %v2040
      %v2062 = vadd.f32 %v1950, %v2042
      %v2063 = vadd.f32 %v1951, %v2045
      %v2064 = vadd.f32 %v1952, %v2047
      %v2065 = vadd.f32 %v1953, %v2050
      %v2066 = vld [vmem:[%s617 + $0x3c] sm:$0xf]
      %s2067 = scalar_lea.vmem %s3, 128
      %v2068 = vld [vmem:[%s2067] sm:$0xf]
      %v2069 = vld [vmem:[%s2067 + $0x4] sm:$0xf]
      %v2070 = vld [vmem:[%s2067 + $0x8] sm:$0xf]
      %v2071 = vld [vmem:[%s2067 + $0xc] sm:$0xf]
      %v2073 = vunpack.c.l.b16 %v2066
      %v2074 = vpack.c.b16 %v2073, %v2073
      %vm2075 = vsmask.f32 6400
      %v2077 = vshrl.u32 %v1962, 16
      %v2079 = vrot.slane %v2077, 1
      %v2080 = vshll.u32 %v1962, 16
      %v2082 = vrot.slane %v2080, 2
      %v2083 = vor.u32 %v2079, %v2082
      %v2084 = vrot.slane %v1822, 1
      %v2085 = vrot.slane %v1818, 2
      %v2086 = vor.u32 %v2084, %v2085
      %v2087 = vsel %vm2075, %v2083, %v2086
      %v2088 = vrot.slane %v1830, 1
      %v2089 = vrot.slane %v1826, 2
      %v2090 = vor.u32 %v2088, %v2089
      %v2091 = vsel %vm2075, %v2086, %v2090
      %v2092 = vrot.slane %v1838, 1
      %v2093 = vrot.slane %v1834, 2
      %v2094 = vor.u32 %v2092, %v2093
      %v2095 = vsel %vm2075, %v2090, %v2094
      %v2096 = vrot.slane %v1846, 1
      %v2097 = vrot.slane %v1842, 2
      %v2098 = vor.u32 %v2096, %v2097
      %v2099 = vsel %vm2075, %v2094, %v2098
      %v2100 = vrot.slane %v1854, 1
      %v2101 = vrot.slane %v1850, 2
      %v2102 = vor.u32 %v2100, %v2101
      %v2103 = vsel %vm2075, %v2098, %v2102
      %v2105 = vshrl.u32 %v2074, 16
      %v2107 = vrot.slane %v2105, 1
      %v2108 = vshll.u32 %v2074, 16
      %v2110 = vrot.slane %v2108, 2
      %v2111 = vor.u32 %v2107, %v2110
      %v2112 = vsel %vm2075, %v2102, %v2111
      %v2117 = vunpack.c.l.b16 %v2068
      %v2118 = vunpack.c.l.b16 %v2069
      %v2119 = vunpack.c.l.b16 %v2070
      %v2120 = vunpack.c.l.b16 %v2071
      %v2121 = vpack.c.b16 %v2118, %v2117
      %v2122 = vpack.c.b16 %v2120, %v2119
      %v2126 = vsel %vm716, %v2087, 0
      %v2129 = vsel %vm716, %v2091, 0
      %v2132 = vsel %vm716, %v2095, 0
      %v2135 = vsel %vm716, %v2099, 0
      %v2138 = vsel %vm716, %v2103, 0
      %v2141 = vsel %vm716, %v2112, 0
      %v2144 = vsel %vm716, %v2111, 0
      %2146 = vmatpush.bf16.msra.mxu0 0
      %2147 = vmatpush.bf16.msra.mxu0 0
      %2148 = vmatpush.bf16.msra.mxu0 0
      %2149 = vmatpush.bf16.msra.mxu0 0
      %2150 = vmatpush.bf16.msra.mxu0 0
      %2151 = vmatpush.bf16.msra.mxu0 0
      %2152 = vmatpush.bf16.msra.mxu0 %v2122
      %2153 = vmatpush.bf16.msra.mxu0 %v2121
      %2154 = vmatmul.bf16.gmra.mxu0 %v2126
      %v2155 = vpop.f32.mrf.mxu0
      %v2156 = vadd.f32 0.0, %v2155
      %v2157 = vpop.f32.mrf.mxu0
      %v2158 = vadd.f32 0.0, %v2157
      %2159 = vmatmul.bf16.gmra.mxu0 %v2129
      %v2160 = vpop.f32.mrf.mxu0
      %v2161 = vadd.f32 0.0, %v2160
      %v2162 = vpop.f32.mrf.mxu0
      %v2163 = vadd.f32 0.0, %v2162
      %2164 = vmatmul.bf16.gmra.mxu0 %v2132
      %v2165 = vpop.f32.mrf.mxu0
      %v2166 = vadd.f32 0.0, %v2165
      %v2167 = vpop.f32.mrf.mxu0
      %v2168 = vadd.f32 0.0, %v2167
      %2169 = vmatmul.bf16.gmra.mxu0 %v2135
      %v2170 = vpop.f32.mrf.mxu0
      %v2171 = vadd.f32 0.0, %v2170
      %v2172 = vpop.f32.mrf.mxu0
      %v2173 = vadd.f32 0.0, %v2172
      %2174 = vmatmul.bf16.gmra.mxu0 %v2138
      %v2175 = vpop.f32.mrf.mxu0
      %v2176 = vadd.f32 0.0, %v2175
      %v2177 = vpop.f32.mrf.mxu0
      %v2178 = vadd.f32 0.0, %v2177
      %2179 = vmatmul.bf16.gmra.mxu0 %v2141
      %v2180 = vpop.f32.mrf.mxu0
      %v2181 = vadd.f32 0.0, %v2180
      %v2182 = vpop.f32.mrf.mxu0
      %v2183 = vadd.f32 0.0, %v2182
      %2184 = vmatmul.bf16.gmra.mxu0 %v2144
      %v2185 = vpop.f32.mrf.mxu0
      %v2186 = vadd.f32 0.0, %v2185
      %v2187 = vpop.f32.mrf.mxu0
      %2188 = vdwg.mxu0
      %v2189 = vadd.f32 %v2053, %v2156
      %v2190 = vadd.f32 %v2054, %v2158
      %v2191 = vadd.f32 %v2055, %v2161
      %v2192 = vadd.f32 %v2056, %v2163
      %v2193 = vadd.f32 %v2057, %v2166
      %v2194 = vadd.f32 %v2058, %v2168
      %v2195 = vadd.f32 %v2059, %v2171
      %v2196 = vadd.f32 %v2060, %v2173
      %v2197 = vadd.f32 %v2061, %v2176
      %v2198 = vadd.f32 %v2062, %v2178
      %v2199 = vadd.f32 %v2063, %v2181
      %v2200 = vadd.f32 %v2064, %v2183
      %v2201 = vadd.f32 %v2065, %v2186
      %vm2202 = vcmp.ge.f32.partialorder %v2189, 0.0
      %vm2203 = vcmp.ge.f32.partialorder %v2190, 0.0
      %vm2204 = vcmp.ge.f32.partialorder %v2191, 0.0
      %vm2205 = vcmp.ge.f32.partialorder %v2192, 0.0
      %vm2206 = vcmp.ge.f32.partialorder %v2193, 0.0
      %vm2207 = vcmp.ge.f32.partialorder %v2194, 0.0
      %vm2208 = vcmp.ge.f32.partialorder %v2195, 0.0
      %vm2209 = vcmp.ge.f32.partialorder %v2196, 0.0
      %vm2210 = vcmp.ge.f32.partialorder %v2197, 0.0
      %vm2211 = vcmp.ge.f32.partialorder %v2198, 0.0
      %vm2212 = vcmp.ge.f32.partialorder %v2199, 0.0
      %vm2213 = vcmp.ge.f32.partialorder %v2200, 0.0
      %vm2214 = vcmp.ge.f32.partialorder %v2201, 0.0
      %v2215 = vmul.f32 %v2189, 0.1
      %v2216 = vmul.f32 %v2190, 0.1
      %v2217 = vmul.f32 %v2191, 0.1
      %v2218 = vmul.f32 %v2192, 0.1
      %v2219 = vmul.f32 %v2193, 0.1
      %v2220 = vmul.f32 %v2194, 0.1
      %v2221 = vmul.f32 %v2195, 0.1
      %v2222 = vmul.f32 %v2196, 0.1
      %v2223 = vmul.f32 %v2197, 0.1
      %v2224 = vmul.f32 %v2198, 0.1
      %v2225 = vmul.f32 %v2199, 0.1
      %v2226 = vmul.f32 %v2200, 0.1
      %v2227 = vmul.f32 %v2201, 0.1
      %v2228 = vsel %vm2202, %v2189, %v2215
      %v2229 = vsel %vm2203, %v2190, %v2216
      %v2230 = vsel %vm2204, %v2191, %v2217
      %v2231 = vsel %vm2205, %v2192, %v2218
      %v2232 = vsel %vm2206, %v2193, %v2219
      %v2233 = vsel %vm2207, %v2194, %v2220
      %v2234 = vsel %vm2208, %v2195, %v2221
      %v2235 = vsel %vm2209, %v2196, %v2222
      %v2236 = vsel %vm2210, %v2197, %v2223
      %v2237 = vsel %vm2211, %v2198, %v2224
      %v2238 = vsel %vm2212, %v2199, %v2225
      %v2239 = vsel %vm2213, %v2200, %v2226
      %v2240 = vsel %vm2214, %v2201, %v2227
      %2242 = vset.pattern.permute.xlu0 0
      %2243 = vperm.xlu0 %2242, %v637
      %v2244 = vpop.permute.xlu0 %2243
      %2247 = vset.pattern.permute.xlu0 0
      %2248 = vperm.xlu0 %2247, %v638
      %v2249 = vpop.permute.xlu0 %2248
      %2252 = vset.pattern.permute.xlu0 0
      %2253 = vperm.xlu0 %2252, %v639
      %v2254 = vpop.permute.xlu0 %2253
      %2257 = vset.pattern.permute.xlu0 0
      %2258 = vperm.xlu0 %2257, %v640
      %v2259 = vpop.permute.xlu0 %2258
      %2262 = vset.pattern.permute.xlu0 0
      %2263 = vperm.xlu0 %2262, %v641
      %v2264 = vpop.permute.xlu0 %2263
      %2267 = vset.pattern.permute.xlu0 0
      %2268 = vperm.xlu0 %2267, %v642
      %v2269 = vpop.permute.xlu0 %2268
      %2272 = vset.pattern.permute.xlu0 0
      %2273 = vperm.xlu0 %2272, %v643
      %v2274 = vpop.permute.xlu0 %2273
      %2277 = vset.pattern.permute.xlu0 0
      %2278 = vperm.xlu0 %2277, %v644
      %v2279 = vpop.permute.xlu0 %2278
      %2282 = vset.pattern.permute.xlu0 0
      %2283 = vperm.xlu0 %2282, %v645
      %v2284 = vpop.permute.xlu0 %2283
      %2287 = vset.pattern.permute.xlu0 0
      %2288 = vperm.xlu0 %2287, %v646
      %v2289 = vpop.permute.xlu0 %2288
      %2292 = vset.pattern.permute.xlu0 0
      %2293 = vperm.xlu0 %2292, %v647
      %v2294 = vpop.permute.xlu0 %2293
      %2297 = vset.pattern.permute.xlu0 0
      %2298 = vperm.xlu0 %2297, %v648
      %v2299 = vpop.permute.xlu0 %2298
      %2302 = vset.pattern.permute.xlu0 0
      %2303 = vperm.xlu0 %2302, %v649
      %v2304 = vpop.permute.xlu0 %2303
      %v2306 = vmul.f32 %v2228, %v2244
      %v2307 = vmul.f32 %v2229, %v2249
      %v2308 = vmul.f32 %v2230, %v2254
      %v2309 = vmul.f32 %v2231, %v2259
      %v2310 = vmul.f32 %v2232, %v2264
      %v2311 = vmul.f32 %v2233, %v2269
      %v2312 = vmul.f32 %v2234, %v2274
      %v2313 = vmul.f32 %v2235, %v2279
      %v2314 = vmul.f32 %v2236, %v2284
      %v2315 = vmul.f32 %v2237, %v2289
      %v2316 = vmul.f32 %v2238, %v2294
      %v2317 = vmul.f32 %v2239, %v2299
      %v2318 = vmul.f32 %v2240, %v2304
      %v2319 = vpack.c.bf16 %v2306, %v2306
      %v2320 = vpack.c.bf16 %v2307, %v2307
      %v2321 = vpack.c.bf16 %v2308, %v2308
      %v2322 = vpack.c.bf16 %v2309, %v2309
      %v2323 = vpack.c.bf16 %v2310, %v2310
      %v2324 = vpack.c.bf16 %v2311, %v2311
      %v2325 = vpack.c.bf16 %v2312, %v2312
      %v2326 = vpack.c.bf16 %v2313, %v2313
      %v2327 = vpack.c.bf16 %v2314, %v2314
      %v2328 = vpack.c.bf16 %v2315, %v2315
      %v2329 = vpack.c.bf16 %v2316, %v2316
      %v2330 = vpack.c.bf16 %v2317, %v2317
      %v2331 = vpack.c.bf16 %v2318, %v2318
      %2332 = vst.msk [vmem:[#allocation2 + $0x8] sm:$0xf] %vm624, %v2319
      %2333 = vst.msk [vmem:[#allocation2 + $0xc] sm:$0xf] %vm624, %v2320
      %2334 = vst.msk [vmem:[#allocation2 + $0x10] sm:$0xf] %vm624, %v2321
      %2335 = vst.msk [vmem:[#allocation2 + $0x14] sm:$0xf] %vm624, %v2322
      %2336 = vst.msk [vmem:[#allocation2 + $0x18] sm:$0xf] %vm624, %v2323
      %2337 = vst.msk [vmem:[#allocation2 + $0x1c] sm:$0xf] %vm624, %v2324
      %2338 = vst.msk [vmem:[#allocation2 + $0x20] sm:$0xf] %vm624, %v2325
      %2339 = vst.msk [vmem:[#allocation2 + $0x24] sm:$0xf] %vm624, %v2326
      %2340 = vst.msk [vmem:[#allocation2 + $0x28] sm:$0xf] %vm624, %v2327
      %2341 = vst.msk [vmem:[#allocation2 + $0x2c] sm:$0xf] %vm624, %v2328
      %2342 = vst.msk [vmem:[#allocation2 + $0x30] sm:$0xf] %vm624, %v2329
      %2343 = vst.msk [vmem:[#allocation2 + $0x34] sm:$0xf] %vm624, %v2330
      %2344 = vst.msk [vmem:[#allocation2 + $0x38] sm:$0x3] %vm630, %v2331
      %v2345 = vld [vmem:[#allocation2] sm:$0xc]
      %v2346 = vld [vmem:[#allocation2 + $0x4] sm:$0xf]
      %v2347 = vld [vmem:[#allocation2 + $0x8] sm:$0xf]
      %v2348 = vld [vmem:[#allocation2 + $0xc] sm:$0xf]
      %v2349 = vld [vmem:[#allocation2 + $0x10] sm:$0xf]
      %v2350 = vld [vmem:[#allocation2 + $0x14] sm:$0xf]
      %v2351 = vld [vmem:[#allocation2 + $0x18] sm:$0xf]
      %v2352 = vld [vmem:[#allocation2 + $0x1c] sm:$0xf]
      %v2353 = vld [vmem:[#allocation2 + $0x20] sm:$0xf]
      %v2354 = vld [vmem:[#allocation2 + $0x24] sm:$0xf]
      %v2355 = vld [vmem:[#allocation2 + $0x28] sm:$0xf]
      %v2356 = vld [vmem:[#allocation2 + $0x2c] sm:$0xf]
      %v2357 = vld [vmem:[#allocation2 + $0x30] sm:$0xf]
      %v2358 = vld [vmem:[#allocation2 + $0x34] sm:$0x1]
      %v2359 = vld [vmem:[%s5] sm:$0xf]
      %v2360 = vld [vmem:[%s5 + $0x4] sm:$0xf]
      %v2361 = vld [vmem:[%s5 + $0x8] sm:$0xf]
      %v2362 = vld [vmem:[%s5 + $0xc] sm:$0xf]
      %v2363 = vld [vmem:[%s5 + $0x10] sm:$0xf]
      %v2364 = vld [vmem:[%s5 + $0x14] sm:$0xf]
      %v2365 = vld [vmem:[%s5 + $0x18] sm:$0xf]
      %v2366 = vld [vmem:[%s5 + $0x1c] sm:$0xf]
      %v2367 = vld [vmem:[%s6] sm:$0x1]
      %v2369 = vperm.slane %v2367, 0
      %v2385 = vunpack.c.l.b16 %v2345
      %v2386 = vunpack.c.l.b16 %v2346
      %v2387 = vunpack.c.l.b16 %v2347
      %v2388 = vunpack.c.l.b16 %v2348
      %v2389 = vunpack.c.l.b16 %v2349
      %v2390 = vunpack.c.l.b16 %v2350
      %v2391 = vunpack.c.l.b16 %v2351
      %v2392 = vunpack.c.l.b16 %v2352
      %v2393 = vunpack.c.l.b16 %v2353
      %v2394 = vunpack.c.l.b16 %v2354
      %v2395 = vunpack.c.l.b16 %v2355
      %v2396 = vunpack.c.l.b16 %v2356
      %v2397 = vunpack.c.l.b16 %v2357
      %v2398 = vunpack.c.l.b16 %v2358
      %v2399 = vpack.c.b16 %v2386, %v2385
      %v2400 = vpack.c.b16 %v2388, %v2387
      %v2401 = vpack.c.b16 %v2390, %v2389
      %v2402 = vpack.c.b16 %v2392, %v2391
      %v2403 = vpack.c.b16 %v2394, %v2393
      %v2404 = vpack.c.b16 %v2396, %v2395
      %v2405 = vpack.c.b16 %v2398, %v2397
      %v2407 = vshrl.u32 %v2399, 16
      %v2409 = vrot.slane %v2407, 2
      %v2410 = vshll.u32 %v2399, 16
      %v2412 = vrot.slane %v2410, 3
      %v2413 = vor.u32 %v2409, %v2412
      %v2415 = vshrl.u32 %v2400, 16
      %v2417 = vrot.slane %v2415, 2
      %v2418 = vshll.u32 %v2400, 16
      %v2420 = vrot.slane %v2418, 3
      %v2421 = vor.u32 %v2417, %v2420
      %v2422 = vsel %vm985, %v2413, %v2421
      %v2424 = vshrl.u32 %v2401, 16
      %v2426 = vrot.slane %v2424, 2
      %v2427 = vshll.u32 %v2401, 16
      %v2429 = vrot.slane %v2427, 3
      %v2430 = vor.u32 %v2426, %v2429
      %v2431 = vsel %vm985, %v2421, %v2430
      %v2433 = vshrl.u32 %v2402, 16
      %v2435 = vrot.slane %v2433, 2
      %v2436 = vshll.u32 %v2402, 16
      %v2438 = vrot.slane %v2436, 3
      %v2439 = vor.u32 %v2435, %v2438
      %v2440 = vsel %vm985, %v2430, %v2439
      %v2442 = vshrl.u32 %v2403, 16
      %v2444 = vrot.slane %v2442, 2
      %v2445 = vshll.u32 %v2403, 16
      %v2447 = vrot.slane %v2445, 3
      %v2448 = vor.u32 %v2444, %v2447
      %v2449 = vsel %vm985, %v2439, %v2448
      %v2451 = vshrl.u32 %v2404, 16
      %v2453 = vrot.slane %v2451, 2
      %v2454 = vshll.u32 %v2404, 16
      %v2456 = vrot.slane %v2454, 3
      %v2457 = vor.u32 %v2453, %v2456
      %v2458 = vsel %vm985, %v2448, %v2457
      %v2460 = vshrl.u32 %v2405, 16
      %v2462 = vrot.slane %v2460, 2
      %v2463 = vshll.u32 %v2405, 16
      %v2465 = vrot.slane %v2463, 3
      %v2466 = vor.u32 %v2462, %v2465
      %v2467 = vsel %vm985, %v2457, %v2466
      %v2476 = vunpack.c.l.b16 %v2359
      %v2477 = vunpack.c.l.b16 %v2360
      %v2478 = vunpack.c.l.b16 %v2361
      %v2479 = vunpack.c.l.b16 %v2362
      %v2480 = vunpack.c.l.b16 %v2363
      %v2481 = vunpack.c.l.b16 %v2364
      %v2482 = vunpack.c.l.b16 %v2365
      %v2483 = vunpack.c.l.b16 %v2366
      %v2484 = vpack.c.b16 %v2477, %v2476
      %v2485 = vpack.c.b16 %v2479, %v2478
      %v2486 = vpack.c.b16 %v2481, %v2480
      %v2487 = vpack.c.b16 %v2483, %v2482
      %v2493 = vsel %vm863, %v2422, 0
      %v2496 = vsel %vm863, %v2431, 0
      %v2499 = vsel %vm863, %v2440, 0
      %v2502 = vsel %vm863, %v2449, 0
      %v2505 = vsel %vm863, %v2458, 0
      %v2508 = vsel %vm863, %v2467, 0
      %v2511 = vsel %vm863, %v2466, 0
      %2513 = vmatpush.bf16.msra.mxu0 0
      %2514 = vmatpush.bf16.msra.mxu0 0
      %2515 = vmatpush.bf16.msra.mxu0 0
      %2516 = vmatpush.bf16.msra.mxu0 0
      %2517 = vmatpush.bf16.msra.mxu0 %v2487
      %2518 = vmatpush.bf16.msra.mxu0 %v2486
      %2519 = vmatpush.bf16.msra.mxu0 %v2485
      %2520 = vmatpush.bf16.msra.mxu0 %v2484
      %2521 = vmatmul.bf16.gmra.mxu0 %v2493
      %v2522 = vpop.f32.mrf.mxu0
      %v2523 = vadd.f32 %v2369, %v2522
      %v2524 = vpop.f32.mrf.mxu0
      %v2525 = vadd.f32 %v2369, %v2524
      %2526 = vmatmul.bf16.gmra.mxu0 %v2496
      %v2527 = vpop.f32.mrf.mxu0
      %v2528 = vadd.f32 %v2369, %v2527
      %v2529 = vpop.f32.mrf.mxu0
      %v2530 = vadd.f32 %v2369, %v2529
      %2531 = vmatmul.bf16.gmra.mxu0 %v2499
      %v2532 = vpop.f32.mrf.mxu0
      %v2533 = vadd.f32 %v2369, %v2532
      %v2534 = vpop.f32.mrf.mxu0
      %v2535 = vadd.f32 %v2369, %v2534
      %2536 = vmatmul.bf16.gmra.mxu0 %v2502
      %v2537 = vpop.f32.mrf.mxu0
      %v2538 = vadd.f32 %v2369, %v2537
      %v2539 = vpop.f32.mrf.mxu0
      %v2540 = vadd.f32 %v2369, %v2539
      %2541 = vmatmul.bf16.gmra.mxu0 %v2505
      %v2542 = vpop.f32.mrf.mxu0
      %v2543 = vadd.f32 %v2369, %v2542
      %v2544 = vpop.f32.mrf.mxu0
      %v2545 = vadd.f32 %v2369, %v2544
      %2546 = vmatmul.bf16.gmra.mxu0 %v2508
      %v2547 = vpop.f32.mrf.mxu0
      %v2548 = vadd.f32 %v2369, %v2547
      %v2549 = vpop.f32.mrf.mxu0
      %v2550 = vadd.f32 %v2369, %v2549
      %2551 = vmatmul.bf16.gmra.mxu0 %v2511
      %v2552 = vpop.f32.mrf.mxu0
      %v2553 = vadd.f32 %v2369, %v2552
      %v2554 = vpop.f32.mrf.mxu0
      %2555 = vdwg.mxu0
      %v2556 = vld [vmem:[#allocation2] sm:$0x8]
      %s2557 = scalar_lea.vmem %s5, 32
      %v2558 = vld [vmem:[%s2557] sm:$0xf]
      %v2559 = vld [vmem:[%s2557 + $0x4] sm:$0xf]
      %v2560 = vld [vmem:[%s2557 + $0x8] sm:$0xf]
      %v2561 = vld [vmem:[%s2557 + $0xc] sm:$0xf]
      %v2562 = vld [vmem:[%s2557 + $0x10] sm:$0xf]
      %v2563 = vld [vmem:[%s2557 + $0x14] sm:$0xf]
      %v2564 = vld [vmem:[%s2557 + $0x18] sm:$0xf]
      %v2565 = vld [vmem:[%s2557 + $0x1c] sm:$0xf]
      %v2567 = vunpack.c.l.b16 %v2556
      %v2568 = vpack.c.b16 %v2386, %v2567
      %v2569 = vrot.slane %v2568, 3
      %v2570 = vrot.slane %v2400, 3
      %v2571 = vsel %vm1133, %v2569, %v2570
      %v2572 = vrot.slane %v2401, 3
      %v2573 = vsel %vm1133, %v2570, %v2572
      %v2574 = vrot.slane %v2402, 3
      %v2575 = vsel %vm1133, %v2572, %v2574
      %v2576 = vrot.slane %v2403, 3
      %v2577 = vsel %vm1133, %v2574, %v2576
      %v2578 = vrot.slane %v2404, 3
      %v2579 = vsel %vm1133, %v2576, %v2578
      %v2580 = vrot.slane %v2405, 3
      %v2581 = vsel %vm1133, %v2578, %v2580
      %v2590 = vunpack.c.l.b16 %v2558
      %v2591 = vunpack.c.l.b16 %v2559
      %v2592 = vunpack.c.l.b16 %v2560
      %v2593 = vunpack.c.l.b16 %v2561
      %v2594 = vunpack.c.l.b16 %v2562
      %v2595 = vunpack.c.l.b16 %v2563
      %v2596 = vunpack.c.l.b16 %v2564
      %v2597 = vunpack.c.l.b16 %v2565
      %v2598 = vpack.c.b16 %v2591, %v2590
      %v2599 = vpack.c.b16 %v2593, %v2592
      %v2600 = vpack.c.b16 %v2595, %v2594
      %v2601 = vpack.c.b16 %v2597, %v2596
      %v2607 = vsel %vm863, %v2571, 0
      %v2610 = vsel %vm863, %v2573, 0
      %v2613 = vsel %vm863, %v2575, 0
      %v2616 = vsel %vm863, %v2577, 0
      %v2619 = vsel %vm863, %v2579, 0
      %v2622 = vsel %vm863, %v2581, 0
      %v2625 = vsel %vm863, %v2580, 0
      %2627 = vmatpush.bf16.msra.mxu0 0
      %2628 = vmatpush.bf16.msra.mxu0 0
      %2629 = vmatpush.bf16.msra.mxu0 0
      %2630 = vmatpush.bf16.msra.mxu0 0
      %2631 = vmatpush.bf16.msra.mxu0 %v2601
      %2632 = vmatpush.bf16.msra.mxu0 %v2600
      %2633 = vmatpush.bf16.msra.mxu0 %v2599
      %2634 = vmatpush.bf16.msra.mxu0 %v2598
      %2635 = vmatmul.bf16.gmra.mxu0 %v2607
      %v2636 = vpop.f32.mrf.mxu0
      %v2637 = vadd.f32 0.0, %v2636
      %v2638 = vpop.f32.mrf.mxu0
      %v2639 = vadd.f32 0.0, %v2638
      %2640 = vmatmul.bf16.gmra.mxu0 %v2610
      %v2641 = vpop.f32.mrf.mxu0
      %v2642 = vadd.f32 0.0, %v2641
      %v2643 = vpop.f32.mrf.mxu0
      %v2644 = vadd.f32 0.0, %v2643
      %2645 = vmatmul.bf16.gmra.mxu0 %v2613
      %v2646 = vpop.f32.mrf.mxu0
      %v2647 = vadd.f32 0.0, %v2646
      %v2648 = vpop.f32.mrf.mxu0
      %v2649 = vadd.f32 0.0, %v2648
      %2650 = vmatmul.bf16.gmra.mxu0 %v2616
      %v2651 = vpop.f32.mrf.mxu0
      %v2652 = vadd.f32 0.0, %v2651
      %v2653 = vpop.f32.mrf.mxu0
      %v2654 = vadd.f32 0.0, %v2653
      %2655 = vmatmul.bf16.gmra.mxu0 %v2619
      %v2656 = vpop.f32.mrf.mxu0
      %v2657 = vadd.f32 0.0, %v2656
      %v2658 = vpop.f32.mrf.mxu0
      %v2659 = vadd.f32 0.0, %v2658
      %2660 = vmatmul.bf16.gmra.mxu0 %v2622
      %v2661 = vpop.f32.mrf.mxu0
      %v2662 = vadd.f32 0.0, %v2661
      %v2663 = vpop.f32.mrf.mxu0
      %v2664 = vadd.f32 0.0, %v2663
      %2665 = vmatmul.bf16.gmra.mxu0 %v2625
      %v2666 = vpop.f32.mrf.mxu0
      %v2667 = vadd.f32 0.0, %v2666
      %v2668 = vpop.f32.mrf.mxu0
      %2669 = vdwg.mxu0
      %v2670 = vadd.f32 %v2523, %v2637
      %v2671 = vadd.f32 %v2525, %v2639
      %v2672 = vadd.f32 %v2528, %v2642
      %v2673 = vadd.f32 %v2530, %v2644
      %v2674 = vadd.f32 %v2533, %v2647
      %v2675 = vadd.f32 %v2535, %v2649
      %v2676 = vadd.f32 %v2538, %v2652
      %v2677 = vadd.f32 %v2540, %v2654
      %v2678 = vadd.f32 %v2543, %v2657
      %v2679 = vadd.f32 %v2545, %v2659
      %v2680 = vadd.f32 %v2548, %v2662
      %v2681 = vadd.f32 %v2550, %v2664
      %v2682 = vadd.f32 %v2553, %v2667
      %v2683 = vld [vmem:[#allocation2 + $0x34] sm:$0x3]
      %s2684 = scalar_lea.vmem %s5, 64
      %v2685 = vld [vmem:[%s2684] sm:$0xf]
      %v2686 = vld [vmem:[%s2684 + $0x4] sm:$0xf]
      %v2687 = vld [vmem:[%s2684 + $0x8] sm:$0xf]
      %v2688 = vld [vmem:[%s2684 + $0xc] sm:$0xf]
      %v2689 = vld [vmem:[%s2684 + $0x10] sm:$0xf]
      %v2690 = vld [vmem:[%s2684 + $0x14] sm:$0xf]
      %v2691 = vld [vmem:[%s2684 + $0x18] sm:$0xf]
      %v2692 = vld [vmem:[%s2684 + $0x1c] sm:$0xf]
      %v2694 = vunpack.c.l.b16 %v2683
      %v2695 = vpack.c.b16 %v2694, %v2397
      %v2697 = vshrl.u32 %v2568, 16
      %v2699 = vrot.slane %v2697, 3
      %v2700 = vshll.u32 %v2568, 16
      %v2702 = vrot.slane %v2700, 4
      %v2703 = vor.u32 %v2699, %v2702
      %v2704 = vrot.slane %v2415, 3
      %v2705 = vrot.slane %v2418, 4
      %v2706 = vor.u32 %v2704, %v2705
      %v2707 = vsel %vm1245, %v2703, %v2706
      %v2708 = vrot.slane %v2424, 3
      %v2709 = vrot.slane %v2427, 4
      %v2710 = vor.u32 %v2708, %v2709
      %v2711 = vsel %vm1245, %v2706, %v2710
      %v2712 = vrot.slane %v2433, 3
      %v2713 = vrot.slane %v2436, 4
      %v2714 = vor.u32 %v2712, %v2713
      %v2715 = vsel %vm1245, %v2710, %v2714
      %v2716 = vrot.slane %v2442, 3
      %v2717 = vrot.slane %v2445, 4
      %v2718 = vor.u32 %v2716, %v2717
      %v2719 = vsel %vm1245, %v2714, %v2718
      %v2720 = vrot.slane %v2451, 3
      %v2721 = vrot.slane %v2454, 4
      %v2722 = vor.u32 %v2720, %v2721
      %v2723 = vsel %vm1245, %v2718, %v2722
      %v2725 = vshrl.u32 %v2695, 16
      %v2727 = vrot.slane %v2725, 3
      %v2728 = vshll.u32 %v2695, 16
      %v2730 = vrot.slane %v2728, 4
      %v2731 = vor.u32 %v2727, %v2730
      %v2732 = vsel %vm1245, %v2722, %v2731
      %v2741 = vunpack.c.l.b16 %v2685
      %v2742 = vunpack.c.l.b16 %v2686
      %v2743 = vunpack.c.l.b16 %v2687
      %v2744 = vunpack.c.l.b16 %v2688
      %v2745 = vunpack.c.l.b16 %v2689
      %v2746 = vunpack.c.l.b16 %v2690
      %v2747 = vunpack.c.l.b16 %v2691
      %v2748 = vunpack.c.l.b16 %v2692
      %v2749 = vpack.c.b16 %v2742, %v2741
      %v2750 = vpack.c.b16 %v2744, %v2743
      %v2751 = vpack.c.b16 %v2746, %v2745
      %v2752 = vpack.c.b16 %v2748, %v2747
      %v2758 = vsel %vm863, %v2707, 0
      %v2761 = vsel %vm863, %v2711, 0
      %v2764 = vsel %vm863, %v2715, 0
      %v2767 = vsel %vm863, %v2719, 0
      %v2770 = vsel %vm863, %v2723, 0
      %v2773 = vsel %vm863, %v2732, 0
      %v2776 = vsel %vm863, %v2731, 0
      %2778 = vmatpush.bf16.msra.mxu0 0
      %2779 = vmatpush.bf16.msra.mxu0 0
      %2780 = vmatpush.bf16.msra.mxu0 0
      %2781 = vmatpush.bf16.msra.mxu0 0
      %2782 = vmatpush.bf16.msra.mxu0 %v2752
      %2783 = vmatpush.bf16.msra.mxu0 %v2751
      %2784 = vmatpush.bf16.msra.mxu0 %v2750
      %2785 = vmatpush.bf16.msra.mxu0 %v2749
      %2786 = vmatmul.bf16.gmra.mxu0 %v2758
      %v2787 = vpop.f32.mrf.mxu0
      %v2788 = vadd.f32 0.0, %v2787
      %v2789 = vpop.f32.mrf.mxu0
      %v2790 = vadd.f32 0.0, %v2789
      %2791 = vmatmul.bf16.gmra.mxu0 %v2761
      %v2792 = vpop.f32.mrf.mxu0
      %v2793 = vadd.f32 0.0, %v2792
      %v2794 = vpop.f32.mrf.mxu0
      %v2795 = vadd.f32 0.0, %v2794
      %2796 = vmatmul.bf16.gmra.mxu0 %v2764
      %v2797 = vpop.f32.mrf.mxu0
      %v2798 = vadd.f32 0.0, %v2797
      %v2799 = vpop.f32.mrf.mxu0
      %v2800 = vadd.f32 0.0, %v2799
      %2801 = vmatmul.bf16.gmra.mxu0 %v2767
      %v2802 = vpop.f32.mrf.mxu0
      %v2803 = vadd.f32 0.0, %v2802
      %v2804 = vpop.f32.mrf.mxu0
      %v2805 = vadd.f32 0.0, %v2804
      %2806 = vmatmul.bf16.gmra.mxu0 %v2770
      %v2807 = vpop.f32.mrf.mxu0
      %v2808 = vadd.f32 0.0, %v2807
      %v2809 = vpop.f32.mrf.mxu0
      %v2810 = vadd.f32 0.0, %v2809
      %2811 = vmatmul.bf16.gmra.mxu0 %v2773
      %v2812 = vpop.f32.mrf.mxu0
      %v2813 = vadd.f32 0.0, %v2812
      %v2814 = vpop.f32.mrf.mxu0
      %v2815 = vadd.f32 0.0, %v2814
      %2816 = vmatmul.bf16.gmra.mxu0 %v2776
      %v2817 = vpop.f32.mrf.mxu0
      %v2818 = vadd.f32 0.0, %v2817
      %v2819 = vpop.f32.mrf.mxu0
      %2820 = vdwg.mxu0
      %v2821 = vadd.f32 %v2670, %v2788
      %v2822 = vadd.f32 %v2671, %v2790
      %v2823 = vadd.f32 %v2672, %v2793
      %v2824 = vadd.f32 %v2673, %v2795
      %v2825 = vadd.f32 %v2674, %v2798
      %v2826 = vadd.f32 %v2675, %v2800
      %v2827 = vadd.f32 %v2676, %v2803
      %v2828 = vadd.f32 %v2677, %v2805
      %v2829 = vadd.f32 %v2678, %v2808
      %v2830 = vadd.f32 %v2679, %v2810
      %v2831 = vadd.f32 %v2680, %v2813
      %v2832 = vadd.f32 %v2681, %v2815
      %v2833 = vadd.f32 %v2682, %v2818
      %v2834 = vld [vmem:[#allocation2 + $0x4] sm:$0x8]
      %v2835 = vld [vmem:[#allocation2 + $0x8] sm:$0xf]
      %v2836 = vld [vmem:[#allocation2 + $0xc] sm:$0xf]
      %v2837 = vld [vmem:[#allocation2 + $0x10] sm:$0xf]
      %v2838 = vld [vmem:[#allocation2 + $0x14] sm:$0xf]
      %v2839 = vld [vmem:[#allocation2 + $0x18] sm:$0xf]
      %v2840 = vld [vmem:[#allocation2 + $0x1c] sm:$0xf]
      %v2841 = vld [vmem:[#allocation2 + $0x20] sm:$0xf]
      %v2842 = vld [vmem:[#allocation2 + $0x24] sm:$0xf]
      %v2843 = vld [vmem:[#allocation2 + $0x28] sm:$0xf]
      %v2844 = vld [vmem:[#allocation2 + $0x2c] sm:$0xf]
      %v2845 = vld [vmem:[#allocation2 + $0x30] sm:$0xf]
      %v2846 = vld [vmem:[#allocation2 + $0x34] sm:$0xf]
      %v2847 = vld [vmem:[#allocation2 + $0x38] sm:$0x3]
      %s2848 = scalar_lea.vmem %s5, 96
      %v2849 = vld [vmem:[%s2848] sm:$0xf]
      %v2850 = vld [vmem:[%s2848 + $0x4] sm:$0xf]
      %v2851 = vld [vmem:[%s2848 + $0x8] sm:$0xf]
      %v2852 = vld [vmem:[%s2848 + $0xc] sm:$0xf]
      %v2853 = vld [vmem:[%s2848 + $0x10] sm:$0xf]
      %v2854 = vld [vmem:[%s2848 + $0x14] sm:$0xf]
      %v2855 = vld [vmem:[%s2848 + $0x18] sm:$0xf]
      %v2856 = vld [vmem:[%s2848 + $0x1c] sm:$0xf]
      %v2871 = vunpack.c.l.b16 %v2834
      %v2872 = vunpack.c.l.b16 %v2835
      %v2873 = vunpack.c.l.b16 %v2836
      %v2874 = vunpack.c.l.b16 %v2837
      %v2875 = vunpack.c.l.b16 %v2838
      %v2876 = vunpack.c.l.b16 %v2839
      %v2877 = vunpack.c.l.b16 %v2840
      %v2878 = vunpack.c.l.b16 %v2841
      %v2879 = vunpack.c.l.b16 %v2842
      %v2880 = vunpack.c.l.b16 %v2843
      %v2881 = vunpack.c.l.b16 %v2844
      %v2882 = vunpack.c.l.b16 %v2845
      %v2883 = vunpack.c.l.b16 %v2846
      %v2884 = vunpack.c.l.b16 %v2847
      %v2885 = vpack.c.b16 %v2872, %v2871
      %v2886 = vpack.c.b16 %v2874, %v2873
      %v2887 = vpack.c.b16 %v2876, %v2875
      %v2888 = vpack.c.b16 %v2878, %v2877
      %v2889 = vpack.c.b16 %v2880, %v2879
      %v2890 = vpack.c.b16 %v2882, %v2881
      %v2891 = vpack.c.b16 %v2884, %v2883
      %v2893 = vshrl.u32 %v2885, 16
      %v2895 = vrot.slane %v2893, 3
      %v2896 = vshll.u32 %v2885, 16
      %v2898 = vrot.slane %v2896, 4
      %v2899 = vor.u32 %v2895, %v2898
      %v2901 = vshrl.u32 %v2886, 16
      %v2903 = vrot.slane %v2901, 3
      %v2904 = vshll.u32 %v2886, 16
      %v2906 = vrot.slane %v2904, 4
      %v2907 = vor.u32 %v2903, %v2906
      %v2908 = vsel %vm1245, %v2899, %v2907
      %v2910 = vshrl.u32 %v2887, 16
      %v2912 = vrot.slane %v2910, 3
      %v2913 = vshll.u32 %v2887, 16
      %v2915 = vrot.slane %v2913, 4
      %v2916 = vor.u32 %v2912, %v2915
      %v2917 = vsel %vm1245, %v2907, %v2916
      %v2919 = vshrl.u32 %v2888, 16
      %v2921 = vrot.slane %v2919, 3
      %v2922 = vshll.u32 %v2888, 16
      %v2924 = vrot.slane %v2922, 4
      %v2925 = vor.u32 %v2921, %v2924
      %v2926 = vsel %vm1245, %v2916, %v2925
      %v2928 = vshrl.u32 %v2889, 16
      %v2930 = vrot.slane %v2928, 3
      %v2931 = vshll.u32 %v2889, 16
      %v2933 = vrot.slane %v2931, 4
      %v2934 = vor.u32 %v2930, %v2933
      %v2935 = vsel %vm1245, %v2925, %v2934
      %v2937 = vshrl.u32 %v2890, 16
      %v2939 = vrot.slane %v2937, 3
      %v2940 = vshll.u32 %v2890, 16
      %v2942 = vrot.slane %v2940, 4
      %v2943 = vor.u32 %v2939, %v2942
      %v2944 = vsel %vm1245, %v2934, %v2943
      %v2946 = vshrl.u32 %v2891, 16
      %v2948 = vrot.slane %v2946, 3
      %v2949 = vshll.u32 %v2891, 16
      %v2951 = vrot.slane %v2949, 4
      %v2952 = vor.u32 %v2948, %v2951
      %v2953 = vsel %vm1245, %v2943, %v2952
      %v2962 = vunpack.c.l.b16 %v2849
      %v2963 = vunpack.c.l.b16 %v2850
      %v2964 = vunpack.c.l.b16 %v2851
      %v2965 = vunpack.c.l.b16 %v2852
      %v2966 = vunpack.c.l.b16 %v2853
      %v2967 = vunpack.c.l.b16 %v2854
      %v2968 = vunpack.c.l.b16 %v2855
      %v2969 = vunpack.c.l.b16 %v2856
      %v2970 = vpack.c.b16 %v2963, %v2962
      %v2971 = vpack.c.b16 %v2965, %v2964
      %v2972 = vpack.c.b16 %v2967, %v2966
      %v2973 = vpack.c.b16 %v2969, %v2968
      %v2979 = vsel %vm863, %v2908, 0
      %v2982 = vsel %vm863, %v2917, 0
      %v2985 = vsel %vm863, %v2926, 0
      %v2988 = vsel %vm863, %v2935, 0
      %v2991 = vsel %vm863, %v2944, 0
      %v2994 = vsel %vm863, %v2953, 0
      %v2997 = vsel %vm863, %v2952, 0
      %2999 = vmatpush.bf16.msra.mxu0 0
      %3000 = vmatpush.bf16.msra.mxu0 0
      %3001 = vmatpush.bf16.msra.mxu0 0
      %3002 = vmatpush.bf16.msra.mxu0 0
      %3003 = vmatpush.bf16.msra.mxu0 %v2973
      %3004 = vmatpush.bf16.msra.mxu0 %v2972
      %3005 = vmatpush.bf16.msra.mxu0 %v2971
      %3006 = vmatpush.bf16.msra.mxu0 %v2970
      %3007 = vmatmul.bf16.gmra.mxu0 %v2979
      %v3008 = vpop.f32.mrf.mxu0
      %v3009 = vadd.f32 0.0, %v3008
      %v3010 = vpop.f32.mrf.mxu0
      %v3011 = vadd.f32 0.0, %v3010
      %3012 = vmatmul.bf16.gmra.mxu0 %v2982
      %v3013 = vpop.f32.mrf.mxu0
      %v3014 = vadd.f32 0.0, %v3013
      %v3015 = vpop.f32.mrf.mxu0
      %v3016 = vadd.f32 0.0, %v3015
      %3017 = vmatmul.bf16.gmra.mxu0 %v2985
      %v3018 = vpop.f32.mrf.mxu0
      %v3019 = vadd.f32 0.0, %v3018
      %v3020 = vpop.f32.mrf.mxu0
      %v3021 = vadd.f32 0.0, %v3020
      %3022 = vmatmul.bf16.gmra.mxu0 %v2988
      %v3023 = vpop.f32.mrf.mxu0
      %v3024 = vadd.f32 0.0, %v3023
      %v3025 = vpop.f32.mrf.mxu0
      %v3026 = vadd.f32 0.0, %v3025
      %3027 = vmatmul.bf16.gmra.mxu0 %v2991
      %v3028 = vpop.f32.mrf.mxu0
      %v3029 = vadd.f32 0.0, %v3028
      %v3030 = vpop.f32.mrf.mxu0
      %v3031 = vadd.f32 0.0, %v3030
      %3032 = vmatmul.bf16.gmra.mxu0 %v2994
      %v3033 = vpop.f32.mrf.mxu0
      %v3034 = vadd.f32 0.0, %v3033
      %v3035 = vpop.f32.mrf.mxu0
      %v3036 = vadd.f32 0.0, %v3035
      %3037 = vmatmul.bf16.gmra.mxu0 %v2997
      %v3038 = vpop.f32.mrf.mxu0
      %v3039 = vadd.f32 0.0, %v3038
      %v3040 = vpop.f32.mrf.mxu0
      %3041 = vdwg.mxu0
      %v3042 = vadd.f32 %v2821, %v3009
      %v3043 = vadd.f32 %v2822, %v3011
      %v3044 = vadd.f32 %v2823, %v3014
      %v3045 = vadd.f32 %v2824, %v3016
      %v3046 = vadd.f32 %v2825, %v3019
      %v3047 = vadd.f32 %v2826, %v3021
      %v3048 = vadd.f32 %v2827, %v3024
      %v3049 = vadd.f32 %v2828, %v3026
      %v3050 = vadd.f32 %v2829, %v3029
      %v3051 = vadd.f32 %v2830, %v3031
      %v3052 = vadd.f32 %v2831, %v3034
      %v3053 = vadd.f32 %v2832, %v3036
      %v3054 = vadd.f32 %v2833, %v3039
      %s3055 = scalar_lea.vmem %s5, 128
      %v3056 = vld [vmem:[%s3055] sm:$0xf]
      %v3057 = vld [vmem:[%s3055 + $0x4] sm:$0xf]
      %v3058 = vld [vmem:[%s3055 + $0x8] sm:$0xf]
      %v3059 = vld [vmem:[%s3055 + $0xc] sm:$0xf]
      %v3060 = vld [vmem:[%s3055 + $0x10] sm:$0xf]
      %v3061 = vld [vmem:[%s3055 + $0x14] sm:$0xf]
      %v3062 = vld [vmem:[%s3055 + $0x18] sm:$0xf]
      %v3063 = vld [vmem:[%s3055 + $0x1c] sm:$0xf]
      %v3064 = vpack.c.b16 %v2873, %v2872
      %v3065 = vpack.c.b16 %v2875, %v2874
      %v3066 = vpack.c.b16 %v2877, %v2876
      %v3067 = vpack.c.b16 %v2879, %v2878
      %v3068 = vpack.c.b16 %v2881, %v2880
      %v3069 = vpack.c.b16 %v2883, %v2882
      %v3070 = vpack.c.b16 %v2884, %v2884
      %v3079 = vunpack.c.l.b16 %v3056
      %v3080 = vunpack.c.l.b16 %v3057
      %v3081 = vunpack.c.l.b16 %v3058
      %v3082 = vunpack.c.l.b16 %v3059
      %v3083 = vunpack.c.l.b16 %v3060
      %v3084 = vunpack.c.l.b16 %v3061
      %v3085 = vunpack.c.l.b16 %v3062
      %v3086 = vunpack.c.l.b16 %v3063
      %v3087 = vpack.c.b16 %v3080, %v3079
      %v3088 = vpack.c.b16 %v3082, %v3081
      %v3089 = vpack.c.b16 %v3084, %v3083
      %v3090 = vpack.c.b16 %v3086, %v3085
      %v3096 = vsel %vm863, %v3064, 0
      %v3099 = vsel %vm863, %v3065, 0
      %v3102 = vsel %vm863, %v3066, 0
      %v3105 = vsel %vm863, %v3067, 0
      %v3108 = vsel %vm863, %v3068, 0
      %v3111 = vsel %vm863, %v3069, 0
      %v3114 = vsel %vm863, %v3070, 0
      %3116 = vmatpush.bf16.msra.mxu0 0
      %3117 = vmatpush.bf16.msra.mxu0 0
      %3118 = vmatpush.bf16.msra.mxu0 0
      %3119 = vmatpush.bf16.msra.mxu0 0
      %3120 = vmatpush.bf16.msra.mxu0 %v3090
      %3121 = vmatpush.bf16.msra.mxu0 %v3089
      %3122 = vmatpush.bf16.msra.mxu0 %v3088
      %3123 = vmatpush.bf16.msra.mxu0 %v3087
      %3124 = vmatmul.bf16.gmra.mxu0 %v3096
      %v3125 = vpop.f32.mrf.mxu0
      %v3126 = vadd.f32 0.0, %v3125
      %v3127 = vpop.f32.mrf.mxu0
      %v3128 = vadd.f32 0.0, %v3127
      %3129 = vmatmul.bf16.gmra.mxu0 %v3099
      %v3130 = vpop.f32.mrf.mxu0
      %v3131 = vadd.f32 0.0, %v3130
      %v3132 = vpop.f32.mrf.mxu0
      %v3133 = vadd.f32 0.0, %v3132
      %3134 = vmatmul.bf16.gmra.mxu0 %v3102
      %v3135 = vpop.f32.mrf.mxu0
      %v3136 = vadd.f32 0.0, %v3135
      %v3137 = vpop.f32.mrf.mxu0
      %v3138 = vadd.f32 0.0, %v3137
      %3139 = vmatmul.bf16.gmra.mxu0 %v3105
      %v3140 = vpop.f32.mrf.mxu0
      %v3141 = vadd.f32 0.0, %v3140
      %v3142 = vpop.f32.mrf.mxu0
      %v3143 = vadd.f32 0.0, %v3142
      %3144 = vmatmul.bf16.gmra.mxu0 %v3108
      %v3145 = vpop.f32.mrf.mxu0
      %v3146 = vadd.f32 0.0, %v3145
      %v3147 = vpop.f32.mrf.mxu0
      %v3148 = vadd.f32 0.0, %v3147
      %3149 = vmatmul.bf16.gmra.mxu0 %v3111
      %v3150 = vpop.f32.mrf.mxu0
      %v3151 = vadd.f32 0.0, %v3150
      %v3152 = vpop.f32.mrf.mxu0
      %v3153 = vadd.f32 0.0, %v3152
      %3154 = vmatmul.bf16.gmra.mxu0 %v3114
      %v3155 = vpop.f32.mrf.mxu0
      %v3156 = vadd.f32 0.0, %v3155
      %v3157 = vpop.f32.mrf.mxu0
      %3158 = vdwg.mxu0
      %v3159 = vadd.f32 %v3042, %v3126
      %v3160 = vadd.f32 %v3043, %v3128
      %v3161 = vadd.f32 %v3044, %v3131
      %v3162 = vadd.f32 %v3045, %v3133
      %v3163 = vadd.f32 %v3046, %v3136
      %v3164 = vadd.f32 %v3047, %v3138
      %v3165 = vadd.f32 %v3048, %v3141
      %v3166 = vadd.f32 %v3049, %v3143
      %v3167 = vadd.f32 %v3050, %v3146
      %v3168 = vadd.f32 %v3051, %v3148
      %v3169 = vadd.f32 %v3052, %v3151
      %v3170 = vadd.f32 %v3053, %v3153
      %v3171 = vadd.f32 %v3054, %v3156
      %v3172 = vld [vmem:[#allocation2 + $0x38] sm:$0x7]
      %s3173 = scalar_lea.vmem %s5, 160
      %v3174 = vld [vmem:[%s3173] sm:$0xf]
      %v3175 = vld [vmem:[%s3173 + $0x4] sm:$0xf]
      %v3176 = vld [vmem:[%s3173 + $0x8] sm:$0xf]
      %v3177 = vld [vmem:[%s3173 + $0xc] sm:$0xf]
      %v3178 = vld [vmem:[%s3173 + $0x10] sm:$0xf]
      %v3179 = vld [vmem:[%s3173 + $0x14] sm:$0xf]
      %v3180 = vld [vmem:[%s3173 + $0x18] sm:$0xf]
      %v3181 = vld [vmem:[%s3173 + $0x1c] sm:$0xf]
      %v3183 = vunpack.c.l.b16 %v3172
      %v3184 = vpack.c.b16 %v3183, %v3183
      %v3185 = vshrl.u32 %v3064, 16
      %v3187 = vshll.u32 %v3064, 16
      %v3189 = vrot.slane %v3187, 1
      %v3190 = vor.u32 %v3185, %v3189
      %v3191 = vshll.u32 %v3065, 16
      %v3193 = vrot.slane %v3191, 1
      %v3194 = vsel %vm1620, %v3190, %v3193
      %v3195 = vshrl.u32 %v3065, 16
      %v3197 = vor.u32 %v3195, %v3193
      %v3198 = vshll.u32 %v3066, 16
      %v3200 = vrot.slane %v3198, 1
      %v3201 = vsel %vm1620, %v3197, %v3200
      %v3202 = vshrl.u32 %v3066, 16
      %v3204 = vor.u32 %v3202, %v3200
      %v3205 = vshll.u32 %v3067, 16
      %v3207 = vrot.slane %v3205, 1
      %v3208 = vsel %vm1620, %v3204, %v3207
      %v3209 = vshrl.u32 %v3067, 16
      %v3211 = vor.u32 %v3209, %v3207
      %v3212 = vshll.u32 %v3068, 16
      %v3214 = vrot.slane %v3212, 1
      %v3215 = vsel %vm1620, %v3211, %v3214
      %v3216 = vshrl.u32 %v3068, 16
      %v3218 = vor.u32 %v3216, %v3214
      %v3219 = vshll.u32 %v3069, 16
      %v3221 = vrot.slane %v3219, 1
      %v3222 = vsel %vm1620, %v3218, %v3221
      %v3223 = vshrl.u32 %v3069, 16
      %v3225 = vor.u32 %v3223, %v3221
      %v3227 = vshll.u32 %v3184, 16
      %v3229 = vrot.slane %v3227, 1
      %v3230 = vsel %vm1620, %v3225, %v3229
      %v3231 = vshrl.u32 %v3184, 16
      %v3233 = vor.u32 %v3231, %v3229
      %v3242 = vunpack.c.l.b16 %v3174
      %v3243 = vunpack.c.l.b16 %v3175
      %v3244 = vunpack.c.l.b16 %v3176
      %v3245 = vunpack.c.l.b16 %v3177
      %v3246 = vunpack.c.l.b16 %v3178
      %v3247 = vunpack.c.l.b16 %v3179
      %v3248 = vunpack.c.l.b16 %v3180
      %v3249 = vunpack.c.l.b16 %v3181
      %v3250 = vpack.c.b16 %v3243, %v3242
      %v3251 = vpack.c.b16 %v3245, %v3244
      %v3252 = vpack.c.b16 %v3247, %v3246
      %v3253 = vpack.c.b16 %v3249, %v3248
      %v3259 = vsel %vm863, %v3194, 0
      %v3262 = vsel %vm863, %v3201, 0
      %v3265 = vsel %vm863, %v3208, 0
      %v3268 = vsel %vm863, %v3215, 0
      %v3271 = vsel %vm863, %v3222, 0
      %v3274 = vsel %vm863, %v3230, 0
      %v3277 = vsel %vm863, %v3233, 0
      %3279 = vmatpush.bf16.msra.mxu0 0
      %3280 = vmatpush.bf16.msra.mxu0 0
      %3281 = vmatpush.bf16.msra.mxu0 0
      %3282 = vmatpush.bf16.msra.mxu0 0
      %3283 = vmatpush.bf16.msra.mxu0 %v3253
      %3284 = vmatpush.bf16.msra.mxu0 %v3252
      %3285 = vmatpush.bf16.msra.mxu0 %v3251
      %3286 = vmatpush.bf16.msra.mxu0 %v3250
      %3287 = vmatmul.bf16.gmra.mxu0 %v3259
      %v3288 = vpop.f32.mrf.mxu0
      %v3289 = vadd.f32 0.0, %v3288
      %v3290 = vpop.f32.mrf.mxu0
      %v3291 = vadd.f32 0.0, %v3290
      %3292 = vmatmul.bf16.gmra.mxu0 %v3262
      %v3293 = vpop.f32.mrf.mxu0
      %v3294 = vadd.f32 0.0, %v3293
      %v3295 = vpop.f32.mrf.mxu0
      %v3296 = vadd.f32 0.0, %v3295
      %3297 = vmatmul.bf16.gmra.mxu0 %v3265
      %v3298 = vpop.f32.mrf.mxu0
      %v3299 = vadd.f32 0.0, %v3298
      %v3300 = vpop.f32.mrf.mxu0
      %v3301 = vadd.f32 0.0, %v3300
      %3302 = vmatmul.bf16.gmra.mxu0 %v3268
      %v3303 = vpop.f32.mrf.mxu0
      %v3304 = vadd.f32 0.0, %v3303
      %v3305 = vpop.f32.mrf.mxu0
      %v3306 = vadd.f32 0.0, %v3305
      %3307 = vmatmul.bf16.gmra.mxu0 %v3271
      %v3308 = vpop.f32.mrf.mxu0
      %v3309 = vadd.f32 0.0, %v3308
      %v3310 = vpop.f32.mrf.mxu0
      %v3311 = vadd.f32 0.0, %v3310
      %3312 = vmatmul.bf16.gmra.mxu0 %v3274
      %v3313 = vpop.f32.mrf.mxu0
      %v3314 = vadd.f32 0.0, %v3313
      %v3315 = vpop.f32.mrf.mxu0
      %v3316 = vadd.f32 0.0, %v3315
      %3317 = vmatmul.bf16.gmra.mxu0 %v3277
      %v3318 = vpop.f32.mrf.mxu0
      %v3319 = vadd.f32 0.0, %v3318
      %v3320 = vpop.f32.mrf.mxu0
      %3321 = vdwg.mxu0
      %v3322 = vadd.f32 %v3159, %v3289
      %v3323 = vadd.f32 %v3160, %v3291
      %v3324 = vadd.f32 %v3161, %v3294
      %v3325 = vadd.f32 %v3162, %v3296
      %v3326 = vadd.f32 %v3163, %v3299
      %v3327 = vadd.f32 %v3164, %v3301
      %v3328 = vadd.f32 %v3165, %v3304
      %v3329 = vadd.f32 %v3166, %v3306
      %v3330 = vadd.f32 %v3167, %v3309
      %v3331 = vadd.f32 %v3168, %v3311
      %v3332 = vadd.f32 %v3169, %v3314
      %v3333 = vadd.f32 %v3170, %v3316
      %v3334 = vadd.f32 %v3171, %v3319
      %v3335 = vld [vmem:[#allocation2 + $0xc] sm:$0xf]
      %v3336 = vld [vmem:[#allocation2 + $0x10] sm:$0xf]
      %v3337 = vld [vmem:[#allocation2 + $0x14] sm:$0xf]
      %v3338 = vld [vmem:[#allocation2 + $0x18] sm:$0xf]
      %v3339 = vld [vmem:[#allocation2 + $0x1c] sm:$0xf]
      %v3340 = vld [vmem:[#allocation2 + $0x20] sm:$0xf]
      %v3341 = vld [vmem:[#allocation2 + $0x24] sm:$0xf]
      %v3342 = vld [vmem:[#allocation2 + $0x28] sm:$0xf]
      %v3343 = vld [vmem:[#allocation2 + $0x2c] sm:$0xf]
      %v3344 = vld [vmem:[#allocation2 + $0x30] sm:$0xf]
      %v3345 = vld [vmem:[#allocation2 + $0x34] sm:$0xf]
      %v3346 = vld [vmem:[#allocation2 + $0x38] sm:$0xf]
      %v3347 = vld [vmem:[#allocation2 + $0x3c] sm:$0x7]
      %s3348 = scalar_lea.vmem %s5, 192
      %v3349 = vld [vmem:[%s3348] sm:$0xf]
      %v3350 = vld [vmem:[%s3348 + $0x4] sm:$0xf]
      %v3351 = vld [vmem:[%s3348 + $0x8] sm:$0xf]
      %v3352 = vld [vmem:[%s3348 + $0xc] sm:$0xf]
      %v3353 = vld [vmem:[%s3348 + $0x10] sm:$0xf]
      %v3354 = vld [vmem:[%s3348 + $0x14] sm:$0xf]
      %v3355 = vld [vmem:[%s3348 + $0x18] sm:$0xf]
      %v3356 = vld [vmem:[%s3348 + $0x1c] sm:$0xf]
      %v3370 = vunpack.c.l.b16 %v3335
      %v3371 = vunpack.c.l.b16 %v3336
      %v3372 = vunpack.c.l.b16 %v3337
      %v3373 = vunpack.c.l.b16 %v3338
      %v3374 = vunpack.c.l.b16 %v3339
      %v3375 = vunpack.c.l.b16 %v3340
      %v3376 = vunpack.c.l.b16 %v3341
      %v3377 = vunpack.c.l.b16 %v3342
      %v3378 = vunpack.c.l.b16 %v3343
      %v3379 = vunpack.c.l.b16 %v3344
      %v3380 = vunpack.c.l.b16 %v3345
      %v3381 = vunpack.c.l.b16 %v3346
      %v3382 = vunpack.c.l.b16 %v3347
      %v3383 = vpack.c.b16 %v3371, %v3370
      %v3384 = vpack.c.b16 %v3373, %v3372
      %v3385 = vpack.c.b16 %v3375, %v3374
      %v3386 = vpack.c.b16 %v3377, %v3376
      %v3387 = vpack.c.b16 %v3379, %v3378
      %v3388 = vpack.c.b16 %v3381, %v3380
      %v3389 = vpack.c.b16 %v3382, %v3382
      %v3391 = vshrl.u32 %v3383, 16
      %v3393 = vshll.u32 %v3383, 16
      %v3395 = vrot.slane %v3393, 1
      %v3396 = vor.u32 %v3391, %v3395
      %v3398 = vshll.u32 %v3384, 16
      %v3400 = vrot.slane %v3398, 1
      %v3401 = vsel %vm1620, %v3396, %v3400
      %v3402 = vshrl.u32 %v3384, 16
      %v3404 = vor.u32 %v3402, %v3400
      %v3406 = vshll.u32 %v3385, 16
      %v3408 = vrot.slane %v3406, 1
      %v3409 = vsel %vm1620, %v3404, %v3408
      %v3410 = vshrl.u32 %v3385, 16
      %v3412 = vor.u32 %v3410, %v3408
      %v3414 = vshll.u32 %v3386, 16
      %v3416 = vrot.slane %v3414, 1
      %v3417 = vsel %vm1620, %v3412, %v3416
      %v3418 = vshrl.u32 %v3386, 16
      %v3420 = vor.u32 %v3418, %v3416
      %v3422 = vshll.u32 %v3387, 16
      %v3424 = vrot.slane %v3422, 1
      %v3425 = vsel %vm1620, %v3420, %v3424
      %v3426 = vshrl.u32 %v3387, 16
      %v3428 = vor.u32 %v3426, %v3424
      %v3430 = vshll.u32 %v3388, 16
      %v3432 = vrot.slane %v3430, 1
      %v3433 = vsel %vm1620, %v3428, %v3432
      %v3434 = vshrl.u32 %v3388, 16
      %v3436 = vor.u32 %v3434, %v3432
      %v3438 = vshll.u32 %v3389, 16
      %v3440 = vrot.slane %v3438, 1
      %v3441 = vsel %vm1620, %v3436, %v3440
      %v3442 = vshrl.u32 %v3389, 16
      %v3444 = vor.u32 %v3442, %v3440
      %v3453 = vunpack.c.l.b16 %v3349
      %v3454 = vunpack.c.l.b16 %v3350
      %v3455 = vunpack.c.l.b16 %v3351
      %v3456 = vunpack.c.l.b16 %v3352
      %v3457 = vunpack.c.l.b16 %v3353
      %v3458 = vunpack.c.l.b16 %v3354
      %v3459 = vunpack.c.l.b16 %v3355
      %v3460 = vunpack.c.l.b16 %v3356
      %v3461 = vpack.c.b16 %v3454, %v3453
      %v3462 = vpack.c.b16 %v3456, %v3455
      %v3463 = vpack.c.b16 %v3458, %v3457
      %v3464 = vpack.c.b16 %v3460, %v3459
      %v3470 = vsel %vm863, %v3401, 0
      %v3473 = vsel %vm863, %v3409, 0
      %v3476 = vsel %vm863, %v3417, 0
      %v3479 = vsel %vm863, %v3425, 0
      %v3482 = vsel %vm863, %v3433, 0
      %v3485 = vsel %vm863, %v3441, 0
      %v3488 = vsel %vm863, %v3444, 0
      %3490 = vmatpush.bf16.msra.mxu0 0
      %3491 = vmatpush.bf16.msra.mxu0 0
      %3492 = vmatpush.bf16.msra.mxu0 0
      %3493 = vmatpush.bf16.msra.mxu0 0
      %3494 = vmatpush.bf16.msra.mxu0 %v3464
      %3495 = vmatpush.bf16.msra.mxu0 %v3463
      %3496 = vmatpush.bf16.msra.mxu0 %v3462
      %3497 = vmatpush.bf16.msra.mxu0 %v3461
      %3498 = vmatmul.bf16.gmra.mxu0 %v3470
      %v3499 = vpop.f32.mrf.mxu0
      %v3500 = vadd.f32 0.0, %v3499
      %v3501 = vpop.f32.mrf.mxu0
      %v3502 = vadd.f32 0.0, %v3501
      %3503 = vmatmul.bf16.gmra.mxu0 %v3473
      %v3504 = vpop.f32.mrf.mxu0
      %v3505 = vadd.f32 0.0, %v3504
      %v3506 = vpop.f32.mrf.mxu0
      %v3507 = vadd.f32 0.0, %v3506
      %3508 = vmatmul.bf16.gmra.mxu0 %v3476
      %v3509 = vpop.f32.mrf.mxu0
      %v3510 = vadd.f32 0.0, %v3509
      %v3511 = vpop.f32.mrf.mxu0
      %v3512 = vadd.f32 0.0, %v3511
      %3513 = vmatmul.bf16.gmra.mxu0 %v3479
      %v3514 = vpop.f32.mrf.mxu0
      %v3515 = vadd.f32 0.0, %v3514
      %v3516 = vpop.f32.mrf.mxu0
      %v3517 = vadd.f32 0.0, %v3516
      %3518 = vmatmul.bf16.gmra.mxu0 %v3482
      %v3519 = vpop.f32.mrf.mxu0
      %v3520 = vadd.f32 0.0, %v3519
      %v3521 = vpop.f32.mrf.mxu0
      %v3522 = vadd.f32 0.0, %v3521
      %3523 = vmatmul.bf16.gmra.mxu0 %v3485
      %v3524 = vpop.f32.mrf.mxu0
      %v3525 = vadd.f32 0.0, %v3524
      %v3526 = vpop.f32.mrf.mxu0
      %v3527 = vadd.f32 0.0, %v3526
      %3528 = vmatmul.bf16.gmra.mxu0 %v3488
      %v3529 = vpop.f32.mrf.mxu0
      %v3530 = vadd.f32 0.0, %v3529
      %v3531 = vpop.f32.mrf.mxu0
      %3532 = vdwg.mxu0
      %v3533 = vadd.f32 %v3322, %v3500
      %v3534 = vadd.f32 %v3323, %v3502
      %v3535 = vadd.f32 %v3324, %v3505
      %v3536 = vadd.f32 %v3325, %v3507
      %v3537 = vadd.f32 %v3326, %v3510
      %v3538 = vadd.f32 %v3327, %v3512
      %v3539 = vadd.f32 %v3328, %v3515
      %v3540 = vadd.f32 %v3329, %v3517
      %v3541 = vadd.f32 %v3330, %v3520
      %v3542 = vadd.f32 %v3331, %v3522
      %v3543 = vadd.f32 %v3332, %v3525
      %v3544 = vadd.f32 %v3333, %v3527
      %v3545 = vadd.f32 %v3334, %v3530
      %v3546 = vld [vmem:[#allocation2 + $0xc] sm:$0xe]
      %s3547 = scalar_lea.vmem %s5, 224
      %v3548 = vld [vmem:[%s3547] sm:$0xf]
      %v3549 = vld [vmem:[%s3547 + $0x4] sm:$0xf]
      %v3550 = vld [vmem:[%s3547 + $0x8] sm:$0xf]
      %v3551 = vld [vmem:[%s3547 + $0xc] sm:$0xf]
      %v3552 = vld [vmem:[%s3547 + $0x10] sm:$0xf]
      %v3553 = vld [vmem:[%s3547 + $0x14] sm:$0xf]
      %v3554 = vld [vmem:[%s3547 + $0x18] sm:$0xf]
      %v3555 = vld [vmem:[%s3547 + $0x1c] sm:$0xf]
      %v3557 = vunpack.c.l.b16 %v3546
      %v3558 = vpack.c.b16 %v3371, %v3557
      %v3559 = vrot.slane %v3558, 1
      %v3560 = vrot.slane %v3384, 1
      %v3561 = vsel %vm1963, %v3559, %v3560
      %v3562 = vrot.slane %v3385, 1
      %v3563 = vsel %vm1963, %v3560, %v3562
      %v3564 = vrot.slane %v3386, 1
      %v3565 = vsel %vm1963, %v3562, %v3564
      %v3566 = vrot.slane %v3387, 1
      %v3567 = vsel %vm1963, %v3564, %v3566
      %v3568 = vrot.slane %v3388, 1
      %v3569 = vsel %vm1963, %v3566, %v3568
      %v3570 = vrot.slane %v3389, 1
      %v3571 = vsel %vm1963, %v3568, %v3570
      %v3580 = vunpack.c.l.b16 %v3548
      %v3581 = vunpack.c.l.b16 %v3549
      %v3582 = vunpack.c.l.b16 %v3550
      %v3583 = vunpack.c.l.b16 %v3551
      %v3584 = vunpack.c.l.b16 %v3552
      %v3585 = vunpack.c.l.b16 %v3553
      %v3586 = vunpack.c.l.b16 %v3554
      %v3587 = vunpack.c.l.b16 %v3555
      %v3588 = vpack.c.b16 %v3581, %v3580
      %v3589 = vpack.c.b16 %v3583, %v3582
      %v3590 = vpack.c.b16 %v3585, %v3584
      %v3591 = vpack.c.b16 %v3587, %v3586
      %v3597 = vsel %vm863, %v3561, 0
      %v3600 = vsel %vm863, %v3563, 0
      %v3603 = vsel %vm863, %v3565, 0
      %v3606 = vsel %vm863, %v3567, 0
      %v3609 = vsel %vm863, %v3569, 0
      %v3612 = vsel %vm863, %v3571, 0
      %v3615 = vsel %vm863, %v3570, 0
      %3617 = vmatpush.bf16.msra.mxu0 0
      %3618 = vmatpush.bf16.msra.mxu0 0
      %3619 = vmatpush.bf16.msra.mxu0 0
      %3620 = vmatpush.bf16.msra.mxu0 0
      %3621 = vmatpush.bf16.msra.mxu0 %v3591
      %3622 = vmatpush.bf16.msra.mxu0 %v3590
      %3623 = vmatpush.bf16.msra.mxu0 %v3589
      %3624 = vmatpush.bf16.msra.mxu0 %v3588
      %3625 = vmatmul.bf16.gmra.mxu0 %v3597
      %v3626 = vpop.f32.mrf.mxu0
      %v3627 = vadd.f32 0.0, %v3626
      %v3628 = vpop.f32.mrf.mxu0
      %v3629 = vadd.f32 0.0, %v3628
      %3630 = vmatmul.bf16.gmra.mxu0 %v3600
      %v3631 = vpop.f32.mrf.mxu0
      %v3632 = vadd.f32 0.0, %v3631
      %v3633 = vpop.f32.mrf.mxu0
      %v3634 = vadd.f32 0.0, %v3633
      %3635 = vmatmul.bf16.gmra.mxu0 %v3603
      %v3636 = vpop.f32.mrf.mxu0
      %v3637 = vadd.f32 0.0, %v3636
      %v3638 = vpop.f32.mrf.mxu0
      %v3639 = vadd.f32 0.0, %v3638
      %3640 = vmatmul.bf16.gmra.mxu0 %v3606
      %v3641 = vpop.f32.mrf.mxu0
      %v3642 = vadd.f32 0.0, %v3641
      %v3643 = vpop.f32.mrf.mxu0
      %v3644 = vadd.f32 0.0, %v3643
      %3645 = vmatmul.bf16.gmra.mxu0 %v3609
      %v3646 = vpop.f32.mrf.mxu0
      %v3647 = vadd.f32 0.0, %v3646
      %v3648 = vpop.f32.mrf.mxu0
      %v3649 = vadd.f32 0.0, %v3648
      %3650 = vmatmul.bf16.gmra.mxu0 %v3612
      %v3651 = vpop.f32.mrf.mxu0
      %v3652 = vadd.f32 0.0, %v3651
      %v3653 = vpop.f32.mrf.mxu0
      %v3654 = vadd.f32 0.0, %v3653
      %3655 = vmatmul.bf16.gmra.mxu0 %v3615
      %v3656 = vpop.f32.mrf.mxu0
      %v3657 = vadd.f32 0.0, %v3656
      %v3658 = vpop.f32.mrf.mxu0
      %3659 = vdwg.mxu0
      %v3660 = vadd.f32 %v3533, %v3627
      %v3661 = vadd.f32 %v3534, %v3629
      %v3662 = vadd.f32 %v3535, %v3632
      %v3663 = vadd.f32 %v3536, %v3634
      %v3664 = vadd.f32 %v3537, %v3637
      %v3665 = vadd.f32 %v3538, %v3639
      %v3666 = vadd.f32 %v3539, %v3642
      %v3667 = vadd.f32 %v3540, %v3644
      %v3668 = vadd.f32 %v3541, %v3647
      %v3669 = vadd.f32 %v3542, %v3649
      %v3670 = vadd.f32 %v3543, %v3652
      %v3671 = vadd.f32 %v3544, %v3654
      %v3672 = vadd.f32 %v3545, %v3657
      %v3673 = vld [vmem:[#allocation2 + $0x3c] sm:$0xf]
      %s3674 = scalar_lea.vmem %s5, 256
      %v3675 = vld [vmem:[%s3674] sm:$0xf]
      %v3676 = vld [vmem:[%s3674 + $0x4] sm:$0xf]
      %v3677 = vld [vmem:[%s3674 + $0x8] sm:$0xf]
      %v3678 = vld [vmem:[%s3674 + $0xc] sm:$0xf]
      %v3679 = vld [vmem:[%s3674 + $0x10] sm:$0xf]
      %v3680 = vld [vmem:[%s3674 + $0x14] sm:$0xf]
      %v3681 = vld [vmem:[%s3674 + $0x18] sm:$0xf]
      %v3682 = vld [vmem:[%s3674 + $0x1c] sm:$0xf]
      %v3684 = vunpack.c.l.b16 %v3673
      %v3685 = vpack.c.b16 %v3684, %v3684
      %v3687 = vshrl.u32 %v3558, 16
      %v3689 = vrot.slane %v3687, 1
      %v3690 = vshll.u32 %v3558, 16
      %v3692 = vrot.slane %v3690, 2
      %v3693 = vor.u32 %v3689, %v3692
      %v3694 = vrot.slane %v3402, 1
      %v3695 = vrot.slane %v3398, 2
      %v3696 = vor.u32 %v3694, %v3695
      %v3697 = vsel %vm2075, %v3693, %v3696
      %v3698 = vrot.slane %v3410, 1
      %v3699 = vrot.slane %v3406, 2
      %v3700 = vor.u32 %v3698, %v3699
      %v3701 = vsel %vm2075, %v3696, %v3700
      %v3702 = vrot.slane %v3418, 1
      %v3703 = vrot.slane %v3414, 2
      %v3704 = vor.u32 %v3702, %v3703
      %v3705 = vsel %vm2075, %v3700, %v3704
      %v3706 = vrot.slane %v3426, 1
      %v3707 = vrot.slane %v3422, 2
      %v3708 = vor.u32 %v3706, %v3707
      %v3709 = vsel %vm2075, %v3704, %v3708
      %v3710 = vrot.slane %v3434, 1
      %v3711 = vrot.slane %v3430, 2
      %v3712 = vor.u32 %v3710, %v3711
      %v3713 = vsel %vm2075, %v3708, %v3712
      %v3715 = vshrl.u32 %v3685, 16
      %v3717 = vrot.slane %v3715, 1
      %v3718 = vshll.u32 %v3685, 16
      %v3720 = vrot.slane %v3718, 2
      %v3721 = vor.u32 %v3717, %v3720
      %v3722 = vsel %vm2075, %v3712, %v3721
      %v3731 = vunpack.c.l.b16 %v3675
      %v3732 = vunpack.c.l.b16 %v3676
      %v3733 = vunpack.c.l.b16 %v3677
      %v3734 = vunpack.c.l.b16 %v3678
      %v3735 = vunpack.c.l.b16 %v3679
      %v3736 = vunpack.c.l.b16 %v3680
      %v3737 = vunpack.c.l.b16 %v3681
      %v3738 = vunpack.c.l.b16 %v3682
      %v3739 = vpack.c.b16 %v3732, %v3731
      %v3740 = vpack.c.b16 %v3734, %v3733
      %v3741 = vpack.c.b16 %v3736, %v3735
      %v3742 = vpack.c.b16 %v3738, %v3737
      %v3748 = vsel %vm863, %v3697, 0
      %v3751 = vsel %vm863, %v3701, 0
      %v3754 = vsel %vm863, %v3705, 0
      %v3757 = vsel %vm863, %v3709, 0
      %v3760 = vsel %vm863, %v3713, 0
      %v3763 = vsel %vm863, %v3722, 0
      %v3766 = vsel %vm863, %v3721, 0
      %3768 = vmatpush.bf16.msra.mxu0 0
      %3769 = vmatpush.bf16.msra.mxu0 0
      %3770 = vmatpush.bf16.msra.mxu0 0
      %3771 = vmatpush.bf16.msra.mxu0 0
      %3772 = vmatpush.bf16.msra.mxu0 %v3742
      %3773 = vmatpush.bf16.msra.mxu0 %v3741
      %3774 = vmatpush.bf16.msra.mxu0 %v3740
      %3775 = vmatpush.bf16.msra.mxu0 %v3739
      %3776 = vmatmul.bf16.gmra.mxu0 %v3748
      %v3777 = vpop.f32.mrf.mxu0
      %v3778 = vadd.f32 0.0, %v3777
      %v3779 = vpop.f32.mrf.mxu0
      %v3780 = vadd.f32 0.0, %v3779
      %3781 = vmatmul.bf16.gmra.mxu0 %v3751
      %v3782 = vpop.f32.mrf.mxu0
      %v3783 = vadd.f32 0.0, %v3782
      %v3784 = vpop.f32.mrf.mxu0
      %v3785 = vadd.f32 0.0, %v3784
      %3786 = vmatmul.bf16.gmra.mxu0 %v3754
      %v3787 = vpop.f32.mrf.mxu0
      %v3788 = vadd.f32 0.0, %v3787
      %v3789 = vpop.f32.mrf.mxu0
      %v3790 = vadd.f32 0.0, %v3789
      %3791 = vmatmul.bf16.gmra.mxu0 %v3757
      %v3792 = vpop.f32.mrf.mxu0
      %v3793 = vadd.f32 0.0, %v3792
      %v3794 = vpop.f32.mrf.mxu0
      %v3795 = vadd.f32 0.0, %v3794
      %3796 = vmatmul.bf16.gmra.mxu0 %v3760
      %v3797 = vpop.f32.mrf.mxu0
      %v3798 = vadd.f32 0.0, %v3797
      %v3799 = vpop.f32.mrf.mxu0
      %v3800 = vadd.f32 0.0, %v3799
      %3801 = vmatmul.bf16.gmra.mxu0 %v3763
      %v3802 = vpop.f32.mrf.mxu0
      %v3803 = vadd.f32 0.0, %v3802
      %v3804 = vpop.f32.mrf.mxu0
      %v3805 = vadd.f32 0.0, %v3804
      %3806 = vmatmul.bf16.gmra.mxu0 %v3766
      %v3807 = vpop.f32.mrf.mxu0
      %v3808 = vadd.f32 0.0, %v3807
      %v3809 = vpop.f32.mrf.mxu0
      %3810 = vdwg.mxu0
      %v3811 = vadd.f32 %v3660, %v3778
      %v3812 = vadd.f32 %v3661, %v3780
      %v3813 = vadd.f32 %v3662, %v3783
      %v3814 = vadd.f32 %v3663, %v3785
      %v3815 = vadd.f32 %v3664, %v3788
      %v3816 = vadd.f32 %v3665, %v3790
      %v3817 = vadd.f32 %v3666, %v3793
      %v3818 = vadd.f32 %v3667, %v3795
      %v3819 = vadd.f32 %v3668, %v3798
      %v3820 = vadd.f32 %v3669, %v3800
      %v3821 = vadd.f32 %v3670, %v3803
      %v3822 = vadd.f32 %v3671, %v3805
      %v3823 = vadd.f32 %v3672, %v3808
      %v3824 = vmul.f32 %v3811, %v2244
      %v3825 = vmul.f32 %v3812, %v2249
      %v3826 = vmul.f32 %v3813, %v2254
      %v3827 = vmul.f32 %v3814, %v2259
      %v3828 = vmul.f32 %v3815, %v2264
      %v3829 = vmul.f32 %v3816, %v2269
      %v3830 = vmul.f32 %v3817, %v2274
      %v3831 = vmul.f32 %v3818, %v2279
      %v3832 = vmul.f32 %v3819, %v2284
      %v3833 = vmul.f32 %v3820, %v2289
      %v3834 = vmul.f32 %v3821, %v2294
      %v3835 = vmul.f32 %v3822, %v2299
      %v3836 = vmul.f32 %v3823, %v2304
      %v3837 = vpack.c.bf16 %v3824, %v3824
      %v3838 = vpack.c.bf16 %v3825, %v3825
      %v3839 = vpack.c.bf16 %v3826, %v3826
      %v3840 = vpack.c.bf16 %v3827, %v3827
      %v3841 = vpack.c.bf16 %v3828, %v3828
      %v3842 = vpack.c.bf16 %v3829, %v3829
      %v3843 = vpack.c.bf16 %v3830, %v3830
      %v3844 = vpack.c.bf16 %v3831, %v3831
      %v3845 = vpack.c.bf16 %v3832, %v3832
      %v3846 = vpack.c.bf16 %v3833, %v3833
      %v3847 = vpack.c.bf16 %v3834, %v3834
      %v3848 = vpack.c.bf16 %v3835, %v3835
      %v3849 = vpack.c.bf16 %v3836, %v3836
      %v3850 = vld [vmem:[%s612 + $0x10] sm:$0xff]
      %v3851 = vld [vmem:[%s612 + $0x18] sm:$0xff]
      %v3852 = vld [vmem:[%s612 + $0x20] sm:$0xff]
      %v3853 = vld [vmem:[%s612 + $0x28] sm:$0xff]
      %v3854 = vld [vmem:[%s612 + $0x30] sm:$0xff]
      %v3855 = vld [vmem:[%s612 + $0x38] sm:$0xff]
      %v3856 = vld [vmem:[%s612 + $0x40] sm:$0xff]
      %v3857 = vld [vmem:[%s612 + $0x48] sm:$0xff]
      %v3858 = vld [vmem:[%s612 + $0x50] sm:$0xff]
      %v3859 = vld [vmem:[%s612 + $0x58] sm:$0xff]
      %v3860 = vld [vmem:[%s612 + $0x60] sm:$0xff]
      %v3861 = vld [vmem:[%s612 + $0x68] sm:$0xff]
      %v3862 = vld [vmem:[%s612 + $0x70] sm:$0xf]
      %v3863 = vpack.c.bf16 %v3850, %v3850
      %v3864 = vpack.c.bf16 %v3851, %v3851
      %v3865 = vpack.c.bf16 %v3852, %v3852
      %v3866 = vpack.c.bf16 %v3853, %v3853
      %v3867 = vpack.c.bf16 %v3854, %v3854
      %v3868 = vpack.c.bf16 %v3855, %v3855
      %v3869 = vpack.c.bf16 %v3856, %v3856
      %v3870 = vpack.c.bf16 %v3857, %v3857
      %v3871 = vpack.c.bf16 %v3858, %v3858
      %v3872 = vpack.c.bf16 %v3859, %v3859
      %v3873 = vpack.c.bf16 %v3860, %v3860
      %v3874 = vpack.c.bf16 %v3861, %v3861
      %v3875 = vpack.c.bf16 %v3862, %v3862
      %3876 = vst.msk [vmem:[#allocation3 + $0x8] sm:$0xf] %vm624, %v3863
      %3877 = vst.msk [vmem:[#allocation3 + $0xc] sm:$0xf] %vm624, %v3864
      %3878 = vst.msk [vmem:[#allocation3 + $0x10] sm:$0xf] %vm624, %v3865
      %3879 = vst.msk [vmem:[#allocation3 + $0x14] sm:$0xf] %vm624, %v3866
      %3880 = vst.msk [vmem:[#allocation3 + $0x18] sm:$0xf] %vm624, %v3867
      %3881 = vst.msk [vmem:[#allocation3 + $0x1c] sm:$0xf] %vm624, %v3868
      %3882 = vst.msk [vmem:[#allocation3 + $0x20] sm:$0xf] %vm624, %v3869
      %3883 = vst.msk [vmem:[#allocation3 + $0x24] sm:$0xf] %vm624, %v3870
      %3884 = vst.msk [vmem:[#allocation3 + $0x28] sm:$0xf] %vm624, %v3871
      %3885 = vst.msk [vmem:[#allocation3 + $0x2c] sm:$0xf] %vm624, %v3872
      %3886 = vst.msk [vmem:[#allocation3 + $0x30] sm:$0xf] %vm624, %v3873
      %3887 = vst.msk [vmem:[#allocation3 + $0x34] sm:$0xf] %vm624, %v3874
      %3888 = vst.msk [vmem:[#allocation3 + $0x38] sm:$0x3] %vm630, %v3875
      %3902 = vrot.lane.b32.xlu0 %v3837, 64
      %v3903 = vpop.permute.xlu0 %3902
      %3904 = vrot.lane.b32.xlu0 %v3838, 64
      %v3905 = vpop.permute.xlu0 %3904
      %3906 = vrot.lane.b32.xlu0 %v3839, 64
      %v3907 = vpop.permute.xlu0 %3906
      %3908 = vrot.lane.b32.xlu0 %v3840, 64
      %v3909 = vpop.permute.xlu0 %3908
      %3910 = vrot.lane.b32.xlu0 %v3841, 64
      %v3911 = vpop.permute.xlu0 %3910
      %3912 = vrot.lane.b32.xlu0 %v3842, 64
      %v3913 = vpop.permute.xlu0 %3912
      %3914 = vrot.lane.b32.xlu0 %v3843, 64
      %v3915 = vpop.permute.xlu0 %3914
      %3916 = vrot.lane.b32.xlu0 %v3844, 64
      %v3917 = vpop.permute.xlu0 %3916
      %3918 = vrot.lane.b32.xlu0 %v3845, 64
      %v3919 = vpop.permute.xlu0 %3918
      %3920 = vrot.lane.b32.xlu0 %v3846, 64
      %v3921 = vpop.permute.xlu0 %3920
      %3922 = vrot.lane.b32.xlu0 %v3847, 64
      %v3923 = vpop.permute.xlu0 %3922
      %3924 = vrot.lane.b32.xlu0 %v3848, 64
      %v3925 = vpop.permute.xlu0 %3924
      %3926 = vrot.lane.b32.xlu0 %v3849, 64
      %v3927 = vpop.permute.xlu0 %3926
      %vm3941 = vcmask 1043968
      %3942 = vst.msk [vmem:[#allocation3 + $0x8] sm:$0xf] %vm3941, %v3903
      %3943 = vst.msk [vmem:[#allocation3 + $0xc] sm:$0xf] %vm3941, %v3905
      %3944 = vst.msk [vmem:[#allocation3 + $0x10] sm:$0xf] %vm3941, %v3907
      %3945 = vst.msk [vmem:[#allocation3 + $0x14] sm:$0xf] %vm3941, %v3909
      %3946 = vst.msk [vmem:[#allocation3 + $0x18] sm:$0xf] %vm3941, %v3911
      %3947 = vst.msk [vmem:[#allocation3 + $0x1c] sm:$0xf] %vm3941, %v3913
      %3948 = vst.msk [vmem:[#allocation3 + $0x20] sm:$0xf] %vm3941, %v3915
      %3949 = vst.msk [vmem:[#allocation3 + $0x24] sm:$0xf] %vm3941, %v3917
      %3950 = vst.msk [vmem:[#allocation3 + $0x28] sm:$0xf] %vm3941, %v3919
      %3951 = vst.msk [vmem:[#allocation3 + $0x2c] sm:$0xf] %vm3941, %v3921
      %3952 = vst.msk [vmem:[#allocation3 + $0x30] sm:$0xf] %vm3941, %v3923
      %3953 = vst.msk [vmem:[#allocation3 + $0x34] sm:$0xf] %vm3941, %v3925
      %vm3954 = vcmask 1041920
      %3955 = vst.msk [vmem:[#allocation3 + $0x38] sm:$0x3] %vm3954, %v3927
      %v3956 = vld [vmem:[#allocation3] sm:$0xc]
      %v3957 = vld [vmem:[#allocation3 + $0x4] sm:$0xf]
      %v3958 = vld [vmem:[#allocation3 + $0x8] sm:$0xf]
      %v3959 = vld [vmem:[#allocation3 + $0xc] sm:$0xf]
      %v3960 = vld [vmem:[#allocation3 + $0x10] sm:$0xf]
      %v3961 = vld [vmem:[#allocation3 + $0x14] sm:$0xf]
      %v3962 = vld [vmem:[#allocation3 + $0x18] sm:$0xf]
      %v3963 = vld [vmem:[#allocation3 + $0x1c] sm:$0xf]
      %v3964 = vld [vmem:[#allocation3 + $0x20] sm:$0xf]
      %v3965 = vld [vmem:[#allocation3 + $0x24] sm:$0xf]
      %v3966 = vld [vmem:[#allocation3 + $0x28] sm:$0xf]
      %v3967 = vld [vmem:[#allocation3 + $0x2c] sm:$0xf]
      %v3968 = vld [vmem:[#allocation3 + $0x30] sm:$0xf]
      %v3969 = vld [vmem:[#allocation3 + $0x34] sm:$0x1]
      %v3970 = vld [vmem:[%s11] sm:$0xf]
      %v3971 = vld [vmem:[%s11 + $0x4] sm:$0xf]
      %v3972 = vld [vmem:[%s11 + $0x8] sm:$0xf]
      %v3973 = vld [vmem:[%s11 + $0xc] sm:$0xf]
      %v3974 = vld [vmem:[%s11 + $0x10] sm:$0xf]
      %v3975 = vld [vmem:[%s11 + $0x14] sm:$0xf]
      %v3976 = vld [vmem:[%s11 + $0x18] sm:$0xf]
      %v3977 = vld [vmem:[%s11 + $0x1c] sm:$0xf]
      %v3978 = vld [vmem:[%s11 + $0x20] sm:$0xf]
      %v3979 = vld [vmem:[%s11 + $0x24] sm:$0xf]
      %v3980 = vld [vmem:[%s11 + $0x28] sm:$0xf]
      %v3981 = vld [vmem:[%s11 + $0x2c] sm:$0xf]
      %v3982 = vld [vmem:[%s11 + $0x30] sm:$0xf]
      %v3983 = vld [vmem:[%s11 + $0x34] sm:$0xf]
      %v3984 = vld [vmem:[%s11 + $0x38] sm:$0xf]
      %v3985 = vld [vmem:[%s11 + $0x3c] sm:$0xf]
      %v3986 = vld [vmem:[%s12] sm:$0x1]
      %v3988 = vperm.slane %v3986, 0
      %v4004 = vunpack.c.l.b16 %v3956
      %v4005 = vunpack.c.l.b16 %v3957
      %v4006 = vunpack.c.l.b16 %v3958
      %v4007 = vunpack.c.l.b16 %v3959
      %v4008 = vunpack.c.l.b16 %v3960
      %v4009 = vunpack.c.l.b16 %v3961
      %v4010 = vunpack.c.l.b16 %v3962
      %v4011 = vunpack.c.l.b16 %v3963
      %v4012 = vunpack.c.l.b16 %v3964
      %v4013 = vunpack.c.l.b16 %v3965
      %v4014 = vunpack.c.l.b16 %v3966
      %v4015 = vunpack.c.l.b16 %v3967
      %v4016 = vunpack.c.l.b16 %v3968
      %v4017 = vunpack.c.l.b16 %v3969
      %v4018 = vpack.c.b16 %v4005, %v4004
      %v4019 = vpack.c.b16 %v4007, %v4006
      %v4020 = vpack.c.b16 %v4009, %v4008
      %v4021 = vpack.c.b16 %v4011, %v4010
      %v4022 = vpack.c.b16 %v4013, %v4012
      %v4023 = vpack.c.b16 %v4015, %v4014
      %v4024 = vpack.c.b16 %v4017, %v4016
      %v4026 = vshrl.u32 %v4018, 16
      %v4028 = vrot.slane %v4026, 2
      %v4029 = vshll.u32 %v4018, 16
      %v4031 = vrot.slane %v4029, 3
      %v4032 = vor.u32 %v4028, %v4031
      %v4034 = vshrl.u32 %v4019, 16
      %v4036 = vrot.slane %v4034, 2
      %v4037 = vshll.u32 %v4019, 16
      %v4039 = vrot.slane %v4037, 3
      %v4040 = vor.u32 %v4036, %v4039
      %v4041 = vsel %vm985, %v4032, %v4040
      %v4043 = vshrl.u32 %v4020, 16
      %v4045 = vrot.slane %v4043, 2
      %v4046 = vshll.u32 %v4020, 16
      %v4048 = vrot.slane %v4046, 3
      %v4049 = vor.u32 %v4045, %v4048
      %v4050 = vsel %vm985, %v4040, %v4049
      %v4052 = vshrl.u32 %v4021, 16
      %v4054 = vrot.slane %v4052, 2
      %v4055 = vshll.u32 %v4021, 16
      %v4057 = vrot.slane %v4055, 3
      %v4058 = vor.u32 %v4054, %v4057
      %v4059 = vsel %vm985, %v4049, %v4058
      %v4061 = vshrl.u32 %v4022, 16
      %v4063 = vrot.slane %v4061, 2
      %v4064 = vshll.u32 %v4022, 16
      %v4066 = vrot.slane %v4064, 3
      %v4067 = vor.u32 %v4063, %v4066
      %v4068 = vsel %vm985, %v4058, %v4067
      %v4070 = vshrl.u32 %v4023, 16
      %v4072 = vrot.slane %v4070, 2
      %v4073 = vshll.u32 %v4023, 16
      %v4075 = vrot.slane %v4073, 3
      %v4076 = vor.u32 %v4072, %v4075
      %v4077 = vsel %vm985, %v4067, %v4076
      %v4079 = vshrl.u32 %v4024, 16
      %v4081 = vrot.slane %v4079, 2
      %v4082 = vshll.u32 %v4024, 16
      %v4084 = vrot.slane %v4082, 3
      %v4085 = vor.u32 %v4081, %v4084
      %v4086 = vsel %vm985, %v4076, %v4085
      %v4110 = vunpack.c.l.b16 %v3970
      %v4111 = vunpack.c.l.b16 %v3971
      %v4112 = vunpack.c.l.b16 %v3972
      %v4113 = vunpack.c.l.b16 %v3973
      %v4114 = vunpack.c.l.b16 %v3974
      %v4115 = vunpack.c.l.b16 %v3975
      %v4116 = vunpack.c.l.b16 %v3976
      %v4117 = vunpack.c.l.b16 %v3977
      %v4118 = vunpack.c.l.b16 %v3978
      %v4119 = vunpack.c.l.b16 %v3979
      %v4120 = vunpack.c.l.b16 %v3980
      %v4121 = vunpack.c.l.b16 %v3981
      %v4122 = vunpack.c.l.b16 %v3982
      %v4123 = vunpack.c.l.b16 %v3983
      %v4124 = vunpack.c.l.b16 %v3984
      %v4125 = vunpack.c.l.b16 %v3985
      %v4126 = vpack.c.b16 %v4111, %v4110
      %v4127 = vpack.c.b16 %v4113, %v4112
      %v4128 = vpack.c.b16 %v4115, %v4114
      %v4129 = vpack.c.b16 %v4117, %v4116
      %v4130 = vpack.c.b16 %v4119, %v4118
      %v4131 = vpack.c.b16 %v4121, %v4120
      %v4132 = vpack.c.b16 %v4123, %v4122
      %v4133 = vpack.c.b16 %v4125, %v4124
      %4142 = vmatpush.bf16.msra.mxu0 %v4133
      %4143 = vmatpush.bf16.msra.mxu0 %v4132
      %4144 = vmatpush.bf16.msra.mxu0 %v4131
      %4145 = vmatpush.bf16.msra.mxu0 %v4130
      %4146 = vmatpush.bf16.msra.mxu0 %v4129
      %4147 = vmatpush.bf16.msra.mxu0 %v4128
      %4148 = vmatpush.bf16.msra.mxu0 %v4127
      %4149 = vmatpush.bf16.msra.mxu0 %v4126
      %4150 = vmatmul.bf16.gmra.mxu0 %v4041
      %v4151 = vpop.f32.mrf.mxu0
      %v4152 = vadd.f32 %v3988, %v4151
      %v4153 = vpop.f32.mrf.mxu0
      %v4154 = vadd.f32 %v3988, %v4153
      %4155 = vmatmul.bf16.gmra.mxu0 %v4050
      %v4156 = vpop.f32.mrf.mxu0
      %v4157 = vadd.f32 %v3988, %v4156
      %v4158 = vpop.f32.mrf.mxu0
      %v4159 = vadd.f32 %v3988, %v4158
      %4160 = vmatmul.bf16.gmra.mxu0 %v4059
      %v4161 = vpop.f32.mrf.mxu0
      %v4162 = vadd.f32 %v3988, %v4161
      %v4163 = vpop.f32.mrf.mxu0
      %v4164 = vadd.f32 %v3988, %v4163
      %4165 = vmatmul.bf16.gmra.mxu0 %v4068
      %v4166 = vpop.f32.mrf.mxu0
      %v4167 = vadd.f32 %v3988, %v4166
      %v4168 = vpop.f32.mrf.mxu0
      %v4169 = vadd.f32 %v3988, %v4168
      %4170 = vmatmul.bf16.gmra.mxu0 %v4077
      %v4171 = vpop.f32.mrf.mxu0
      %v4172 = vadd.f32 %v3988, %v4171
      %v4173 = vpop.f32.mrf.mxu0
      %v4174 = vadd.f32 %v3988, %v4173
      %4175 = vmatmul.bf16.gmra.mxu0 %v4086
      %v4176 = vpop.f32.mrf.mxu0
      %v4177 = vadd.f32 %v3988, %v4176
      %v4178 = vpop.f32.mrf.mxu0
      %v4179 = vadd.f32 %v3988, %v4178
      %4180 = vmatmul.bf16.gmra.mxu0 %v4085
      %v4181 = vpop.f32.mrf.mxu0
      %v4182 = vadd.f32 %v3988, %v4181
      %v4183 = vpop.f32.mrf.mxu0
      %4184 = vdwg.mxu0
      %v4185 = vld [vmem:[#allocation3] sm:$0x8]
      %s4186 = scalar_lea.vmem %s11, 64
      %v4187 = vld [vmem:[%s4186] sm:$0xf]
      %v4188 = vld [vmem:[%s4186 + $0x4] sm:$0xf]
      %v4189 = vld [vmem:[%s4186 + $0x8] sm:$0xf]
      %v4190 = vld [vmem:[%s4186 + $0xc] sm:$0xf]
      %v4191 = vld [vmem:[%s4186 + $0x10] sm:$0xf]
      %v4192 = vld [vmem:[%s4186 + $0x14] sm:$0xf]
      %v4193 = vld [vmem:[%s4186 + $0x18] sm:$0xf]
      %v4194 = vld [vmem:[%s4186 + $0x1c] sm:$0xf]
      %v4195 = vld [vmem:[%s4186 + $0x20] sm:$0xf]
      %v4196 = vld [vmem:[%s4186 + $0x24] sm:$0xf]
      %v4197 = vld [vmem:[%s4186 + $0x28] sm:$0xf]
      %v4198 = vld [vmem:[%s4186 + $0x2c] sm:$0xf]
      %v4199 = vld [vmem:[%s4186 + $0x30] sm:$0xf]
      %v4200 = vld [vmem:[%s4186 + $0x34] sm:$0xf]
      %v4201 = vld [vmem:[%s4186 + $0x38] sm:$0xf]
      %v4202 = vld [vmem:[%s4186 + $0x3c] sm:$0xf]
      %v4204 = vunpack.c.l.b16 %v4185
      %v4205 = vpack.c.b16 %v4005, %v4204
      %v4206 = vrot.slane %v4205, 3
      %v4207 = vrot.slane %v4019, 3
      %v4208 = vsel %vm1133, %v4206, %v4207
      %v4209 = vrot.slane %v4020, 3
      %v4210 = vsel %vm1133, %v4207, %v4209
      %v4211 = vrot.slane %v4021, 3
      %v4212 = vsel %vm1133, %v4209, %v4211
      %v4213 = vrot.slane %v4022, 3
      %v4214 = vsel %vm1133, %v4211, %v4213
      %v4215 = vrot.slane %v4023, 3
      %v4216 = vsel %vm1133, %v4213, %v4215
      %v4217 = vrot.slane %v4024, 3
      %v4218 = vsel %vm1133, %v4215, %v4217
      %v4242 = vunpack.c.l.b16 %v4187
      %v4243 = vunpack.c.l.b16 %v4188
      %v4244 = vunpack.c.l.b16 %v4189
      %v4245 = vunpack.c.l.b16 %v4190
      %v4246 = vunpack.c.l.b16 %v4191
      %v4247 = vunpack.c.l.b16 %v4192
      %v4248 = vunpack.c.l.b16 %v4193
      %v4249 = vunpack.c.l.b16 %v4194
      %v4250 = vunpack.c.l.b16 %v4195
      %v4251 = vunpack.c.l.b16 %v4196
      %v4252 = vunpack.c.l.b16 %v4197
      %v4253 = vunpack.c.l.b16 %v4198
      %v4254 = vunpack.c.l.b16 %v4199
      %v4255 = vunpack.c.l.b16 %v4200
      %v4256 = vunpack.c.l.b16 %v4201
      %v4257 = vunpack.c.l.b16 %v4202
      %v4258 = vpack.c.b16 %v4243, %v4242
      %v4259 = vpack.c.b16 %v4245, %v4244
      %v4260 = vpack.c.b16 %v4247, %v4246
      %v4261 = vpack.c.b16 %v4249, %v4248
      %v4262 = vpack.c.b16 %v4251, %v4250
      %v4263 = vpack.c.b16 %v4253, %v4252
      %v4264 = vpack.c.b16 %v4255, %v4254
      %v4265 = vpack.c.b16 %v4257, %v4256
      %4274 = vmatpush.bf16.msra.mxu0 %v4265
      %4275 = vmatpush.bf16.msra.mxu0 %v4264
      %4276 = vmatpush.bf16.msra.mxu0 %v4263
      %4277 = vmatpush.bf16.msra.mxu0 %v4262
      %4278 = vmatpush.bf16.msra.mxu0 %v4261
      %4279 = vmatpush.bf16.msra.mxu0 %v4260
      %4280 = vmatpush.bf16.msra.mxu0 %v4259
      %4281 = vmatpush.bf16.msra.mxu0 %v4258
      %4282 = vmatmul.bf16.gmra.mxu0 %v4208
      %v4283 = vpop.f32.mrf.mxu0
      %v4284 = vadd.f32 0.0, %v4283
      %v4285 = vpop.f32.mrf.mxu0
      %v4286 = vadd.f32 0.0, %v4285
      %4287 = vmatmul.bf16.gmra.mxu0 %v4210
      %v4288 = vpop.f32.mrf.mxu0
      %v4289 = vadd.f32 0.0, %v4288
      %v4290 = vpop.f32.mrf.mxu0
      %v4291 = vadd.f32 0.0, %v4290
      %4292 = vmatmul.bf16.gmra.mxu0 %v4212
      %v4293 = vpop.f32.mrf.mxu0
      %v4294 = vadd.f32 0.0, %v4293
      %v4295 = vpop.f32.mrf.mxu0
      %v4296 = vadd.f32 0.0, %v4295
      %4297 = vmatmul.bf16.gmra.mxu0 %v4214
      %v4298 = vpop.f32.mrf.mxu0
      %v4299 = vadd.f32 0.0, %v4298
      %v4300 = vpop.f32.mrf.mxu0
      %v4301 = vadd.f32 0.0, %v4300
      %4302 = vmatmul.bf16.gmra.mxu0 %v4216
      %v4303 = vpop.f32.mrf.mxu0
      %v4304 = vadd.f32 0.0, %v4303
      %v4305 = vpop.f32.mrf.mxu0
      %v4306 = vadd.f32 0.0, %v4305
      %4307 = vmatmul.bf16.gmra.mxu0 %v4218
      %v4308 = vpop.f32.mrf.mxu0
      %v4309 = vadd.f32 0.0, %v4308
      %v4310 = vpop.f32.mrf.mxu0
      %v4311 = vadd.f32 0.0, %v4310
      %4312 = vmatmul.bf16.gmra.mxu0 %v4217
      %v4313 = vpop.f32.mrf.mxu0
      %v4314 = vadd.f32 0.0, %v4313
      %v4315 = vpop.f32.mrf.mxu0
      %4316 = vdwg.mxu0
      %v4317 = vadd.f32 %v4152, %v4284
      %v4318 = vadd.f32 %v4154, %v4286
      %v4319 = vadd.f32 %v4157, %v4289
      %v4320 = vadd.f32 %v4159, %v4291
      %v4321 = vadd.f32 %v4162, %v4294
      %v4322 = vadd.f32 %v4164, %v4296
      %v4323 = vadd.f32 %v4167, %v4299
      %v4324 = vadd.f32 %v4169, %v4301
      %v4325 = vadd.f32 %v4172, %v4304
      %v4326 = vadd.f32 %v4174, %v4306
      %v4327 = vadd.f32 %v4177, %v4309
      %v4328 = vadd.f32 %v4179, %v4311
      %v4329 = vadd.f32 %v4182, %v4314
      %v4330 = vld [vmem:[#allocation3 + $0x34] sm:$0x3]
      %s4331 = scalar_lea.vmem %s11, 128
      %v4332 = vld [vmem:[%s4331] sm:$0xf]
      %v4333 = vld [vmem:[%s4331 + $0x4] sm:$0xf]
      %v4334 = vld [vmem:[%s4331 + $0x8] sm:$0xf]
      %v4335 = vld [vmem:[%s4331 + $0xc] sm:$0xf]
      %v4336 = vld [vmem:[%s4331 + $0x10] sm:$0xf]
      %v4337 = vld [vmem:[%s4331 + $0x14] sm:$0xf]
      %v4338 = vld [vmem:[%s4331 + $0x18] sm:$0xf]
      %v4339 = vld [vmem:[%s4331 + $0x1c] sm:$0xf]
      %v4340 = vld [vmem:[%s4331 + $0x20] sm:$0xf]
      %v4341 = vld [vmem:[%s4331 + $0x24] sm:$0xf]
      %v4342 = vld [vmem:[%s4331 + $0x28] sm:$0xf]
      %v4343 = vld [vmem:[%s4331 + $0x2c] sm:$0xf]
      %v4344 = vld [vmem:[%s4331 + $0x30] sm:$0xf]
      %v4345 = vld [vmem:[%s4331 + $0x34] sm:$0xf]
      %v4346 = vld [vmem:[%s4331 + $0x38] sm:$0xf]
      %v4347 = vld [vmem:[%s4331 + $0x3c] sm:$0xf]
      %v4349 = vunpack.c.l.b16 %v4330
      %v4350 = vpack.c.b16 %v4349, %v4016
      %v4352 = vshrl.u32 %v4205, 16
      %v4354 = vrot.slane %v4352, 3
      %v4355 = vshll.u32 %v4205, 16
      %v4357 = vrot.slane %v4355, 4
      %v4358 = vor.u32 %v4354, %v4357
      %v4359 = vrot.slane %v4034, 3
      %v4360 = vrot.slane %v4037, 4
      %v4361 = vor.u32 %v4359, %v4360
      %v4362 = vsel %vm1245, %v4358, %v4361
      %v4363 = vrot.slane %v4043, 3
      %v4364 = vrot.slane %v4046, 4
      %v4365 = vor.u32 %v4363, %v4364
      %v4366 = vsel %vm1245, %v4361, %v4365
      %v4367 = vrot.slane %v4052, 3
      %v4368 = vrot.slane %v4055, 4
      %v4369 = vor.u32 %v4367, %v4368
      %v4370 = vsel %vm1245, %v4365, %v4369
      %v4371 = vrot.slane %v4061, 3
      %v4372 = vrot.slane %v4064, 4
      %v4373 = vor.u32 %v4371, %v4372
      %v4374 = vsel %vm1245, %v4369, %v4373
      %v4375 = vrot.slane %v4070, 3
      %v4376 = vrot.slane %v4073, 4
      %v4377 = vor.u32 %v4375, %v4376
      %v4378 = vsel %vm1245, %v4373, %v4377
      %v4380 = vshrl.u32 %v4350, 16
      %v4382 = vrot.slane %v4380, 3
      %v4383 = vshll.u32 %v4350, 16
      %v4385 = vrot.slane %v4383, 4
      %v4386 = vor.u32 %v4382, %v4385
      %v4387 = vsel %vm1245, %v4377, %v4386
      %v4411 = vunpack.c.l.b16 %v4332
      %v4412 = vunpack.c.l.b16 %v4333
      %v4413 = vunpack.c.l.b16 %v4334
      %v4414 = vunpack.c.l.b16 %v4335
      %v4415 = vunpack.c.l.b16 %v4336
      %v4416 = vunpack.c.l.b16 %v4337
      %v4417 = vunpack.c.l.b16 %v4338
      %v4418 = vunpack.c.l.b16 %v4339
      %v4419 = vunpack.c.l.b16 %v4340
      %v4420 = vunpack.c.l.b16 %v4341
      %v4421 = vunpack.c.l.b16 %v4342
      %v4422 = vunpack.c.l.b16 %v4343
      %v4423 = vunpack.c.l.b16 %v4344
      %v4424 = vunpack.c.l.b16 %v4345
      %v4425 = vunpack.c.l.b16 %v4346
      %v4426 = vunpack.c.l.b16 %v4347
      %v4427 = vpack.c.b16 %v4412, %v4411
      %v4428 = vpack.c.b16 %v4414, %v4413
      %v4429 = vpack.c.b16 %v4416, %v4415
      %v4430 = vpack.c.b16 %v4418, %v4417
      %v4431 = vpack.c.b16 %v4420, %v4419
      %v4432 = vpack.c.b16 %v4422, %v4421
      %v4433 = vpack.c.b16 %v4424, %v4423
      %v4434 = vpack.c.b16 %v4426, %v4425
      %4443 = vmatpush.bf16.msra.mxu0 %v4434
      %4444 = vmatpush.bf16.msra.mxu0 %v4433
      %4445 = vmatpush.bf16.msra.mxu0 %v4432
      %4446 = vmatpush.bf16.msra.mxu0 %v4431
      %4447 = vmatpush.bf16.msra.mxu0 %v4430
      %4448 = vmatpush.bf16.msra.mxu0 %v4429
      %4449 = vmatpush.bf16.msra.mxu0 %v4428
      %4450 = vmatpush.bf16.msra.mxu0 %v4427
      %4451 = vmatmul.bf16.gmra.mxu0 %v4362
      %v4452 = vpop.f32.mrf.mxu0
      %v4453 = vadd.f32 0.0, %v4452
      %v4454 = vpop.f32.mrf.mxu0
      %v4455 = vadd.f32 0.0, %v4454
      %4456 = vmatmul.bf16.gmra.mxu0 %v4366
      %v4457 = vpop.f32.mrf.mxu0
      %v4458 = vadd.f32 0.0, %v4457
      %v4459 = vpop.f32.mrf.mxu0
      %v4460 = vadd.f32 0.0, %v4459
      %4461 = vmatmul.bf16.gmra.mxu0 %v4370
      %v4462 = vpop.f32.mrf.mxu0
      %v4463 = vadd.f32 0.0, %v4462
      %v4464 = vpop.f32.mrf.mxu0
      %v4465 = vadd.f32 0.0, %v4464
      %4466 = vmatmul.bf16.gmra.mxu0 %v4374
      %v4467 = vpop.f32.mrf.mxu0
      %v4468 = vadd.f32 0.0, %v4467
      %v4469 = vpop.f32.mrf.mxu0
      %v4470 = vadd.f32 0.0, %v4469
      %4471 = vmatmul.bf16.gmra.mxu0 %v4378
      %v4472 = vpop.f32.mrf.mxu0
      %v4473 = vadd.f32 0.0, %v4472
      %v4474 = vpop.f32.mrf.mxu0
      %v4475 = vadd.f32 0.0, %v4474
      %4476 = vmatmul.bf16.gmra.mxu0 %v4387
      %v4477 = vpop.f32.mrf.mxu0
      %v4478 = vadd.f32 0.0, %v4477
      %v4479 = vpop.f32.mrf.mxu0
      %v4480 = vadd.f32 0.0, %v4479
      %4481 = vmatmul.bf16.gmra.mxu0 %v4386
      %v4482 = vpop.f32.mrf.mxu0
      %v4483 = vadd.f32 0.0, %v4482
      %v4484 = vpop.f32.mrf.mxu0
      %4485 = vdwg.mxu0
      %v4486 = vadd.f32 %v4317, %v4453
      %v4487 = vadd.f32 %v4318, %v4455
      %v4488 = vadd.f32 %v4319, %v4458
      %v4489 = vadd.f32 %v4320, %v4460
      %v4490 = vadd.f32 %v4321, %v4463
      %v4491 = vadd.f32 %v4322, %v4465
      %v4492 = vadd.f32 %v4323, %v4468
      %v4493 = vadd.f32 %v4324, %v4470
      %v4494 = vadd.f32 %v4325, %v4473
      %v4495 = vadd.f32 %v4326, %v4475
      %v4496 = vadd.f32 %v4327, %v4478
      %v4497 = vadd.f32 %v4328, %v4480
      %v4498 = vadd.f32 %v4329, %v4483
      %v4499 = vld [vmem:[#allocation3 + $0x4] sm:$0x8]
      %v4500 = vld [vmem:[#allocation3 + $0x8] sm:$0xf]
      %v4501 = vld [vmem:[#allocation3 + $0xc] sm:$0xf]
      %v4502 = vld [vmem:[#allocation3 + $0x10] sm:$0xf]
      %v4503 = vld [vmem:[#allocation3 + $0x14] sm:$0xf]
      %v4504 = vld [vmem:[#allocation3 + $0x18] sm:$0xf]
      %v4505 = vld [vmem:[#allocation3 + $0x1c] sm:$0xf]
      %v4506 = vld [vmem:[#allocation3 + $0x20] sm:$0xf]
      %v4507 = vld [vmem:[#allocation3 + $0x24] sm:$0xf]
      %v4508 = vld [vmem:[#allocation3 + $0x28] sm:$0xf]
      %v4509 = vld [vmem:[#allocation3 + $0x2c] sm:$0xf]
      %v4510 = vld [vmem:[#allocation3 + $0x30] sm:$0xf]
      %v4511 = vld [vmem:[#allocation3 + $0x34] sm:$0xf]
      %v4512 = vld [vmem:[#allocation3 + $0x38] sm:$0x3]
      %s4513 = scalar_lea.vmem %s11, 192
      %v4514 = vld [vmem:[%s4513] sm:$0xf]
      %v4515 = vld [vmem:[%s4513 + $0x4] sm:$0xf]
      %v4516 = vld [vmem:[%s4513 + $0x8] sm:$0xf]
      %v4517 = vld [vmem:[%s4513 + $0xc] sm:$0xf]
      %v4518 = vld [vmem:[%s4513 + $0x10] sm:$0xf]
      %v4519 = vld [vmem:[%s4513 + $0x14] sm:$0xf]
      %v4520 = vld [vmem:[%s4513 + $0x18] sm:$0xf]
      %v4521 = vld [vmem:[%s4513 + $0x1c] sm:$0xf]
      %v4522 = vld [vmem:[%s4513 + $0x20] sm:$0xf]
      %v4523 = vld [vmem:[%s4513 + $0x24] sm:$0xf]
      %v4524 = vld [vmem:[%s4513 + $0x28] sm:$0xf]
      %v4525 = vld [vmem:[%s4513 + $0x2c] sm:$0xf]
      %v4526 = vld [vmem:[%s4513 + $0x30] sm:$0xf]
      %v4527 = vld [vmem:[%s4513 + $0x34] sm:$0xf]
      %v4528 = vld [vmem:[%s4513 + $0x38] sm:$0xf]
      %v4529 = vld [vmem:[%s4513 + $0x3c] sm:$0xf]
      %v4544 = vunpack.c.l.b16 %v4499
      %v4545 = vunpack.c.l.b16 %v4500
      %v4546 = vunpack.c.l.b16 %v4501
      %v4547 = vunpack.c.l.b16 %v4502
      %v4548 = vunpack.c.l.b16 %v4503
      %v4549 = vunpack.c.l.b16 %v4504
      %v4550 = vunpack.c.l.b16 %v4505
      %v4551 = vunpack.c.l.b16 %v4506
      %v4552 = vunpack.c.l.b16 %v4507
      %v4553 = vunpack.c.l.b16 %v4508
      %v4554 = vunpack.c.l.b16 %v4509
      %v4555 = vunpack.c.l.b16 %v4510
      %v4556 = vunpack.c.l.b16 %v4511
      %v4557 = vunpack.c.l.b16 %v4512
      %v4558 = vpack.c.b16 %v4545, %v4544
      %v4559 = vpack.c.b16 %v4547, %v4546
      %v4560 = vpack.c.b16 %v4549, %v4548
      %v4561 = vpack.c.b16 %v4551, %v4550
      %v4562 = vpack.c.b16 %v4553, %v4552
      %v4563 = vpack.c.b16 %v4555, %v4554
      %v4564 = vpack.c.b16 %v4557, %v4556
      %v4566 = vshrl.u32 %v4558, 16
      %v4568 = vrot.slane %v4566, 3
      %v4569 = vshll.u32 %v4558, 16
      %v4571 = vrot.slane %v4569, 4
      %v4572 = vor.u32 %v4568, %v4571
      %v4574 = vshrl.u32 %v4559, 16
      %v4576 = vrot.slane %v4574, 3
      %v4577 = vshll.u32 %v4559, 16
      %v4579 = vrot.slane %v4577, 4
      %v4580 = vor.u32 %v4576, %v4579
      %v4581 = vsel %vm1245, %v4572, %v4580
      %v4583 = vshrl.u32 %v4560, 16
      %v4585 = vrot.slane %v4583, 3
      %v4586 = vshll.u32 %v4560, 16
      %v4588 = vrot.slane %v4586, 4
      %v4589 = vor.u32 %v4585, %v4588
      %v4590 = vsel %vm1245, %v4580, %v4589
      %v4592 = vshrl.u32 %v4561, 16
      %v4594 = vrot.slane %v4592, 3
      %v4595 = vshll.u32 %v4561, 16
      %v4597 = vrot.slane %v4595, 4
      %v4598 = vor.u32 %v4594, %v4597
      %v4599 = vsel %vm1245, %v4589, %v4598
      %v4601 = vshrl.u32 %v4562, 16
      %v4603 = vrot.slane %v4601, 3
      %v4604 = vshll.u32 %v4562, 16
      %v4606 = vrot.slane %v4604, 4
      %v4607 = vor.u32 %v4603, %v4606
      %v4608 = vsel %vm1245, %v4598, %v4607
      %v4610 = vshrl.u32 %v4563, 16
      %v4612 = vrot.slane %v4610, 3
      %v4613 = vshll.u32 %v4563, 16
      %v4615 = vrot.slane %v4613, 4
      %v4616 = vor.u32 %v4612, %v4615
      %v4617 = vsel %vm1245, %v4607, %v4616
      %v4619 = vshrl.u32 %v4564, 16
      %v4621 = vrot.slane %v4619, 3
      %v4622 = vshll.u32 %v4564, 16
      %v4624 = vrot.slane %v4622, 4
      %v4625 = vor.u32 %v4621, %v4624
      %v4626 = vsel %vm1245, %v4616, %v4625
      %v4650 = vunpack.c.l.b16 %v4514
      %v4651 = vunpack.c.l.b16 %v4515
      %v4652 = vunpack.c.l.b16 %v4516
      %v4653 = vunpack.c.l.b16 %v4517
      %v4654 = vunpack.c.l.b16 %v4518
      %v4655 = vunpack.c.l.b16 %v4519
      %v4656 = vunpack.c.l.b16 %v4520
      %v4657 = vunpack.c.l.b16 %v4521
      %v4658 = vunpack.c.l.b16 %v4522
      %v4659 = vunpack.c.l.b16 %v4523
      %v4660 = vunpack.c.l.b16 %v4524
      %v4661 = vunpack.c.l.b16 %v4525
      %v4662 = vunpack.c.l.b16 %v4526
      %v4663 = vunpack.c.l.b16 %v4527
      %v4664 = vunpack.c.l.b16 %v4528
      %v4665 = vunpack.c.l.b16 %v4529
      %v4666 = vpack.c.b16 %v4651, %v4650
      %v4667 = vpack.c.b16 %v4653, %v4652
      %v4668 = vpack.c.b16 %v4655, %v4654
      %v4669 = vpack.c.b16 %v4657, %v4656
      %v4670 = vpack.c.b16 %v4659, %v4658
      %v4671 = vpack.c.b16 %v4661, %v4660
      %v4672 = vpack.c.b16 %v4663, %v4662
      %v4673 = vpack.c.b16 %v4665, %v4664
      %4682 = vmatpush.bf16.msra.mxu0 %v4673
      %4683 = vmatpush.bf16.msra.mxu0 %v4672
      %4684 = vmatpush.bf16.msra.mxu0 %v4671
      %4685 = vmatpush.bf16.msra.mxu0 %v4670
      %4686 = vmatpush.bf16.msra.mxu0 %v4669
      %4687 = vmatpush.bf16.msra.mxu0 %v4668
      %4688 = vmatpush.bf16.msra.mxu0 %v4667
      %4689 = vmatpush.bf16.msra.mxu0 %v4666
      %4690 = vmatmul.bf16.gmra.mxu0 %v4581
      %v4691 = vpop.f32.mrf.mxu0
      %v4692 = vadd.f32 0.0, %v4691
      %v4693 = vpop.f32.mrf.mxu0
      %v4694 = vadd.f32 0.0, %v4693
      %4695 = vmatmul.bf16.gmra.mxu0 %v4590
      %v4696 = vpop.f32.mrf.mxu0
      %v4697 = vadd.f32 0.0, %v4696
      %v4698 = vpop.f32.mrf.mxu0
      %v4699 = vadd.f32 0.0, %v4698
      %4700 = vmatmul.bf16.gmra.mxu0 %v4599
      %v4701 = vpop.f32.mrf.mxu0
      %v4702 = vadd.f32 0.0, %v4701
      %v4703 = vpop.f32.mrf.mxu0
      %v4704 = vadd.f32 0.0, %v4703
      %4705 = vmatmul.bf16.gmra.mxu0 %v4608
      %v4706 = vpop.f32.mrf.mxu0
      %v4707 = vadd.f32 0.0, %v4706
      %v4708 = vpop.f32.mrf.mxu0
      %v4709 = vadd.f32 0.0, %v4708
      %4710 = vmatmul.bf16.gmra.mxu0 %v4617
      %v4711 = vpop.f32.mrf.mxu0
      %v4712 = vadd.f32 0.0, %v4711
      %v4713 = vpop.f32.mrf.mxu0
      %v4714 = vadd.f32 0.0, %v4713
      %4715 = vmatmul.bf16.gmra.mxu0 %v4626
      %v4716 = vpop.f32.mrf.mxu0
      %v4717 = vadd.f32 0.0, %v4716
      %v4718 = vpop.f32.mrf.mxu0
      %v4719 = vadd.f32 0.0, %v4718
      %4720 = vmatmul.bf16.gmra.mxu0 %v4625
      %v4721 = vpop.f32.mrf.mxu0
      %v4722 = vadd.f32 0.0, %v4721
      %v4723 = vpop.f32.mrf.mxu0
      %4724 = vdwg.mxu0
      %v4725 = vadd.f32 %v4486, %v4692
      %v4726 = vadd.f32 %v4487, %v4694
      %v4727 = vadd.f32 %v4488, %v4697
      %v4728 = vadd.f32 %v4489, %v4699
      %v4729 = vadd.f32 %v4490, %v4702
      %v4730 = vadd.f32 %v4491, %v4704
      %v4731 = vadd.f32 %v4492, %v4707
      %v4732 = vadd.f32 %v4493, %v4709
      %v4733 = vadd.f32 %v4494, %v4712
      %v4734 = vadd.f32 %v4495, %v4714
      %v4735 = vadd.f32 %v4496, %v4717
      %v4736 = vadd.f32 %v4497, %v4719
      %v4737 = vadd.f32 %v4498, %v4722
      %s4738 = scalar_lea.vmem %s11, 256
      %v4739 = vld [vmem:[%s4738] sm:$0xf]
      %v4740 = vld [vmem:[%s4738 + $0x4] sm:$0xf]
      %v4741 = vld [vmem:[%s4738 + $0x8] sm:$0xf]
      %v4742 = vld [vmem:[%s4738 + $0xc] sm:$0xf]
      %v4743 = vld [vmem:[%s4738 + $0x10] sm:$0xf]
      %v4744 = vld [vmem:[%s4738 + $0x14] sm:$0xf]
      %v4745 = vld [vmem:[%s4738 + $0x18] sm:$0xf]
      %v4746 = vld [vmem:[%s4738 + $0x1c] sm:$0xf]
      %v4747 = vld [vmem:[%s4738 + $0x20] sm:$0xf]
      %v4748 = vld [vmem:[%s4738 + $0x24] sm:$0xf]
      %v4749 = vld [vmem:[%s4738 + $0x28] sm:$0xf]
      %v4750 = vld [vmem:[%s4738 + $0x2c] sm:$0xf]
      %v4751 = vld [vmem:[%s4738 + $0x30] sm:$0xf]
      %v4752 = vld [vmem:[%s4738 + $0x34] sm:$0xf]
      %v4753 = vld [vmem:[%s4738 + $0x38] sm:$0xf]
      %v4754 = vld [vmem:[%s4738 + $0x3c] sm:$0xf]
      %v4755 = vpack.c.b16 %v4546, %v4545
      %v4756 = vpack.c.b16 %v4548, %v4547
      %v4757 = vpack.c.b16 %v4550, %v4549
      %v4758 = vpack.c.b16 %v4552, %v4551
      %v4759 = vpack.c.b16 %v4554, %v4553
      %v4760 = vpack.c.b16 %v4556, %v4555
      %v4761 = vpack.c.b16 %v4557, %v4557
      %v4785 = vunpack.c.l.b16 %v4739
      %v4786 = vunpack.c.l.b16 %v4740
      %v4787 = vunpack.c.l.b16 %v4741
      %v4788 = vunpack.c.l.b16 %v4742
      %v4789 = vunpack.c.l.b16 %v4743
      %v4790 = vunpack.c.l.b16 %v4744
      %v4791 = vunpack.c.l.b16 %v4745
      %v4792 = vunpack.c.l.b16 %v4746
      %v4793 = vunpack.c.l.b16 %v4747
      %v4794 = vunpack.c.l.b16 %v4748
      %v4795 = vunpack.c.l.b16 %v4749
      %v4796 = vunpack.c.l.b16 %v4750
      %v4797 = vunpack.c.l.b16 %v4751
      %v4798 = vunpack.c.l.b16 %v4752
      %v4799 = vunpack.c.l.b16 %v4753
      %v4800 = vunpack.c.l.b16 %v4754
      %v4801 = vpack.c.b16 %v4786, %v4785
      %v4802 = vpack.c.b16 %v4788, %v4787
      %v4803 = vpack.c.b16 %v4790, %v4789
      %v4804 = vpack.c.b16 %v4792, %v4791
      %v4805 = vpack.c.b16 %v4794, %v4793
      %v4806 = vpack.c.b16 %v4796, %v4795
      %v4807 = vpack.c.b16 %v4798, %v4797
      %v4808 = vpack.c.b16 %v4800, %v4799
      %4817 = vmatpush.bf16.msra.mxu0 %v4808
      %4818 = vmatpush.bf16.msra.mxu0 %v4807
      %4819 = vmatpush.bf16.msra.mxu0 %v4806
      %4820 = vmatpush.bf16.msra.mxu0 %v4805
      %4821 = vmatpush.bf16.msra.mxu0 %v4804
      %4822 = vmatpush.bf16.msra.mxu0 %v4803
      %4823 = vmatpush.bf16.msra.mxu0 %v4802
      %4824 = vmatpush.bf16.msra.mxu0 %v4801
      %4825 = vmatmul.bf16.gmra.mxu0 %v4755
      %v4826 = vpop.f32.mrf.mxu0
      %v4827 = vadd.f32 0.0, %v4826
      %v4828 = vpop.f32.mrf.mxu0
      %v4829 = vadd.f32 0.0, %v4828
      %4830 = vmatmul.bf16.gmra.mxu0 %v4756
      %v4831 = vpop.f32.mrf.mxu0
      %v4832 = vadd.f32 0.0, %v4831
      %v4833 = vpop.f32.mrf.mxu0
      %v4834 = vadd.f32 0.0, %v4833
      %4835 = vmatmul.bf16.gmra.mxu0 %v4757
      %v4836 = vpop.f32.mrf.mxu0
      %v4837 = vadd.f32 0.0, %v4836
      %v4838 = vpop.f32.mrf.mxu0
      %v4839 = vadd.f32 0.0, %v4838
      %4840 = vmatmul.bf16.gmra.mxu0 %v4758
      %v4841 = vpop.f32.mrf.mxu0
      %v4842 = vadd.f32 0.0, %v4841
      %v4843 = vpop.f32.mrf.mxu0
      %v4844 = vadd.f32 0.0, %v4843
      %4845 = vmatmul.bf16.gmra.mxu0 %v4759
      %v4846 = vpop.f32.mrf.mxu0
      %v4847 = vadd.f32 0.0, %v4846
      %v4848 = vpop.f32.mrf.mxu0
      %v4849 = vadd.f32 0.0, %v4848
      %4850 = vmatmul.bf16.gmra.mxu0 %v4760
      %v4851 = vpop.f32.mrf.mxu0
      %v4852 = vadd.f32 0.0, %v4851
      %v4853 = vpop.f32.mrf.mxu0
      %v4854 = vadd.f32 0.0, %v4853
      %4855 = vmatmul.bf16.gmra.mxu0 %v4761
      %v4856 = vpop.f32.mrf.mxu0
      %v4857 = vadd.f32 0.0, %v4856
      %v4858 = vpop.f32.mrf.mxu0
      %4859 = vdwg.mxu0
      %v4860 = vadd.f32 %v4725, %v4827
      %v4861 = vadd.f32 %v4726, %v4829
      %v4862 = vadd.f32 %v4727, %v4832
      %v4863 = vadd.f32 %v4728, %v4834
      %v4864 = vadd.f32 %v4729, %v4837
      %v4865 = vadd.f32 %v4730, %v4839
      %v4866 = vadd.f32 %v4731, %v4842
      %v4867 = vadd.f32 %v4732, %v4844
      %v4868 = vadd.f32 %v4733, %v4847
      %v4869 = vadd.f32 %v4734, %v4849
      %v4870 = vadd.f32 %v4735, %v4852
      %v4871 = vadd.f32 %v4736, %v4854
      %v4872 = vadd.f32 %v4737, %v4857
      %v4873 = vld [vmem:[#allocation3 + $0x38] sm:$0x7]
      %s4874 = scalar_lea.vmem %s11, 320
      %v4875 = vld [vmem:[%s4874] sm:$0xf]
      %v4876 = vld [vmem:[%s4874 + $0x4] sm:$0xf]
      %v4877 = vld [vmem:[%s4874 + $0x8] sm:$0xf]
      %v4878 = vld [vmem:[%s4874 + $0xc] sm:$0xf]
      %v4879 = vld [vmem:[%s4874 + $0x10] sm:$0xf]
      %v4880 = vld [vmem:[%s4874 + $0x14] sm:$0xf]
      %v4881 = vld [vmem:[%s4874 + $0x18] sm:$0xf]
      %v4882 = vld [vmem:[%s4874 + $0x1c] sm:$0xf]
      %v4883 = vld [vmem:[%s4874 + $0x20] sm:$0xf]
      %v4884 = vld [vmem:[%s4874 + $0x24] sm:$0xf]
      %v4885 = vld [vmem:[%s4874 + $0x28] sm:$0xf]
      %v4886 = vld [vmem:[%s4874 + $0x2c] sm:$0xf]
      %v4887 = vld [vmem:[%s4874 + $0x30] sm:$0xf]
      %v4888 = vld [vmem:[%s4874 + $0x34] sm:$0xf]
      %v4889 = vld [vmem:[%s4874 + $0x38] sm:$0xf]
      %v4890 = vld [vmem:[%s4874 + $0x3c] sm:$0xf]
      %v4892 = vunpack.c.l.b16 %v4873
      %v4893 = vpack.c.b16 %v4892, %v4892
      %v4895 = vshrl.u32 %v4755, 16
      %v4897 = vshll.u32 %v4755, 16
      %v4899 = vrot.slane %v4897, 1
      %v4900 = vor.u32 %v4895, %v4899
      %v4902 = vshll.u32 %v4756, 16
      %v4904 = vrot.slane %v4902, 1
      %v4905 = vsel %vm1620, %v4900, %v4904
      %v4906 = vshrl.u32 %v4756, 16
      %v4908 = vor.u32 %v4906, %v4904
      %v4910 = vshll.u32 %v4757, 16
      %v4912 = vrot.slane %v4910, 1
      %v4913 = vsel %vm1620, %v4908, %v4912
      %v4914 = vshrl.u32 %v4757, 16
      %v4916 = vor.u32 %v4914, %v4912
      %v4918 = vshll.u32 %v4758, 16
      %v4920 = vrot.slane %v4918, 1
      %v4921 = vsel %vm1620, %v4916, %v4920
      %v4922 = vshrl.u32 %v4758, 16
      %v4924 = vor.u32 %v4922, %v4920
      %v4926 = vshll.u32 %v4759, 16
      %v4928 = vrot.slane %v4926, 1
      %v4929 = vsel %vm1620, %v4924, %v4928
      %v4930 = vshrl.u32 %v4759, 16
      %v4932 = vor.u32 %v4930, %v4928
      %v4934 = vshll.u32 %v4760, 16
      %v4936 = vrot.slane %v4934, 1
      %v4937 = vsel %vm1620, %v4932, %v4936
      %v4938 = vshrl.u32 %v4760, 16
      %v4940 = vor.u32 %v4938, %v4936
      %v4942 = vshll.u32 %v4893, 16
      %v4944 = vrot.slane %v4942, 1
      %v4945 = vsel %vm1620, %v4940, %v4944
      %v4946 = vshrl.u32 %v4893, 16
      %v4948 = vor.u32 %v4946, %v4944
      %v4972 = vunpack.c.l.b16 %v4875
      %v4973 = vunpack.c.l.b16 %v4876
      %v4974 = vunpack.c.l.b16 %v4877
      %v4975 = vunpack.c.l.b16 %v4878
      %v4976 = vunpack.c.l.b16 %v4879
      %v4977 = vunpack.c.l.b16 %v4880
      %v4978 = vunpack.c.l.b16 %v4881
      %v4979 = vunpack.c.l.b16 %v4882
      %v4980 = vunpack.c.l.b16 %v4883
      %v4981 = vunpack.c.l.b16 %v4884
      %v4982 = vunpack.c.l.b16 %v4885
      %v4983 = vunpack.c.l.b16 %v4886
      %v4984 = vunpack.c.l.b16 %v4887
      %v4985 = vunpack.c.l.b16 %v4888
      %v4986 = vunpack.c.l.b16 %v4889
      %v4987 = vunpack.c.l.b16 %v4890
      %v4988 = vpack.c.b16 %v4973, %v4972
      %v4989 = vpack.c.b16 %v4975, %v4974
      %v4990 = vpack.c.b16 %v4977, %v4976
      %v4991 = vpack.c.b16 %v4979, %v4978
      %v4992 = vpack.c.b16 %v4981, %v4980
      %v4993 = vpack.c.b16 %v4983, %v4982
      %v4994 = vpack.c.b16 %v4985, %v4984
      %v4995 = vpack.c.b16 %v4987, %v4986
      %5004 = vmatpush.bf16.msra.mxu0 %v4995
      %5005 = vmatpush.bf16.msra.mxu0 %v4994
      %5006 = vmatpush.bf16.msra.mxu0 %v4993
      %5007 = vmatpush.bf16.msra.mxu0 %v4992
      %5008 = vmatpush.bf16.msra.mxu0 %v4991
      %5009 = vmatpush.bf16.msra.mxu0 %v4990
      %5010 = vmatpush.bf16.msra.mxu0 %v4989
      %5011 = vmatpush.bf16.msra.mxu0 %v4988
      %5012 = vmatmul.bf16.gmra.mxu0 %v4905
      %v5013 = vpop.f32.mrf.mxu0
      %v5014 = vadd.f32 0.0, %v5013
      %v5015 = vpop.f32.mrf.mxu0
      %v5016 = vadd.f32 0.0, %v5015
      %5017 = vmatmul.bf16.gmra.mxu0 %v4913
      %v5018 = vpop.f32.mrf.mxu0
      %v5019 = vadd.f32 0.0, %v5018
      %v5020 = vpop.f32.mrf.mxu0
      %v5021 = vadd.f32 0.0, %v5020
      %5022 = vmatmul.bf16.gmra.mxu0 %v4921
      %v5023 = vpop.f32.mrf.mxu0
      %v5024 = vadd.f32 0.0, %v5023
      %v5025 = vpop.f32.mrf.mxu0
      %v5026 = vadd.f32 0.0, %v5025
      %5027 = vmatmul.bf16.gmra.mxu0 %v4929
      %v5028 = vpop.f32.mrf.mxu0
      %v5029 = vadd.f32 0.0, %v5028
      %v5030 = vpop.f32.mrf.mxu0
      %v5031 = vadd.f32 0.0, %v5030
      %5032 = vmatmul.bf16.gmra.mxu0 %v4937
      %v5033 = vpop.f32.mrf.mxu0
      %v5034 = vadd.f32 0.0, %v5033
      %v5035 = vpop.f32.mrf.mxu0
      %v5036 = vadd.f32 0.0, %v5035
      %5037 = vmatmul.bf16.gmra.mxu0 %v4945
      %v5038 = vpop.f32.mrf.mxu0
      %v5039 = vadd.f32 0.0, %v5038
      %v5040 = vpop.f32.mrf.mxu0
      %v5041 = vadd.f32 0.0, %v5040
      %5042 = vmatmul.bf16.gmra.mxu0 %v4948
      %v5043 = vpop.f32.mrf.mxu0
      %v5044 = vadd.f32 0.0, %v5043
      %v5045 = vpop.f32.mrf.mxu0
      %5046 = vdwg.mxu0
      %v5047 = vadd.f32 %v4860, %v5014
      %v5048 = vadd.f32 %v4861, %v5016
      %v5049 = vadd.f32 %v4862, %v5019
      %v5050 = vadd.f32 %v4863, %v5021
      %v5051 = vadd.f32 %v4864, %v5024
      %v5052 = vadd.f32 %v4865, %v5026
      %v5053 = vadd.f32 %v4866, %v5029
      %v5054 = vadd.f32 %v4867, %v5031
      %v5055 = vadd.f32 %v4868, %v5034
      %v5056 = vadd.f32 %v4869, %v5036
      %v5057 = vadd.f32 %v4870, %v5039
      %v5058 = vadd.f32 %v4871, %v5041
      %v5059 = vadd.f32 %v4872, %v5044
      %v5060 = vld [vmem:[#allocation3 + $0xc] sm:$0xf]
      %v5061 = vld [vmem:[#allocation3 + $0x10] sm:$0xf]
      %v5062 = vld [vmem:[#allocation3 + $0x14] sm:$0xf]
      %v5063 = vld [vmem:[#allocation3 + $0x18] sm:$0xf]
      %v5064 = vld [vmem:[#allocation3 + $0x1c] sm:$0xf]
      %v5065 = vld [vmem:[#allocation3 + $0x20] sm:$0xf]
      %v5066 = vld [vmem:[#allocation3 + $0x24] sm:$0xf]
      %v5067 = vld [vmem:[#allocation3 + $0x28] sm:$0xf]
      %v5068 = vld [vmem:[#allocation3 + $0x2c] sm:$0xf]
      %v5069 = vld [vmem:[#allocation3 + $0x30] sm:$0xf]
      %v5070 = vld [vmem:[#allocation3 + $0x34] sm:$0xf]
      %v5071 = vld [vmem:[#allocation3 + $0x38] sm:$0xf]
      %v5072 = vld [vmem:[#allocation3 + $0x3c] sm:$0x7]
      %s5073 = scalar_lea.vmem %s11, 384
      %v5074 = vld [vmem:[%s5073] sm:$0xf]
      %v5075 = vld [vmem:[%s5073 + $0x4] sm:$0xf]
      %v5076 = vld [vmem:[%s5073 + $0x8] sm:$0xf]
      %v5077 = vld [vmem:[%s5073 + $0xc] sm:$0xf]
      %v5078 = vld [vmem:[%s5073 + $0x10] sm:$0xf]
      %v5079 = vld [vmem:[%s5073 + $0x14] sm:$0xf]
      %v5080 = vld [vmem:[%s5073 + $0x18] sm:$0xf]
      %v5081 = vld [vmem:[%s5073 + $0x1c] sm:$0xf]
      %v5082 = vld [vmem:[%s5073 + $0x20] sm:$0xf]
      %v5083 = vld [vmem:[%s5073 + $0x24] sm:$0xf]
      %v5084 = vld [vmem:[%s5073 + $0x28] sm:$0xf]
      %v5085 = vld [vmem:[%s5073 + $0x2c] sm:$0xf]
      %v5086 = vld [vmem:[%s5073 + $0x30] sm:$0xf]
      %v5087 = vld [vmem:[%s5073 + $0x34] sm:$0xf]
      %v5088 = vld [vmem:[%s5073 + $0x38] sm:$0xf]
      %v5089 = vld [vmem:[%s5073 + $0x3c] sm:$0xf]
      %v5103 = vunpack.c.l.b16 %v5060
      %v5104 = vunpack.c.l.b16 %v5061
      %v5105 = vunpack.c.l.b16 %v5062
      %v5106 = vunpack.c.l.b16 %v5063
      %v5107 = vunpack.c.l.b16 %v5064
      %v5108 = vunpack.c.l.b16 %v5065
      %v5109 = vunpack.c.l.b16 %v5066
      %v5110 = vunpack.c.l.b16 %v5067
      %v5111 = vunpack.c.l.b16 %v5068
      %v5112 = vunpack.c.l.b16 %v5069
      %v5113 = vunpack.c.l.b16 %v5070
      %v5114 = vunpack.c.l.b16 %v5071
      %v5115 = vunpack.c.l.b16 %v5072
      %v5116 = vpack.c.b16 %v5104, %v5103
      %v5117 = vpack.c.b16 %v5106, %v5105
      %v5118 = vpack.c.b16 %v5108, %v5107
      %v5119 = vpack.c.b16 %v5110, %v5109
      %v5120 = vpack.c.b16 %v5112, %v5111
      %v5121 = vpack.c.b16 %v5114, %v5113
      %v5122 = vpack.c.b16 %v5115, %v5115
      %v5124 = vshrl.u32 %v5116, 16
      %v5126 = vshll.u32 %v5116, 16
      %v5128 = vrot.slane %v5126, 1
      %v5129 = vor.u32 %v5124, %v5128
      %v5131 = vshll.u32 %v5117, 16
      %v5133 = vrot.slane %v5131, 1
      %v5134 = vsel %vm1620, %v5129, %v5133
      %v5135 = vshrl.u32 %v5117, 16
      %v5137 = vor.u32 %v5135, %v5133
      %v5139 = vshll.u32 %v5118, 16
      %v5141 = vrot.slane %v5139, 1
      %v5142 = vsel %vm1620, %v5137, %v5141
      %v5143 = vshrl.u32 %v5118, 16
      %v5145 = vor.u32 %v5143, %v5141
      %v5147 = vshll.u32 %v5119, 16
      %v5149 = vrot.slane %v5147, 1
      %v5150 = vsel %vm1620, %v5145, %v5149
      %v5151 = vshrl.u32 %v5119, 16
      %v5153 = vor.u32 %v5151, %v5149
      %v5155 = vshll.u32 %v5120, 16
      %v5157 = vrot.slane %v5155, 1
      %v5158 = vsel %vm1620, %v5153, %v5157
      %v5159 = vshrl.u32 %v5120, 16
      %v5161 = vor.u32 %v5159, %v5157
      %v5163 = vshll.u32 %v5121, 16
      %v5165 = vrot.slane %v5163, 1
      %v5166 = vsel %vm1620, %v5161, %v5165
      %v5167 = vshrl.u32 %v5121, 16
      %v5169 = vor.u32 %v5167, %v5165
      %v5171 = vshll.u32 %v5122, 16
      %v5173 = vrot.slane %v5171, 1
      %v5174 = vsel %vm1620, %v5169, %v5173
      %v5175 = vshrl.u32 %v5122, 16
      %v5177 = vor.u32 %v5175, %v5173
      %v5201 = vunpack.c.l.b16 %v5074
      %v5202 = vunpack.c.l.b16 %v5075
      %v5203 = vunpack.c.l.b16 %v5076
      %v5204 = vunpack.c.l.b16 %v5077
      %v5205 = vunpack.c.l.b16 %v5078
      %v5206 = vunpack.c.l.b16 %v5079
      %v5207 = vunpack.c.l.b16 %v5080
      %v5208 = vunpack.c.l.b16 %v5081
      %v5209 = vunpack.c.l.b16 %v5082
      %v5210 = vunpack.c.l.b16 %v5083
      %v5211 = vunpack.c.l.b16 %v5084
      %v5212 = vunpack.c.l.b16 %v5085
      %v5213 = vunpack.c.l.b16 %v5086
      %v5214 = vunpack.c.l.b16 %v5087
      %v5215 = vunpack.c.l.b16 %v5088
      %v5216 = vunpack.c.l.b16 %v5089
      %v5217 = vpack.c.b16 %v5202, %v5201
      %v5218 = vpack.c.b16 %v5204, %v5203
      %v5219 = vpack.c.b16 %v5206, %v5205
      %v5220 = vpack.c.b16 %v5208, %v5207
      %v5221 = vpack.c.b16 %v5210, %v5209
      %v5222 = vpack.c.b16 %v5212, %v5211
      %v5223 = vpack.c.b16 %v5214, %v5213
      %v5224 = vpack.c.b16 %v5216, %v5215
      %5233 = vmatpush.bf16.msra.mxu0 %v5224
      %5234 = vmatpush.bf16.msra.mxu0 %v5223
      %5235 = vmatpush.bf16.msra.mxu0 %v5222
      %5236 = vmatpush.bf16.msra.mxu0 %v5221
      %5237 = vmatpush.bf16.msra.mxu0 %v5220
      %5238 = vmatpush.bf16.msra.mxu0 %v5219
      %5239 = vmatpush.bf16.msra.mxu0 %v5218
      %5240 = vmatpush.bf16.msra.mxu0 %v5217
      %5241 = vmatmul.bf16.gmra.mxu0 %v5134
      %v5242 = vpop.f32.mrf.mxu0
      %v5243 = vadd.f32 0.0, %v5242
      %v5244 = vpop.f32.mrf.mxu0
      %v5245 = vadd.f32 0.0, %v5244
      %5246 = vmatmul.bf16.gmra.mxu0 %v5142
      %v5247 = vpop.f32.mrf.mxu0
      %v5248 = vadd.f32 0.0, %v5247
      %v5249 = vpop.f32.mrf.mxu0
      %v5250 = vadd.f32 0.0, %v5249
      %5251 = vmatmul.bf16.gmra.mxu0 %v5150
      %v5252 = vpop.f32.mrf.mxu0
      %v5253 = vadd.f32 0.0, %v5252
      %v5254 = vpop.f32.mrf.mxu0
      %v5255 = vadd.f32 0.0, %v5254
      %5256 = vmatmul.bf16.gmra.mxu0 %v5158
      %v5257 = vpop.f32.mrf.mxu0
      %v5258 = vadd.f32 0.0, %v5257
      %v5259 = vpop.f32.mrf.mxu0
      %v5260 = vadd.f32 0.0, %v5259
      %5261 = vmatmul.bf16.gmra.mxu0 %v5166
      %v5262 = vpop.f32.mrf.mxu0
      %v5263 = vadd.f32 0.0, %v5262
      %v5264 = vpop.f32.mrf.mxu0
      %v5265 = vadd.f32 0.0, %v5264
      %5266 = vmatmul.bf16.gmra.mxu0 %v5174
      %v5267 = vpop.f32.mrf.mxu0
      %v5268 = vadd.f32 0.0, %v5267
      %v5269 = vpop.f32.mrf.mxu0
      %v5270 = vadd.f32 0.0, %v5269
      %5271 = vmatmul.bf16.gmra.mxu0 %v5177
      %v5272 = vpop.f32.mrf.mxu0
      %v5273 = vadd.f32 0.0, %v5272
      %v5274 = vpop.f32.mrf.mxu0
      %5275 = vdwg.mxu0
      %v5276 = vadd.f32 %v5047, %v5243
      %v5277 = vadd.f32 %v5048, %v5245
      %v5278 = vadd.f32 %v5049, %v5248
      %v5279 = vadd.f32 %v5050, %v5250
      %v5280 = vadd.f32 %v5051, %v5253
      %v5281 = vadd.f32 %v5052, %v5255
      %v5282 = vadd.f32 %v5053, %v5258
      %v5283 = vadd.f32 %v5054, %v5260
      %v5284 = vadd.f32 %v5055, %v5263
      %v5285 = vadd.f32 %v5056, %v5265
      %v5286 = vadd.f32 %v5057, %v5268
      %v5287 = vadd.f32 %v5058, %v5270
      %v5288 = vadd.f32 %v5059, %v5273
      %v5289 = vld [vmem:[#allocation3 + $0xc] sm:$0xe]
      %s5290 = scalar_lea.vmem %s11, 448
      %v5291 = vld [vmem:[%s5290] sm:$0xf]
      %v5292 = vld [vmem:[%s5290 + $0x4] sm:$0xf]
      %v5293 = vld [vmem:[%s5290 + $0x8] sm:$0xf]
      %v5294 = vld [vmem:[%s5290 + $0xc] sm:$0xf]
      %v5295 = vld [vmem:[%s5290 + $0x10] sm:$0xf]
      %v5296 = vld [vmem:[%s5290 + $0x14] sm:$0xf]
      %v5297 = vld [vmem:[%s5290 + $0x18] sm:$0xf]
      %v5298 = vld [vmem:[%s5290 + $0x1c] sm:$0xf]
      %v5299 = vld [vmem:[%s5290 + $0x20] sm:$0xf]
      %v5300 = vld [vmem:[%s5290 + $0x24] sm:$0xf]
      %v5301 = vld [vmem:[%s5290 + $0x28] sm:$0xf]
      %v5302 = vld [vmem:[%s5290 + $0x2c] sm:$0xf]
      %v5303 = vld [vmem:[%s5290 + $0x30] sm:$0xf]
      %v5304 = vld [vmem:[%s5290 + $0x34] sm:$0xf]
      %v5305 = vld [vmem:[%s5290 + $0x38] sm:$0xf]
      %v5306 = vld [vmem:[%s5290 + $0x3c] sm:$0xf]
      %v5308 = vunpack.c.l.b16 %v5289
      %v5309 = vpack.c.b16 %v5104, %v5308
      %v5310 = vrot.slane %v5309, 1
      %v5311 = vrot.slane %v5117, 1
      %v5312 = vsel %vm1963, %v5310, %v5311
      %v5313 = vrot.slane %v5118, 1
      %v5314 = vsel %vm1963, %v5311, %v5313
      %v5315 = vrot.slane %v5119, 1
      %v5316 = vsel %vm1963, %v5313, %v5315
      %v5317 = vrot.slane %v5120, 1
      %v5318 = vsel %vm1963, %v5315, %v5317
      %v5319 = vrot.slane %v5121, 1
      %v5320 = vsel %vm1963, %v5317, %v5319
      %v5321 = vrot.slane %v5122, 1
      %v5322 = vsel %vm1963, %v5319, %v5321
      %v5346 = vunpack.c.l.b16 %v5291
      %v5347 = vunpack.c.l.b16 %v5292
      %v5348 = vunpack.c.l.b16 %v5293
      %v5349 = vunpack.c.l.b16 %v5294
      %v5350 = vunpack.c.l.b16 %v5295
      %v5351 = vunpack.c.l.b16 %v5296
      %v5352 = vunpack.c.l.b16 %v5297
      %v5353 = vunpack.c.l.b16 %v5298
      %v5354 = vunpack.c.l.b16 %v5299
      %v5355 = vunpack.c.l.b16 %v5300
      %v5356 = vunpack.c.l.b16 %v5301
      %v5357 = vunpack.c.l.b16 %v5302
      %v5358 = vunpack.c.l.b16 %v5303
      %v5359 = vunpack.c.l.b16 %v5304
      %v5360 = vunpack.c.l.b16 %v5305
      %v5361 = vunpack.c.l.b16 %v5306
      %v5362 = vpack.c.b16 %v5347, %v5346
      %v5363 = vpack.c.b16 %v5349, %v5348
      %v5364 = vpack.c.b16 %v5351, %v5350
      %v5365 = vpack.c.b16 %v5353, %v5352
      %v5366 = vpack.c.b16 %v5355, %v5354
      %v5367 = vpack.c.b16 %v5357, %v5356
      %v5368 = vpack.c.b16 %v5359, %v5358
      %v5369 = vpack.c.b16 %v5361, %v5360
      %5378 = vmatpush.bf16.msra.mxu0 %v5369
      %5379 = vmatpush.bf16.msra.mxu0 %v5368
      %5380 = vmatpush.bf16.msra.mxu0 %v5367
      %5381 = vmatpush.bf16.msra.mxu0 %v5366
      %5382 = vmatpush.bf16.msra.mxu0 %v5365
      %5383 = vmatpush.bf16.msra.mxu0 %v5364
      %5384 = vmatpush.bf16.msra.mxu0 %v5363
      %5385 = vmatpush.bf16.msra.mxu0 %v5362
      %5386 = vmatmul.bf16.gmra.mxu0 %v5312
      %v5387 = vpop.f32.mrf.mxu0
      %v5388 = vadd.f32 0.0, %v5387
      %v5389 = vpop.f32.mrf.mxu0
      %v5390 = vadd.f32 0.0, %v5389
      %5391 = vmatmul.bf16.gmra.mxu0 %v5314
      %v5392 = vpop.f32.mrf.mxu0
      %v5393 = vadd.f32 0.0, %v5392
      %v5394 = vpop.f32.mrf.mxu0
      %v5395 = vadd.f32 0.0, %v5394
      %5396 = vmatmul.bf16.gmra.mxu0 %v5316
      %v5397 = vpop.f32.mrf.mxu0
      %v5398 = vadd.f32 0.0, %v5397
      %v5399 = vpop.f32.mrf.mxu0
      %v5400 = vadd.f32 0.0, %v5399
      %5401 = vmatmul.bf16.gmra.mxu0 %v5318
      %v5402 = vpop.f32.mrf.mxu0
      %v5403 = vadd.f32 0.0, %v5402
      %v5404 = vpop.f32.mrf.mxu0
      %v5405 = vadd.f32 0.0, %v5404
      %5406 = vmatmul.bf16.gmra.mxu0 %v5320
      %v5407 = vpop.f32.mrf.mxu0
      %v5408 = vadd.f32 0.0, %v5407
      %v5409 = vpop.f32.mrf.mxu0
      %v5410 = vadd.f32 0.0, %v5409
      %5411 = vmatmul.bf16.gmra.mxu0 %v5322
      %v5412 = vpop.f32.mrf.mxu0
      %v5413 = vadd.f32 0.0, %v5412
      %v5414 = vpop.f32.mrf.mxu0
      %v5415 = vadd.f32 0.0, %v5414
      %5416 = vmatmul.bf16.gmra.mxu0 %v5321
      %v5417 = vpop.f32.mrf.mxu0
      %v5418 = vadd.f32 0.0, %v5417
      %v5419 = vpop.f32.mrf.mxu0
      %5420 = vdwg.mxu0
      %v5421 = vadd.f32 %v5276, %v5388
      %v5422 = vadd.f32 %v5277, %v5390
      %v5423 = vadd.f32 %v5278, %v5393
      %v5424 = vadd.f32 %v5279, %v5395
      %v5425 = vadd.f32 %v5280, %v5398
      %v5426 = vadd.f32 %v5281, %v5400
      %v5427 = vadd.f32 %v5282, %v5403
      %v5428 = vadd.f32 %v5283, %v5405
      %v5429 = vadd.f32 %v5284, %v5408
      %v5430 = vadd.f32 %v5285, %v5410
      %v5431 = vadd.f32 %v5286, %v5413
      %v5432 = vadd.f32 %v5287, %v5415
      %v5433 = vadd.f32 %v5288, %v5418
      %v5434 = vld [vmem:[#allocation3 + $0x3c] sm:$0xf]
      %s5435 = scalar_lea.vmem %s11, 512
      %v5436 = vld [vmem:[%s5435] sm:$0xf]
      %v5437 = vld [vmem:[%s5435 + $0x4] sm:$0xf]
      %v5438 = vld [vmem:[%s5435 + $0x8] sm:$0xf]
      %v5439 = vld [vmem:[%s5435 + $0xc] sm:$0xf]
      %v5440 = vld [vmem:[%s5435 + $0x10] sm:$0xf]
      %v5441 = vld [vmem:[%s5435 + $0x14] sm:$0xf]
      %v5442 = vld [vmem:[%s5435 + $0x18] sm:$0xf]
      %v5443 = vld [vmem:[%s5435 + $0x1c] sm:$0xf]
      %v5444 = vld [vmem:[%s5435 + $0x20] sm:$0xf]
      %v5445 = vld [vmem:[%s5435 + $0x24] sm:$0xf]
      %v5446 = vld [vmem:[%s5435 + $0x28] sm:$0xf]
      %v5447 = vld [vmem:[%s5435 + $0x2c] sm:$0xf]
      %v5448 = vld [vmem:[%s5435 + $0x30] sm:$0xf]
      %v5449 = vld [vmem:[%s5435 + $0x34] sm:$0xf]
      %v5450 = vld [vmem:[%s5435 + $0x38] sm:$0xf]
      %v5451 = vld [vmem:[%s5435 + $0x3c] sm:$0xf]
      %v5453 = vunpack.c.l.b16 %v5434
      %v5454 = vpack.c.b16 %v5453, %v5453
      %v5456 = vshrl.u32 %v5309, 16
      %v5458 = vrot.slane %v5456, 1
      %v5459 = vshll.u32 %v5309, 16
      %v5461 = vrot.slane %v5459, 2
      %v5462 = vor.u32 %v5458, %v5461
      %v5463 = vrot.slane %v5135, 1
      %v5464 = vrot.slane %v5131, 2
      %v5465 = vor.u32 %v5463, %v5464
      %v5466 = vsel %vm2075, %v5462, %v5465
      %v5467 = vrot.slane %v5143, 1
      %v5468 = vrot.slane %v5139, 2
      %v5469 = vor.u32 %v5467, %v5468
      %v5470 = vsel %vm2075, %v5465, %v5469
      %v5471 = vrot.slane %v5151, 1
      %v5472 = vrot.slane %v5147, 2
      %v5473 = vor.u32 %v5471, %v5472
      %v5474 = vsel %vm2075, %v5469, %v5473
      %v5475 = vrot.slane %v5159, 1
      %v5476 = vrot.slane %v5155, 2
      %v5477 = vor.u32 %v5475, %v5476
      %v5478 = vsel %vm2075, %v5473, %v5477
      %v5479 = vrot.slane %v5167, 1
      %v5480 = vrot.slane %v5163, 2
      %v5481 = vor.u32 %v5479, %v5480
      %v5482 = vsel %vm2075, %v5477, %v5481
      %v5484 = vshrl.u32 %v5454, 16
      %v5486 = vrot.slane %v5484, 1
      %v5487 = vshll.u32 %v5454, 16
      %v5489 = vrot.slane %v5487, 2
      %v5490 = vor.u32 %v5486, %v5489
      %v5491 = vsel %vm2075, %v5481, %v5490
      %v5515 = vunpack.c.l.b16 %v5436
      %v5516 = vunpack.c.l.b16 %v5437
      %v5517 = vunpack.c.l.b16 %v5438
      %v5518 = vunpack.c.l.b16 %v5439
      %v5519 = vunpack.c.l.b16 %v5440
      %v5520 = vunpack.c.l.b16 %v5441
      %v5521 = vunpack.c.l.b16 %v5442
      %v5522 = vunpack.c.l.b16 %v5443
      %v5523 = vunpack.c.l.b16 %v5444
      %v5524 = vunpack.c.l.b16 %v5445
      %v5525 = vunpack.c.l.b16 %v5446
      %v5526 = vunpack.c.l.b16 %v5447
      %v5527 = vunpack.c.l.b16 %v5448
      %v5528 = vunpack.c.l.b16 %v5449
      %v5529 = vunpack.c.l.b16 %v5450
      %v5530 = vunpack.c.l.b16 %v5451
      %v5531 = vpack.c.b16 %v5516, %v5515
      %v5532 = vpack.c.b16 %v5518, %v5517
      %v5533 = vpack.c.b16 %v5520, %v5519
      %v5534 = vpack.c.b16 %v5522, %v5521
      %v5535 = vpack.c.b16 %v5524, %v5523
      %v5536 = vpack.c.b16 %v5526, %v5525
      %v5537 = vpack.c.b16 %v5528, %v5527
      %v5538 = vpack.c.b16 %v5530, %v5529
      %5547 = vmatpush.bf16.msra.mxu0 %v5538
      %5548 = vmatpush.bf16.msra.mxu0 %v5537
      %5549 = vmatpush.bf16.msra.mxu0 %v5536
      %5550 = vmatpush.bf16.msra.mxu0 %v5535
      %5551 = vmatpush.bf16.msra.mxu0 %v5534
      %5552 = vmatpush.bf16.msra.mxu0 %v5533
      %5553 = vmatpush.bf16.msra.mxu0 %v5532
      %5554 = vmatpush.bf16.msra.mxu0 %v5531
      %5555 = vmatmul.bf16.gmra.mxu0 %v5466
      %v5556 = vpop.f32.mrf.mxu0
      %v5557 = vadd.f32 0.0, %v5556
      %v5558 = vpop.f32.mrf.mxu0
      %v5559 = vadd.f32 0.0, %v5558
      %5560 = vmatmul.bf16.gmra.mxu0 %v5470
      %v5561 = vpop.f32.mrf.mxu0
      %v5562 = vadd.f32 0.0, %v5561
      %v5563 = vpop.f32.mrf.mxu0
      %v5564 = vadd.f32 0.0, %v5563
      %5565 = vmatmul.bf16.gmra.mxu0 %v5474
      %v5566 = vpop.f32.mrf.mxu0
      %v5567 = vadd.f32 0.0, %v5566
      %v5568 = vpop.f32.mrf.mxu0
      %v5569 = vadd.f32 0.0, %v5568
      %5570 = vmatmul.bf16.gmra.mxu0 %v5478
      %v5571 = vpop.f32.mrf.mxu0
      %v5572 = vadd.f32 0.0, %v5571
      %v5573 = vpop.f32.mrf.mxu0
      %v5574 = vadd.f32 0.0, %v5573
      %5575 = vmatmul.bf16.gmra.mxu0 %v5482
      %v5576 = vpop.f32.mrf.mxu0
      %v5577 = vadd.f32 0.0, %v5576
      %v5578 = vpop.f32.mrf.mxu0
      %v5579 = vadd.f32 0.0, %v5578
      %5580 = vmatmul.bf16.gmra.mxu0 %v5491
      %v5581 = vpop.f32.mrf.mxu0
      %v5582 = vadd.f32 0.0, %v5581
      %v5583 = vpop.f32.mrf.mxu0
      %v5584 = vadd.f32 0.0, %v5583
      %5585 = vmatmul.bf16.gmra.mxu0 %v5490
      %v5586 = vpop.f32.mrf.mxu0
      %v5587 = vadd.f32 0.0, %v5586
      %v5588 = vpop.f32.mrf.mxu0
      %5589 = vdwg.mxu0
      %v5590 = vadd.f32 %v5421, %v5557
      %v5591 = vadd.f32 %v5422, %v5559
      %v5592 = vadd.f32 %v5423, %v5562
      %v5593 = vadd.f32 %v5424, %v5564
      %v5594 = vadd.f32 %v5425, %v5567
      %v5595 = vadd.f32 %v5426, %v5569
      %v5596 = vadd.f32 %v5427, %v5572
      %v5597 = vadd.f32 %v5428, %v5574
      %v5598 = vadd.f32 %v5429, %v5577
      %v5599 = vadd.f32 %v5430, %v5579
      %v5600 = vadd.f32 %v5431, %v5582
      %v5601 = vadd.f32 %v5432, %v5584
      %v5602 = vadd.f32 %v5433, %v5587
      %vm5603 = vcmp.ge.f32.partialorder %v5590, 0.0
      %vm5604 = vcmp.ge.f32.partialorder %v5591, 0.0
      %vm5605 = vcmp.ge.f32.partialorder %v5592, 0.0
      %vm5606 = vcmp.ge.f32.partialorder %v5593, 0.0
      %vm5607 = vcmp.ge.f32.partialorder %v5594, 0.0
      %vm5608 = vcmp.ge.f32.partialorder %v5595, 0.0
      %vm5609 = vcmp.ge.f32.partialorder %v5596, 0.0
      %vm5610 = vcmp.ge.f32.partialorder %v5597, 0.0
      %vm5611 = vcmp.ge.f32.partialorder %v5598, 0.0
      %vm5612 = vcmp.ge.f32.partialorder %v5599, 0.0
      %vm5613 = vcmp.ge.f32.partialorder %v5600, 0.0
      %vm5614 = vcmp.ge.f32.partialorder %v5601, 0.0
      %vm5615 = vcmp.ge.f32.partialorder %v5602, 0.0
      %v5616 = vmul.f32 %v5590, 0.01
      %v5617 = vmul.f32 %v5591, 0.01
      %v5618 = vmul.f32 %v5592, 0.01
      %v5619 = vmul.f32 %v5593, 0.01
      %v5620 = vmul.f32 %v5594, 0.01
      %v5621 = vmul.f32 %v5595, 0.01
      %v5622 = vmul.f32 %v5596, 0.01
      %v5623 = vmul.f32 %v5597, 0.01
      %v5624 = vmul.f32 %v5598, 0.01
      %v5625 = vmul.f32 %v5599, 0.01
      %v5626 = vmul.f32 %v5600, 0.01
      %v5627 = vmul.f32 %v5601, 0.01
      %v5628 = vmul.f32 %v5602, 0.01
      %v5629 = vsel %vm5603, %v5590, %v5616
      %v5630 = vsel %vm5604, %v5591, %v5617
      %v5631 = vsel %vm5605, %v5592, %v5618
      %v5632 = vsel %vm5606, %v5593, %v5619
      %v5633 = vsel %vm5607, %v5594, %v5620
      %v5634 = vsel %vm5608, %v5595, %v5621
      %v5635 = vsel %vm5609, %v5596, %v5622
      %v5636 = vsel %vm5610, %v5597, %v5623
      %v5637 = vsel %vm5611, %v5598, %v5624
      %v5638 = vsel %vm5612, %v5599, %v5625
      %v5639 = vsel %vm5613, %v5600, %v5626
      %v5640 = vsel %vm5614, %v5601, %v5627
      %v5641 = vsel %vm5615, %v5602, %v5628
      %v5642 = vadd.f32 %v5629, %v895
      %v5643 = vadd.f32 %v5630, %v897
      %v5644 = vadd.f32 %v5631, %v900
      %v5645 = vadd.f32 %v5632, %v902
      %v5646 = vadd.f32 %v5633, %v905
      %v5647 = vadd.f32 %v5634, %v907
      %v5648 = vadd.f32 %v5635, %v910
      %v5649 = vadd.f32 %v5636, %v912
      %v5650 = vadd.f32 %v5637, %v915
      %v5651 = vadd.f32 %v5638, %v917
      %v5652 = vadd.f32 %v5639, %v920
      %v5653 = vadd.f32 %v5640, %v922
      %v5654 = vadd.f32 %v5641, %v925
      %v5655 = vmul.f32 %v5642, %v2244
      %v5656 = vmul.f32 %v5643, %v2249
      %v5657 = vmul.f32 %v5644, %v2254
      %v5658 = vmul.f32 %v5645, %v2259
      %v5659 = vmul.f32 %v5646, %v2264
      %v5660 = vmul.f32 %v5647, %v2269
      %v5661 = vmul.f32 %v5648, %v2274
      %v5662 = vmul.f32 %v5649, %v2279
      %v5663 = vmul.f32 %v5650, %v2284
      %v5664 = vmul.f32 %v5651, %v2289
      %v5665 = vmul.f32 %v5652, %v2294
      %v5666 = vmul.f32 %v5653, %v2299
      %v5667 = vmul.f32 %v5654, %v2304
      %v5668 = vpack.c.bf16 %v5655, %v5655
      %v5669 = vpack.c.bf16 %v5656, %v5656
      %v5670 = vpack.c.bf16 %v5657, %v5657
      %v5671 = vpack.c.bf16 %v5658, %v5658
      %v5672 = vpack.c.bf16 %v5659, %v5659
      %v5673 = vpack.c.bf16 %v5660, %v5660
      %v5674 = vpack.c.bf16 %v5661, %v5661
      %v5675 = vpack.c.bf16 %v5662, %v5662
      %v5676 = vpack.c.bf16 %v5663, %v5663
      %v5677 = vpack.c.bf16 %v5664, %v5664
      %v5678 = vpack.c.bf16 %v5665, %v5665
      %v5679 = vpack.c.bf16 %v5666, %v5666
      %v5680 = vpack.c.bf16 %v5667, %v5667
      %5681 = vst.msk [vmem:[#allocation2 + $0x8] sm:$0xf] %vm624, %v5668
      %5682 = vst.msk [vmem:[#allocation2 + $0xc] sm:$0xf] %vm624, %v5669
      %5683 = vst.msk [vmem:[#allocation2 + $0x10] sm:$0xf] %vm624, %v5670
      %5684 = vst.msk [vmem:[#allocation2 + $0x14] sm:$0xf] %vm624, %v5671
      %5685 = vst.msk [vmem:[#allocation2 + $0x18] sm:$0xf] %vm624, %v5672
      %5686 = vst.msk [vmem:[#allocation2 + $0x1c] sm:$0xf] %vm624, %v5673
      %5687 = vst.msk [vmem:[#allocation2 + $0x20] sm:$0xf] %vm624, %v5674
      %5688 = vst.msk [vmem:[#allocation2 + $0x24] sm:$0xf] %vm624, %v5675
      %5689 = vst.msk [vmem:[#allocation2 + $0x28] sm:$0xf] %vm624, %v5676
      %5690 = vst.msk [vmem:[#allocation2 + $0x2c] sm:$0xf] %vm624, %v5677
      %5691 = vst.msk [vmem:[#allocation2 + $0x30] sm:$0xf] %vm624, %v5678
      %5692 = vst.msk [vmem:[#allocation2 + $0x34] sm:$0xf] %vm624, %v5679
      %5693 = vst.msk [vmem:[#allocation2 + $0x38] sm:$0x3] %vm630, %v5680
      %v5694 = vld [vmem:[#allocation2] sm:$0xc]
      %v5695 = vld [vmem:[#allocation2 + $0x4] sm:$0xf]
      %v5696 = vld [vmem:[#allocation2 + $0x8] sm:$0xf]
      %v5697 = vld [vmem:[#allocation2 + $0xc] sm:$0xf]
      %v5698 = vld [vmem:[#allocation2 + $0x10] sm:$0xf]
      %v5699 = vld [vmem:[#allocation2 + $0x14] sm:$0xf]
      %v5700 = vld [vmem:[#allocation2 + $0x18] sm:$0xf]
      %v5701 = vld [vmem:[#allocation2 + $0x1c] sm:$0xf]
      %v5702 = vld [vmem:[#allocation2 + $0x20] sm:$0xf]
      %v5703 = vld [vmem:[#allocation2 + $0x24] sm:$0xf]
      %v5704 = vld [vmem:[#allocation2 + $0x28] sm:$0xf]
      %v5705 = vld [vmem:[#allocation2 + $0x2c] sm:$0xf]
      %v5706 = vld [vmem:[#allocation2 + $0x30] sm:$0xf]
      %v5707 = vld [vmem:[#allocation2 + $0x34] sm:$0x1]
      %v5708 = vld [vmem:[%s15] sm:$0xf]
      %v5709 = vld [vmem:[%s15 + $0x4] sm:$0xf]
      %v5710 = vld [vmem:[%s15 + $0x8] sm:$0xf]
      %v5711 = vld [vmem:[%s15 + $0xc] sm:$0xf]
      %v5712 = vld [vmem:[%s15 + $0x10] sm:$0xf]
      %v5713 = vld [vmem:[%s15 + $0x14] sm:$0xf]
      %v5714 = vld [vmem:[%s15 + $0x18] sm:$0xf]
      %v5715 = vld [vmem:[%s15 + $0x1c] sm:$0xf]
      %v5716 = vld [vmem:[%s16] sm:$0x1]
      %v5718 = vperm.slane %v5716, 0
      %v5734 = vunpack.c.l.b16 %v5694
      %v5735 = vunpack.c.l.b16 %v5695
      %v5736 = vunpack.c.l.b16 %v5696
      %v5737 = vunpack.c.l.b16 %v5697
      %v5738 = vunpack.c.l.b16 %v5698
      %v5739 = vunpack.c.l.b16 %v5699
      %v5740 = vunpack.c.l.b16 %v5700
      %v5741 = vunpack.c.l.b16 %v5701
      %v5742 = vunpack.c.l.b16 %v5702
      %v5743 = vunpack.c.l.b16 %v5703
      %v5744 = vunpack.c.l.b16 %v5704
      %v5745 = vunpack.c.l.b16 %v5705
      %v5746 = vunpack.c.l.b16 %v5706
      %v5747 = vunpack.c.l.b16 %v5707
      %v5748 = vpack.c.b16 %v5735, %v5734
      %v5749 = vpack.c.b16 %v5737, %v5736
      %v5750 = vpack.c.b16 %v5739, %v5738
      %v5751 = vpack.c.b16 %v5741, %v5740
      %v5752 = vpack.c.b16 %v5743, %v5742
      %v5753 = vpack.c.b16 %v5745, %v5744
      %v5754 = vpack.c.b16 %v5747, %v5746
      %v5756 = vshrl.u32 %v5748, 16
      %v5758 = vrot.slane %v5756, 2
      %v5759 = vshll.u32 %v5748, 16
      %v5761 = vrot.slane %v5759, 3
      %v5762 = vor.u32 %v5758, %v5761
      %v5764 = vshrl.u32 %v5749, 16
      %v5766 = vrot.slane %v5764, 2
      %v5767 = vshll.u32 %v5749, 16
      %v5769 = vrot.slane %v5767, 3
      %v5770 = vor.u32 %v5766, %v5769
      %v5771 = vsel %vm985, %v5762, %v5770
      %v5773 = vshrl.u32 %v5750, 16
      %v5775 = vrot.slane %v5773, 2
      %v5776 = vshll.u32 %v5750, 16
      %v5778 = vrot.slane %v5776, 3
      %v5779 = vor.u32 %v5775, %v5778
      %v5780 = vsel %vm985, %v5770, %v5779
      %v5782 = vshrl.u32 %v5751, 16
      %v5784 = vrot.slane %v5782, 2
      %v5785 = vshll.u32 %v5751, 16
      %v5787 = vrot.slane %v5785, 3
      %v5788 = vor.u32 %v5784, %v5787
      %v5789 = vsel %vm985, %v5779, %v5788
      %v5791 = vshrl.u32 %v5752, 16
      %v5793 = vrot.slane %v5791, 2
      %v5794 = vshll.u32 %v5752, 16
      %v5796 = vrot.slane %v5794, 3
      %v5797 = vor.u32 %v5793, %v5796
      %v5798 = vsel %vm985, %v5788, %v5797
      %v5800 = vshrl.u32 %v5753, 16
      %v5802 = vrot.slane %v5800, 2
      %v5803 = vshll.u32 %v5753, 16
      %v5805 = vrot.slane %v5803, 3
      %v5806 = vor.u32 %v5802, %v5805
      %v5807 = vsel %vm985, %v5797, %v5806
      %v5809 = vshrl.u32 %v5754, 16
      %v5811 = vrot.slane %v5809, 2
      %v5812 = vshll.u32 %v5754, 16
      %v5814 = vrot.slane %v5812, 3
      %v5815 = vor.u32 %v5811, %v5814
      %v5816 = vsel %vm985, %v5806, %v5815
      %v5825 = vunpack.c.l.b16 %v5708
      %v5826 = vunpack.c.l.b16 %v5709
      %v5827 = vunpack.c.l.b16 %v5710
      %v5828 = vunpack.c.l.b16 %v5711
      %v5829 = vunpack.c.l.b16 %v5712
      %v5830 = vunpack.c.l.b16 %v5713
      %v5831 = vunpack.c.l.b16 %v5714
      %v5832 = vunpack.c.l.b16 %v5715
      %v5833 = vpack.c.b16 %v5826, %v5825
      %v5834 = vpack.c.b16 %v5828, %v5827
      %v5835 = vpack.c.b16 %v5830, %v5829
      %v5836 = vpack.c.b16 %v5832, %v5831
      %v5842 = vsel %vm863, %v5771, 0
      %v5845 = vsel %vm863, %v5780, 0
      %v5848 = vsel %vm863, %v5789, 0
      %v5851 = vsel %vm863, %v5798, 0
      %v5854 = vsel %vm863, %v5807, 0
      %v5857 = vsel %vm863, %v5816, 0
      %v5860 = vsel %vm863, %v5815, 0
      %5862 = vmatpush.bf16.msra.mxu0 0
      %5863 = vmatpush.bf16.msra.mxu0 0
      %5864 = vmatpush.bf16.msra.mxu0 0
      %5865 = vmatpush.bf16.msra.mxu0 0
      %5866 = vmatpush.bf16.msra.mxu0 %v5836
      %5867 = vmatpush.bf16.msra.mxu0 %v5835
      %5868 = vmatpush.bf16.msra.mxu0 %v5834
      %5869 = vmatpush.bf16.msra.mxu0 %v5833
      %5870 = vmatmul.bf16.gmra.mxu0 %v5842
      %v5871 = vpop.f32.mrf.mxu0
      %v5872 = vadd.f32 %v5718, %v5871
      %v5873 = vpop.f32.mrf.mxu0
      %v5874 = vadd.f32 %v5718, %v5873
      %5875 = vmatmul.bf16.gmra.mxu0 %v5845
      %v5876 = vpop.f32.mrf.mxu0
      %v5877 = vadd.f32 %v5718, %v5876
      %v5878 = vpop.f32.mrf.mxu0
      %v5879 = vadd.f32 %v5718, %v5878
      %5880 = vmatmul.bf16.gmra.mxu0 %v5848
      %v5881 = vpop.f32.mrf.mxu0
      %v5882 = vadd.f32 %v5718, %v5881
      %v5883 = vpop.f32.mrf.mxu0
      %v5884 = vadd.f32 %v5718, %v5883
      %5885 = vmatmul.bf16.gmra.mxu0 %v5851
      %v5886 = vpop.f32.mrf.mxu0
      %v5887 = vadd.f32 %v5718, %v5886
      %v5888 = vpop.f32.mrf.mxu0
      %v5889 = vadd.f32 %v5718, %v5888
      %5890 = vmatmul.bf16.gmra.mxu0 %v5854
      %v5891 = vpop.f32.mrf.mxu0
      %v5892 = vadd.f32 %v5718, %v5891
      %v5893 = vpop.f32.mrf.mxu0
      %v5894 = vadd.f32 %v5718, %v5893
      %5895 = vmatmul.bf16.gmra.mxu0 %v5857
      %v5896 = vpop.f32.mrf.mxu0
      %v5897 = vadd.f32 %v5718, %v5896
      %v5898 = vpop.f32.mrf.mxu0
      %v5899 = vadd.f32 %v5718, %v5898
      %5900 = vmatmul.bf16.gmra.mxu0 %v5860
      %v5901 = vpop.f32.mrf.mxu0
      %v5902 = vadd.f32 %v5718, %v5901
      %v5903 = vpop.f32.mrf.mxu0
      %5904 = vdwg.mxu0
      %v5905 = vld [vmem:[#allocation2] sm:$0x8]
      %s5906 = scalar_lea.vmem %s15, 32
      %v5907 = vld [vmem:[%s5906] sm:$0xf]
      %v5908 = vld [vmem:[%s5906 + $0x4] sm:$0xf]
      %v5909 = vld [vmem:[%s5906 + $0x8] sm:$0xf]
      %v5910 = vld [vmem:[%s5906 + $0xc] sm:$0xf]
      %v5911 = vld [vmem:[%s5906 + $0x10] sm:$0xf]
      %v5912 = vld [vmem:[%s5906 + $0x14] sm:$0xf]
      %v5913 = vld [vmem:[%s5906 + $0x18] sm:$0xf]
      %v5914 = vld [vmem:[%s5906 + $0x1c] sm:$0xf]
      %v5916 = vunpack.c.l.b16 %v5905
      %v5917 = vpack.c.b16 %v5735, %v5916
      %v5918 = vrot.slane %v5917, 3
      %v5919 = vrot.slane %v5749, 3
      %v5920 = vsel %vm1133, %v5918, %v5919
      %v5921 = vrot.slane %v5750, 3
      %v5922 = vsel %vm1133, %v5919, %v5921
      %v5923 = vrot.slane %v5751, 3
      %v5924 = vsel %vm1133, %v5921, %v5923
      %v5925 = vrot.slane %v5752, 3
      %v5926 = vsel %vm1133, %v5923, %v5925
      %v5927 = vrot.slane %v5753, 3
      %v5928 = vsel %vm1133, %v5925, %v5927
      %v5929 = vrot.slane %v5754, 3
      %v5930 = vsel %vm1133, %v5927, %v5929
      %v5939 = vunpack.c.l.b16 %v5907
      %v5940 = vunpack.c.l.b16 %v5908
      %v5941 = vunpack.c.l.b16 %v5909
      %v5942 = vunpack.c.l.b16 %v5910
      %v5943 = vunpack.c.l.b16 %v5911
      %v5944 = vunpack.c.l.b16 %v5912
      %v5945 = vunpack.c.l.b16 %v5913
      %v5946 = vunpack.c.l.b16 %v5914
      %v5947 = vpack.c.b16 %v5940, %v5939
      %v5948 = vpack.c.b16 %v5942, %v5941
      %v5949 = vpack.c.b16 %v5944, %v5943
      %v5950 = vpack.c.b16 %v5946, %v5945
      %v5956 = vsel %vm863, %v5920, 0
      %v5959 = vsel %vm863, %v5922, 0
      %v5962 = vsel %vm863, %v5924, 0
      %v5965 = vsel %vm863, %v5926, 0
      %v5968 = vsel %vm863, %v5928, 0
      %v5971 = vsel %vm863, %v5930, 0
      %v5974 = vsel %vm863, %v5929, 0
      %5976 = vmatpush.bf16.msra.mxu0 0
      %5977 = vmatpush.bf16.msra.mxu0 0
      %5978 = vmatpush.bf16.msra.mxu0 0
      %5979 = vmatpush.bf16.msra.mxu0 0
      %5980 = vmatpush.bf16.msra.mxu0 %v5950
      %5981 = vmatpush.bf16.msra.mxu0 %v5949
      %5982 = vmatpush.bf16.msra.mxu0 %v5948
      %5983 = vmatpush.bf16.msra.mxu0 %v5947
      %5984 = vmatmul.bf16.gmra.mxu0 %v5956
      %v5985 = vpop.f32.mrf.mxu0
      %v5986 = vadd.f32 0.0, %v5985
      %v5987 = vpop.f32.mrf.mxu0
      %v5988 = vadd.f32 0.0, %v5987
      %5989 = vmatmul.bf16.gmra.mxu0 %v5959
      %v5990 = vpop.f32.mrf.mxu0
      %v5991 = vadd.f32 0.0, %v5990
      %v5992 = vpop.f32.mrf.mxu0
      %v5993 = vadd.f32 0.0, %v5992
      %5994 = vmatmul.bf16.gmra.mxu0 %v5962
      %v5995 = vpop.f32.mrf.mxu0
      %v5996 = vadd.f32 0.0, %v5995
      %v5997 = vpop.f32.mrf.mxu0
      %v5998 = vadd.f32 0.0, %v5997
      %5999 = vmatmul.bf16.gmra.mxu0 %v5965
      %v6000 = vpop.f32.mrf.mxu0
      %v6001 = vadd.f32 0.0, %v6000
      %v6002 = vpop.f32.mrf.mxu0
      %v6003 = vadd.f32 0.0, %v6002
      %6004 = vmatmul.bf16.gmra.mxu0 %v5968
      %v6005 = vpop.f32.mrf.mxu0
      %v6006 = vadd.f32 0.0, %v6005
      %v6007 = vpop.f32.mrf.mxu0
      %v6008 = vadd.f32 0.0, %v6007
      %6009 = vmatmul.bf16.gmra.mxu0 %v5971
      %v6010 = vpop.f32.mrf.mxu0
      %v6011 = vadd.f32 0.0, %v6010
      %v6012 = vpop.f32.mrf.mxu0
      %v6013 = vadd.f32 0.0, %v6012
      %6014 = vmatmul.bf16.gmra.mxu0 %v5974
      %v6015 = vpop.f32.mrf.mxu0
      %v6016 = vadd.f32 0.0, %v6015
      %v6017 = vpop.f32.mrf.mxu0
      %6018 = vdwg.mxu0
      %v6019 = vadd.f32 %v5872, %v5986
      %v6020 = vadd.f32 %v5874, %v5988
      %v6021 = vadd.f32 %v5877, %v5991
      %v6022 = vadd.f32 %v5879, %v5993
      %v6023 = vadd.f32 %v5882, %v5996
      %v6024 = vadd.f32 %v5884, %v5998
      %v6025 = vadd.f32 %v5887, %v6001
      %v6026 = vadd.f32 %v5889, %v6003
      %v6027 = vadd.f32 %v5892, %v6006
      %v6028 = vadd.f32 %v5894, %v6008
      %v6029 = vadd.f32 %v5897, %v6011
      %v6030 = vadd.f32 %v5899, %v6013
      %v6031 = vadd.f32 %v5902, %v6016
      %v6032 = vld [vmem:[#allocation2 + $0x34] sm:$0x3]
      %s6033 = scalar_lea.vmem %s15, 64
      %v6034 = vld [vmem:[%s6033] sm:$0xf]
      %v6035 = vld [vmem:[%s6033 + $0x4] sm:$0xf]
      %v6036 = vld [vmem:[%s6033 + $0x8] sm:$0xf]
      %v6037 = vld [vmem:[%s6033 + $0xc] sm:$0xf]
      %v6038 = vld [vmem:[%s6033 + $0x10] sm:$0xf]
      %v6039 = vld [vmem:[%s6033 + $0x14] sm:$0xf]
      %v6040 = vld [vmem:[%s6033 + $0x18] sm:$0xf]
      %v6041 = vld [vmem:[%s6033 + $0x1c] sm:$0xf]
      %v6043 = vunpack.c.l.b16 %v6032
      %v6044 = vpack.c.b16 %v6043, %v5746
      %v6046 = vshrl.u32 %v5917, 16
      %v6048 = vrot.slane %v6046, 3
      %v6049 = vshll.u32 %v5917, 16
      %v6051 = vrot.slane %v6049, 4
      %v6052 = vor.u32 %v6048, %v6051
      %v6053 = vrot.slane %v5764, 3
      %v6054 = vrot.slane %v5767, 4
      %v6055 = vor.u32 %v6053, %v6054
      %v6056 = vsel %vm1245, %v6052, %v6055
      %v6057 = vrot.slane %v5773, 3
      %v6058 = vrot.slane %v5776, 4
      %v6059 = vor.u32 %v6057, %v6058
      %v6060 = vsel %vm1245, %v6055, %v6059
      %v6061 = vrot.slane %v5782, 3
      %v6062 = vrot.slane %v5785, 4
      %v6063 = vor.u32 %v6061, %v6062
      %v6064 = vsel %vm1245, %v6059, %v6063
      %v6065 = vrot.slane %v5791, 3
      %v6066 = vrot.slane %v5794, 4
      %v6067 = vor.u32 %v6065, %v6066
      %v6068 = vsel %vm1245, %v6063, %v6067
      %v6069 = vrot.slane %v5800, 3
      %v6070 = vrot.slane %v5803, 4
      %v6071 = vor.u32 %v6069, %v6070
      %v6072 = vsel %vm1245, %v6067, %v6071
      %v6074 = vshrl.u32 %v6044, 16
      %v6076 = vrot.slane %v6074, 3
      %v6077 = vshll.u32 %v6044, 16
      %v6079 = vrot.slane %v6077, 4
      %v6080 = vor.u32 %v6076, %v6079
      %v6081 = vsel %vm1245, %v6071, %v6080
      %v6090 = vunpack.c.l.b16 %v6034
      %v6091 = vunpack.c.l.b16 %v6035
      %v6092 = vunpack.c.l.b16 %v6036
      %v6093 = vunpack.c.l.b16 %v6037
      %v6094 = vunpack.c.l.b16 %v6038
      %v6095 = vunpack.c.l.b16 %v6039
      %v6096 = vunpack.c.l.b16 %v6040
      %v6097 = vunpack.c.l.b16 %v6041
      %v6098 = vpack.c.b16 %v6091, %v6090
      %v6099 = vpack.c.b16 %v6093, %v6092
      %v6100 = vpack.c.b16 %v6095, %v6094
      %v6101 = vpack.c.b16 %v6097, %v6096
      %v6107 = vsel %vm863, %v6056, 0
      %v6110 = vsel %vm863, %v6060, 0
      %v6113 = vsel %vm863, %v6064, 0
      %v6116 = vsel %vm863, %v6068, 0
      %v6119 = vsel %vm863, %v6072, 0
      %v6122 = vsel %vm863, %v6081, 0
      %v6125 = vsel %vm863, %v6080, 0
      %6127 = vmatpush.bf16.msra.mxu0 0
      %6128 = vmatpush.bf16.msra.mxu0 0
      %6129 = vmatpush.bf16.msra.mxu0 0
      %6130 = vmatpush.bf16.msra.mxu0 0
      %6131 = vmatpush.bf16.msra.mxu0 %v6101
      %6132 = vmatpush.bf16.msra.mxu0 %v6100
      %6133 = vmatpush.bf16.msra.mxu0 %v6099
      %6134 = vmatpush.bf16.msra.mxu0 %v6098
      %6135 = vmatmul.bf16.gmra.mxu0 %v6107
      %v6136 = vpop.f32.mrf.mxu0
      %v6137 = vadd.f32 0.0, %v6136
      %v6138 = vpop.f32.mrf.mxu0
      %v6139 = vadd.f32 0.0, %v6138
      %6140 = vmatmul.bf16.gmra.mxu0 %v6110
      %v6141 = vpop.f32.mrf.mxu0
      %v6142 = vadd.f32 0.0, %v6141
      %v6143 = vpop.f32.mrf.mxu0
      %v6144 = vadd.f32 0.0, %v6143
      %6145 = vmatmul.bf16.gmra.mxu0 %v6113
      %v6146 = vpop.f32.mrf.mxu0
      %v6147 = vadd.f32 0.0, %v6146
      %v6148 = vpop.f32.mrf.mxu0
      %v6149 = vadd.f32 0.0, %v6148
      %6150 = vmatmul.bf16.gmra.mxu0 %v6116
      %v6151 = vpop.f32.mrf.mxu0
      %v6152 = vadd.f32 0.0, %v6151
      %v6153 = vpop.f32.mrf.mxu0
      %v6154 = vadd.f32 0.0, %v6153
      %6155 = vmatmul.bf16.gmra.mxu0 %v6119
      %v6156 = vpop.f32.mrf.mxu0
      %v6157 = vadd.f32 0.0, %v6156
      %v6158 = vpop.f32.mrf.mxu0
      %v6159 = vadd.f32 0.0, %v6158
      %6160 = vmatmul.bf16.gmra.mxu0 %v6122
      %v6161 = vpop.f32.mrf.mxu0
      %v6162 = vadd.f32 0.0, %v6161
      %v6163 = vpop.f32.mrf.mxu0
      %v6164 = vadd.f32 0.0, %v6163
      %6165 = vmatmul.bf16.gmra.mxu0 %v6125
      %v6166 = vpop.f32.mrf.mxu0
      %v6167 = vadd.f32 0.0, %v6166
      %v6168 = vpop.f32.mrf.mxu0
      %6169 = vdwg.mxu0
      %v6170 = vadd.f32 %v6019, %v6137
      %v6171 = vadd.f32 %v6020, %v6139
      %v6172 = vadd.f32 %v6021, %v6142
      %v6173 = vadd.f32 %v6022, %v6144
      %v6174 = vadd.f32 %v6023, %v6147
      %v6175 = vadd.f32 %v6024, %v6149
      %v6176 = vadd.f32 %v6025, %v6152
      %v6177 = vadd.f32 %v6026, %v6154
      %v6178 = vadd.f32 %v6027, %v6157
      %v6179 = vadd.f32 %v6028, %v6159
      %v6180 = vadd.f32 %v6029, %v6162
      %v6181 = vadd.f32 %v6030, %v6164
      %v6182 = vadd.f32 %v6031, %v6167
      %v6183 = vld [vmem:[#allocation2 + $0x4] sm:$0x8]
      %v6184 = vld [vmem:[#allocation2 + $0x8] sm:$0xf]
      %v6185 = vld [vmem:[#allocation2 + $0xc] sm:$0xf]
      %v6186 = vld [vmem:[#allocation2 + $0x10] sm:$0xf]
      %v6187 = vld [vmem:[#allocation2 + $0x14] sm:$0xf]
      %v6188 = vld [vmem:[#allocation2 + $0x18] sm:$0xf]
      %v6189 = vld [vmem:[#allocation2 + $0x1c] sm:$0xf]
      %v6190 = vld [vmem:[#allocation2 + $0x20] sm:$0xf]
      %v6191 = vld [vmem:[#allocation2 + $0x24] sm:$0xf]
      %v6192 = vld [vmem:[#allocation2 + $0x28] sm:$0xf]
      %v6193 = vld [vmem:[#allocation2 + $0x2c] sm:$0xf]
      %v6194 = vld [vmem:[#allocation2 + $0x30] sm:$0xf]
      %v6195 = vld [vmem:[#allocation2 + $0x34] sm:$0xf]
      %v6196 = vld [vmem:[#allocation2 + $0x38] sm:$0x3]
      %s6197 = scalar_lea.vmem %s15, 96
      %v6198 = vld [vmem:[%s6197] sm:$0xf]
      %v6199 = vld [vmem:[%s6197 + $0x4] sm:$0xf]
      %v6200 = vld [vmem:[%s6197 + $0x8] sm:$0xf]
      %v6201 = vld [vmem:[%s6197 + $0xc] sm:$0xf]
      %v6202 = vld [vmem:[%s6197 + $0x10] sm:$0xf]
      %v6203 = vld [vmem:[%s6197 + $0x14] sm:$0xf]
      %v6204 = vld [vmem:[%s6197 + $0x18] sm:$0xf]
      %v6205 = vld [vmem:[%s6197 + $0x1c] sm:$0xf]
      %v6220 = vunpack.c.l.b16 %v6183
      %v6221 = vunpack.c.l.b16 %v6184
      %v6222 = vunpack.c.l.b16 %v6185
      %v6223 = vunpack.c.l.b16 %v6186
      %v6224 = vunpack.c.l.b16 %v6187
      %v6225 = vunpack.c.l.b16 %v6188
      %v6226 = vunpack.c.l.b16 %v6189
      %v6227 = vunpack.c.l.b16 %v6190
      %v6228 = vunpack.c.l.b16 %v6191
      %v6229 = vunpack.c.l.b16 %v6192
      %v6230 = vunpack.c.l.b16 %v6193
      %v6231 = vunpack.c.l.b16 %v6194
      %v6232 = vunpack.c.l.b16 %v6195
      %v6233 = vunpack.c.l.b16 %v6196
      %v6234 = vpack.c.b16 %v6221, %v6220
      %v6235 = vpack.c.b16 %v6223, %v6222
      %v6236 = vpack.c.b16 %v6225, %v6224
      %v6237 = vpack.c.b16 %v6227, %v6226
      %v6238 = vpack.c.b16 %v6229, %v6228
      %v6239 = vpack.c.b16 %v6231, %v6230
      %v6240 = vpack.c.b16 %v6233, %v6232
      %v6242 = vshrl.u32 %v6234, 16
      %v6244 = vrot.slane %v6242, 3
      %v6245 = vshll.u32 %v6234, 16
      %v6247 = vrot.slane %v6245, 4
      %v6248 = vor.u32 %v6244, %v6247
      %v6250 = vshrl.u32 %v6235, 16
      %v6252 = vrot.slane %v6250, 3
      %v6253 = vshll.u32 %v6235, 16
      %v6255 = vrot.slane %v6253, 4
      %v6256 = vor.u32 %v6252, %v6255
      %v6257 = vsel %vm1245, %v6248, %v6256
      %v6259 = vshrl.u32 %v6236, 16
      %v6261 = vrot.slane %v6259, 3
      %v6262 = vshll.u32 %v6236, 16
      %v6264 = vrot.slane %v6262, 4
      %v6265 = vor.u32 %v6261, %v6264
      %v6266 = vsel %vm1245, %v6256, %v6265
      %v6268 = vshrl.u32 %v6237, 16
      %v6270 = vrot.slane %v6268, 3
      %v6271 = vshll.u32 %v6237, 16
      %v6273 = vrot.slane %v6271, 4
      %v6274 = vor.u32 %v6270, %v6273
      %v6275 = vsel %vm1245, %v6265, %v6274
      %v6277 = vshrl.u32 %v6238, 16
      %v6279 = vrot.slane %v6277, 3
      %v6280 = vshll.u32 %v6238, 16
      %v6282 = vrot.slane %v6280, 4
      %v6283 = vor.u32 %v6279, %v6282
      %v6284 = vsel %vm1245, %v6274, %v6283
      %v6286 = vshrl.u32 %v6239, 16
      %v6288 = vrot.slane %v6286, 3
      %v6289 = vshll.u32 %v6239, 16
      %v6291 = vrot.slane %v6289, 4
      %v6292 = vor.u32 %v6288, %v6291
      %v6293 = vsel %vm1245, %v6283, %v6292
      %v6295 = vshrl.u32 %v6240, 16
      %v6297 = vrot.slane %v6295, 3
      %v6298 = vshll.u32 %v6240, 16
      %v6300 = vrot.slane %v6298, 4
      %v6301 = vor.u32 %v6297, %v6300
      %v6302 = vsel %vm1245, %v6292, %v6301
      %v6311 = vunpack.c.l.b16 %v6198
      %v6312 = vunpack.c.l.b16 %v6199
      %v6313 = vunpack.c.l.b16 %v6200
      %v6314 = vunpack.c.l.b16 %v6201
      %v6315 = vunpack.c.l.b16 %v6202
      %v6316 = vunpack.c.l.b16 %v6203
      %v6317 = vunpack.c.l.b16 %v6204
      %v6318 = vunpack.c.l.b16 %v6205
      %v6319 = vpack.c.b16 %v6312, %v6311
      %v6320 = vpack.c.b16 %v6314, %v6313
      %v6321 = vpack.c.b16 %v6316, %v6315
      %v6322 = vpack.c.b16 %v6318, %v6317
      %v6328 = vsel %vm863, %v6257, 0
      %v6331 = vsel %vm863, %v6266, 0
      %v6334 = vsel %vm863, %v6275, 0
      %v6337 = vsel %vm863, %v6284, 0
      %v6340 = vsel %vm863, %v6293, 0
      %v6343 = vsel %vm863, %v6302, 0
      %v6346 = vsel %vm863, %v6301, 0
      %6348 = vmatpush.bf16.msra.mxu0 0
      %6349 = vmatpush.bf16.msra.mxu0 0
      %6350 = vmatpush.bf16.msra.mxu0 0
      %6351 = vmatpush.bf16.msra.mxu0 0
      %6352 = vmatpush.bf16.msra.mxu0 %v6322
      %6353 = vmatpush.bf16.msra.mxu0 %v6321
      %6354 = vmatpush.bf16.msra.mxu0 %v6320
      %6355 = vmatpush.bf16.msra.mxu0 %v6319
      %6356 = vmatmul.bf16.gmra.mxu0 %v6328
      %v6357 = vpop.f32.mrf.mxu0
      %v6358 = vadd.f32 0.0, %v6357
      %v6359 = vpop.f32.mrf.mxu0
      %v6360 = vadd.f32 0.0, %v6359
      %6361 = vmatmul.bf16.gmra.mxu0 %v6331
      %v6362 = vpop.f32.mrf.mxu0
      %v6363 = vadd.f32 0.0, %v6362
      %v6364 = vpop.f32.mrf.mxu0
      %v6365 = vadd.f32 0.0, %v6364
      %6366 = vmatmul.bf16.gmra.mxu0 %v6334
      %v6367 = vpop.f32.mrf.mxu0
      %v6368 = vadd.f32 0.0, %v6367
      %v6369 = vpop.f32.mrf.mxu0
      %v6370 = vadd.f32 0.0, %v6369
      %6371 = vmatmul.bf16.gmra.mxu0 %v6337
      %v6372 = vpop.f32.mrf.mxu0
      %v6373 = vadd.f32 0.0, %v6372
      %v6374 = vpop.f32.mrf.mxu0
      %v6375 = vadd.f32 0.0, %v6374
      %6376 = vmatmul.bf16.gmra.mxu0 %v6340
      %v6377 = vpop.f32.mrf.mxu0
      %v6378 = vadd.f32 0.0, %v6377
      %v6379 = vpop.f32.mrf.mxu0
      %v6380 = vadd.f32 0.0, %v6379
      %6381 = vmatmul.bf16.gmra.mxu0 %v6343
      %v6382 = vpop.f32.mrf.mxu0
      %v6383 = vadd.f32 0.0, %v6382
      %v6384 = vpop.f32.mrf.mxu0
      %v6385 = vadd.f32 0.0, %v6384
      %6386 = vmatmul.bf16.gmra.mxu0 %v6346
      %v6387 = vpop.f32.mrf.mxu0
      %v6388 = vadd.f32 0.0, %v6387
      %v6389 = vpop.f32.mrf.mxu0
      %6390 = vdwg.mxu0
      %v6391 = vadd.f32 %v6170, %v6358
      %v6392 = vadd.f32 %v6171, %v6360
      %v6393 = vadd.f32 %v6172, %v6363
      %v6394 = vadd.f32 %v6173, %v6365
      %v6395 = vadd.f32 %v6174, %v6368
      %v6396 = vadd.f32 %v6175, %v6370
      %v6397 = vadd.f32 %v6176, %v6373
      %v6398 = vadd.f32 %v6177, %v6375
      %v6399 = vadd.f32 %v6178, %v6378
      %v6400 = vadd.f32 %v6179, %v6380
      %v6401 = vadd.f32 %v6180, %v6383
      %v6402 = vadd.f32 %v6181, %v6385
      %v6403 = vadd.f32 %v6182, %v6388
      %s6404 = scalar_lea.vmem %s15, 128
      %v6405 = vld [vmem:[%s6404] sm:$0xf]
      %v6406 = vld [vmem:[%s6404 + $0x4] sm:$0xf]
      %v6407 = vld [vmem:[%s6404 + $0x8] sm:$0xf]
      %v6408 = vld [vmem:[%s6404 + $0xc] sm:$0xf]
      %v6409 = vld [vmem:[%s6404 + $0x10] sm:$0xf]
      %v6410 = vld [vmem:[%s6404 + $0x14] sm:$0xf]
      %v6411 = vld [vmem:[%s6404 + $0x18] sm:$0xf]
      %v6412 = vld [vmem:[%s6404 + $0x1c] sm:$0xf]
      %v6413 = vpack.c.b16 %v6222, %v6221
      %v6414 = vpack.c.b16 %v6224, %v6223
      %v6415 = vpack.c.b16 %v6226, %v6225
      %v6416 = vpack.c.b16 %v6228, %v6227
      %v6417 = vpack.c.b16 %v6230, %v6229
      %v6418 = vpack.c.b16 %v6232, %v6231
      %v6419 = vpack.c.b16 %v6233, %v6233
      %v6428 = vunpack.c.l.b16 %v6405
      %v6429 = vunpack.c.l.b16 %v6406
      %v6430 = vunpack.c.l.b16 %v6407
      %v6431 = vunpack.c.l.b16 %v6408
      %v6432 = vunpack.c.l.b16 %v6409
      %v6433 = vunpack.c.l.b16 %v6410
      %v6434 = vunpack.c.l.b16 %v6411
      %v6435 = vunpack.c.l.b16 %v6412
      %v6436 = vpack.c.b16 %v6429, %v6428
      %v6437 = vpack.c.b16 %v6431, %v6430
      %v6438 = vpack.c.b16 %v6433, %v6432
      %v6439 = vpack.c.b16 %v6435, %v6434
      %v6445 = vsel %vm863, %v6413, 0
      %v6448 = vsel %vm863, %v6414, 0
      %v6451 = vsel %vm863, %v6415, 0
      %v6454 = vsel %vm863, %v6416, 0
      %v6457 = vsel %vm863, %v6417, 0
      %v6460 = vsel %vm863, %v6418, 0
      %v6463 = vsel %vm863, %v6419, 0
      %6465 = vmatpush.bf16.msra.mxu0 0
      %6466 = vmatpush.bf16.msra.mxu0 0
      %6467 = vmatpush.bf16.msra.mxu0 0
      %6468 = vmatpush.bf16.msra.mxu0 0
      %6469 = vmatpush.bf16.msra.mxu0 %v6439
      %6470 = vmatpush.bf16.msra.mxu0 %v6438
      %6471 = vmatpush.bf16.msra.mxu0 %v6437
      %6472 = vmatpush.bf16.msra.mxu0 %v6436
      %6473 = vmatmul.bf16.gmra.mxu0 %v6445
      %v6474 = vpop.f32.mrf.mxu0
      %v6475 = vadd.f32 0.0, %v6474
      %v6476 = vpop.f32.mrf.mxu0
      %v6477 = vadd.f32 0.0, %v6476
      %6478 = vmatmul.bf16.gmra.mxu0 %v6448
      %v6479 = vpop.f32.mrf.mxu0
      %v6480 = vadd.f32 0.0, %v6479
      %v6481 = vpop.f32.mrf.mxu0
      %v6482 = vadd.f32 0.0, %v6481
      %6483 = vmatmul.bf16.gmra.mxu0 %v6451
      %v6484 = vpop.f32.mrf.mxu0
      %v6485 = vadd.f32 0.0, %v6484
      %v6486 = vpop.f32.mrf.mxu0
      %v6487 = vadd.f32 0.0, %v6486
      %6488 = vmatmul.bf16.gmra.mxu0 %v6454
      %v6489 = vpop.f32.mrf.mxu0
      %v6490 = vadd.f32 0.0, %v6489
      %v6491 = vpop.f32.mrf.mxu0
      %v6492 = vadd.f32 0.0, %v6491
      %6493 = vmatmul.bf16.gmra.mxu0 %v6457
      %v6494 = vpop.f32.mrf.mxu0
      %v6495 = vadd.f32 0.0, %v6494
      %v6496 = vpop.f32.mrf.mxu0
      %v6497 = vadd.f32 0.0, %v6496
      %6498 = vmatmul.bf16.gmra.mxu0 %v6460
      %v6499 = vpop.f32.mrf.mxu0
      %v6500 = vadd.f32 0.0, %v6499
      %v6501 = vpop.f32.mrf.mxu0
      %v6502 = vadd.f32 0.0, %v6501
      %6503 = vmatmul.bf16.gmra.mxu0 %v6463
      %v6504 = vpop.f32.mrf.mxu0
      %v6505 = vadd.f32 0.0, %v6504
      %v6506 = vpop.f32.mrf.mxu0
      %6507 = vdwg.mxu0
      %v6508 = vadd.f32 %v6391, %v6475
      %v6509 = vadd.f32 %v6392, %v6477
      %v6510 = vadd.f32 %v6393, %v6480
      %v6511 = vadd.f32 %v6394, %v6482
      %v6512 = vadd.f32 %v6395, %v6485
      %v6513 = vadd.f32 %v6396, %v6487
      %v6514 = vadd.f32 %v6397, %v6490
      %v6515 = vadd.f32 %v6398, %v6492
      %v6516 = vadd.f32 %v6399, %v6495
      %v6517 = vadd.f32 %v6400, %v6497
      %v6518 = vadd.f32 %v6401, %v6500
      %v6519 = vadd.f32 %v6402, %v6502
      %v6520 = vadd.f32 %v6403, %v6505
      %v6521 = vld [vmem:[#allocation2 + $0x38] sm:$0x7]
      %s6522 = scalar_lea.vmem %s15, 160
      %v6523 = vld [vmem:[%s6522] sm:$0xf]
      %v6524 = vld [vmem:[%s6522 + $0x4] sm:$0xf]
      %v6525 = vld [vmem:[%s6522 + $0x8] sm:$0xf]
      %v6526 = vld [vmem:[%s6522 + $0xc] sm:$0xf]
      %v6527 = vld [vmem:[%s6522 + $0x10] sm:$0xf]
      %v6528 = vld [vmem:[%s6522 + $0x14] sm:$0xf]
      %v6529 = vld [vmem:[%s6522 + $0x18] sm:$0xf]
      %v6530 = vld [vmem:[%s6522 + $0x1c] sm:$0xf]
      %v6532 = vunpack.c.l.b16 %v6521
      %v6533 = vpack.c.b16 %v6532, %v6532
      %v6534 = vshrl.u32 %v6413, 16
      %v6536 = vshll.u32 %v6413, 16
      %v6538 = vrot.slane %v6536, 1
      %v6539 = vor.u32 %v6534, %v6538
      %v6540 = vshll.u32 %v6414, 16
      %v6542 = vrot.slane %v6540, 1
      %v6543 = vsel %vm1620, %v6539, %v6542
      %v6544 = vshrl.u32 %v6414, 16
      %v6546 = vor.u32 %v6544, %v6542
      %v6547 = vshll.u32 %v6415, 16
      %v6549 = vrot.slane %v6547, 1
      %v6550 = vsel %vm1620, %v6546, %v6549
      %v6551 = vshrl.u32 %v6415, 16
      %v6553 = vor.u32 %v6551, %v6549
      %v6554 = vshll.u32 %v6416, 16
      %v6556 = vrot.slane %v6554, 1
      %v6557 = vsel %vm1620, %v6553, %v6556
      %v6558 = vshrl.u32 %v6416, 16
      %v6560 = vor.u32 %v6558, %v6556
      %v6561 = vshll.u32 %v6417, 16
      %v6563 = vrot.slane %v6561, 1
      %v6564 = vsel %vm1620, %v6560, %v6563
      %v6565 = vshrl.u32 %v6417, 16
      %v6567 = vor.u32 %v6565, %v6563
      %v6568 = vshll.u32 %v6418, 16
      %v6570 = vrot.slane %v6568, 1
      %v6571 = vsel %vm1620, %v6567, %v6570
      %v6572 = vshrl.u32 %v6418, 16
      %v6574 = vor.u32 %v6572, %v6570
      %v6576 = vshll.u32 %v6533, 16
      %v6578 = vrot.slane %v6576, 1
      %v6579 = vsel %vm1620, %v6574, %v6578
      %v6580 = vshrl.u32 %v6533, 16
      %v6582 = vor.u32 %v6580, %v6578
      %v6591 = vunpack.c.l.b16 %v6523
      %v6592 = vunpack.c.l.b16 %v6524
      %v6593 = vunpack.c.l.b16 %v6525
      %v6594 = vunpack.c.l.b16 %v6526
      %v6595 = vunpack.c.l.b16 %v6527
      %v6596 = vunpack.c.l.b16 %v6528
      %v6597 = vunpack.c.l.b16 %v6529
      %v6598 = vunpack.c.l.b16 %v6530
      %v6599 = vpack.c.b16 %v6592, %v6591
      %v6600 = vpack.c.b16 %v6594, %v6593
      %v6601 = vpack.c.b16 %v6596, %v6595
      %v6602 = vpack.c.b16 %v6598, %v6597
      %v6608 = vsel %vm863, %v6543, 0
      %v6611 = vsel %vm863, %v6550, 0
      %v6614 = vsel %vm863, %v6557, 0
      %v6617 = vsel %vm863, %v6564, 0
      %v6620 = vsel %vm863, %v6571, 0
      %v6623 = vsel %vm863, %v6579, 0
      %v6626 = vsel %vm863, %v6582, 0
      %6628 = vmatpush.bf16.msra.mxu0 0
      %6629 = vmatpush.bf16.msra.mxu0 0
      %6630 = vmatpush.bf16.msra.mxu0 0
      %6631 = vmatpush.bf16.msra.mxu0 0
      %6632 = vmatpush.bf16.msra.mxu0 %v6602
      %6633 = vmatpush.bf16.msra.mxu0 %v6601
      %6634 = vmatpush.bf16.msra.mxu0 %v6600
      %6635 = vmatpush.bf16.msra.mxu0 %v6599
      %6636 = vmatmul.bf16.gmra.mxu0 %v6608
      %v6637 = vpop.f32.mrf.mxu0
      %v6638 = vadd.f32 0.0, %v6637
      %v6639 = vpop.f32.mrf.mxu0
      %v6640 = vadd.f32 0.0, %v6639
      %6641 = vmatmul.bf16.gmra.mxu0 %v6611
      %v6642 = vpop.f32.mrf.mxu0
      %v6643 = vadd.f32 0.0, %v6642
      %v6644 = vpop.f32.mrf.mxu0
      %v6645 = vadd.f32 0.0, %v6644
      %6646 = vmatmul.bf16.gmra.mxu0 %v6614
      %v6647 = vpop.f32.mrf.mxu0
      %v6648 = vadd.f32 0.0, %v6647
      %v6649 = vpop.f32.mrf.mxu0
      %v6650 = vadd.f32 0.0, %v6649
      %6651 = vmatmul.bf16.gmra.mxu0 %v6617
      %v6652 = vpop.f32.mrf.mxu0
      %v6653 = vadd.f32 0.0, %v6652
      %v6654 = vpop.f32.mrf.mxu0
      %v6655 = vadd.f32 0.0, %v6654
      %6656 = vmatmul.bf16.gmra.mxu0 %v6620
      %v6657 = vpop.f32.mrf.mxu0
      %v6658 = vadd.f32 0.0, %v6657
      %v6659 = vpop.f32.mrf.mxu0
      %v6660 = vadd.f32 0.0, %v6659
      %6661 = vmatmul.bf16.gmra.mxu0 %v6623
      %v6662 = vpop.f32.mrf.mxu0
      %v6663 = vadd.f32 0.0, %v6662
      %v6664 = vpop.f32.mrf.mxu0
      %v6665 = vadd.f32 0.0, %v6664
      %6666 = vmatmul.bf16.gmra.mxu0 %v6626
      %v6667 = vpop.f32.mrf.mxu0
      %v6668 = vadd.f32 0.0, %v6667
      %v6669 = vpop.f32.mrf.mxu0
      %6670 = vdwg.mxu0
      %v6671 = vadd.f32 %v6508, %v6638
      %v6672 = vadd.f32 %v6509, %v6640
      %v6673 = vadd.f32 %v6510, %v6643
      %v6674 = vadd.f32 %v6511, %v6645
      %v6675 = vadd.f32 %v6512, %v6648
      %v6676 = vadd.f32 %v6513, %v6650
      %v6677 = vadd.f32 %v6514, %v6653
      %v6678 = vadd.f32 %v6515, %v6655
      %v6679 = vadd.f32 %v6516, %v6658
      %v6680 = vadd.f32 %v6517, %v6660
      %v6681 = vadd.f32 %v6518, %v6663
      %v6682 = vadd.f32 %v6519, %v6665
      %v6683 = vadd.f32 %v6520, %v6668
      %v6684 = vld [vmem:[#allocation2 + $0xc] sm:$0xf]
      %v6685 = vld [vmem:[#allocation2 + $0x10] sm:$0xf]
      %v6686 = vld [vmem:[#allocation2 + $0x14] sm:$0xf]
      %v6687 = vld [vmem:[#allocation2 + $0x18] sm:$0xf]
      %v6688 = vld [vmem:[#allocation2 + $0x1c] sm:$0xf]
      %v6689 = vld [vmem:[#allocation2 + $0x20] sm:$0xf]
      %v6690 = vld [vmem:[#allocation2 + $0x24] sm:$0xf]
      %v6691 = vld [vmem:[#allocation2 + $0x28] sm:$0xf]
      %v6692 = vld [vmem:[#allocation2 + $0x2c] sm:$0xf]
      %v6693 = vld [vmem:[#allocation2 + $0x30] sm:$0xf]
      %v6694 = vld [vmem:[#allocation2 + $0x34] sm:$0xf]
      %v6695 = vld [vmem:[#allocation2 + $0x38] sm:$0xf]
      %v6696 = vld [vmem:[#allocation2 + $0x3c] sm:$0x7]
      %s6697 = scalar_lea.vmem %s15, 192
      %v6698 = vld [vmem:[%s6697] sm:$0xf]
      %v6699 = vld [vmem:[%s6697 + $0x4] sm:$0xf]
      %v6700 = vld [vmem:[%s6697 + $0x8] sm:$0xf]
      %v6701 = vld [vmem:[%s6697 + $0xc] sm:$0xf]
      %v6702 = vld [vmem:[%s6697 + $0x10] sm:$0xf]
      %v6703 = vld [vmem:[%s6697 + $0x14] sm:$0xf]
      %v6704 = vld [vmem:[%s6697 + $0x18] sm:$0xf]
      %v6705 = vld [vmem:[%s6697 + $0x1c] sm:$0xf]
      %v6719 = vunpack.c.l.b16 %v6684
      %v6720 = vunpack.c.l.b16 %v6685
      %v6721 = vunpack.c.l.b16 %v6686
      %v6722 = vunpack.c.l.b16 %v6687
      %v6723 = vunpack.c.l.b16 %v6688
      %v6724 = vunpack.c.l.b16 %v6689
      %v6725 = vunpack.c.l.b16 %v6690
      %v6726 = vunpack.c.l.b16 %v6691
      %v6727 = vunpack.c.l.b16 %v6692
      %v6728 = vunpack.c.l.b16 %v6693
      %v6729 = vunpack.c.l.b16 %v6694
      %v6730 = vunpack.c.l.b16 %v6695
      %v6731 = vunpack.c.l.b16 %v6696
      %v6732 = vpack.c.b16 %v6720, %v6719
      %v6733 = vpack.c.b16 %v6722, %v6721
      %v6734 = vpack.c.b16 %v6724, %v6723
      %v6735 = vpack.c.b16 %v6726, %v6725
      %v6736 = vpack.c.b16 %v6728, %v6727
      %v6737 = vpack.c.b16 %v6730, %v6729
      %v6738 = vpack.c.b16 %v6731, %v6731
      %v6740 = vshrl.u32 %v6732, 16
      %v6742 = vshll.u32 %v6732, 16
      %v6744 = vrot.slane %v6742, 1
      %v6745 = vor.u32 %v6740, %v6744
      %v6747 = vshll.u32 %v6733, 16
      %v6749 = vrot.slane %v6747, 1
      %v6750 = vsel %vm1620, %v6745, %v6749
      %v6751 = vshrl.u32 %v6733, 16
      %v6753 = vor.u32 %v6751, %v6749
      %v6755 = vshll.u32 %v6734, 16
      %v6757 = vrot.slane %v6755, 1
      %v6758 = vsel %vm1620, %v6753, %v6757
      %v6759 = vshrl.u32 %v6734, 16
      %v6761 = vor.u32 %v6759, %v6757
      %v6763 = vshll.u32 %v6735, 16
      %v6765 = vrot.slane %v6763, 1
      %v6766 = vsel %vm1620, %v6761, %v6765
      %v6767 = vshrl.u32 %v6735, 16
      %v6769 = vor.u32 %v6767, %v6765
      %v6771 = vshll.u32 %v6736, 16
      %v6773 = vrot.slane %v6771, 1
      %v6774 = vsel %vm1620, %v6769, %v6773
      %v6775 = vshrl.u32 %v6736, 16
      %v6777 = vor.u32 %v6775, %v6773
      %v6779 = vshll.u32 %v6737, 16
      %v6781 = vrot.slane %v6779, 1
      %v6782 = vsel %vm1620, %v6777, %v6781
      %v6783 = vshrl.u32 %v6737, 16
      %v6785 = vor.u32 %v6783, %v6781
      %v6787 = vshll.u32 %v6738, 16
      %v6789 = vrot.slane %v6787, 1
      %v6790 = vsel %vm1620, %v6785, %v6789
      %v6791 = vshrl.u32 %v6738, 16
      %v6793 = vor.u32 %v6791, %v6789
      %v6802 = vunpack.c.l.b16 %v6698
      %v6803 = vunpack.c.l.b16 %v6699
      %v6804 = vunpack.c.l.b16 %v6700
      %v6805 = vunpack.c.l.b16 %v6701
      %v6806 = vunpack.c.l.b16 %v6702
      %v6807 = vunpack.c.l.b16 %v6703
      %v6808 = vunpack.c.l.b16 %v6704
      %v6809 = vunpack.c.l.b16 %v6705
      %v6810 = vpack.c.b16 %v6803, %v6802
      %v6811 = vpack.c.b16 %v6805, %v6804
      %v6812 = vpack.c.b16 %v6807, %v6806
      %v6813 = vpack.c.b16 %v6809, %v6808
      %v6819 = vsel %vm863, %v6750, 0
      %v6822 = vsel %vm863, %v6758, 0
      %v6825 = vsel %vm863, %v6766, 0
      %v6828 = vsel %vm863, %v6774, 0
      %v6831 = vsel %vm863, %v6782, 0
      %v6834 = vsel %vm863, %v6790, 0
      %v6837 = vsel %vm863, %v6793, 0
      %6839 = vmatpush.bf16.msra.mxu0 0
      %6840 = vmatpush.bf16.msra.mxu0 0
      %6841 = vmatpush.bf16.msra.mxu0 0
      %6842 = vmatpush.bf16.msra.mxu0 0
      %6843 = vmatpush.bf16.msra.mxu0 %v6813
      %6844 = vmatpush.bf16.msra.mxu0 %v6812
      %6845 = vmatpush.bf16.msra.mxu0 %v6811
      %6846 = vmatpush.bf16.msra.mxu0 %v6810
      %6847 = vmatmul.bf16.gmra.mxu0 %v6819
      %v6848 = vpop.f32.mrf.mxu0
      %v6849 = vadd.f32 0.0, %v6848
      %v6850 = vpop.f32.mrf.mxu0
      %v6851 = vadd.f32 0.0, %v6850
      %6852 = vmatmul.bf16.gmra.mxu0 %v6822
      %v6853 = vpop.f32.mrf.mxu0
      %v6854 = vadd.f32 0.0, %v6853
      %v6855 = vpop.f32.mrf.mxu0
      %v6856 = vadd.f32 0.0, %v6855
      %6857 = vmatmul.bf16.gmra.mxu0 %v6825
      %v6858 = vpop.f32.mrf.mxu0
      %v6859 = vadd.f32 0.0, %v6858
      %v6860 = vpop.f32.mrf.mxu0
      %v6861 = vadd.f32 0.0, %v6860
      %6862 = vmatmul.bf16.gmra.mxu0 %v6828
      %v6863 = vpop.f32.mrf.mxu0
      %v6864 = vadd.f32 0.0, %v6863
      %v6865 = vpop.f32.mrf.mxu0
      %v6866 = vadd.f32 0.0, %v6865
      %6867 = vmatmul.bf16.gmra.mxu0 %v6831
      %v6868 = vpop.f32.mrf.mxu0
      %v6869 = vadd.f32 0.0, %v6868
      %v6870 = vpop.f32.mrf.mxu0
      %v6871 = vadd.f32 0.0, %v6870
      %6872 = vmatmul.bf16.gmra.mxu0 %v6834
      %v6873 = vpop.f32.mrf.mxu0
      %v6874 = vadd.f32 0.0, %v6873
      %v6875 = vpop.f32.mrf.mxu0
      %v6876 = vadd.f32 0.0, %v6875
      %6877 = vmatmul.bf16.gmra.mxu0 %v6837
      %v6878 = vpop.f32.mrf.mxu0
      %v6879 = vadd.f32 0.0, %v6878
      %v6880 = vpop.f32.mrf.mxu0
      %6881 = vdwg.mxu0
      %v6882 = vadd.f32 %v6671, %v6849
      %v6883 = vadd.f32 %v6672, %v6851
      %v6884 = vadd.f32 %v6673, %v6854
      %v6885 = vadd.f32 %v6674, %v6856
      %v6886 = vadd.f32 %v6675, %v6859
      %v6887 = vadd.f32 %v6676, %v6861
      %v6888 = vadd.f32 %v6677, %v6864
      %v6889 = vadd.f32 %v6678, %v6866
      %v6890 = vadd.f32 %v6679, %v6869
      %v6891 = vadd.f32 %v6680, %v6871
      %v6892 = vadd.f32 %v6681, %v6874
      %v6893 = vadd.f32 %v6682, %v6876
      %v6894 = vadd.f32 %v6683, %v6879
      %v6895 = vld [vmem:[#allocation2 + $0xc] sm:$0xe]
      %s6896 = scalar_lea.vmem %s15, 224
      %v6897 = vld [vmem:[%s6896] sm:$0xf]
      %v6898 = vld [vmem:[%s6896 + $0x4] sm:$0xf]
      %v6899 = vld [vmem:[%s6896 + $0x8] sm:$0xf]
      %v6900 = vld [vmem:[%s6896 + $0xc] sm:$0xf]
      %v6901 = vld [vmem:[%s6896 + $0x10] sm:$0xf]
      %v6902 = vld [vmem:[%s6896 + $0x14] sm:$0xf]
      %v6903 = vld [vmem:[%s6896 + $0x18] sm:$0xf]
      %v6904 = vld [vmem:[%s6896 + $0x1c] sm:$0xf]
      %v6906 = vunpack.c.l.b16 %v6895
      %v6907 = vpack.c.b16 %v6720, %v6906
      %v6908 = vrot.slane %v6907, 1
      %v6909 = vrot.slane %v6733, 1
      %v6910 = vsel %vm1963, %v6908, %v6909
      %v6911 = vrot.slane %v6734, 1
      %v6912 = vsel %vm1963, %v6909, %v6911
      %v6913 = vrot.slane %v6735, 1
      %v6914 = vsel %vm1963, %v6911, %v6913
      %v6915 = vrot.slane %v6736, 1
      %v6916 = vsel %vm1963, %v6913, %v6915
      %v6917 = vrot.slane %v6737, 1
      %v6918 = vsel %vm1963, %v6915, %v6917
      %v6919 = vrot.slane %v6738, 1
      %v6920 = vsel %vm1963, %v6917, %v6919
      %v6929 = vunpack.c.l.b16 %v6897
      %v6930 = vunpack.c.l.b16 %v6898
      %v6931 = vunpack.c.l.b16 %v6899
      %v6932 = vunpack.c.l.b16 %v6900
      %v6933 = vunpack.c.l.b16 %v6901
      %v6934 = vunpack.c.l.b16 %v6902
      %v6935 = vunpack.c.l.b16 %v6903
      %v6936 = vunpack.c.l.b16 %v6904
      %v6937 = vpack.c.b16 %v6930, %v6929
      %v6938 = vpack.c.b16 %v6932, %v6931
      %v6939 = vpack.c.b16 %v6934, %v6933
      %v6940 = vpack.c.b16 %v6936, %v6935
      %v6946 = vsel %vm863, %v6910, 0
      %v6949 = vsel %vm863, %v6912, 0
      %v6952 = vsel %vm863, %v6914, 0
      %v6955 = vsel %vm863, %v6916, 0
      %v6958 = vsel %vm863, %v6918, 0
      %v6961 = vsel %vm863, %v6920, 0
      %v6964 = vsel %vm863, %v6919, 0
      %6966 = vmatpush.bf16.msra.mxu0 0
      %6967 = vmatpush.bf16.msra.mxu0 0
      %6968 = vmatpush.bf16.msra.mxu0 0
      %6969 = vmatpush.bf16.msra.mxu0 0
      %6970 = vmatpush.bf16.msra.mxu0 %v6940
      %6971 = vmatpush.bf16.msra.mxu0 %v6939
      %6972 = vmatpush.bf16.msra.mxu0 %v6938
      %6973 = vmatpush.bf16.msra.mxu0 %v6937
      %6974 = vmatmul.bf16.gmra.mxu0 %v6946
      %v6975 = vpop.f32.mrf.mxu0
      %v6976 = vadd.f32 0.0, %v6975
      %v6977 = vpop.f32.mrf.mxu0
      %v6978 = vadd.f32 0.0, %v6977
      %6979 = vmatmul.bf16.gmra.mxu0 %v6949
      %v6980 = vpop.f32.mrf.mxu0
      %v6981 = vadd.f32 0.0, %v6980
      %v6982 = vpop.f32.mrf.mxu0
      %v6983 = vadd.f32 0.0, %v6982
      %6984 = vmatmul.bf16.gmra.mxu0 %v6952
      %v6985 = vpop.f32.mrf.mxu0
      %v6986 = vadd.f32 0.0, %v6985
      %v6987 = vpop.f32.mrf.mxu0
      %v6988 = vadd.f32 0.0, %v6987
      %6989 = vmatmul.bf16.gmra.mxu0 %v6955
      %v6990 = vpop.f32.mrf.mxu0
      %v6991 = vadd.f32 0.0, %v6990
      %v6992 = vpop.f32.mrf.mxu0
      %v6993 = vadd.f32 0.0, %v6992
      %6994 = vmatmul.bf16.gmra.mxu0 %v6958
      %v6995 = vpop.f32.mrf.mxu0
      %v6996 = vadd.f32 0.0, %v6995
      %v6997 = vpop.f32.mrf.mxu0
      %v6998 = vadd.f32 0.0, %v6997
      %6999 = vmatmul.bf16.gmra.mxu0 %v6961
      %v7000 = vpop.f32.mrf.mxu0
      %v7001 = vadd.f32 0.0, %v7000
      %v7002 = vpop.f32.mrf.mxu0
      %v7003 = vadd.f32 0.0, %v7002
      %7004 = vmatmul.bf16.gmra.mxu0 %v6964
      %v7005 = vpop.f32.mrf.mxu0
      %v7006 = vadd.f32 0.0, %v7005
      %v7007 = vpop.f32.mrf.mxu0
      %7008 = vdwg.mxu0
      %v7009 = vadd.f32 %v6882, %v6976
      %v7010 = vadd.f32 %v6883, %v6978
      %v7011 = vadd.f32 %v6884, %v6981
      %v7012 = vadd.f32 %v6885, %v6983
      %v7013 = vadd.f32 %v6886, %v6986
      %v7014 = vadd.f32 %v6887, %v6988
      %v7015 = vadd.f32 %v6888, %v6991
      %v7016 = vadd.f32 %v6889, %v6993
      %v7017 = vadd.f32 %v6890, %v6996
      %v7018 = vadd.f32 %v6891, %v6998
      %v7019 = vadd.f32 %v6892, %v7001
      %v7020 = vadd.f32 %v6893, %v7003
      %v7021 = vadd.f32 %v6894, %v7006
      %v7022 = vld [vmem:[#allocation2 + $0x3c] sm:$0xf]
      %s7023 = scalar_lea.vmem %s15, 256
      %v7024 = vld [vmem:[%s7023] sm:$0xf]
      %v7025 = vld [vmem:[%s7023 + $0x4] sm:$0xf]
      %v7026 = vld [vmem:[%s7023 + $0x8] sm:$0xf]
      %v7027 = vld [vmem:[%s7023 + $0xc] sm:$0xf]
      %v7028 = vld [vmem:[%s7023 + $0x10] sm:$0xf]
      %v7029 = vld [vmem:[%s7023 + $0x14] sm:$0xf]
      %v7030 = vld [vmem:[%s7023 + $0x18] sm:$0xf]
      %v7031 = vld [vmem:[%s7023 + $0x1c] sm:$0xf]
      %v7033 = vunpack.c.l.b16 %v7022
      %v7034 = vpack.c.b16 %v7033, %v7033
      %v7036 = vshrl.u32 %v6907, 16
      %v7038 = vrot.slane %v7036, 1
      %v7039 = vshll.u32 %v6907, 16
      %v7041 = vrot.slane %v7039, 2
      %v7042 = vor.u32 %v7038, %v7041
      %v7043 = vrot.slane %v6751, 1
      %v7044 = vrot.slane %v6747, 2
      %v7045 = vor.u32 %v7043, %v7044
      %v7046 = vsel %vm2075, %v7042, %v7045
      %v7047 = vrot.slane %v6759, 1
      %v7048 = vrot.slane %v6755, 2
      %v7049 = vor.u32 %v7047, %v7048
      %v7050 = vsel %vm2075, %v7045, %v7049
      %v7051 = vrot.slane %v6767, 1
      %v7052 = vrot.slane %v6763, 2
      %v7053 = vor.u32 %v7051, %v7052
      %v7054 = vsel %vm2075, %v7049, %v7053
      %v7055 = vrot.slane %v6775, 1
      %v7056 = vrot.slane %v6771, 2
      %v7057 = vor.u32 %v7055, %v7056
      %v7058 = vsel %vm2075, %v7053, %v7057
      %v7059 = vrot.slane %v6783, 1
      %v7060 = vrot.slane %v6779, 2
      %v7061 = vor.u32 %v7059, %v7060
      %v7062 = vsel %vm2075, %v7057, %v7061
      %v7064 = vshrl.u32 %v7034, 16
      %v7066 = vrot.slane %v7064, 1
      %v7067 = vshll.u32 %v7034, 16
      %v7069 = vrot.slane %v7067, 2
      %v7070 = vor.u32 %v7066, %v7069
      %v7071 = vsel %vm2075, %v7061, %v7070
      %v7080 = vunpack.c.l.b16 %v7024
      %v7081 = vunpack.c.l.b16 %v7025
      %v7082 = vunpack.c.l.b16 %v7026
      %v7083 = vunpack.c.l.b16 %v7027
      %v7084 = vunpack.c.l.b16 %v7028
      %v7085 = vunpack.c.l.b16 %v7029
      %v7086 = vunpack.c.l.b16 %v7030
      %v7087 = vunpack.c.l.b16 %v7031
      %v7088 = vpack.c.b16 %v7081, %v7080
      %v7089 = vpack.c.b16 %v7083, %v7082
      %v7090 = vpack.c.b16 %v7085, %v7084
      %v7091 = vpack.c.b16 %v7087, %v7086
      %v7097 = vsel %vm863, %v7046, 0
      %v7100 = vsel %vm863, %v7050, 0
      %v7103 = vsel %vm863, %v7054, 0
      %v7106 = vsel %vm863, %v7058, 0
      %v7109 = vsel %vm863, %v7062, 0
      %v7112 = vsel %vm863, %v7071, 0
      %v7115 = vsel %vm863, %v7070, 0
      %7117 = vmatpush.bf16.msra.mxu0 0
      %7118 = vmatpush.bf16.msra.mxu0 0
      %7119 = vmatpush.bf16.msra.mxu0 0
      %7120 = vmatpush.bf16.msra.mxu0 0
      %7121 = vmatpush.bf16.msra.mxu0 %v7091
      %7122 = vmatpush.bf16.msra.mxu0 %v7090
      %7123 = vmatpush.bf16.msra.mxu0 %v7089
      %7124 = vmatpush.bf16.msra.mxu0 %v7088
      %7125 = vmatmul.bf16.gmra.mxu0 %v7097
      %v7126 = vpop.f32.mrf.mxu0
      %v7127 = vadd.f32 0.0, %v7126
      %v7128 = vpop.f32.mrf.mxu0
      %v7129 = vadd.f32 0.0, %v7128
      %7130 = vmatmul.bf16.gmra.mxu0 %v7100
      %v7131 = vpop.f32.mrf.mxu0
      %v7132 = vadd.f32 0.0, %v7131
      %v7133 = vpop.f32.mrf.mxu0
      %v7134 = vadd.f32 0.0, %v7133
      %7135 = vmatmul.bf16.gmra.mxu0 %v7103
      %v7136 = vpop.f32.mrf.mxu0
      %v7137 = vadd.f32 0.0, %v7136
      %v7138 = vpop.f32.mrf.mxu0
      %v7139 = vadd.f32 0.0, %v7138
      %7140 = vmatmul.bf16.gmra.mxu0 %v7106
      %v7141 = vpop.f32.mrf.mxu0
      %v7142 = vadd.f32 0.0, %v7141
      %v7143 = vpop.f32.mrf.mxu0
      %v7144 = vadd.f32 0.0, %v7143
      %7145 = vmatmul.bf16.gmra.mxu0 %v7109
      %v7146 = vpop.f32.mrf.mxu0
      %v7147 = vadd.f32 0.0, %v7146
      %v7148 = vpop.f32.mrf.mxu0
      %v7149 = vadd.f32 0.0, %v7148
      %7150 = vmatmul.bf16.gmra.mxu0 %v7112
      %v7151 = vpop.f32.mrf.mxu0
      %v7152 = vadd.f32 0.0, %v7151
      %v7153 = vpop.f32.mrf.mxu0
      %v7154 = vadd.f32 0.0, %v7153
      %7155 = vmatmul.bf16.gmra.mxu0 %v7115
      %v7156 = vpop.f32.mrf.mxu0
      %v7157 = vadd.f32 0.0, %v7156
      %v7158 = vpop.f32.mrf.mxu0
      %7159 = vdwg.mxu0
      %v7160 = vadd.f32 %v7009, %v7127
      %v7161 = vadd.f32 %v7010, %v7129
      %v7162 = vadd.f32 %v7011, %v7132
      %v7163 = vadd.f32 %v7012, %v7134
      %v7164 = vadd.f32 %v7013, %v7137
      %v7165 = vadd.f32 %v7014, %v7139
      %v7166 = vadd.f32 %v7015, %v7142
      %v7167 = vadd.f32 %v7016, %v7144
      %v7168 = vadd.f32 %v7017, %v7147
      %v7169 = vadd.f32 %v7018, %v7149
      %v7170 = vadd.f32 %v7019, %v7152
      %v7171 = vadd.f32 %v7020, %v7154
      %v7172 = vadd.f32 %v7021, %v7157
      %v7173 = vmax.f32 %v7160, 0.0
      %v7174 = vmax.f32 %v7161, 0.0
      %v7175 = vmax.f32 %v7162, 0.0
      %v7176 = vmax.f32 %v7163, 0.0
      %v7177 = vmax.f32 %v7164, 0.0
      %v7178 = vmax.f32 %v7165, 0.0
      %v7179 = vmax.f32 %v7166, 0.0
      %v7180 = vmax.f32 %v7167, 0.0
      %v7181 = vmax.f32 %v7168, 0.0
      %v7182 = vmax.f32 %v7169, 0.0
      %v7183 = vmax.f32 %v7170, 0.0
      %v7184 = vmax.f32 %v7171, 0.0
      %v7185 = vmax.f32 %v7172, 0.0
      %v7186 = vmul.f32 %v7173, %v2244
      %v7187 = vmul.f32 %v7174, %v2249
      %v7188 = vmul.f32 %v7175, %v2254
      %v7189 = vmul.f32 %v7176, %v2259
      %v7190 = vmul.f32 %v7177, %v2264
      %v7191 = vmul.f32 %v7178, %v2269
      %v7192 = vmul.f32 %v7179, %v2274
      %v7193 = vmul.f32 %v7180, %v2279
      %v7194 = vmul.f32 %v7181, %v2284
      %v7195 = vmul.f32 %v7182, %v2289
      %v7196 = vmul.f32 %v7183, %v2294
      %v7197 = vmul.f32 %v7184, %v2299
      %v7198 = vmul.f32 %v7185, %v2304
      %v7199 = vpack.c.bf16 %v7186, %v7186
      %v7200 = vpack.c.bf16 %v7187, %v7187
      %v7201 = vpack.c.bf16 %v7188, %v7188
      %v7202 = vpack.c.bf16 %v7189, %v7189
      %v7203 = vpack.c.bf16 %v7190, %v7190
      %v7204 = vpack.c.bf16 %v7191, %v7191
      %v7205 = vpack.c.bf16 %v7192, %v7192
      %v7206 = vpack.c.bf16 %v7193, %v7193
      %v7207 = vpack.c.bf16 %v7194, %v7194
      %v7208 = vpack.c.bf16 %v7195, %v7195
      %v7209 = vpack.c.bf16 %v7196, %v7196
      %v7210 = vpack.c.bf16 %v7197, %v7197
      %v7211 = vpack.c.bf16 %v7198, %v7198
      %7212 = vst.msk [vmem:[#allocation3 + $0x8] sm:$0xf] %vm624, %v7199
      %7213 = vst.msk [vmem:[#allocation3 + $0xc] sm:$0xf] %vm624, %v7200
      %7214 = vst.msk [vmem:[#allocation3 + $0x10] sm:$0xf] %vm624, %v7201
      %7215 = vst.msk [vmem:[#allocation3 + $0x14] sm:$0xf] %vm624, %v7202
      %7216 = vst.msk [vmem:[#allocation3 + $0x18] sm:$0xf] %vm624, %v7203
      %7217 = vst.msk [vmem:[#allocation3 + $0x1c] sm:$0xf] %vm624, %v7204
      %7218 = vst.msk [vmem:[#allocation3 + $0x20] sm:$0xf] %vm624, %v7205
      %7219 = vst.msk [vmem:[#allocation3 + $0x24] sm:$0xf] %vm624, %v7206
      %7220 = vst.msk [vmem:[#allocation3 + $0x28] sm:$0xf] %vm624, %v7207
      %7221 = vst.msk [vmem:[#allocation3 + $0x2c] sm:$0xf] %vm624, %v7208
      %7222 = vst.msk [vmem:[#allocation3 + $0x30] sm:$0xf] %vm624, %v7209
      %7223 = vst.msk [vmem:[#allocation3 + $0x34] sm:$0xf] %vm624, %v7210
      %7224 = vst.msk [vmem:[#allocation3 + $0x38] sm:$0x3] %vm630, %v7211
      %7225 = vst.msk [vmem:[#allocation3 + $0x8] sm:$0xf] %vm3941, %v3837
      %7226 = vst.msk [vmem:[#allocation3 + $0xc] sm:$0xf] %vm3941, %v3838
      %7227 = vst.msk [vmem:[#allocation3 + $0x10] sm:$0xf] %vm3941, %v3839
      %7228 = vst.msk [vmem:[#allocation3 + $0x14] sm:$0xf] %vm3941, %v3840
      %7229 = vst.msk [vmem:[#allocation3 + $0x18] sm:$0xf] %vm3941, %v3841
      %7230 = vst.msk [vmem:[#allocation3 + $0x1c] sm:$0xf] %vm3941, %v3842
      %7231 = vst.msk [vmem:[#allocation3 + $0x20] sm:$0xf] %vm3941, %v3843
      %7232 = vst.msk [vmem:[#allocation3 + $0x24] sm:$0xf] %vm3941, %v3844
      %7233 = vst.msk [vmem:[#allocation3 + $0x28] sm:$0xf] %vm3941, %v3845
      %7234 = vst.msk [vmem:[#allocation3 + $0x2c] sm:$0xf] %vm3941, %v3846
      %7235 = vst.msk [vmem:[#allocation3 + $0x30] sm:$0xf] %vm3941, %v3847
      %7236 = vst.msk [vmem:[#allocation3 + $0x34] sm:$0xf] %vm3941, %v3848
      %7237 = vst.msk [vmem:[#allocation3 + $0x38] sm:$0x3] %vm3954, %v3849
      %v7238 = vld [vmem:[#allocation3] sm:$0xc]
      %v7239 = vld [vmem:[#allocation3 + $0x4] sm:$0xf]
      %v7240 = vld [vmem:[#allocation3 + $0x8] sm:$0xf]
      %v7241 = vld [vmem:[#allocation3 + $0xc] sm:$0xf]
      %v7242 = vld [vmem:[#allocation3 + $0x10] sm:$0xf]
      %v7243 = vld [vmem:[#allocation3 + $0x14] sm:$0xf]
      %v7244 = vld [vmem:[#allocation3 + $0x18] sm:$0xf]
      %v7245 = vld [vmem:[#allocation3 + $0x1c] sm:$0xf]
      %v7246 = vld [vmem:[#allocation3 + $0x20] sm:$0xf]
      %v7247 = vld [vmem:[#allocation3 + $0x24] sm:$0xf]
      %v7248 = vld [vmem:[#allocation3 + $0x28] sm:$0xf]
      %v7249 = vld [vmem:[#allocation3 + $0x2c] sm:$0xf]
      %v7250 = vld [vmem:[#allocation3 + $0x30] sm:$0xf]
      %v7251 = vld [vmem:[#allocation3 + $0x34] sm:$0x1]
      %v7252 = vld [vmem:[%s13] sm:$0xf]
      %v7253 = vld [vmem:[%s13 + $0x4] sm:$0xf]
      %v7254 = vld [vmem:[%s13 + $0x8] sm:$0xf]
      %v7255 = vld [vmem:[%s13 + $0xc] sm:$0xf]
      %v7256 = vld [vmem:[%s13 + $0x10] sm:$0xf]
      %v7257 = vld [vmem:[%s13 + $0x14] sm:$0xf]
      %v7258 = vld [vmem:[%s13 + $0x18] sm:$0xf]
      %v7259 = vld [vmem:[%s13 + $0x1c] sm:$0xf]
      %v7260 = vld [vmem:[%s13 + $0x20] sm:$0xf]
      %v7261 = vld [vmem:[%s13 + $0x24] sm:$0xf]
      %v7262 = vld [vmem:[%s13 + $0x28] sm:$0xf]
      %v7263 = vld [vmem:[%s13 + $0x2c] sm:$0xf]
      %v7264 = vld [vmem:[%s13 + $0x30] sm:$0xf]
      %v7265 = vld [vmem:[%s13 + $0x34] sm:$0xf]
      %v7266 = vld [vmem:[%s13 + $0x38] sm:$0xf]
      %v7267 = vld [vmem:[%s13 + $0x3c] sm:$0xf]
      %v7268 = vld [vmem:[%s14] sm:$0x1]
      %v7270 = vperm.slane %v7268, 0
      %v7286 = vunpack.c.l.b16 %v7238
      %v7287 = vunpack.c.l.b16 %v7239
      %v7288 = vunpack.c.l.b16 %v7240
      %v7289 = vunpack.c.l.b16 %v7241
      %v7290 = vunpack.c.l.b16 %v7242
      %v7291 = vunpack.c.l.b16 %v7243
      %v7292 = vunpack.c.l.b16 %v7244
      %v7293 = vunpack.c.l.b16 %v7245
      %v7294 = vunpack.c.l.b16 %v7246
      %v7295 = vunpack.c.l.b16 %v7247
      %v7296 = vunpack.c.l.b16 %v7248
      %v7297 = vunpack.c.l.b16 %v7249
      %v7298 = vunpack.c.l.b16 %v7250
      %v7299 = vunpack.c.l.b16 %v7251
      %v7300 = vpack.c.b16 %v7287, %v7286
      %v7301 = vpack.c.b16 %v7289, %v7288
      %v7302 = vpack.c.b16 %v7291, %v7290
      %v7303 = vpack.c.b16 %v7293, %v7292
      %v7304 = vpack.c.b16 %v7295, %v7294
      %v7305 = vpack.c.b16 %v7297, %v7296
      %v7306 = vpack.c.b16 %v7299, %v7298
      %v7308 = vshrl.u32 %v7300, 16
      %v7310 = vrot.slane %v7308, 2
      %v7311 = vshll.u32 %v7300, 16
      %v7313 = vrot.slane %v7311, 3
      %v7314 = vor.u32 %v7310, %v7313
      %v7316 = vshrl.u32 %v7301, 16
      %v7318 = vrot.slane %v7316, 2
      %v7319 = vshll.u32 %v7301, 16
      %v7321 = vrot.slane %v7319, 3
      %v7322 = vor.u32 %v7318, %v7321
      %v7323 = vsel %vm985, %v7314, %v7322
      %v7325 = vshrl.u32 %v7302, 16
      %v7327 = vrot.slane %v7325, 2
      %v7328 = vshll.u32 %v7302, 16
      %v7330 = vrot.slane %v7328, 3
      %v7331 = vor.u32 %v7327, %v7330
      %v7332 = vsel %vm985, %v7322, %v7331
      %v7334 = vshrl.u32 %v7303, 16
      %v7336 = vrot.slane %v7334, 2
      %v7337 = vshll.u32 %v7303, 16
      %v7339 = vrot.slane %v7337, 3
      %v7340 = vor.u32 %v7336, %v7339
      %v7341 = vsel %vm985, %v7331, %v7340
      %v7343 = vshrl.u32 %v7304, 16
      %v7345 = vrot.slane %v7343, 2
      %v7346 = vshll.u32 %v7304, 16
      %v7348 = vrot.slane %v7346, 3
      %v7349 = vor.u32 %v7345, %v7348
      %v7350 = vsel %vm985, %v7340, %v7349
      %v7352 = vshrl.u32 %v7305, 16
      %v7354 = vrot.slane %v7352, 2
      %v7355 = vshll.u32 %v7305, 16
      %v7357 = vrot.slane %v7355, 3
      %v7358 = vor.u32 %v7354, %v7357
      %v7359 = vsel %vm985, %v7349, %v7358
      %v7361 = vshrl.u32 %v7306, 16
      %v7363 = vrot.slane %v7361, 2
      %v7364 = vshll.u32 %v7306, 16
      %v7366 = vrot.slane %v7364, 3
      %v7367 = vor.u32 %v7363, %v7366
      %v7368 = vsel %vm985, %v7358, %v7367
      %v7392 = vunpack.c.l.b16 %v7252
      %v7393 = vunpack.c.l.b16 %v7253
      %v7394 = vunpack.c.l.b16 %v7254
      %v7395 = vunpack.c.l.b16 %v7255
      %v7396 = vunpack.c.l.b16 %v7256
      %v7397 = vunpack.c.l.b16 %v7257
      %v7398 = vunpack.c.l.b16 %v7258
      %v7399 = vunpack.c.l.b16 %v7259
      %v7400 = vunpack.c.l.b16 %v7260
      %v7401 = vunpack.c.l.b16 %v7261
      %v7402 = vunpack.c.l.b16 %v7262
      %v7403 = vunpack.c.l.b16 %v7263
      %v7404 = vunpack.c.l.b16 %v7264
      %v7405 = vunpack.c.l.b16 %v7265
      %v7406 = vunpack.c.l.b16 %v7266
      %v7407 = vunpack.c.l.b16 %v7267
      %v7408 = vpack.c.b16 %v7393, %v7392
      %v7409 = vpack.c.b16 %v7395, %v7394
      %v7410 = vpack.c.b16 %v7397, %v7396
      %v7411 = vpack.c.b16 %v7399, %v7398
      %v7412 = vpack.c.b16 %v7401, %v7400
      %v7413 = vpack.c.b16 %v7403, %v7402
      %v7414 = vpack.c.b16 %v7405, %v7404
      %v7415 = vpack.c.b16 %v7407, %v7406
      %7424 = vmatpush.bf16.msra.mxu0 %v7415
      %7425 = vmatpush.bf16.msra.mxu0 %v7414
      %7426 = vmatpush.bf16.msra.mxu0 %v7413
      %7427 = vmatpush.bf16.msra.mxu0 %v7412
      %7428 = vmatpush.bf16.msra.mxu0 %v7411
      %7429 = vmatpush.bf16.msra.mxu0 %v7410
      %7430 = vmatpush.bf16.msra.mxu0 %v7409
      %7431 = vmatpush.bf16.msra.mxu0 %v7408
      %7432 = vmatmul.bf16.gmra.mxu0 %v7323
      %v7433 = vpop.f32.mrf.mxu0
      %v7434 = vadd.f32 %v7270, %v7433
      %v7435 = vpop.f32.mrf.mxu0
      %v7436 = vadd.f32 %v7270, %v7435
      %7437 = vmatmul.bf16.gmra.mxu0 %v7332
      %v7438 = vpop.f32.mrf.mxu0
      %v7439 = vadd.f32 %v7270, %v7438
      %v7440 = vpop.f32.mrf.mxu0
      %v7441 = vadd.f32 %v7270, %v7440
      %7442 = vmatmul.bf16.gmra.mxu0 %v7341
      %v7443 = vpop.f32.mrf.mxu0
      %v7444 = vadd.f32 %v7270, %v7443
      %v7445 = vpop.f32.mrf.mxu0
      %v7446 = vadd.f32 %v7270, %v7445
      %7447 = vmatmul.bf16.gmra.mxu0 %v7350
      %v7448 = vpop.f32.mrf.mxu0
      %v7449 = vadd.f32 %v7270, %v7448
      %v7450 = vpop.f32.mrf.mxu0
      %v7451 = vadd.f32 %v7270, %v7450
      %7452 = vmatmul.bf16.gmra.mxu0 %v7359
      %v7453 = vpop.f32.mrf.mxu0
      %v7454 = vadd.f32 %v7270, %v7453
      %v7455 = vpop.f32.mrf.mxu0
      %v7456 = vadd.f32 %v7270, %v7455
      %7457 = vmatmul.bf16.gmra.mxu0 %v7368
      %v7458 = vpop.f32.mrf.mxu0
      %v7459 = vadd.f32 %v7270, %v7458
      %v7460 = vpop.f32.mrf.mxu0
      %v7461 = vadd.f32 %v7270, %v7460
      %7462 = vmatmul.bf16.gmra.mxu0 %v7367
      %v7463 = vpop.f32.mrf.mxu0
      %v7464 = vadd.f32 %v7270, %v7463
      %v7465 = vpop.f32.mrf.mxu0
      %7466 = vdwg.mxu0
      %v7467 = vld [vmem:[#allocation3] sm:$0x8]
      %s7468 = scalar_lea.vmem %s13, 64
      %v7469 = vld [vmem:[%s7468] sm:$0xf]
      %v7470 = vld [vmem:[%s7468 + $0x4] sm:$0xf]
      %v7471 = vld [vmem:[%s7468 + $0x8] sm:$0xf]
      %v7472 = vld [vmem:[%s7468 + $0xc] sm:$0xf]
      %v7473 = vld [vmem:[%s7468 + $0x10] sm:$0xf]
      %v7474 = vld [vmem:[%s7468 + $0x14] sm:$0xf]
      %v7475 = vld [vmem:[%s7468 + $0x18] sm:$0xf]
      %v7476 = vld [vmem:[%s7468 + $0x1c] sm:$0xf]
      %v7477 = vld [vmem:[%s7468 + $0x20] sm:$0xf]
      %v7478 = vld [vmem:[%s7468 + $0x24] sm:$0xf]
      %v7479 = vld [vmem:[%s7468 + $0x28] sm:$0xf]
      %v7480 = vld [vmem:[%s7468 + $0x2c] sm:$0xf]
      %v7481 = vld [vmem:[%s7468 + $0x30] sm:$0xf]
      %v7482 = vld [vmem:[%s7468 + $0x34] sm:$0xf]
      %v7483 = vld [vmem:[%s7468 + $0x38] sm:$0xf]
      %v7484 = vld [vmem:[%s7468 + $0x3c] sm:$0xf]
      %v7486 = vunpack.c.l.b16 %v7467
      %v7487 = vpack.c.b16 %v7287, %v7486
      %v7488 = vrot.slane %v7487, 3
      %v7489 = vrot.slane %v7301, 3
      %v7490 = vsel %vm1133, %v7488, %v7489
      %v7491 = vrot.slane %v7302, 3
      %v7492 = vsel %vm1133, %v7489, %v7491
      %v7493 = vrot.slane %v7303, 3
      %v7494 = vsel %vm1133, %v7491, %v7493
      %v7495 = vrot.slane %v7304, 3
      %v7496 = vsel %vm1133, %v7493, %v7495
      %v7497 = vrot.slane %v7305, 3
      %v7498 = vsel %vm1133, %v7495, %v7497
      %v7499 = vrot.slane %v7306, 3
      %v7500 = vsel %vm1133, %v7497, %v7499
      %v7524 = vunpack.c.l.b16 %v7469
      %v7525 = vunpack.c.l.b16 %v7470
      %v7526 = vunpack.c.l.b16 %v7471
      %v7527 = vunpack.c.l.b16 %v7472
      %v7528 = vunpack.c.l.b16 %v7473
      %v7529 = vunpack.c.l.b16 %v7474
      %v7530 = vunpack.c.l.b16 %v7475
      %v7531 = vunpack.c.l.b16 %v7476
      %v7532 = vunpack.c.l.b16 %v7477
      %v7533 = vunpack.c.l.b16 %v7478
      %v7534 = vunpack.c.l.b16 %v7479
      %v7535 = vunpack.c.l.b16 %v7480
      %v7536 = vunpack.c.l.b16 %v7481
      %v7537 = vunpack.c.l.b16 %v7482
      %v7538 = vunpack.c.l.b16 %v7483
      %v7539 = vunpack.c.l.b16 %v7484
      %v7540 = vpack.c.b16 %v7525, %v7524
      %v7541 = vpack.c.b16 %v7527, %v7526
      %v7542 = vpack.c.b16 %v7529, %v7528
      %v7543 = vpack.c.b16 %v7531, %v7530
      %v7544 = vpack.c.b16 %v7533, %v7532
      %v7545 = vpack.c.b16 %v7535, %v7534
      %v7546 = vpack.c.b16 %v7537, %v7536
      %v7547 = vpack.c.b16 %v7539, %v7538
      %7556 = vmatpush.bf16.msra.mxu0 %v7547
      %7557 = vmatpush.bf16.msra.mxu0 %v7546
      %7558 = vmatpush.bf16.msra.mxu0 %v7545
      %7559 = vmatpush.bf16.msra.mxu0 %v7544
      %7560 = vmatpush.bf16.msra.mxu0 %v7543
      %7561 = vmatpush.bf16.msra.mxu0 %v7542
      %7562 = vmatpush.bf16.msra.mxu0 %v7541
      %7563 = vmatpush.bf16.msra.mxu0 %v7540
      %7564 = vmatmul.bf16.gmra.mxu0 %v7490
      %v7565 = vpop.f32.mrf.mxu0
      %v7566 = vadd.f32 0.0, %v7565
      %v7567 = vpop.f32.mrf.mxu0
      %v7568 = vadd.f32 0.0, %v7567
      %7569 = vmatmul.bf16.gmra.mxu0 %v7492
      %v7570 = vpop.f32.mrf.mxu0
      %v7571 = vadd.f32 0.0, %v7570
      %v7572 = vpop.f32.mrf.mxu0
      %v7573 = vadd.f32 0.0, %v7572
      %7574 = vmatmul.bf16.gmra.mxu0 %v7494
      %v7575 = vpop.f32.mrf.mxu0
      %v7576 = vadd.f32 0.0, %v7575
      %v7577 = vpop.f32.mrf.mxu0
      %v7578 = vadd.f32 0.0, %v7577
      %7579 = vmatmul.bf16.gmra.mxu0 %v7496
      %v7580 = vpop.f32.mrf.mxu0
      %v7581 = vadd.f32 0.0, %v7580
      %v7582 = vpop.f32.mrf.mxu0
      %v7583 = vadd.f32 0.0, %v7582
      %7584 = vmatmul.bf16.gmra.mxu0 %v7498
      %v7585 = vpop.f32.mrf.mxu0
      %v7586 = vadd.f32 0.0, %v7585
      %v7587 = vpop.f32.mrf.mxu0
      %v7588 = vadd.f32 0.0, %v7587
      %7589 = vmatmul.bf16.gmra.mxu0 %v7500
      %v7590 = vpop.f32.mrf.mxu0
      %v7591 = vadd.f32 0.0, %v7590
      %v7592 = vpop.f32.mrf.mxu0
      %v7593 = vadd.f32 0.0, %v7592
      %7594 = vmatmul.bf16.gmra.mxu0 %v7499
      %v7595 = vpop.f32.mrf.mxu0
      %v7596 = vadd.f32 0.0, %v7595
      %v7597 = vpop.f32.mrf.mxu0
      %7598 = vdwg.mxu0
      %v7599 = vadd.f32 %v7434, %v7566
      %v7600 = vadd.f32 %v7436, %v7568
      %v7601 = vadd.f32 %v7439, %v7571
      %v7602 = vadd.f32 %v7441, %v7573
      %v7603 = vadd.f32 %v7444, %v7576
      %v7604 = vadd.f32 %v7446, %v7578
      %v7605 = vadd.f32 %v7449, %v7581
      %v7606 = vadd.f32 %v7451, %v7583
      %v7607 = vadd.f32 %v7454, %v7586
      %v7608 = vadd.f32 %v7456, %v7588
      %v7609 = vadd.f32 %v7459, %v7591
      %v7610 = vadd.f32 %v7461, %v7593
      %v7611 = vadd.f32 %v7464, %v7596
      %v7612 = vld [vmem:[#allocation3 + $0x34] sm:$0x3]
      %s7613 = scalar_lea.vmem %s13, 128
      %v7614 = vld [vmem:[%s7613] sm:$0xf]
      %v7615 = vld [vmem:[%s7613 + $0x4] sm:$0xf]
      %v7616 = vld [vmem:[%s7613 + $0x8] sm:$0xf]
      %v7617 = vld [vmem:[%s7613 + $0xc] sm:$0xf]
      %v7618 = vld [vmem:[%s7613 + $0x10] sm:$0xf]
      %v7619 = vld [vmem:[%s7613 + $0x14] sm:$0xf]
      %v7620 = vld [vmem:[%s7613 + $0x18] sm:$0xf]
      %v7621 = vld [vmem:[%s7613 + $0x1c] sm:$0xf]
      %v7622 = vld [vmem:[%s7613 + $0x20] sm:$0xf]
      %v7623 = vld [vmem:[%s7613 + $0x24] sm:$0xf]
      %v7624 = vld [vmem:[%s7613 + $0x28] sm:$0xf]
      %v7625 = vld [vmem:[%s7613 + $0x2c] sm:$0xf]
      %v7626 = vld [vmem:[%s7613 + $0x30] sm:$0xf]
      %v7627 = vld [vmem:[%s7613 + $0x34] sm:$0xf]
      %v7628 = vld [vmem:[%s7613 + $0x38] sm:$0xf]
      %v7629 = vld [vmem:[%s7613 + $0x3c] sm:$0xf]
      %v7631 = vunpack.c.l.b16 %v7612
      %v7632 = vpack.c.b16 %v7631, %v7298
      %v7634 = vshrl.u32 %v7487, 16
      %v7636 = vrot.slane %v7634, 3
      %v7637 = vshll.u32 %v7487, 16
      %v7639 = vrot.slane %v7637, 4
      %v7640 = vor.u32 %v7636, %v7639
      %v7641 = vrot.slane %v7316, 3
      %v7642 = vrot.slane %v7319, 4
      %v7643 = vor.u32 %v7641, %v7642
      %v7644 = vsel %vm1245, %v7640, %v7643
      %v7645 = vrot.slane %v7325, 3
      %v7646 = vrot.slane %v7328, 4
      %v7647 = vor.u32 %v7645, %v7646
      %v7648 = vsel %vm1245, %v7643, %v7647
      %v7649 = vrot.slane %v7334, 3
      %v7650 = vrot.slane %v7337, 4
      %v7651 = vor.u32 %v7649, %v7650
      %v7652 = vsel %vm1245, %v7647, %v7651
      %v7653 = vrot.slane %v7343, 3
      %v7654 = vrot.slane %v7346, 4
      %v7655 = vor.u32 %v7653, %v7654
      %v7656 = vsel %vm1245, %v7651, %v7655
      %v7657 = vrot.slane %v7352, 3
      %v7658 = vrot.slane %v7355, 4
      %v7659 = vor.u32 %v7657, %v7658
      %v7660 = vsel %vm1245, %v7655, %v7659
      %v7662 = vshrl.u32 %v7632, 16
      %v7664 = vrot.slane %v7662, 3
      %v7665 = vshll.u32 %v7632, 16
      %v7667 = vrot.slane %v7665, 4
      %v7668 = vor.u32 %v7664, %v7667
      %v7669 = vsel %vm1245, %v7659, %v7668
      %v7693 = vunpack.c.l.b16 %v7614
      %v7694 = vunpack.c.l.b16 %v7615
      %v7695 = vunpack.c.l.b16 %v7616
      %v7696 = vunpack.c.l.b16 %v7617
      %v7697 = vunpack.c.l.b16 %v7618
      %v7698 = vunpack.c.l.b16 %v7619
      %v7699 = vunpack.c.l.b16 %v7620
      %v7700 = vunpack.c.l.b16 %v7621
      %v7701 = vunpack.c.l.b16 %v7622
      %v7702 = vunpack.c.l.b16 %v7623
      %v7703 = vunpack.c.l.b16 %v7624
      %v7704 = vunpack.c.l.b16 %v7625
      %v7705 = vunpack.c.l.b16 %v7626
      %v7706 = vunpack.c.l.b16 %v7627
      %v7707 = vunpack.c.l.b16 %v7628
      %v7708 = vunpack.c.l.b16 %v7629
      %v7709 = vpack.c.b16 %v7694, %v7693
      %v7710 = vpack.c.b16 %v7696, %v7695
      %v7711 = vpack.c.b16 %v7698, %v7697
      %v7712 = vpack.c.b16 %v7700, %v7699
      %v7713 = vpack.c.b16 %v7702, %v7701
      %v7714 = vpack.c.b16 %v7704, %v7703
      %v7715 = vpack.c.b16 %v7706, %v7705
      %v7716 = vpack.c.b16 %v7708, %v7707
      %7725 = vmatpush.bf16.msra.mxu0 %v7716
      %7726 = vmatpush.bf16.msra.mxu0 %v7715
      %7727 = vmatpush.bf16.msra.mxu0 %v7714
      %7728 = vmatpush.bf16.msra.mxu0 %v7713
      %7729 = vmatpush.bf16.msra.mxu0 %v7712
      %7730 = vmatpush.bf16.msra.mxu0 %v7711
      %7731 = vmatpush.bf16.msra.mxu0 %v7710
      %7732 = vmatpush.bf16.msra.mxu0 %v7709
      %7733 = vmatmul.bf16.gmra.mxu0 %v7644
      %v7734 = vpop.f32.mrf.mxu0
      %v7735 = vadd.f32 0.0, %v7734
      %v7736 = vpop.f32.mrf.mxu0
      %v7737 = vadd.f32 0.0, %v7736
      %7738 = vmatmul.bf16.gmra.mxu0 %v7648
      %v7739 = vpop.f32.mrf.mxu0
      %v7740 = vadd.f32 0.0, %v7739
      %v7741 = vpop.f32.mrf.mxu0
      %v7742 = vadd.f32 0.0, %v7741
      %7743 = vmatmul.bf16.gmra.mxu0 %v7652
      %v7744 = vpop.f32.mrf.mxu0
      %v7745 = vadd.f32 0.0, %v7744
      %v7746 = vpop.f32.mrf.mxu0
      %v7747 = vadd.f32 0.0, %v7746
      %7748 = vmatmul.bf16.gmra.mxu0 %v7656
      %v7749 = vpop.f32.mrf.mxu0
      %v7750 = vadd.f32 0.0, %v7749
      %v7751 = vpop.f32.mrf.mxu0
      %v7752 = vadd.f32 0.0, %v7751
      %7753 = vmatmul.bf16.gmra.mxu0 %v7660
      %v7754 = vpop.f32.mrf.mxu0
      %v7755 = vadd.f32 0.0, %v7754
      %v7756 = vpop.f32.mrf.mxu0
      %v7757 = vadd.f32 0.0, %v7756
      %7758 = vmatmul.bf16.gmra.mxu0 %v7669
      %v7759 = vpop.f32.mrf.mxu0
      %v7760 = vadd.f32 0.0, %v7759
      %v7761 = vpop.f32.mrf.mxu0
      %v7762 = vadd.f32 0.0, %v7761
      %7763 = vmatmul.bf16.gmra.mxu0 %v7668
      %v7764 = vpop.f32.mrf.mxu0
      %v7765 = vadd.f32 0.0, %v7764
      %v7766 = vpop.f32.mrf.mxu0
      %7767 = vdwg.mxu0
      %v7768 = vadd.f32 %v7599, %v7735
      %v7769 = vadd.f32 %v7600, %v7737
      %v7770 = vadd.f32 %v7601, %v7740
      %v7771 = vadd.f32 %v7602, %v7742
      %v7772 = vadd.f32 %v7603, %v7745
      %v7773 = vadd.f32 %v7604, %v7747
      %v7774 = vadd.f32 %v7605, %v7750
      %v7775 = vadd.f32 %v7606, %v7752
      %v7776 = vadd.f32 %v7607, %v7755
      %v7777 = vadd.f32 %v7608, %v7757
      %v7778 = vadd.f32 %v7609, %v7760
      %v7779 = vadd.f32 %v7610, %v7762
      %v7780 = vadd.f32 %v7611, %v7765
      %v7781 = vld [vmem:[#allocation3 + $0x4] sm:$0x8]
      %v7782 = vld [vmem:[#allocation3 + $0x8] sm:$0xf]
      %v7783 = vld [vmem:[#allocation3 + $0xc] sm:$0xf]
      %v7784 = vld [vmem:[#allocation3 + $0x10] sm:$0xf]
      %v7785 = vld [vmem:[#allocation3 + $0x14] sm:$0xf]
      %v7786 = vld [vmem:[#allocation3 + $0x18] sm:$0xf]
      %v7787 = vld [vmem:[#allocation3 + $0x1c] sm:$0xf]
      %v7788 = vld [vmem:[#allocation3 + $0x20] sm:$0xf]
      %v7789 = vld [vmem:[#allocation3 + $0x24] sm:$0xf]
      %v7790 = vld [vmem:[#allocation3 + $0x28] sm:$0xf]
      %v7791 = vld [vmem:[#allocation3 + $0x2c] sm:$0xf]
      %v7792 = vld [vmem:[#allocation3 + $0x30] sm:$0xf]
      %v7793 = vld [vmem:[#allocation3 + $0x34] sm:$0xf]
      %v7794 = vld [vmem:[#allocation3 + $0x38] sm:$0x3]
      %s7795 = scalar_lea.vmem %s13, 192
      %v7796 = vld [vmem:[%s7795] sm:$0xf]
      %v7797 = vld [vmem:[%s7795 + $0x4] sm:$0xf]
      %v7798 = vld [vmem:[%s7795 + $0x8] sm:$0xf]
      %v7799 = vld [vmem:[%s7795 + $0xc] sm:$0xf]
      %v7800 = vld [vmem:[%s7795 + $0x10] sm:$0xf]
      %v7801 = vld [vmem:[%s7795 + $0x14] sm:$0xf]
      %v7802 = vld [vmem:[%s7795 + $0x18] sm:$0xf]
      %v7803 = vld [vmem:[%s7795 + $0x1c] sm:$0xf]
      %v7804 = vld [vmem:[%s7795 + $0x20] sm:$0xf]
      %v7805 = vld [vmem:[%s7795 + $0x24] sm:$0xf]
      %v7806 = vld [vmem:[%s7795 + $0x28] sm:$0xf]
      %v7807 = vld [vmem:[%s7795 + $0x2c] sm:$0xf]
      %v7808 = vld [vmem:[%s7795 + $0x30] sm:$0xf]
      %v7809 = vld [vmem:[%s7795 + $0x34] sm:$0xf]
      %v7810 = vld [vmem:[%s7795 + $0x38] sm:$0xf]
      %v7811 = vld [vmem:[%s7795 + $0x3c] sm:$0xf]
      %v7826 = vunpack.c.l.b16 %v7781
      %v7827 = vunpack.c.l.b16 %v7782
      %v7828 = vunpack.c.l.b16 %v7783
      %v7829 = vunpack.c.l.b16 %v7784
      %v7830 = vunpack.c.l.b16 %v7785
      %v7831 = vunpack.c.l.b16 %v7786
      %v7832 = vunpack.c.l.b16 %v7787
      %v7833 = vunpack.c.l.b16 %v7788
      %v7834 = vunpack.c.l.b16 %v7789
      %v7835 = vunpack.c.l.b16 %v7790
      %v7836 = vunpack.c.l.b16 %v7791
      %v7837 = vunpack.c.l.b16 %v7792
      %v7838 = vunpack.c.l.b16 %v7793
      %v7839 = vunpack.c.l.b16 %v7794
      %v7840 = vpack.c.b16 %v7827, %v7826
      %v7841 = vpack.c.b16 %v7829, %v7828
      %v7842 = vpack.c.b16 %v7831, %v7830
      %v7843 = vpack.c.b16 %v7833, %v7832
      %v7844 = vpack.c.b16 %v7835, %v7834
      %v7845 = vpack.c.b16 %v7837, %v7836
      %v7846 = vpack.c.b16 %v7839, %v7838
      %v7848 = vshrl.u32 %v7840, 16
      %v7850 = vrot.slane %v7848, 3
      %v7851 = vshll.u32 %v7840, 16
      %v7853 = vrot.slane %v7851, 4
      %v7854 = vor.u32 %v7850, %v7853
      %v7856 = vshrl.u32 %v7841, 16
      %v7858 = vrot.slane %v7856, 3
      %v7859 = vshll.u32 %v7841, 16
      %v7861 = vrot.slane %v7859, 4
      %v7862 = vor.u32 %v7858, %v7861
      %v7863 = vsel %vm1245, %v7854, %v7862
      %v7865 = vshrl.u32 %v7842, 16
      %v7867 = vrot.slane %v7865, 3
      %v7868 = vshll.u32 %v7842, 16
      %v7870 = vrot.slane %v7868, 4
      %v7871 = vor.u32 %v7867, %v7870
      %v7872 = vsel %vm1245, %v7862, %v7871
      %v7874 = vshrl.u32 %v7843, 16
      %v7876 = vrot.slane %v7874, 3
      %v7877 = vshll.u32 %v7843, 16
      %v7879 = vrot.slane %v7877, 4
      %v7880 = vor.u32 %v7876, %v7879
      %v7881 = vsel %vm1245, %v7871, %v7880
      %v7883 = vshrl.u32 %v7844, 16
      %v7885 = vrot.slane %v7883, 3
      %v7886 = vshll.u32 %v7844, 16
      %v7888 = vrot.slane %v7886, 4
      %v7889 = vor.u32 %v7885, %v7888
      %v7890 = vsel %vm1245, %v7880, %v7889
      %v7892 = vshrl.u32 %v7845, 16
      %v7894 = vrot.slane %v7892, 3
      %v7895 = vshll.u32 %v7845, 16
      %v7897 = vrot.slane %v7895, 4
      %v7898 = vor.u32 %v7894, %v7897
      %v7899 = vsel %vm1245, %v7889, %v7898
      %v7901 = vshrl.u32 %v7846, 16
      %v7903 = vrot.slane %v7901, 3
      %v7904 = vshll.u32 %v7846, 16
      %v7906 = vrot.slane %v7904, 4
      %v7907 = vor.u32 %v7903, %v7906
      %v7908 = vsel %vm1245, %v7898, %v7907
      %v7932 = vunpack.c.l.b16 %v7796
      %v7933 = vunpack.c.l.b16 %v7797
      %v7934 = vunpack.c.l.b16 %v7798
      %v7935 = vunpack.c.l.b16 %v7799
      %v7936 = vunpack.c.l.b16 %v7800
      %v7937 = vunpack.c.l.b16 %v7801
      %v7938 = vunpack.c.l.b16 %v7802
      %v7939 = vunpack.c.l.b16 %v7803
      %v7940 = vunpack.c.l.b16 %v7804
      %v7941 = vunpack.c.l.b16 %v7805
      %v7942 = vunpack.c.l.b16 %v7806
      %v7943 = vunpack.c.l.b16 %v7807
      %v7944 = vunpack.c.l.b16 %v7808
      %v7945 = vunpack.c.l.b16 %v7809
      %v7946 = vunpack.c.l.b16 %v7810
      %v7947 = vunpack.c.l.b16 %v7811
      %v7948 = vpack.c.b16 %v7933, %v7932
      %v7949 = vpack.c.b16 %v7935, %v7934
      %v7950 = vpack.c.b16 %v7937, %v7936
      %v7951 = vpack.c.b16 %v7939, %v7938
      %v7952 = vpack.c.b16 %v7941, %v7940
      %v7953 = vpack.c.b16 %v7943, %v7942
      %v7954 = vpack.c.b16 %v7945, %v7944
      %v7955 = vpack.c.b16 %v7947, %v7946
      %7964 = vmatpush.bf16.msra.mxu0 %v7955
      %7965 = vmatpush.bf16.msra.mxu0 %v7954
      %7966 = vmatpush.bf16.msra.mxu0 %v7953
      %7967 = vmatpush.bf16.msra.mxu0 %v7952
      %7968 = vmatpush.bf16.msra.mxu0 %v7951
      %7969 = vmatpush.bf16.msra.mxu0 %v7950
      %7970 = vmatpush.bf16.msra.mxu0 %v7949
      %7971 = vmatpush.bf16.msra.mxu0 %v7948
      %7972 = vmatmul.bf16.gmra.mxu0 %v7863
      %v7973 = vpop.f32.mrf.mxu0
      %v7974 = vadd.f32 0.0, %v7973
      %v7975 = vpop.f32.mrf.mxu0
      %v7976 = vadd.f32 0.0, %v7975
      %7977 = vmatmul.bf16.gmra.mxu0 %v7872
      %v7978 = vpop.f32.mrf.mxu0
      %v7979 = vadd.f32 0.0, %v7978
      %v7980 = vpop.f32.mrf.mxu0
      %v7981 = vadd.f32 0.0, %v7980
      %7982 = vmatmul.bf16.gmra.mxu0 %v7881
      %v7983 = vpop.f32.mrf.mxu0
      %v7984 = vadd.f32 0.0, %v7983
      %v7985 = vpop.f32.mrf.mxu0
      %v7986 = vadd.f32 0.0, %v7985
      %7987 = vmatmul.bf16.gmra.mxu0 %v7890
      %v7988 = vpop.f32.mrf.mxu0
      %v7989 = vadd.f32 0.0, %v7988
      %v7990 = vpop.f32.mrf.mxu0
      %v7991 = vadd.f32 0.0, %v7990
      %7992 = vmatmul.bf16.gmra.mxu0 %v7899
      %v7993 = vpop.f32.mrf.mxu0
      %v7994 = vadd.f32 0.0, %v7993
      %v7995 = vpop.f32.mrf.mxu0
      %v7996 = vadd.f32 0.0, %v7995
      %7997 = vmatmul.bf16.gmra.mxu0 %v7908
      %v7998 = vpop.f32.mrf.mxu0
      %v7999 = vadd.f32 0.0, %v7998
      %v8000 = vpop.f32.mrf.mxu0
      %v8001 = vadd.f32 0.0, %v8000
      %8002 = vmatmul.bf16.gmra.mxu0 %v7907
      %v8003 = vpop.f32.mrf.mxu0
      %v8004 = vadd.f32 0.0, %v8003
      %v8005 = vpop.f32.mrf.mxu0
      %8006 = vdwg.mxu0
      %v8007 = vadd.f32 %v7768, %v7974
      %v8008 = vadd.f32 %v7769, %v7976
      %v8009 = vadd.f32 %v7770, %v7979
      %v8010 = vadd.f32 %v7771, %v7981
      %v8011 = vadd.f32 %v7772, %v7984
      %v8012 = vadd.f32 %v7773, %v7986
      %v8013 = vadd.f32 %v7774, %v7989
      %v8014 = vadd.f32 %v7775, %v7991
      %v8015 = vadd.f32 %v7776, %v7994
      %v8016 = vadd.f32 %v7777, %v7996
      %v8017 = vadd.f32 %v7778, %v7999
      %v8018 = vadd.f32 %v7779, %v8001
      %v8019 = vadd.f32 %v7780, %v8004
      %s8020 = scalar_lea.vmem %s13, 256
      %v8021 = vld [vmem:[%s8020] sm:$0xf]
      %v8022 = vld [vmem:[%s8020 + $0x4] sm:$0xf]
      %v8023 = vld [vmem:[%s8020 + $0x8] sm:$0xf]
      %v8024 = vld [vmem:[%s8020 + $0xc] sm:$0xf]
      %v8025 = vld [vmem:[%s8020 + $0x10] sm:$0xf]
      %v8026 = vld [vmem:[%s8020 + $0x14] sm:$0xf]
      %v8027 = vld [vmem:[%s8020 + $0x18] sm:$0xf]
      %v8028 = vld [vmem:[%s8020 + $0x1c] sm:$0xf]
      %v8029 = vld [vmem:[%s8020 + $0x20] sm:$0xf]
      %v8030 = vld [vmem:[%s8020 + $0x24] sm:$0xf]
      %v8031 = vld [vmem:[%s8020 + $0x28] sm:$0xf]
      %v8032 = vld [vmem:[%s8020 + $0x2c] sm:$0xf]
      %v8033 = vld [vmem:[%s8020 + $0x30] sm:$0xf]
      %v8034 = vld [vmem:[%s8020 + $0x34] sm:$0xf]
      %v8035 = vld [vmem:[%s8020 + $0x38] sm:$0xf]
      %v8036 = vld [vmem:[%s8020 + $0x3c] sm:$0xf]
      %v8037 = vpack.c.b16 %v7828, %v7827
      %v8038 = vpack.c.b16 %v7830, %v7829
      %v8039 = vpack.c.b16 %v7832, %v7831
      %v8040 = vpack.c.b16 %v7834, %v7833
      %v8041 = vpack.c.b16 %v7836, %v7835
      %v8042 = vpack.c.b16 %v7838, %v7837
      %v8043 = vpack.c.b16 %v7839, %v7839
      %v8067 = vunpack.c.l.b16 %v8021
      %v8068 = vunpack.c.l.b16 %v8022
      %v8069 = vunpack.c.l.b16 %v8023
      %v8070 = vunpack.c.l.b16 %v8024
      %v8071 = vunpack.c.l.b16 %v8025
      %v8072 = vunpack.c.l.b16 %v8026
      %v8073 = vunpack.c.l.b16 %v8027
      %v8074 = vunpack.c.l.b16 %v8028
      %v8075 = vunpack.c.l.b16 %v8029
      %v8076 = vunpack.c.l.b16 %v8030
      %v8077 = vunpack.c.l.b16 %v8031
      %v8078 = vunpack.c.l.b16 %v8032
      %v8079 = vunpack.c.l.b16 %v8033
      %v8080 = vunpack.c.l.b16 %v8034
      %v8081 = vunpack.c.l.b16 %v8035
      %v8082 = vunpack.c.l.b16 %v8036
      %v8083 = vpack.c.b16 %v8068, %v8067
      %v8084 = vpack.c.b16 %v8070, %v8069
      %v8085 = vpack.c.b16 %v8072, %v8071
      %v8086 = vpack.c.b16 %v8074, %v8073
      %v8087 = vpack.c.b16 %v8076, %v8075
      %v8088 = vpack.c.b16 %v8078, %v8077
      %v8089 = vpack.c.b16 %v8080, %v8079
      %v8090 = vpack.c.b16 %v8082, %v8081
      %8099 = vmatpush.bf16.msra.mxu0 %v8090
      %8100 = vmatpush.bf16.msra.mxu0 %v8089
      %8101 = vmatpush.bf16.msra.mxu0 %v8088
      %8102 = vmatpush.bf16.msra.mxu0 %v8087
      %8103 = vmatpush.bf16.msra.mxu0 %v8086
      %8104 = vmatpush.bf16.msra.mxu0 %v8085
      %8105 = vmatpush.bf16.msra.mxu0 %v8084
      %8106 = vmatpush.bf16.msra.mxu0 %v8083
      %8107 = vmatmul.bf16.gmra.mxu0 %v8037
      %v8108 = vpop.f32.mrf.mxu0
      %v8109 = vadd.f32 0.0, %v8108
      %v8110 = vpop.f32.mrf.mxu0
      %v8111 = vadd.f32 0.0, %v8110
      %8112 = vmatmul.bf16.gmra.mxu0 %v8038
      %v8113 = vpop.f32.mrf.mxu0
      %v8114 = vadd.f32 0.0, %v8113
      %v8115 = vpop.f32.mrf.mxu0
      %v8116 = vadd.f32 0.0, %v8115
      %8117 = vmatmul.bf16.gmra.mxu0 %v8039
      %v8118 = vpop.f32.mrf.mxu0
      %v8119 = vadd.f32 0.0, %v8118
      %v8120 = vpop.f32.mrf.mxu0
      %v8121 = vadd.f32 0.0, %v8120
      %8122 = vmatmul.bf16.gmra.mxu0 %v8040
      %v8123 = vpop.f32.mrf.mxu0
      %v8124 = vadd.f32 0.0, %v8123
      %v8125 = vpop.f32.mrf.mxu0
      %v8126 = vadd.f32 0.0, %v8125
      %8127 = vmatmul.bf16.gmra.mxu0 %v8041
      %v8128 = vpop.f32.mrf.mxu0
      %v8129 = vadd.f32 0.0, %v8128
      %v8130 = vpop.f32.mrf.mxu0
      %v8131 = vadd.f32 0.0, %v8130
      %8132 = vmatmul.bf16.gmra.mxu0 %v8042
      %v8133 = vpop.f32.mrf.mxu0
      %v8134 = vadd.f32 0.0, %v8133
      %v8135 = vpop.f32.mrf.mxu0
      %v8136 = vadd.f32 0.0, %v8135
      %8137 = vmatmul.bf16.gmra.mxu0 %v8043
      %v8138 = vpop.f32.mrf.mxu0
      %v8139 = vadd.f32 0.0, %v8138
      %v8140 = vpop.f32.mrf.mxu0
      %8141 = vdwg.mxu0
      %v8142 = vadd.f32 %v8007, %v8109
      %v8143 = vadd.f32 %v8008, %v8111
      %v8144 = vadd.f32 %v8009, %v8114
      %v8145 = vadd.f32 %v8010, %v8116
      %v8146 = vadd.f32 %v8011, %v8119
      %v8147 = vadd.f32 %v8012, %v8121
      %v8148 = vadd.f32 %v8013, %v8124
      %v8149 = vadd.f32 %v8014, %v8126
      %v8150 = vadd.f32 %v8015, %v8129
      %v8151 = vadd.f32 %v8016, %v8131
      %v8152 = vadd.f32 %v8017, %v8134
      %v8153 = vadd.f32 %v8018, %v8136
      %v8154 = vadd.f32 %v8019, %v8139
      %v8155 = vld [vmem:[#allocation3 + $0x38] sm:$0x7]
      %s8156 = scalar_lea.vmem %s13, 320
      %v8157 = vld [vmem:[%s8156] sm:$0xf]
      %v8158 = vld [vmem:[%s8156 + $0x4] sm:$0xf]
      %v8159 = vld [vmem:[%s8156 + $0x8] sm:$0xf]
      %v8160 = vld [vmem:[%s8156 + $0xc] sm:$0xf]
      %v8161 = vld [vmem:[%s8156 + $0x10] sm:$0xf]
      %v8162 = vld [vmem:[%s8156 + $0x14] sm:$0xf]
      %v8163 = vld [vmem:[%s8156 + $0x18] sm:$0xf]
      %v8164 = vld [vmem:[%s8156 + $0x1c] sm:$0xf]
      %v8165 = vld [vmem:[%s8156 + $0x20] sm:$0xf]
      %v8166 = vld [vmem:[%s8156 + $0x24] sm:$0xf]
      %v8167 = vld [vmem:[%s8156 + $0x28] sm:$0xf]
      %v8168 = vld [vmem:[%s8156 + $0x2c] sm:$0xf]
      %v8169 = vld [vmem:[%s8156 + $0x30] sm:$0xf]
      %v8170 = vld [vmem:[%s8156 + $0x34] sm:$0xf]
      %v8171 = vld [vmem:[%s8156 + $0x38] sm:$0xf]
      %v8172 = vld [vmem:[%s8156 + $0x3c] sm:$0xf]
      %v8174 = vunpack.c.l.b16 %v8155
      %v8175 = vpack.c.b16 %v8174, %v8174
      %v8177 = vshrl.u32 %v8037, 16
      %v8179 = vshll.u32 %v8037, 16
      %v8181 = vrot.slane %v8179, 1
      %v8182 = vor.u32 %v8177, %v8181
      %v8184 = vshll.u32 %v8038, 16
      %v8186 = vrot.slane %v8184, 1
      %v8187 = vsel %vm1620, %v8182, %v8186
      %v8188 = vshrl.u32 %v8038, 16
      %v8190 = vor.u32 %v8188, %v8186
      %v8192 = vshll.u32 %v8039, 16
      %v8194 = vrot.slane %v8192, 1
      %v8195 = vsel %vm1620, %v8190, %v8194
      %v8196 = vshrl.u32 %v8039, 16
      %v8198 = vor.u32 %v8196, %v8194
      %v8200 = vshll.u32 %v8040, 16
      %v8202 = vrot.slane %v8200, 1
      %v8203 = vsel %vm1620, %v8198, %v8202
      %v8204 = vshrl.u32 %v8040, 16
      %v8206 = vor.u32 %v8204, %v8202
      %v8208 = vshll.u32 %v8041, 16
      %v8210 = vrot.slane %v8208, 1
      %v8211 = vsel %vm1620, %v8206, %v8210
      %v8212 = vshrl.u32 %v8041, 16
      %v8214 = vor.u32 %v8212, %v8210
      %v8216 = vshll.u32 %v8042, 16
      %v8218 = vrot.slane %v8216, 1
      %v8219 = vsel %vm1620, %v8214, %v8218
      %v8220 = vshrl.u32 %v8042, 16
      %v8222 = vor.u32 %v8220, %v8218
      %v8224 = vshll.u32 %v8175, 16
      %v8226 = vrot.slane %v8224, 1
      %v8227 = vsel %vm1620, %v8222, %v8226
      %v8228 = vshrl.u32 %v8175, 16
      %v8230 = vor.u32 %v8228, %v8226
      %v8254 = vunpack.c.l.b16 %v8157
      %v8255 = vunpack.c.l.b16 %v8158
      %v8256 = vunpack.c.l.b16 %v8159
      %v8257 = vunpack.c.l.b16 %v8160
      %v8258 = vunpack.c.l.b16 %v8161
      %v8259 = vunpack.c.l.b16 %v8162
      %v8260 = vunpack.c.l.b16 %v8163
      %v8261 = vunpack.c.l.b16 %v8164
      %v8262 = vunpack.c.l.b16 %v8165
      %v8263 = vunpack.c.l.b16 %v8166
      %v8264 = vunpack.c.l.b16 %v8167
      %v8265 = vunpack.c.l.b16 %v8168
      %v8266 = vunpack.c.l.b16 %v8169
      %v8267 = vunpack.c.l.b16 %v8170
      %v8268 = vunpack.c.l.b16 %v8171
      %v8269 = vunpack.c.l.b16 %v8172
      %v8270 = vpack.c.b16 %v8255, %v8254
      %v8271 = vpack.c.b16 %v8257, %v8256
      %v8272 = vpack.c.b16 %v8259, %v8258
      %v8273 = vpack.c.b16 %v8261, %v8260
      %v8274 = vpack.c.b16 %v8263, %v8262
      %v8275 = vpack.c.b16 %v8265, %v8264
      %v8276 = vpack.c.b16 %v8267, %v8266
      %v8277 = vpack.c.b16 %v8269, %v8268
      %8286 = vmatpush.bf16.msra.mxu0 %v8277
      %8287 = vmatpush.bf16.msra.mxu0 %v8276
      %8288 = vmatpush.bf16.msra.mxu0 %v8275
      %8289 = vmatpush.bf16.msra.mxu0 %v8274
      %8290 = vmatpush.bf16.msra.mxu0 %v8273
      %8291 = vmatpush.bf16.msra.mxu0 %v8272
      %8292 = vmatpush.bf16.msra.mxu0 %v8271
      %8293 = vmatpush.bf16.msra.mxu0 %v8270
      %8294 = vmatmul.bf16.gmra.mxu0 %v8187
      %v8295 = vpop.f32.mrf.mxu0
      %v8296 = vadd.f32 0.0, %v8295
      %v8297 = vpop.f32.mrf.mxu0
      %v8298 = vadd.f32 0.0, %v8297
      %8299 = vmatmul.bf16.gmra.mxu0 %v8195
      %v8300 = vpop.f32.mrf.mxu0
      %v8301 = vadd.f32 0.0, %v8300
      %v8302 = vpop.f32.mrf.mxu0
      %v8303 = vadd.f32 0.0, %v8302
      %8304 = vmatmul.bf16.gmra.mxu0 %v8203
      %v8305 = vpop.f32.mrf.mxu0
      %v8306 = vadd.f32 0.0, %v8305
      %v8307 = vpop.f32.mrf.mxu0
      %v8308 = vadd.f32 0.0, %v8307
      %8309 = vmatmul.bf16.gmra.mxu0 %v8211
      %v8310 = vpop.f32.mrf.mxu0
      %v8311 = vadd.f32 0.0, %v8310
      %v8312 = vpop.f32.mrf.mxu0
      %v8313 = vadd.f32 0.0, %v8312
      %8314 = vmatmul.bf16.gmra.mxu0 %v8219
      %v8315 = vpop.f32.mrf.mxu0
      %v8316 = vadd.f32 0.0, %v8315
      %v8317 = vpop.f32.mrf.mxu0
      %v8318 = vadd.f32 0.0, %v8317
      %8319 = vmatmul.bf16.gmra.mxu0 %v8227
      %v8320 = vpop.f32.mrf.mxu0
      %v8321 = vadd.f32 0.0, %v8320
      %v8322 = vpop.f32.mrf.mxu0
      %v8323 = vadd.f32 0.0, %v8322
      %8324 = vmatmul.bf16.gmra.mxu0 %v8230
      %v8325 = vpop.f32.mrf.mxu0
      %v8326 = vadd.f32 0.0, %v8325
      %v8327 = vpop.f32.mrf.mxu0
      %8328 = vdwg.mxu0
      %v8329 = vadd.f32 %v8142, %v8296
      %v8330 = vadd.f32 %v8143, %v8298
      %v8331 = vadd.f32 %v8144, %v8301
      %v8332 = vadd.f32 %v8145, %v8303
      %v8333 = vadd.f32 %v8146, %v8306
      %v8334 = vadd.f32 %v8147, %v8308
      %v8335 = vadd.f32 %v8148, %v8311
      %v8336 = vadd.f32 %v8149, %v8313
      %v8337 = vadd.f32 %v8150, %v8316
      %v8338 = vadd.f32 %v8151, %v8318
      %v8339 = vadd.f32 %v8152, %v8321
      %v8340 = vadd.f32 %v8153, %v8323
      %v8341 = vadd.f32 %v8154, %v8326
      %v8342 = vld [vmem:[#allocation3 + $0xc] sm:$0xf]
      %v8343 = vld [vmem:[#allocation3 + $0x10] sm:$0xf]
      %v8344 = vld [vmem:[#allocation3 + $0x14] sm:$0xf]
      %v8345 = vld [vmem:[#allocation3 + $0x18] sm:$0xf]
      %v8346 = vld [vmem:[#allocation3 + $0x1c] sm:$0xf]
      %v8347 = vld [vmem:[#allocation3 + $0x20] sm:$0xf]
      %v8348 = vld [vmem:[#allocation3 + $0x24] sm:$0xf]
      %v8349 = vld [vmem:[#allocation3 + $0x28] sm:$0xf]
      %v8350 = vld [vmem:[#allocation3 + $0x2c] sm:$0xf]
      %v8351 = vld [vmem:[#allocation3 + $0x30] sm:$0xf]
      %v8352 = vld [vmem:[#allocation3 + $0x34] sm:$0xf]
      %v8353 = vld [vmem:[#allocation3 + $0x38] sm:$0xf]
      %v8354 = vld [vmem:[#allocation3 + $0x3c] sm:$0x7]
      %s8355 = scalar_lea.vmem %s13, 384
      %v8356 = vld [vmem:[%s8355] sm:$0xf]
      %v8357 = vld [vmem:[%s8355 + $0x4] sm:$0xf]
      %v8358 = vld [vmem:[%s8355 + $0x8] sm:$0xf]
      %v8359 = vld [vmem:[%s8355 + $0xc] sm:$0xf]
      %v8360 = vld [vmem:[%s8355 + $0x10] sm:$0xf]
      %v8361 = vld [vmem:[%s8355 + $0x14] sm:$0xf]
      %v8362 = vld [vmem:[%s8355 + $0x18] sm:$0xf]
      %v8363 = vld [vmem:[%s8355 + $0x1c] sm:$0xf]
      %v8364 = vld [vmem:[%s8355 + $0x20] sm:$0xf]
      %v8365 = vld [vmem:[%s8355 + $0x24] sm:$0xf]
      %v8366 = vld [vmem:[%s8355 + $0x28] sm:$0xf]
      %v8367 = vld [vmem:[%s8355 + $0x2c] sm:$0xf]
      %v8368 = vld [vmem:[%s8355 + $0x30] sm:$0xf]
      %v8369 = vld [vmem:[%s8355 + $0x34] sm:$0xf]
      %v8370 = vld [vmem:[%s8355 + $0x38] sm:$0xf]
      %v8371 = vld [vmem:[%s8355 + $0x3c] sm:$0xf]
      %v8385 = vunpack.c.l.b16 %v8342
      %v8386 = vunpack.c.l.b16 %v8343
      %v8387 = vunpack.c.l.b16 %v8344
      %v8388 = vunpack.c.l.b16 %v8345
      %v8389 = vunpack.c.l.b16 %v8346
      %v8390 = vunpack.c.l.b16 %v8347
      %v8391 = vunpack.c.l.b16 %v8348
      %v8392 = vunpack.c.l.b16 %v8349
      %v8393 = vunpack.c.l.b16 %v8350
      %v8394 = vunpack.c.l.b16 %v8351
      %v8395 = vunpack.c.l.b16 %v8352
      %v8396 = vunpack.c.l.b16 %v8353
      %v8397 = vunpack.c.l.b16 %v8354
      %v8398 = vpack.c.b16 %v8386, %v8385
      %v8399 = vpack.c.b16 %v8388, %v8387
      %v8400 = vpack.c.b16 %v8390, %v8389
      %v8401 = vpack.c.b16 %v8392, %v8391
      %v8402 = vpack.c.b16 %v8394, %v8393
      %v8403 = vpack.c.b16 %v8396, %v8395
      %v8404 = vpack.c.b16 %v8397, %v8397
      %v8406 = vshrl.u32 %v8398, 16
      %v8408 = vshll.u32 %v8398, 16
      %v8410 = vrot.slane %v8408, 1
      %v8411 = vor.u32 %v8406, %v8410
      %v8413 = vshll.u32 %v8399, 16
      %v8415 = vrot.slane %v8413, 1
      %v8416 = vsel %vm1620, %v8411, %v8415
      %v8417 = vshrl.u32 %v8399, 16
      %v8419 = vor.u32 %v8417, %v8415
      %v8421 = vshll.u32 %v8400, 16
      %v8423 = vrot.slane %v8421, 1
      %v8424 = vsel %vm1620, %v8419, %v8423
      %v8425 = vshrl.u32 %v8400, 16
      %v8427 = vor.u32 %v8425, %v8423
      %v8429 = vshll.u32 %v8401, 16
      %v8431 = vrot.slane %v8429, 1
      %v8432 = vsel %vm1620, %v8427, %v8431
      %v8433 = vshrl.u32 %v8401, 16
      %v8435 = vor.u32 %v8433, %v8431
      %v8437 = vshll.u32 %v8402, 16
      %v8439 = vrot.slane %v8437, 1
      %v8440 = vsel %vm1620, %v8435, %v8439
      %v8441 = vshrl.u32 %v8402, 16
      %v8443 = vor.u32 %v8441, %v8439
      %v8445 = vshll.u32 %v8403, 16
      %v8447 = vrot.slane %v8445, 1
      %v8448 = vsel %vm1620, %v8443, %v8447
      %v8449 = vshrl.u32 %v8403, 16
      %v8451 = vor.u32 %v8449, %v8447
      %v8453 = vshll.u32 %v8404, 16
      %v8455 = vrot.slane %v8453, 1
      %v8456 = vsel %vm1620, %v8451, %v8455
      %v8457 = vshrl.u32 %v8404, 16
      %v8459 = vor.u32 %v8457, %v8455
      %v8483 = vunpack.c.l.b16 %v8356
      %v8484 = vunpack.c.l.b16 %v8357
      %v8485 = vunpack.c.l.b16 %v8358
      %v8486 = vunpack.c.l.b16 %v8359
      %v8487 = vunpack.c.l.b16 %v8360
      %v8488 = vunpack.c.l.b16 %v8361
      %v8489 = vunpack.c.l.b16 %v8362
      %v8490 = vunpack.c.l.b16 %v8363
      %v8491 = vunpack.c.l.b16 %v8364
      %v8492 = vunpack.c.l.b16 %v8365
      %v8493 = vunpack.c.l.b16 %v8366
      %v8494 = vunpack.c.l.b16 %v8367
      %v8495 = vunpack.c.l.b16 %v8368
      %v8496 = vunpack.c.l.b16 %v8369
      %v8497 = vunpack.c.l.b16 %v8370
      %v8498 = vunpack.c.l.b16 %v8371
      %v8499 = vpack.c.b16 %v8484, %v8483
      %v8500 = vpack.c.b16 %v8486, %v8485
      %v8501 = vpack.c.b16 %v8488, %v8487
      %v8502 = vpack.c.b16 %v8490, %v8489
      %v8503 = vpack.c.b16 %v8492, %v8491
      %v8504 = vpack.c.b16 %v8494, %v8493
      %v8505 = vpack.c.b16 %v8496, %v8495
      %v8506 = vpack.c.b16 %v8498, %v8497
      %8515 = vmatpush.bf16.msra.mxu0 %v8506
      %8516 = vmatpush.bf16.msra.mxu0 %v8505
      %8517 = vmatpush.bf16.msra.mxu0 %v8504
      %8518 = vmatpush.bf16.msra.mxu0 %v8503
      %8519 = vmatpush.bf16.msra.mxu0 %v8502
      %8520 = vmatpush.bf16.msra.mxu0 %v8501
      %8521 = vmatpush.bf16.msra.mxu0 %v8500
      %8522 = vmatpush.bf16.msra.mxu0 %v8499
      %8523 = vmatmul.bf16.gmra.mxu0 %v8416
      %v8524 = vpop.f32.mrf.mxu0
      %v8525 = vadd.f32 0.0, %v8524
      %v8526 = vpop.f32.mrf.mxu0
      %v8527 = vadd.f32 0.0, %v8526
      %8528 = vmatmul.bf16.gmra.mxu0 %v8424
      %v8529 = vpop.f32.mrf.mxu0
      %v8530 = vadd.f32 0.0, %v8529
      %v8531 = vpop.f32.mrf.mxu0
      %v8532 = vadd.f32 0.0, %v8531
      %8533 = vmatmul.bf16.gmra.mxu0 %v8432
      %v8534 = vpop.f32.mrf.mxu0
      %v8535 = vadd.f32 0.0, %v8534
      %v8536 = vpop.f32.mrf.mxu0
      %v8537 = vadd.f32 0.0, %v8536
      %8538 = vmatmul.bf16.gmra.mxu0 %v8440
      %v8539 = vpop.f32.mrf.mxu0
      %v8540 = vadd.f32 0.0, %v8539
      %v8541 = vpop.f32.mrf.mxu0
      %v8542 = vadd.f32 0.0, %v8541
      %8543 = vmatmul.bf16.gmra.mxu0 %v8448
      %v8544 = vpop.f32.mrf.mxu0
      %v8545 = vadd.f32 0.0, %v8544
      %v8546 = vpop.f32.mrf.mxu0
      %v8547 = vadd.f32 0.0, %v8546
      %8548 = vmatmul.bf16.gmra.mxu0 %v8456
      %v8549 = vpop.f32.mrf.mxu0
      %v8550 = vadd.f32 0.0, %v8549
      %v8551 = vpop.f32.mrf.mxu0
      %v8552 = vadd.f32 0.0, %v8551
      %8553 = vmatmul.bf16.gmra.mxu0 %v8459
      %v8554 = vpop.f32.mrf.mxu0
      %v8555 = vadd.f32 0.0, %v8554
      %v8556 = vpop.f32.mrf.mxu0
      %8557 = vdwg.mxu0
      %v8558 = vadd.f32 %v8329, %v8525
      %v8559 = vadd.f32 %v8330, %v8527
      %v8560 = vadd.f32 %v8331, %v8530
      %v8561 = vadd.f32 %v8332, %v8532
      %v8562 = vadd.f32 %v8333, %v8535
      %v8563 = vadd.f32 %v8334, %v8537
      %v8564 = vadd.f32 %v8335, %v8540
      %v8565 = vadd.f32 %v8336, %v8542
      %v8566 = vadd.f32 %v8337, %v8545
      %v8567 = vadd.f32 %v8338, %v8547
      %v8568 = vadd.f32 %v8339, %v8550
      %v8569 = vadd.f32 %v8340, %v8552
      %v8570 = vadd.f32 %v8341, %v8555
      %v8571 = vld [vmem:[#allocation3 + $0xc] sm:$0xe]
      %s8572 = scalar_lea.vmem %s13, 448
      %v8573 = vld [vmem:[%s8572] sm:$0xf]
      %v8574 = vld [vmem:[%s8572 + $0x4] sm:$0xf]
      %v8575 = vld [vmem:[%s8572 + $0x8] sm:$0xf]
      %v8576 = vld [vmem:[%s8572 + $0xc] sm:$0xf]
      %v8577 = vld [vmem:[%s8572 + $0x10] sm:$0xf]
      %v8578 = vld [vmem:[%s8572 + $0x14] sm:$0xf]
      %v8579 = vld [vmem:[%s8572 + $0x18] sm:$0xf]
      %v8580 = vld [vmem:[%s8572 + $0x1c] sm:$0xf]
      %v8581 = vld [vmem:[%s8572 + $0x20] sm:$0xf]
      %v8582 = vld [vmem:[%s8572 + $0x24] sm:$0xf]
      %v8583 = vld [vmem:[%s8572 + $0x28] sm:$0xf]
      %v8584 = vld [vmem:[%s8572 + $0x2c] sm:$0xf]
      %v8585 = vld [vmem:[%s8572 + $0x30] sm:$0xf]
      %v8586 = vld [vmem:[%s8572 + $0x34] sm:$0xf]
      %v8587 = vld [vmem:[%s8572 + $0x38] sm:$0xf]
      %v8588 = vld [vmem:[%s8572 + $0x3c] sm:$0xf]
      %v8590 = vunpack.c.l.b16 %v8571
      %v8591 = vpack.c.b16 %v8386, %v8590
      %v8592 = vrot.slane %v8591, 1
      %v8593 = vrot.slane %v8399, 1
      %v8594 = vsel %vm1963, %v8592, %v8593
      %v8595 = vrot.slane %v8400, 1
      %v8596 = vsel %vm1963, %v8593, %v8595
      %v8597 = vrot.slane %v8401, 1
      %v8598 = vsel %vm1963, %v8595, %v8597
      %v8599 = vrot.slane %v8402, 1
      %v8600 = vsel %vm1963, %v8597, %v8599
      %v8601 = vrot.slane %v8403, 1
      %v8602 = vsel %vm1963, %v8599, %v8601
      %v8603 = vrot.slane %v8404, 1
      %v8604 = vsel %vm1963, %v8601, %v8603
      %v8628 = vunpack.c.l.b16 %v8573
      %v8629 = vunpack.c.l.b16 %v8574
      %v8630 = vunpack.c.l.b16 %v8575
      %v8631 = vunpack.c.l.b16 %v8576
      %v8632 = vunpack.c.l.b16 %v8577
      %v8633 = vunpack.c.l.b16 %v8578
      %v8634 = vunpack.c.l.b16 %v8579
      %v8635 = vunpack.c.l.b16 %v8580
      %v8636 = vunpack.c.l.b16 %v8581
      %v8637 = vunpack.c.l.b16 %v8582
      %v8638 = vunpack.c.l.b16 %v8583
      %v8639 = vunpack.c.l.b16 %v8584
      %v8640 = vunpack.c.l.b16 %v8585
      %v8641 = vunpack.c.l.b16 %v8586
      %v8642 = vunpack.c.l.b16 %v8587
      %v8643 = vunpack.c.l.b16 %v8588
      %v8644 = vpack.c.b16 %v8629, %v8628
      %v8645 = vpack.c.b16 %v8631, %v8630
      %v8646 = vpack.c.b16 %v8633, %v8632
      %v8647 = vpack.c.b16 %v8635, %v8634
      %v8648 = vpack.c.b16 %v8637, %v8636
      %v8649 = vpack.c.b16 %v8639, %v8638
      %v8650 = vpack.c.b16 %v8641, %v8640
      %v8651 = vpack.c.b16 %v8643, %v8642
      %8660 = vmatpush.bf16.msra.mxu0 %v8651
      %8661 = vmatpush.bf16.msra.mxu0 %v8650
      %8662 = vmatpush.bf16.msra.mxu0 %v8649
      %8663 = vmatpush.bf16.msra.mxu0 %v8648
      %8664 = vmatpush.bf16.msra.mxu0 %v8647
      %8665 = vmatpush.bf16.msra.mxu0 %v8646
      %8666 = vmatpush.bf16.msra.mxu0 %v8645
      %8667 = vmatpush.bf16.msra.mxu0 %v8644
      %8668 = vmatmul.bf16.gmra.mxu0 %v8594
      %v8669 = vpop.f32.mrf.mxu0
      %v8670 = vadd.f32 0.0, %v8669
      %v8671 = vpop.f32.mrf.mxu0
      %v8672 = vadd.f32 0.0, %v8671
      %8673 = vmatmul.bf16.gmra.mxu0 %v8596
      %v8674 = vpop.f32.mrf.mxu0
      %v8675 = vadd.f32 0.0, %v8674
      %v8676 = vpop.f32.mrf.mxu0
      %v8677 = vadd.f32 0.0, %v8676
      %8678 = vmatmul.bf16.gmra.mxu0 %v8598
      %v8679 = vpop.f32.mrf.mxu0
      %v8680 = vadd.f32 0.0, %v8679
      %v8681 = vpop.f32.mrf.mxu0
      %v8682 = vadd.f32 0.0, %v8681
      %8683 = vmatmul.bf16.gmra.mxu0 %v8600
      %v8684 = vpop.f32.mrf.mxu0
      %v8685 = vadd.f32 0.0, %v8684
      %v8686 = vpop.f32.mrf.mxu0
      %v8687 = vadd.f32 0.0, %v8686
      %8688 = vmatmul.bf16.gmra.mxu0 %v8602
      %v8689 = vpop.f32.mrf.mxu0
      %v8690 = vadd.f32 0.0, %v8689
      %v8691 = vpop.f32.mrf.mxu0
      %v8692 = vadd.f32 0.0, %v8691
      %8693 = vmatmul.bf16.gmra.mxu0 %v8604
      %v8694 = vpop.f32.mrf.mxu0
      %v8695 = vadd.f32 0.0, %v8694
      %v8696 = vpop.f32.mrf.mxu0
      %v8697 = vadd.f32 0.0, %v8696
      %8698 = vmatmul.bf16.gmra.mxu0 %v8603
      %v8699 = vpop.f32.mrf.mxu0
      %v8700 = vadd.f32 0.0, %v8699
      %v8701 = vpop.f32.mrf.mxu0
      %8702 = vdwg.mxu0
      %v8703 = vadd.f32 %v8558, %v8670
      %v8704 = vadd.f32 %v8559, %v8672
      %v8705 = vadd.f32 %v8560, %v8675
      %v8706 = vadd.f32 %v8561, %v8677
      %v8707 = vadd.f32 %v8562, %v8680
      %v8708 = vadd.f32 %v8563, %v8682
      %v8709 = vadd.f32 %v8564, %v8685
      %v8710 = vadd.f32 %v8565, %v8687
      %v8711 = vadd.f32 %v8566, %v8690
      %v8712 = vadd.f32 %v8567, %v8692
      %v8713 = vadd.f32 %v8568, %v8695
      %v8714 = vadd.f32 %v8569, %v8697
      %v8715 = vadd.f32 %v8570, %v8700
      %v8716 = vld [vmem:[#allocation3 + $0x3c] sm:$0xf]
      %s8717 = scalar_lea.vmem %s13, 512
      %v8718 = vld [vmem:[%s8717] sm:$0xf]
      %v8719 = vld [vmem:[%s8717 + $0x4] sm:$0xf]
      %v8720 = vld [vmem:[%s8717 + $0x8] sm:$0xf]
      %v8721 = vld [vmem:[%s8717 + $0xc] sm:$0xf]
      %v8722 = vld [vmem:[%s8717 + $0x10] sm:$0xf]
      %v8723 = vld [vmem:[%s8717 + $0x14] sm:$0xf]
      %v8724 = vld [vmem:[%s8717 + $0x18] sm:$0xf]
      %v8725 = vld [vmem:[%s8717 + $0x1c] sm:$0xf]
      %v8726 = vld [vmem:[%s8717 + $0x20] sm:$0xf]
      %v8727 = vld [vmem:[%s8717 + $0x24] sm:$0xf]
      %v8728 = vld [vmem:[%s8717 + $0x28] sm:$0xf]
      %v8729 = vld [vmem:[%s8717 + $0x2c] sm:$0xf]
      %v8730 = vld [vmem:[%s8717 + $0x30] sm:$0xf]
      %v8731 = vld [vmem:[%s8717 + $0x34] sm:$0xf]
      %v8732 = vld [vmem:[%s8717 + $0x38] sm:$0xf]
      %v8733 = vld [vmem:[%s8717 + $0x3c] sm:$0xf]
      %v8735 = vunpack.c.l.b16 %v8716
      %v8736 = vpack.c.b16 %v8735, %v8735
      %v8738 = vshrl.u32 %v8591, 16
      %v8740 = vrot.slane %v8738, 1
      %v8741 = vshll.u32 %v8591, 16
      %v8743 = vrot.slane %v8741, 2
      %v8744 = vor.u32 %v8740, %v8743
      %v8745 = vrot.slane %v8417, 1
      %v8746 = vrot.slane %v8413, 2
      %v8747 = vor.u32 %v8745, %v8746
      %v8748 = vsel %vm2075, %v8744, %v8747
      %v8749 = vrot.slane %v8425, 1
      %v8750 = vrot.slane %v8421, 2
      %v8751 = vor.u32 %v8749, %v8750
      %v8752 = vsel %vm2075, %v8747, %v8751
      %v8753 = vrot.slane %v8433, 1
      %v8754 = vrot.slane %v8429, 2
      %v8755 = vor.u32 %v8753, %v8754
      %v8756 = vsel %vm2075, %v8751, %v8755
      %v8757 = vrot.slane %v8441, 1
      %v8758 = vrot.slane %v8437, 2
      %v8759 = vor.u32 %v8757, %v8758
      %v8760 = vsel %vm2075, %v8755, %v8759
      %v8761 = vrot.slane %v8449, 1
      %v8762 = vrot.slane %v8445, 2
      %v8763 = vor.u32 %v8761, %v8762
      %v8764 = vsel %vm2075, %v8759, %v8763
      %v8766 = vshrl.u32 %v8736, 16
      %v8768 = vrot.slane %v8766, 1
      %v8769 = vshll.u32 %v8736, 16
      %v8771 = vrot.slane %v8769, 2
      %v8772 = vor.u32 %v8768, %v8771
      %v8773 = vsel %vm2075, %v8763, %v8772
      %v8797 = vunpack.c.l.b16 %v8718
      %v8798 = vunpack.c.l.b16 %v8719
      %v8799 = vunpack.c.l.b16 %v8720
      %v8800 = vunpack.c.l.b16 %v8721
      %v8801 = vunpack.c.l.b16 %v8722
      %v8802 = vunpack.c.l.b16 %v8723
      %v8803 = vunpack.c.l.b16 %v8724
      %v8804 = vunpack.c.l.b16 %v8725
      %v8805 = vunpack.c.l.b16 %v8726
      %v8806 = vunpack.c.l.b16 %v8727
      %v8807 = vunpack.c.l.b16 %v8728
      %v8808 = vunpack.c.l.b16 %v8729
      %v8809 = vunpack.c.l.b16 %v8730
      %v8810 = vunpack.c.l.b16 %v8731
      %v8811 = vunpack.c.l.b16 %v8732
      %v8812 = vunpack.c.l.b16 %v8733
      %v8813 = vpack.c.b16 %v8798, %v8797
      %v8814 = vpack.c.b16 %v8800, %v8799
      %v8815 = vpack.c.b16 %v8802, %v8801
      %v8816 = vpack.c.b16 %v8804, %v8803
      %v8817 = vpack.c.b16 %v8806, %v8805
      %v8818 = vpack.c.b16 %v8808, %v8807
      %v8819 = vpack.c.b16 %v8810, %v8809
      %v8820 = vpack.c.b16 %v8812, %v8811
      %8829 = vmatpush.bf16.msra.mxu0 %v8820
      %8830 = vmatpush.bf16.msra.mxu0 %v8819
      %8831 = vmatpush.bf16.msra.mxu0 %v8818
      %8832 = vmatpush.bf16.msra.mxu0 %v8817
      %8833 = vmatpush.bf16.msra.mxu0 %v8816
      %8834 = vmatpush.bf16.msra.mxu0 %v8815
      %8835 = vmatpush.bf16.msra.mxu0 %v8814
      %8836 = vmatpush.bf16.msra.mxu0 %v8813
      %8837 = vmatmul.bf16.gmra.mxu0 %v8748
      %v8838 = vpop.f32.mrf.mxu0
      %v8839 = vadd.f32 0.0, %v8838
      %v8840 = vpop.f32.mrf.mxu0
      %v8841 = vadd.f32 0.0, %v8840
      %8842 = vmatmul.bf16.gmra.mxu0 %v8752
      %v8843 = vpop.f32.mrf.mxu0
      %v8844 = vadd.f32 0.0, %v8843
      %v8845 = vpop.f32.mrf.mxu0
      %v8846 = vadd.f32 0.0, %v8845
      %8847 = vmatmul.bf16.gmra.mxu0 %v8756
      %v8848 = vpop.f32.mrf.mxu0
      %v8849 = vadd.f32 0.0, %v8848
      %v8850 = vpop.f32.mrf.mxu0
      %v8851 = vadd.f32 0.0, %v8850
      %8852 = vmatmul.bf16.gmra.mxu0 %v8760
      %v8853 = vpop.f32.mrf.mxu0
      %v8854 = vadd.f32 0.0, %v8853
      %v8855 = vpop.f32.mrf.mxu0
      %v8856 = vadd.f32 0.0, %v8855
      %8857 = vmatmul.bf16.gmra.mxu0 %v8764
      %v8858 = vpop.f32.mrf.mxu0
      %v8859 = vadd.f32 0.0, %v8858
      %v8860 = vpop.f32.mrf.mxu0
      %v8861 = vadd.f32 0.0, %v8860
      %8862 = vmatmul.bf16.gmra.mxu0 %v8773
      %v8863 = vpop.f32.mrf.mxu0
      %v8864 = vadd.f32 0.0, %v8863
      %v8865 = vpop.f32.mrf.mxu0
      %v8866 = vadd.f32 0.0, %v8865
      %8867 = vmatmul.bf16.gmra.mxu0 %v8772
      %v8868 = vpop.f32.mrf.mxu0
      %v8869 = vadd.f32 0.0, %v8868
      %v8870 = vpop.f32.mrf.mxu0
      %8871 = vdwg.mxu0
      %v8872 = vadd.f32 %v8703, %v8839
      %v8873 = vadd.f32 %v8704, %v8841
      %v8874 = vadd.f32 %v8705, %v8844
      %v8875 = vadd.f32 %v8706, %v8846
      %v8876 = vadd.f32 %v8707, %v8849
      %v8877 = vadd.f32 %v8708, %v8851
      %v8878 = vadd.f32 %v8709, %v8854
      %v8879 = vadd.f32 %v8710, %v8856
      %v8880 = vadd.f32 %v8711, %v8859
      %v8881 = vadd.f32 %v8712, %v8861
      %v8882 = vadd.f32 %v8713, %v8864
      %v8883 = vadd.f32 %v8714, %v8866
      %v8884 = vadd.f32 %v8715, %v8869
      %vm8885 = vcmp.ge.f32.partialorder %v8872, 0.0
      %vm8886 = vcmp.ge.f32.partialorder %v8873, 0.0
      %vm8887 = vcmp.ge.f32.partialorder %v8874, 0.0
      %vm8888 = vcmp.ge.f32.partialorder %v8875, 0.0
      %vm8889 = vcmp.ge.f32.partialorder %v8876, 0.0
      %vm8890 = vcmp.ge.f32.partialorder %v8877, 0.0
      %vm8891 = vcmp.ge.f32.partialorder %v8878, 0.0
      %vm8892 = vcmp.ge.f32.partialorder %v8879, 0.0
      %vm8893 = vcmp.ge.f32.partialorder %v8880, 0.0
      %vm8894 = vcmp.ge.f32.partialorder %v8881, 0.0
      %vm8895 = vcmp.ge.f32.partialorder %v8882, 0.0
      %vm8896 = vcmp.ge.f32.partialorder %v8883, 0.0
      %vm8897 = vcmp.ge.f32.partialorder %v8884, 0.0
      %v8898 = vmul.f32 %v8872, 0.01
      %v8899 = vmul.f32 %v8873, 0.01
      %v8900 = vmul.f32 %v8874, 0.01
      %v8901 = vmul.f32 %v8875, 0.01
      %v8902 = vmul.f32 %v8876, 0.01
      %v8903 = vmul.f32 %v8877, 0.01
      %v8904 = vmul.f32 %v8878, 0.01
      %v8905 = vmul.f32 %v8879, 0.01
      %v8906 = vmul.f32 %v8880, 0.01
      %v8907 = vmul.f32 %v8881, 0.01
      %v8908 = vmul.f32 %v8882, 0.01
      %v8909 = vmul.f32 %v8883, 0.01
      %v8910 = vmul.f32 %v8884, 0.01
      %v8911 = vsel %vm8885, %v8872, %v8898
      %v8912 = vsel %vm8886, %v8873, %v8899
      %v8913 = vsel %vm8887, %v8874, %v8900
      %v8914 = vsel %vm8888, %v8875, %v8901
      %v8915 = vsel %vm8889, %v8876, %v8902
      %v8916 = vsel %vm8890, %v8877, %v8903
      %v8917 = vsel %vm8891, %v8878, %v8904
      %v8918 = vsel %vm8892, %v8879, %v8905
      %v8919 = vsel %vm8893, %v8880, %v8906
      %v8920 = vsel %vm8894, %v8881, %v8907
      %v8921 = vsel %vm8895, %v8882, %v8908
      %v8922 = vsel %vm8896, %v8883, %v8909
      %v8923 = vsel %vm8897, %v8884, %v8910
      %8937 = vrot.lane.b32.xlu0 %v895, 64
      %v8938 = vpop.permute.xlu0 %8937
      %8939 = vrot.lane.b32.xlu0 %v897, 64
      %v8940 = vpop.permute.xlu0 %8939
      %8941 = vrot.lane.b32.xlu0 %v900, 64
      %v8942 = vpop.permute.xlu0 %8941
      %8943 = vrot.lane.b32.xlu0 %v902, 64
      %v8944 = vpop.permute.xlu0 %8943
      %8945 = vrot.lane.b32.xlu0 %v905, 64
      %v8946 = vpop.permute.xlu0 %8945
      %8947 = vrot.lane.b32.xlu0 %v907, 64
      %v8948 = vpop.permute.xlu0 %8947
      %8949 = vrot.lane.b32.xlu0 %v910, 64
      %v8950 = vpop.permute.xlu0 %8949
      %8951 = vrot.lane.b32.xlu0 %v912, 64
      %v8952 = vpop.permute.xlu0 %8951
      %8953 = vrot.lane.b32.xlu0 %v915, 64
      %v8954 = vpop.permute.xlu0 %8953
      %8955 = vrot.lane.b32.xlu0 %v917, 64
      %v8956 = vpop.permute.xlu0 %8955
      %8957 = vrot.lane.b32.xlu0 %v920, 64
      %v8958 = vpop.permute.xlu0 %8957
      %8959 = vrot.lane.b32.xlu0 %v922, 64
      %v8960 = vpop.permute.xlu0 %8959
      %8961 = vrot.lane.b32.xlu0 %v925, 64
      %v8962 = vpop.permute.xlu0 %8961
      %v8976 = vadd.f32 %v8911, %v8938
      %v8977 = vadd.f32 %v8912, %v8940
      %v8978 = vadd.f32 %v8913, %v8942
      %v8979 = vadd.f32 %v8914, %v8944
      %v8980 = vadd.f32 %v8915, %v8946
      %v8981 = vadd.f32 %v8916, %v8948
      %v8982 = vadd.f32 %v8917, %v8950
      %v8983 = vadd.f32 %v8918, %v8952
      %v8984 = vadd.f32 %v8919, %v8954
      %v8985 = vadd.f32 %v8920, %v8956
      %v8986 = vadd.f32 %v8921, %v8958
      %v8987 = vadd.f32 %v8922, %v8960
      %v8988 = vadd.f32 %v8923, %v8962
      %v8989 = vmul.f32 %v8976, %v2244
      %v8990 = vmul.f32 %v8977, %v2249
      %v8991 = vmul.f32 %v8978, %v2254
      %v8992 = vmul.f32 %v8979, %v2259
      %v8993 = vmul.f32 %v8980, %v2264
      %v8994 = vmul.f32 %v8981, %v2269
      %v8995 = vmul.f32 %v8982, %v2274
      %v8996 = vmul.f32 %v8983, %v2279
      %v8997 = vmul.f32 %v8984, %v2284
      %v8998 = vmul.f32 %v8985, %v2289
      %v8999 = vmul.f32 %v8986, %v2294
      %v9000 = vmul.f32 %v8987, %v2299
      %v9001 = vmul.f32 %v8988, %v2304
      %v9002 = vpack.c.bf16 %v8989, %v8989
      %v9003 = vpack.c.bf16 %v8990, %v8990
      %v9004 = vpack.c.bf16 %v8991, %v8991
      %v9005 = vpack.c.bf16 %v8992, %v8992
      %v9006 = vpack.c.bf16 %v8993, %v8993
      %v9007 = vpack.c.bf16 %v8994, %v8994
      %v9008 = vpack.c.bf16 %v8995, %v8995
      %v9009 = vpack.c.bf16 %v8996, %v8996
      %v9010 = vpack.c.bf16 %v8997, %v8997
      %v9011 = vpack.c.bf16 %v8998, %v8998
      %v9012 = vpack.c.bf16 %v8999, %v8999
      %v9013 = vpack.c.bf16 %v9000, %v9000
      %v9014 = vpack.c.bf16 %v9001, %v9001
      %9015 = vst.msk [vmem:[#allocation2 + $0x8] sm:$0xf] %vm624, %v9002
      %9016 = vst.msk [vmem:[#allocation2 + $0xc] sm:$0xf] %vm624, %v9003
      %9017 = vst.msk [vmem:[#allocation2 + $0x10] sm:$0xf] %vm624, %v9004
      %9018 = vst.msk [vmem:[#allocation2 + $0x14] sm:$0xf] %vm624, %v9005
      %9019 = vst.msk [vmem:[#allocation2 + $0x18] sm:$0xf] %vm624, %v9006
      %9020 = vst.msk [vmem:[#allocation2 + $0x1c] sm:$0xf] %vm624, %v9007
      %9021 = vst.msk [vmem:[#allocation2 + $0x20] sm:$0xf] %vm624, %v9008
      %9022 = vst.msk [vmem:[#allocation2 + $0x24] sm:$0xf] %vm624, %v9009
      %9023 = vst.msk [vmem:[#allocation2 + $0x28] sm:$0xf] %vm624, %v9010
      %9024 = vst.msk [vmem:[#allocation2 + $0x2c] sm:$0xf] %vm624, %v9011
      %9025 = vst.msk [vmem:[#allocation2 + $0x30] sm:$0xf] %vm624, %v9012
      %9026 = vst.msk [vmem:[#allocation2 + $0x34] sm:$0xf] %vm624, %v9013
      %9027 = vst.msk [vmem:[#allocation2 + $0x38] sm:$0x3] %vm630, %v9014
      %v9028 = vld [vmem:[#allocation2] sm:$0xc]
      %v9029 = vld [vmem:[#allocation2 + $0x4] sm:$0xf]
      %v9030 = vld [vmem:[#allocation2 + $0x8] sm:$0xf]
      %v9031 = vld [vmem:[#allocation2 + $0xc] sm:$0xf]
      %v9032 = vld [vmem:[#allocation2 + $0x10] sm:$0xf]
      %v9033 = vld [vmem:[#allocation2 + $0x14] sm:$0xf]
      %v9034 = vld [vmem:[#allocation2 + $0x18] sm:$0xf]
      %v9035 = vld [vmem:[#allocation2 + $0x1c] sm:$0xf]
      %v9036 = vld [vmem:[#allocation2 + $0x20] sm:$0xf]
      %v9037 = vld [vmem:[#allocation2 + $0x24] sm:$0xf]
      %v9038 = vld [vmem:[#allocation2 + $0x28] sm:$0xf]
      %v9039 = vld [vmem:[#allocation2 + $0x2c] sm:$0xf]
      %v9040 = vld [vmem:[#allocation2 + $0x30] sm:$0xf]
      %v9041 = vld [vmem:[#allocation2 + $0x34] sm:$0x1]
      %v9042 = vld [vmem:[%s17] sm:$0xf]
      %v9043 = vld [vmem:[%s17 + $0x4] sm:$0xf]
      %v9044 = vld [vmem:[%s17 + $0x8] sm:$0xf]
      %v9045 = vld [vmem:[%s17 + $0xc] sm:$0xf]
      %v9046 = vld [vmem:[%s17 + $0x10] sm:$0xf]
      %v9047 = vld [vmem:[%s17 + $0x14] sm:$0xf]
      %v9048 = vld [vmem:[%s17 + $0x18] sm:$0xf]
      %v9049 = vld [vmem:[%s17 + $0x1c] sm:$0xf]
      %v9050 = vld [vmem:[%s18] sm:$0x1]
      %v9052 = vperm.slane %v9050, 0
      %v9068 = vunpack.c.l.b16 %v9028
      %v9069 = vunpack.c.l.b16 %v9029
      %v9070 = vunpack.c.l.b16 %v9030
      %v9071 = vunpack.c.l.b16 %v9031
      %v9072 = vunpack.c.l.b16 %v9032
      %v9073 = vunpack.c.l.b16 %v9033
      %v9074 = vunpack.c.l.b16 %v9034
      %v9075 = vunpack.c.l.b16 %v9035
      %v9076 = vunpack.c.l.b16 %v9036
      %v9077 = vunpack.c.l.b16 %v9037
      %v9078 = vunpack.c.l.b16 %v9038
      %v9079 = vunpack.c.l.b16 %v9039
      %v9080 = vunpack.c.l.b16 %v9040
      %v9081 = vunpack.c.l.b16 %v9041
      %v9082 = vpack.c.b16 %v9069, %v9068
      %v9083 = vpack.c.b16 %v9071, %v9070
      %v9084 = vpack.c.b16 %v9073, %v9072
      %v9085 = vpack.c.b16 %v9075, %v9074
      %v9086 = vpack.c.b16 %v9077, %v9076
      %v9087 = vpack.c.b16 %v9079, %v9078
      %v9088 = vpack.c.b16 %v9081, %v9080
      %v9090 = vshrl.u32 %v9082, 16
      %v9092 = vrot.slane %v9090, 2
      %v9093 = vshll.u32 %v9082, 16
      %v9095 = vrot.slane %v9093, 3
      %v9096 = vor.u32 %v9092, %v9095
      %v9098 = vshrl.u32 %v9083, 16
      %v9100 = vrot.slane %v9098, 2
      %v9101 = vshll.u32 %v9083, 16
      %v9103 = vrot.slane %v9101, 3
      %v9104 = vor.u32 %v9100, %v9103
      %v9105 = vsel %vm985, %v9096, %v9104
      %v9107 = vshrl.u32 %v9084, 16
      %v9109 = vrot.slane %v9107, 2
      %v9110 = vshll.u32 %v9084, 16
      %v9112 = vrot.slane %v9110, 3
      %v9113 = vor.u32 %v9109, %v9112
      %v9114 = vsel %vm985, %v9104, %v9113
      %v9116 = vshrl.u32 %v9085, 16
      %v9118 = vrot.slane %v9116, 2
      %v9119 = vshll.u32 %v9085, 16
      %v9121 = vrot.slane %v9119, 3
      %v9122 = vor.u32 %v9118, %v9121
      %v9123 = vsel %vm985, %v9113, %v9122
      %v9125 = vshrl.u32 %v9086, 16
      %v9127 = vrot.slane %v9125, 2
      %v9128 = vshll.u32 %v9086, 16
      %v9130 = vrot.slane %v9128, 3
      %v9131 = vor.u32 %v9127, %v9130
      %v9132 = vsel %vm985, %v9122, %v9131
      %v9134 = vshrl.u32 %v9087, 16
      %v9136 = vrot.slane %v9134, 2
      %v9137 = vshll.u32 %v9087, 16
      %v9139 = vrot.slane %v9137, 3
      %v9140 = vor.u32 %v9136, %v9139
      %v9141 = vsel %vm985, %v9131, %v9140
      %v9143 = vshrl.u32 %v9088, 16
      %v9145 = vrot.slane %v9143, 2
      %v9146 = vshll.u32 %v9088, 16
      %v9148 = vrot.slane %v9146, 3
      %v9149 = vor.u32 %v9145, %v9148
      %v9150 = vsel %vm985, %v9140, %v9149
      %v9159 = vunpack.c.l.b16 %v9042
      %v9160 = vunpack.c.l.b16 %v9043
      %v9161 = vunpack.c.l.b16 %v9044
      %v9162 = vunpack.c.l.b16 %v9045
      %v9163 = vunpack.c.l.b16 %v9046
      %v9164 = vunpack.c.l.b16 %v9047
      %v9165 = vunpack.c.l.b16 %v9048
      %v9166 = vunpack.c.l.b16 %v9049
      %v9167 = vpack.c.b16 %v9160, %v9159
      %v9168 = vpack.c.b16 %v9162, %v9161
      %v9169 = vpack.c.b16 %v9164, %v9163
      %v9170 = vpack.c.b16 %v9166, %v9165
      %v9176 = vsel %vm863, %v9105, 0
      %v9179 = vsel %vm863, %v9114, 0
      %v9182 = vsel %vm863, %v9123, 0
      %v9185 = vsel %vm863, %v9132, 0
      %v9188 = vsel %vm863, %v9141, 0
      %v9191 = vsel %vm863, %v9150, 0
      %v9194 = vsel %vm863, %v9149, 0
      %9196 = vmatpush.bf16.msra.mxu0 0
      %9197 = vmatpush.bf16.msra.mxu0 0
      %9198 = vmatpush.bf16.msra.mxu0 0
      %9199 = vmatpush.bf16.msra.mxu0 0
      %9200 = vmatpush.bf16.msra.mxu0 %v9170
      %9201 = vmatpush.bf16.msra.mxu0 %v9169
      %9202 = vmatpush.bf16.msra.mxu0 %v9168
      %9203 = vmatpush.bf16.msra.mxu0 %v9167
      %9204 = vmatmul.bf16.gmra.mxu0 %v9176
      %v9205 = vpop.f32.mrf.mxu0
      %v9206 = vadd.f32 %v9052, %v9205
      %v9207 = vpop.f32.mrf.mxu0
      %v9208 = vadd.f32 %v9052, %v9207
      %9209 = vmatmul.bf16.gmra.mxu0 %v9179
      %v9210 = vpop.f32.mrf.mxu0
      %v9211 = vadd.f32 %v9052, %v9210
      %v9212 = vpop.f32.mrf.mxu0
      %v9213 = vadd.f32 %v9052, %v9212
      %9214 = vmatmul.bf16.gmra.mxu0 %v9182
      %v9215 = vpop.f32.mrf.mxu0
      %v9216 = vadd.f32 %v9052, %v9215
      %v9217 = vpop.f32.mrf.mxu0
      %v9218 = vadd.f32 %v9052, %v9217
      %9219 = vmatmul.bf16.gmra.mxu0 %v9185
      %v9220 = vpop.f32.mrf.mxu0
      %v9221 = vadd.f32 %v9052, %v9220
      %v9222 = vpop.f32.mrf.mxu0
      %v9223 = vadd.f32 %v9052, %v9222
      %9224 = vmatmul.bf16.gmra.mxu0 %v9188
      %v9225 = vpop.f32.mrf.mxu0
      %v9226 = vadd.f32 %v9052, %v9225
      %v9227 = vpop.f32.mrf.mxu0
      %v9228 = vadd.f32 %v9052, %v9227
      %9229 = vmatmul.bf16.gmra.mxu0 %v9191
      %v9230 = vpop.f32.mrf.mxu0
      %v9231 = vadd.f32 %v9052, %v9230
      %v9232 = vpop.f32.mrf.mxu0
      %v9233 = vadd.f32 %v9052, %v9232
      %9234 = vmatmul.bf16.gmra.mxu0 %v9194
      %v9235 = vpop.f32.mrf.mxu0
      %v9236 = vadd.f32 %v9052, %v9235
      %v9237 = vpop.f32.mrf.mxu0
      %9238 = vdwg.mxu0
      %v9239 = vld [vmem:[#allocation2] sm:$0x8]
      %s9240 = scalar_lea.vmem %s17, 32
      %v9241 = vld [vmem:[%s9240] sm:$0xf]
      %v9242 = vld [vmem:[%s9240 + $0x4] sm:$0xf]
      %v9243 = vld [vmem:[%s9240 + $0x8] sm:$0xf]
      %v9244 = vld [vmem:[%s9240 + $0xc] sm:$0xf]
      %v9245 = vld [vmem:[%s9240 + $0x10] sm:$0xf]
      %v9246 = vld [vmem:[%s9240 + $0x14] sm:$0xf]
      %v9247 = vld [vmem:[%s9240 + $0x18] sm:$0xf]
      %v9248 = vld [vmem:[%s9240 + $0x1c] sm:$0xf]
      %v9250 = vunpack.c.l.b16 %v9239
      %v9251 = vpack.c.b16 %v9069, %v9250
      %v9252 = vrot.slane %v9251, 3
      %v9253 = vrot.slane %v9083, 3
      %v9254 = vsel %vm1133, %v9252, %v9253
      %v9255 = vrot.slane %v9084, 3
      %v9256 = vsel %vm1133, %v9253, %v9255
      %v9257 = vrot.slane %v9085, 3
      %v9258 = vsel %vm1133, %v9255, %v9257
      %v9259 = vrot.slane %v9086, 3
      %v9260 = vsel %vm1133, %v9257, %v9259
      %v9261 = vrot.slane %v9087, 3
      %v9262 = vsel %vm1133, %v9259, %v9261
      %v9263 = vrot.slane %v9088, 3
      %v9264 = vsel %vm1133, %v9261, %v9263
      %v9273 = vunpack.c.l.b16 %v9241
      %v9274 = vunpack.c.l.b16 %v9242
      %v9275 = vunpack.c.l.b16 %v9243
      %v9276 = vunpack.c.l.b16 %v9244
      %v9277 = vunpack.c.l.b16 %v9245
      %v9278 = vunpack.c.l.b16 %v9246
      %v9279 = vunpack.c.l.b16 %v9247
      %v9280 = vunpack.c.l.b16 %v9248
      %v9281 = vpack.c.b16 %v9274, %v9273
      %v9282 = vpack.c.b16 %v9276, %v9275
      %v9283 = vpack.c.b16 %v9278, %v9277
      %v9284 = vpack.c.b16 %v9280, %v9279
      %v9290 = vsel %vm863, %v9254, 0
      %v9293 = vsel %vm863, %v9256, 0
      %v9296 = vsel %vm863, %v9258, 0
      %v9299 = vsel %vm863, %v9260, 0
      %v9302 = vsel %vm863, %v9262, 0
      %v9305 = vsel %vm863, %v9264, 0
      %v9308 = vsel %vm863, %v9263, 0
      %9310 = vmatpush.bf16.msra.mxu0 0
      %9311 = vmatpush.bf16.msra.mxu0 0
      %9312 = vmatpush.bf16.msra.mxu0 0
      %9313 = vmatpush.bf16.msra.mxu0 0
      %9314 = vmatpush.bf16.msra.mxu0 %v9284
      %9315 = vmatpush.bf16.msra.mxu0 %v9283
      %9316 = vmatpush.bf16.msra.mxu0 %v9282
      %9317 = vmatpush.bf16.msra.mxu0 %v9281
      %9318 = vmatmul.bf16.gmra.mxu0 %v9290
      %v9319 = vpop.f32.mrf.mxu0
      %v9320 = vadd.f32 0.0, %v9319
      %v9321 = vpop.f32.mrf.mxu0
      %v9322 = vadd.f32 0.0, %v9321
      %9323 = vmatmul.bf16.gmra.mxu0 %v9293
      %v9324 = vpop.f32.mrf.mxu0
      %v9325 = vadd.f32 0.0, %v9324
      %v9326 = vpop.f32.mrf.mxu0
      %v9327 = vadd.f32 0.0, %v9326
      %9328 = vmatmul.bf16.gmra.mxu0 %v9296
      %v9329 = vpop.f32.mrf.mxu0
      %v9330 = vadd.f32 0.0, %v9329
      %v9331 = vpop.f32.mrf.mxu0
      %v9332 = vadd.f32 0.0, %v9331
      %9333 = vmatmul.bf16.gmra.mxu0 %v9299
      %v9334 = vpop.f32.mrf.mxu0
      %v9335 = vadd.f32 0.0, %v9334
      %v9336 = vpop.f32.mrf.mxu0
      %v9337 = vadd.f32 0.0, %v9336
      %9338 = vmatmul.bf16.gmra.mxu0 %v9302
      %v9339 = vpop.f32.mrf.mxu0
      %v9340 = vadd.f32 0.0, %v9339
      %v9341 = vpop.f32.mrf.mxu0
      %v9342 = vadd.f32 0.0, %v9341
      %9343 = vmatmul.bf16.gmra.mxu0 %v9305
      %v9344 = vpop.f32.mrf.mxu0
      %v9345 = vadd.f32 0.0, %v9344
      %v9346 = vpop.f32.mrf.mxu0
      %v9347 = vadd.f32 0.0, %v9346
      %9348 = vmatmul.bf16.gmra.mxu0 %v9308
      %v9349 = vpop.f32.mrf.mxu0
      %v9350 = vadd.f32 0.0, %v9349
      %v9351 = vpop.f32.mrf.mxu0
      %9352 = vdwg.mxu0
      %v9353 = vadd.f32 %v9206, %v9320
      %v9354 = vadd.f32 %v9208, %v9322
      %v9355 = vadd.f32 %v9211, %v9325
      %v9356 = vadd.f32 %v9213, %v9327
      %v9357 = vadd.f32 %v9216, %v9330
      %v9358 = vadd.f32 %v9218, %v9332
      %v9359 = vadd.f32 %v9221, %v9335
      %v9360 = vadd.f32 %v9223, %v9337
      %v9361 = vadd.f32 %v9226, %v9340
      %v9362 = vadd.f32 %v9228, %v9342
      %v9363 = vadd.f32 %v9231, %v9345
      %v9364 = vadd.f32 %v9233, %v9347
      %v9365 = vadd.f32 %v9236, %v9350
      %v9366 = vld [vmem:[#allocation2 + $0x34] sm:$0x3]
      %s9367 = scalar_lea.vmem %s17, 64
      %v9368 = vld [vmem:[%s9367] sm:$0xf]
      %v9369 = vld [vmem:[%s9367 + $0x4] sm:$0xf]
      %v9370 = vld [vmem:[%s9367 + $0x8] sm:$0xf]
      %v9371 = vld [vmem:[%s9367 + $0xc] sm:$0xf]
      %v9372 = vld [vmem:[%s9367 + $0x10] sm:$0xf]
      %v9373 = vld [vmem:[%s9367 + $0x14] sm:$0xf]
      %v9374 = vld [vmem:[%s9367 + $0x18] sm:$0xf]
      %v9375 = vld [vmem:[%s9367 + $0x1c] sm:$0xf]
      %v9377 = vunpack.c.l.b16 %v9366
      %v9378 = vpack.c.b16 %v9377, %v9080
      %v9380 = vshrl.u32 %v9251, 16
      %v9382 = vrot.slane %v9380, 3
      %v9383 = vshll.u32 %v9251, 16
      %v9385 = vrot.slane %v9383, 4
      %v9386 = vor.u32 %v9382, %v9385
      %v9387 = vrot.slane %v9098, 3
      %v9388 = vrot.slane %v9101, 4
      %v9389 = vor.u32 %v9387, %v9388
      %v9390 = vsel %vm1245, %v9386, %v9389
      %v9391 = vrot.slane %v9107, 3
      %v9392 = vrot.slane %v9110, 4
      %v9393 = vor.u32 %v9391, %v9392
      %v9394 = vsel %vm1245, %v9389, %v9393
      %v9395 = vrot.slane %v9116, 3
      %v9396 = vrot.slane %v9119, 4
      %v9397 = vor.u32 %v9395, %v9396
      %v9398 = vsel %vm1245, %v9393, %v9397
      %v9399 = vrot.slane %v9125, 3
      %v9400 = vrot.slane %v9128, 4
      %v9401 = vor.u32 %v9399, %v9400
      %v9402 = vsel %vm1245, %v9397, %v9401
      %v9403 = vrot.slane %v9134, 3
      %v9404 = vrot.slane %v9137, 4
      %v9405 = vor.u32 %v9403, %v9404
      %v9406 = vsel %vm1245, %v9401, %v9405
      %v9408 = vshrl.u32 %v9378, 16
      %v9410 = vrot.slane %v9408, 3
      %v9411 = vshll.u32 %v9378, 16
      %v9413 = vrot.slane %v9411, 4
      %v9414 = vor.u32 %v9410, %v9413
      %v9415 = vsel %vm1245, %v9405, %v9414
      %v9424 = vunpack.c.l.b16 %v9368
      %v9425 = vunpack.c.l.b16 %v9369
      %v9426 = vunpack.c.l.b16 %v9370
      %v9427 = vunpack.c.l.b16 %v9371
      %v9428 = vunpack.c.l.b16 %v9372
      %v9429 = vunpack.c.l.b16 %v9373
      %v9430 = vunpack.c.l.b16 %v9374
      %v9431 = vunpack.c.l.b16 %v9375
      %v9432 = vpack.c.b16 %v9425, %v9424
      %v9433 = vpack.c.b16 %v9427, %v9426
      %v9434 = vpack.c.b16 %v9429, %v9428
      %v9435 = vpack.c.b16 %v9431, %v9430
      %v9441 = vsel %vm863, %v9390, 0
      %v9444 = vsel %vm863, %v9394, 0
      %v9447 = vsel %vm863, %v9398, 0
      %v9450 = vsel %vm863, %v9402, 0
      %v9453 = vsel %vm863, %v9406, 0
      %v9456 = vsel %vm863, %v9415, 0
      %v9459 = vsel %vm863, %v9414, 0
      %9461 = vmatpush.bf16.msra.mxu0 0
      %9462 = vmatpush.bf16.msra.mxu0 0
      %9463 = vmatpush.bf16.msra.mxu0 0
      %9464 = vmatpush.bf16.msra.mxu0 0
      %9465 = vmatpush.bf16.msra.mxu0 %v9435
      %9466 = vmatpush.bf16.msra.mxu0 %v9434
      %9467 = vmatpush.bf16.msra.mxu0 %v9433
      %9468 = vmatpush.bf16.msra.mxu0 %v9432
      %9469 = vmatmul.bf16.gmra.mxu0 %v9441
      %v9470 = vpop.f32.mrf.mxu0
      %v9471 = vadd.f32 0.0, %v9470
      %v9472 = vpop.f32.mrf.mxu0
      %v9473 = vadd.f32 0.0, %v9472
      %9474 = vmatmul.bf16.gmra.mxu0 %v9444
      %v9475 = vpop.f32.mrf.mxu0
      %v9476 = vadd.f32 0.0, %v9475
      %v9477 = vpop.f32.mrf.mxu0
      %v9478 = vadd.f32 0.0, %v9477
      %9479 = vmatmul.bf16.gmra.mxu0 %v9447
      %v9480 = vpop.f32.mrf.mxu0
      %v9481 = vadd.f32 0.0, %v9480
      %v9482 = vpop.f32.mrf.mxu0
      %v9483 = vadd.f32 0.0, %v9482
      %9484 = vmatmul.bf16.gmra.mxu0 %v9450
      %v9485 = vpop.f32.mrf.mxu0
      %v9486 = vadd.f32 0.0, %v9485
      %v9487 = vpop.f32.mrf.mxu0
      %v9488 = vadd.f32 0.0, %v9487
      %9489 = vmatmul.bf16.gmra.mxu0 %v9453
      %v9490 = vpop.f32.mrf.mxu0
      %v9491 = vadd.f32 0.0, %v9490
      %v9492 = vpop.f32.mrf.mxu0
      %v9493 = vadd.f32 0.0, %v9492
      %9494 = vmatmul.bf16.gmra.mxu0 %v9456
      %v9495 = vpop.f32.mrf.mxu0
      %v9496 = vadd.f32 0.0, %v9495
      %v9497 = vpop.f32.mrf.mxu0
      %v9498 = vadd.f32 0.0, %v9497
      %9499 = vmatmul.bf16.gmra.mxu0 %v9459
      %v9500 = vpop.f32.mrf.mxu0
      %v9501 = vadd.f32 0.0, %v9500
      %v9502 = vpop.f32.mrf.mxu0
      %9503 = vdwg.mxu0
      %v9504 = vadd.f32 %v9353, %v9471
      %v9505 = vadd.f32 %v9354, %v9473
      %v9506 = vadd.f32 %v9355, %v9476
      %v9507 = vadd.f32 %v9356, %v9478
      %v9508 = vadd.f32 %v9357, %v9481
      %v9509 = vadd.f32 %v9358, %v9483
      %v9510 = vadd.f32 %v9359, %v9486
      %v9511 = vadd.f32 %v9360, %v9488
      %v9512 = vadd.f32 %v9361, %v9491
      %v9513 = vadd.f32 %v9362, %v9493
      %v9514 = vadd.f32 %v9363, %v9496
      %v9515 = vadd.f32 %v9364, %v9498
      %v9516 = vadd.f32 %v9365, %v9501
      %v9517 = vld [vmem:[#allocation2 + $0x4] sm:$0x8]
      %v9518 = vld [vmem:[#allocation2 + $0x8] sm:$0xf]
      %v9519 = vld [vmem:[#allocation2 + $0xc] sm:$0xf]
      %v9520 = vld [vmem:[#allocation2 + $0x10] sm:$0xf]
      %v9521 = vld [vmem:[#allocation2 + $0x14] sm:$0xf]
      %v9522 = vld [vmem:[#allocation2 + $0x18] sm:$0xf]
      %v9523 = vld [vmem:[#allocation2 + $0x1c] sm:$0xf]
      %v9524 = vld [vmem:[#allocation2 + $0x20] sm:$0xf]
      %v9525 = vld [vmem:[#allocation2 + $0x24] sm:$0xf]
      %v9526 = vld [vmem:[#allocation2 + $0x28] sm:$0xf]
      %v9527 = vld [vmem:[#allocation2 + $0x2c] sm:$0xf]
      %v9528 = vld [vmem:[#allocation2 + $0x30] sm:$0xf]
      %v9529 = vld [vmem:[#allocation2 + $0x34] sm:$0xf]
      %v9530 = vld [vmem:[#allocation2 + $0x38] sm:$0x3]
      %s9531 = scalar_lea.vmem %s17, 96
      %v9532 = vld [vmem:[%s9531] sm:$0xf]
      %v9533 = vld [vmem:[%s9531 + $0x4] sm:$0xf]
      %v9534 = vld [vmem:[%s9531 + $0x8] sm:$0xf]
      %v9535 = vld [vmem:[%s9531 + $0xc] sm:$0xf]
      %v9536 = vld [vmem:[%s9531 + $0x10] sm:$0xf]
      %v9537 = vld [vmem:[%s9531 + $0x14] sm:$0xf]
      %v9538 = vld [vmem:[%s9531 + $0x18] sm:$0xf]
      %v9539 = vld [vmem:[%s9531 + $0x1c] sm:$0xf]
      %v9554 = vunpack.c.l.b16 %v9517
      %v9555 = vunpack.c.l.b16 %v9518
      %v9556 = vunpack.c.l.b16 %v9519
      %v9557 = vunpack.c.l.b16 %v9520
      %v9558 = vunpack.c.l.b16 %v9521
      %v9559 = vunpack.c.l.b16 %v9522
      %v9560 = vunpack.c.l.b16 %v9523
      %v9561 = vunpack.c.l.b16 %v9524
      %v9562 = vunpack.c.l.b16 %v9525
      %v9563 = vunpack.c.l.b16 %v9526
      %v9564 = vunpack.c.l.b16 %v9527
      %v9565 = vunpack.c.l.b16 %v9528
      %v9566 = vunpack.c.l.b16 %v9529
      %v9567 = vunpack.c.l.b16 %v9530
      %v9568 = vpack.c.b16 %v9555, %v9554
      %v9569 = vpack.c.b16 %v9557, %v9556
      %v9570 = vpack.c.b16 %v9559, %v9558
      %v9571 = vpack.c.b16 %v9561, %v9560
      %v9572 = vpack.c.b16 %v9563, %v9562
      %v9573 = vpack.c.b16 %v9565, %v9564
      %v9574 = vpack.c.b16 %v9567, %v9566
      %v9576 = vshrl.u32 %v9568, 16
      %v9578 = vrot.slane %v9576, 3
      %v9579 = vshll.u32 %v9568, 16
      %v9581 = vrot.slane %v9579, 4
      %v9582 = vor.u32 %v9578, %v9581
      %v9584 = vshrl.u32 %v9569, 16
      %v9586 = vrot.slane %v9584, 3
      %v9587 = vshll.u32 %v9569, 16
      %v9589 = vrot.slane %v9587, 4
      %v9590 = vor.u32 %v9586, %v9589
      %v9591 = vsel %vm1245, %v9582, %v9590
      %v9593 = vshrl.u32 %v9570, 16
      %v9595 = vrot.slane %v9593, 3
      %v9596 = vshll.u32 %v9570, 16
      %v9598 = vrot.slane %v9596, 4
      %v9599 = vor.u32 %v9595, %v9598
      %v9600 = vsel %vm1245, %v9590, %v9599
      %v9602 = vshrl.u32 %v9571, 16
      %v9604 = vrot.slane %v9602, 3
      %v9605 = vshll.u32 %v9571, 16
      %v9607 = vrot.slane %v9605, 4
      %v9608 = vor.u32 %v9604, %v9607
      %v9609 = vsel %vm1245, %v9599, %v9608
      %v9611 = vshrl.u32 %v9572, 16
      %v9613 = vrot.slane %v9611, 3
      %v9614 = vshll.u32 %v9572, 16
      %v9616 = vrot.slane %v9614, 4
      %v9617 = vor.u32 %v9613, %v9616
      %v9618 = vsel %vm1245, %v9608, %v9617
      %v9620 = vshrl.u32 %v9573, 16
      %v9622 = vrot.slane %v9620, 3
      %v9623 = vshll.u32 %v9573, 16
      %v9625 = vrot.slane %v9623, 4
      %v9626 = vor.u32 %v9622, %v9625
      %v9627 = vsel %vm1245, %v9617, %v9626
      %v9629 = vshrl.u32 %v9574, 16
      %v9631 = vrot.slane %v9629, 3
      %v9632 = vshll.u32 %v9574, 16
      %v9634 = vrot.slane %v9632, 4
      %v9635 = vor.u32 %v9631, %v9634
      %v9636 = vsel %vm1245, %v9626, %v9635
      %v9645 = vunpack.c.l.b16 %v9532
      %v9646 = vunpack.c.l.b16 %v9533
      %v9647 = vunpack.c.l.b16 %v9534
      %v9648 = vunpack.c.l.b16 %v9535
      %v9649 = vunpack.c.l.b16 %v9536
      %v9650 = vunpack.c.l.b16 %v9537
      %v9651 = vunpack.c.l.b16 %v9538
      %v9652 = vunpack.c.l.b16 %v9539
      %v9653 = vpack.c.b16 %v9646, %v9645
      %v9654 = vpack.c.b16 %v9648, %v9647
      %v9655 = vpack.c.b16 %v9650, %v9649
      %v9656 = vpack.c.b16 %v9652, %v9651
      %v9662 = vsel %vm863, %v9591, 0
      %v9665 = vsel %vm863, %v9600, 0
      %v9668 = vsel %vm863, %v9609, 0
      %v9671 = vsel %vm863, %v9618, 0
      %v9674 = vsel %vm863, %v9627, 0
      %v9677 = vsel %vm863, %v9636, 0
      %v9680 = vsel %vm863, %v9635, 0
      %9682 = vmatpush.bf16.msra.mxu0 0
      %9683 = vmatpush.bf16.msra.mxu0 0
      %9684 = vmatpush.bf16.msra.mxu0 0
      %9685 = vmatpush.bf16.msra.mxu0 0
      %9686 = vmatpush.bf16.msra.mxu0 %v9656
      %9687 = vmatpush.bf16.msra.mxu0 %v9655
      %9688 = vmatpush.bf16.msra.mxu0 %v9654
      %9689 = vmatpush.bf16.msra.mxu0 %v9653
      %9690 = vmatmul.bf16.gmra.mxu0 %v9662
      %v9691 = vpop.f32.mrf.mxu0
      %v9692 = vadd.f32 0.0, %v9691
      %v9693 = vpop.f32.mrf.mxu0
      %v9694 = vadd.f32 0.0, %v9693
      %9695 = vmatmul.bf16.gmra.mxu0 %v9665
      %v9696 = vpop.f32.mrf.mxu0
      %v9697 = vadd.f32 0.0, %v9696
      %v9698 = vpop.f32.mrf.mxu0
      %v9699 = vadd.f32 0.0, %v9698
      %9700 = vmatmul.bf16.gmra.mxu0 %v9668
      %v9701 = vpop.f32.mrf.mxu0
      %v9702 = vadd.f32 0.0, %v9701
      %v9703 = vpop.f32.mrf.mxu0
      %v9704 = vadd.f32 0.0, %v9703
      %9705 = vmatmul.bf16.gmra.mxu0 %v9671
      %v9706 = vpop.f32.mrf.mxu0
      %v9707 = vadd.f32 0.0, %v9706
      %v9708 = vpop.f32.mrf.mxu0
      %v9709 = vadd.f32 0.0, %v9708
      %9710 = vmatmul.bf16.gmra.mxu0 %v9674
      %v9711 = vpop.f32.mrf.mxu0
      %v9712 = vadd.f32 0.0, %v9711
      %v9713 = vpop.f32.mrf.mxu0
      %v9714 = vadd.f32 0.0, %v9713
      %9715 = vmatmul.bf16.gmra.mxu0 %v9677
      %v9716 = vpop.f32.mrf.mxu0
      %v9717 = vadd.f32 0.0, %v9716
      %v9718 = vpop.f32.mrf.mxu0
      %v9719 = vadd.f32 0.0, %v9718
      %9720 = vmatmul.bf16.gmra.mxu0 %v9680
      %v9721 = vpop.f32.mrf.mxu0
      %v9722 = vadd.f32 0.0, %v9721
      %v9723 = vpop.f32.mrf.mxu0
      %9724 = vdwg.mxu0
      %v9725 = vadd.f32 %v9504, %v9692
      %v9726 = vadd.f32 %v9505, %v9694
      %v9727 = vadd.f32 %v9506, %v9697
      %v9728 = vadd.f32 %v9507, %v9699
      %v9729 = vadd.f32 %v9508, %v9702
      %v9730 = vadd.f32 %v9509, %v9704
      %v9731 = vadd.f32 %v9510, %v9707
      %v9732 = vadd.f32 %v9511, %v9709
      %v9733 = vadd.f32 %v9512, %v9712
      %v9734 = vadd.f32 %v9513, %v9714
      %v9735 = vadd.f32 %v9514, %v9717
      %v9736 = vadd.f32 %v9515, %v9719
      %v9737 = vadd.f32 %v9516, %v9722
      %s9738 = scalar_lea.vmem %s17, 128
      %v9739 = vld [vmem:[%s9738] sm:$0xf]
      %v9740 = vld [vmem:[%s9738 + $0x4] sm:$0xf]
      %v9741 = vld [vmem:[%s9738 + $0x8] sm:$0xf]
      %v9742 = vld [vmem:[%s9738 + $0xc] sm:$0xf]
      %v9743 = vld [vmem:[%s9738 + $0x10] sm:$0xf]
      %v9744 = vld [vmem:[%s9738 + $0x14] sm:$0xf]
      %v9745 = vld [vmem:[%s9738 + $0x18] sm:$0xf]
      %v9746 = vld [vmem:[%s9738 + $0x1c] sm:$0xf]
      %v9747 = vpack.c.b16 %v9556, %v9555
      %v9748 = vpack.c.b16 %v9558, %v9557
      %v9749 = vpack.c.b16 %v9560, %v9559
      %v9750 = vpack.c.b16 %v9562, %v9561
      %v9751 = vpack.c.b16 %v9564, %v9563
      %v9752 = vpack.c.b16 %v9566, %v9565
      %v9753 = vpack.c.b16 %v9567, %v9567
      %v9762 = vunpack.c.l.b16 %v9739
      %v9763 = vunpack.c.l.b16 %v9740
      %v9764 = vunpack.c.l.b16 %v9741
      %v9765 = vunpack.c.l.b16 %v9742
      %v9766 = vunpack.c.l.b16 %v9743
      %v9767 = vunpack.c.l.b16 %v9744
      %v9768 = vunpack.c.l.b16 %v9745
      %v9769 = vunpack.c.l.b16 %v9746
      %v9770 = vpack.c.b16 %v9763, %v9762
      %v9771 = vpack.c.b16 %v9765, %v9764
      %v9772 = vpack.c.b16 %v9767, %v9766
      %v9773 = vpack.c.b16 %v9769, %v9768
      %v9779 = vsel %vm863, %v9747, 0
      %v9782 = vsel %vm863, %v9748, 0
      %v9785 = vsel %vm863, %v9749, 0
      %v9788 = vsel %vm863, %v9750, 0
      %v9791 = vsel %vm863, %v9751, 0
      %v9794 = vsel %vm863, %v9752, 0
      %v9797 = vsel %vm863, %v9753, 0
      %9799 = vmatpush.bf16.msra.mxu0 0
      %9800 = vmatpush.bf16.msra.mxu0 0
      %9801 = vmatpush.bf16.msra.mxu0 0
      %9802 = vmatpush.bf16.msra.mxu0 0
      %9803 = vmatpush.bf16.msra.mxu0 %v9773
      %9804 = vmatpush.bf16.msra.mxu0 %v9772
      %9805 = vmatpush.bf16.msra.mxu0 %v9771
      %9806 = vmatpush.bf16.msra.mxu0 %v9770
      %9807 = vmatmul.bf16.gmra.mxu0 %v9779
      %v9808 = vpop.f32.mrf.mxu0
      %v9809 = vadd.f32 0.0, %v9808
      %v9810 = vpop.f32.mrf.mxu0
      %v9811 = vadd.f32 0.0, %v9810
      %9812 = vmatmul.bf16.gmra.mxu0 %v9782
      %v9813 = vpop.f32.mrf.mxu0
      %v9814 = vadd.f32 0.0, %v9813
      %v9815 = vpop.f32.mrf.mxu0
      %v9816 = vadd.f32 0.0, %v9815
      %9817 = vmatmul.bf16.gmra.mxu0 %v9785
      %v9818 = vpop.f32.mrf.mxu0
      %v9819 = vadd.f32 0.0, %v9818
      %v9820 = vpop.f32.mrf.mxu0
      %v9821 = vadd.f32 0.0, %v9820
      %9822 = vmatmul.bf16.gmra.mxu0 %v9788
      %v9823 = vpop.f32.mrf.mxu0
      %v9824 = vadd.f32 0.0, %v9823
      %v9825 = vpop.f32.mrf.mxu0
      %v9826 = vadd.f32 0.0, %v9825
      %9827 = vmatmul.bf16.gmra.mxu0 %v9791
      %v9828 = vpop.f32.mrf.mxu0
      %v9829 = vadd.f32 0.0, %v9828
      %v9830 = vpop.f32.mrf.mxu0
      %v9831 = vadd.f32 0.0, %v9830
      %9832 = vmatmul.bf16.gmra.mxu0 %v9794
      %v9833 = vpop.f32.mrf.mxu0
      %v9834 = vadd.f32 0.0, %v9833
      %v9835 = vpop.f32.mrf.mxu0
      %v9836 = vadd.f32 0.0, %v9835
      %9837 = vmatmul.bf16.gmra.mxu0 %v9797
      %v9838 = vpop.f32.mrf.mxu0
      %v9839 = vadd.f32 0.0, %v9838
      %v9840 = vpop.f32.mrf.mxu0
      %9841 = vdwg.mxu0
      %v9842 = vadd.f32 %v9725, %v9809
      %v9843 = vadd.f32 %v9726, %v9811
      %v9844 = vadd.f32 %v9727, %v9814
      %v9845 = vadd.f32 %v9728, %v9816
      %v9846 = vadd.f32 %v9729, %v9819
      %v9847 = vadd.f32 %v9730, %v9821
      %v9848 = vadd.f32 %v9731, %v9824
      %v9849 = vadd.f32 %v9732, %v9826
      %v9850 = vadd.f32 %v9733, %v9829
      %v9851 = vadd.f32 %v9734, %v9831
      %v9852 = vadd.f32 %v9735, %v9834
      %v9853 = vadd.f32 %v9736, %v9836
      %v9854 = vadd.f32 %v9737, %v9839
      %v9855 = vld [vmem:[#allocation2 + $0x38] sm:$0x7]
      %s9856 = scalar_lea.vmem %s17, 160
      %v9857 = vld [vmem:[%s9856] sm:$0xf]
      %v9858 = vld [vmem:[%s9856 + $0x4] sm:$0xf]
      %v9859 = vld [vmem:[%s9856 + $0x8] sm:$0xf]
      %v9860 = vld [vmem:[%s9856 + $0xc] sm:$0xf]
      %v9861 = vld [vmem:[%s9856 + $0x10] sm:$0xf]
      %v9862 = vld [vmem:[%s9856 + $0x14] sm:$0xf]
      %v9863 = vld [vmem:[%s9856 + $0x18] sm:$0xf]
      %v9864 = vld [vmem:[%s9856 + $0x1c] sm:$0xf]
      %v9866 = vunpack.c.l.b16 %v9855
      %v9867 = vpack.c.b16 %v9866, %v9866
      %v9868 = vshrl.u32 %v9747, 16
      %v9870 = vshll.u32 %v9747, 16
      %v9872 = vrot.slane %v9870, 1
      %v9873 = vor.u32 %v9868, %v9872
      %v9874 = vshll.u32 %v9748, 16
      %v9876 = vrot.slane %v9874, 1
      %v9877 = vsel %vm1620, %v9873, %v9876
      %v9878 = vshrl.u32 %v9748, 16
      %v9880 = vor.u32 %v9878, %v9876
      %v9881 = vshll.u32 %v9749, 16
      %v9883 = vrot.slane %v9881, 1
      %v9884 = vsel %vm1620, %v9880, %v9883
      %v9885 = vshrl.u32 %v9749, 16
      %v9887 = vor.u32 %v9885, %v9883
      %v9888 = vshll.u32 %v9750, 16
      %v9890 = vrot.slane %v9888, 1
      %v9891 = vsel %vm1620, %v9887, %v9890
      %v9892 = vshrl.u32 %v9750, 16
      %v9894 = vor.u32 %v9892, %v9890
      %v9895 = vshll.u32 %v9751, 16
      %v9897 = vrot.slane %v9895, 1
      %v9898 = vsel %vm1620, %v9894, %v9897
      %v9899 = vshrl.u32 %v9751, 16
      %v9901 = vor.u32 %v9899, %v9897
      %v9902 = vshll.u32 %v9752, 16
      %v9904 = vrot.slane %v9902, 1
      %v9905 = vsel %vm1620, %v9901, %v9904
      %v9906 = vshrl.u32 %v9752, 16
      %v9908 = vor.u32 %v9906, %v9904
      %v9910 = vshll.u32 %v9867, 16
      %v9912 = vrot.slane %v9910, 1
      %v9913 = vsel %vm1620, %v9908, %v9912
      %v9914 = vshrl.u32 %v9867, 16
      %v9916 = vor.u32 %v9914, %v9912
      %v9925 = vunpack.c.l.b16 %v9857
      %v9926 = vunpack.c.l.b16 %v9858
      %v9927 = vunpack.c.l.b16 %v9859
      %v9928 = vunpack.c.l.b16 %v9860
      %v9929 = vunpack.c.l.b16 %v9861
      %v9930 = vunpack.c.l.b16 %v9862
      %v9931 = vunpack.c.l.b16 %v9863
      %v9932 = vunpack.c.l.b16 %v9864
      %v9933 = vpack.c.b16 %v9926, %v9925
      %v9934 = vpack.c.b16 %v9928, %v9927
      %v9935 = vpack.c.b16 %v9930, %v9929
      %v9936 = vpack.c.b16 %v9932, %v9931
      %v9942 = vsel %vm863, %v9877, 0
      %v9945 = vsel %vm863, %v9884, 0
      %v9948 = vsel %vm863, %v9891, 0
      %v9951 = vsel %vm863, %v9898, 0
      %v9954 = vsel %vm863, %v9905, 0
      %v9957 = vsel %vm863, %v9913, 0
      %v9960 = vsel %vm863, %v9916, 0
      %9962 = vmatpush.bf16.msra.mxu0 0
      %9963 = vmatpush.bf16.msra.mxu0 0
      %9964 = vmatpush.bf16.msra.mxu0 0
      %9965 = vmatpush.bf16.msra.mxu0 0
      %9966 = vmatpush.bf16.msra.mxu0 %v9936
      %9967 = vmatpush.bf16.msra.mxu0 %v9935
      %9968 = vmatpush.bf16.msra.mxu0 %v9934
      %9969 = vmatpush.bf16.msra.mxu0 %v9933
      %9970 = vmatmul.bf16.gmra.mxu0 %v9942
      %v9971 = vpop.f32.mrf.mxu0
      %v9972 = vadd.f32 0.0, %v9971
      %v9973 = vpop.f32.mrf.mxu0
      %v9974 = vadd.f32 0.0, %v9973
      %9975 = vmatmul.bf16.gmra.mxu0 %v9945
      %v9976 = vpop.f32.mrf.mxu0
      %v9977 = vadd.f32 0.0, %v9976
      %v9978 = vpop.f32.mrf.mxu0
      %v9979 = vadd.f32 0.0, %v9978
      %9980 = vmatmul.bf16.gmra.mxu0 %v9948
      %v9981 = vpop.f32.mrf.mxu0
      %v9982 = vadd.f32 0.0, %v9981
      %v9983 = vpop.f32.mrf.mxu0
      %v9984 = vadd.f32 0.0, %v9983
      %9985 = vmatmul.bf16.gmra.mxu0 %v9951
      %v9986 = vpop.f32.mrf.mxu0
      %v9987 = vadd.f32 0.0, %v9986
      %v9988 = vpop.f32.mrf.mxu0
      %v9989 = vadd.f32 0.0, %v9988
      %9990 = vmatmul.bf16.gmra.mxu0 %v9954
      %v9991 = vpop.f32.mrf.mxu0
      %v9992 = vadd.f32 0.0, %v9991
      %v9993 = vpop.f32.mrf.mxu0
      %v9994 = vadd.f32 0.0, %v9993
      %9995 = vmatmul.bf16.gmra.mxu0 %v9957
      %v9996 = vpop.f32.mrf.mxu0
      %v9997 = vadd.f32 0.0, %v9996
      %v9998 = vpop.f32.mrf.mxu0
      %v9999 = vadd.f32 0.0, %v9998
      %10000 = vmatmul.bf16.gmra.mxu0 %v9960
      %v10001 = vpop.f32.mrf.mxu0
      %v10002 = vadd.f32 0.0, %v10001
      %v10003 = vpop.f32.mrf.mxu0
      %10004 = vdwg.mxu0
      %v10005 = vadd.f32 %v9842, %v9972
      %v10006 = vadd.f32 %v9843, %v9974
      %v10007 = vadd.f32 %v9844, %v9977
      %v10008 = vadd.f32 %v9845, %v9979
      %v10009 = vadd.f32 %v9846, %v9982
      %v10010 = vadd.f32 %v9847, %v9984
      %v10011 = vadd.f32 %v9848, %v9987
      %v10012 = vadd.f32 %v9849, %v9989
      %v10013 = vadd.f32 %v9850, %v9992
      %v10014 = vadd.f32 %v9851, %v9994
      %v10015 = vadd.f32 %v9852, %v9997
      %v10016 = vadd.f32 %v9853, %v9999
      %v10017 = vadd.f32 %v9854, %v10002
      %v10018 = vld [vmem:[#allocation2 + $0xc] sm:$0xf]
      %v10019 = vld [vmem:[#allocation2 + $0x10] sm:$0xf]
      %v10020 = vld [vmem:[#allocation2 + $0x14] sm:$0xf]
      %v10021 = vld [vmem:[#allocation2 + $0x18] sm:$0xf]
      %v10022 = vld [vmem:[#allocation2 + $0x1c] sm:$0xf]
      %v10023 = vld [vmem:[#allocation2 + $0x20] sm:$0xf]
      %v10024 = vld [vmem:[#allocation2 + $0x24] sm:$0xf]
      %v10025 = vld [vmem:[#allocation2 + $0x28] sm:$0xf]
      %v10026 = vld [vmem:[#allocation2 + $0x2c] sm:$0xf]
      %v10027 = vld [vmem:[#allocation2 + $0x30] sm:$0xf]
      %v10028 = vld [vmem:[#allocation2 + $0x34] sm:$0xf]
      %v10029 = vld [vmem:[#allocation2 + $0x38] sm:$0xf]
      %v10030 = vld [vmem:[#allocation2 + $0x3c] sm:$0x7]
      %s10031 = scalar_lea.vmem %s17, 192
      %v10032 = vld [vmem:[%s10031] sm:$0xf]
      %v10033 = vld [vmem:[%s10031 + $0x4] sm:$0xf]
      %v10034 = vld [vmem:[%s10031 + $0x8] sm:$0xf]
      %v10035 = vld [vmem:[%s10031 + $0xc] sm:$0xf]
      %v10036 = vld [vmem:[%s10031 + $0x10] sm:$0xf]
      %v10037 = vld [vmem:[%s10031 + $0x14] sm:$0xf]
      %v10038 = vld [vmem:[%s10031 + $0x18] sm:$0xf]
      %v10039 = vld [vmem:[%s10031 + $0x1c] sm:$0xf]
      %v10053 = vunpack.c.l.b16 %v10018
      %v10054 = vunpack.c.l.b16 %v10019
      %v10055 = vunpack.c.l.b16 %v10020
      %v10056 = vunpack.c.l.b16 %v10021
      %v10057 = vunpack.c.l.b16 %v10022
      %v10058 = vunpack.c.l.b16 %v10023
      %v10059 = vunpack.c.l.b16 %v10024
      %v10060 = vunpack.c.l.b16 %v10025
      %v10061 = vunpack.c.l.b16 %v10026
      %v10062 = vunpack.c.l.b16 %v10027
      %v10063 = vunpack.c.l.b16 %v10028
      %v10064 = vunpack.c.l.b16 %v10029
      %v10065 = vunpack.c.l.b16 %v10030
      %v10066 = vpack.c.b16 %v10054, %v10053
      %v10067 = vpack.c.b16 %v10056, %v10055
      %v10068 = vpack.c.b16 %v10058, %v10057
      %v10069 = vpack.c.b16 %v10060, %v10059
      %v10070 = vpack.c.b16 %v10062, %v10061
      %v10071 = vpack.c.b16 %v10064, %v10063
      %v10072 = vpack.c.b16 %v10065, %v10065
      %v10074 = vshrl.u32 %v10066, 16
      %v10076 = vshll.u32 %v10066, 16
      %v10078 = vrot.slane %v10076, 1
      %v10079 = vor.u32 %v10074, %v10078
      %v10081 = vshll.u32 %v10067, 16
      %v10083 = vrot.slane %v10081, 1
      %v10084 = vsel %vm1620, %v10079, %v10083
      %v10085 = vshrl.u32 %v10067, 16
      %v10087 = vor.u32 %v10085, %v10083
      %v10089 = vshll.u32 %v10068, 16
      %v10091 = vrot.slane %v10089, 1
      %v10092 = vsel %vm1620, %v10087, %v10091
      %v10093 = vshrl.u32 %v10068, 16
      %v10095 = vor.u32 %v10093, %v10091
      %v10097 = vshll.u32 %v10069, 16
      %v10099 = vrot.slane %v10097, 1
      %v10100 = vsel %vm1620, %v10095, %v10099
      %v10101 = vshrl.u32 %v10069, 16
      %v10103 = vor.u32 %v10101, %v10099
      %v10105 = vshll.u32 %v10070, 16
      %v10107 = vrot.slane %v10105, 1
      %v10108 = vsel %vm1620, %v10103, %v10107
      %v10109 = vshrl.u32 %v10070, 16
      %v10111 = vor.u32 %v10109, %v10107
      %v10113 = vshll.u32 %v10071, 16
      %v10115 = vrot.slane %v10113, 1
      %v10116 = vsel %vm1620, %v10111, %v10115
      %v10117 = vshrl.u32 %v10071, 16
      %v10119 = vor.u32 %v10117, %v10115
      %v10121 = vshll.u32 %v10072, 16
      %v10123 = vrot.slane %v10121, 1
      %v10124 = vsel %vm1620, %v10119, %v10123
      %v10125 = vshrl.u32 %v10072, 16
      %v10127 = vor.u32 %v10125, %v10123
      %v10136 = vunpack.c.l.b16 %v10032
      %v10137 = vunpack.c.l.b16 %v10033
      %v10138 = vunpack.c.l.b16 %v10034
      %v10139 = vunpack.c.l.b16 %v10035
      %v10140 = vunpack.c.l.b16 %v10036
      %v10141 = vunpack.c.l.b16 %v10037
      %v10142 = vunpack.c.l.b16 %v10038
      %v10143 = vunpack.c.l.b16 %v10039
      %v10144 = vpack.c.b16 %v10137, %v10136
      %v10145 = vpack.c.b16 %v10139, %v10138
      %v10146 = vpack.c.b16 %v10141, %v10140
      %v10147 = vpack.c.b16 %v10143, %v10142
      %v10153 = vsel %vm863, %v10084, 0
      %v10156 = vsel %vm863, %v10092, 0
      %v10159 = vsel %vm863, %v10100, 0
      %v10162 = vsel %vm863, %v10108, 0
      %v10165 = vsel %vm863, %v10116, 0
      %v10168 = vsel %vm863, %v10124, 0
      %v10171 = vsel %vm863, %v10127, 0
      %10173 = vmatpush.bf16.msra.mxu0 0
      %10174 = vmatpush.bf16.msra.mxu0 0
      %10175 = vmatpush.bf16.msra.mxu0 0
      %10176 = vmatpush.bf16.msra.mxu0 0
      %10177 = vmatpush.bf16.msra.mxu0 %v10147
      %10178 = vmatpush.bf16.msra.mxu0 %v10146
      %10179 = vmatpush.bf16.msra.mxu0 %v10145
      %10180 = vmatpush.bf16.msra.mxu0 %v10144
      %10181 = vmatmul.bf16.gmra.mxu0 %v10153
      %v10182 = vpop.f32.mrf.mxu0
      %v10183 = vadd.f32 0.0, %v10182
      %v10184 = vpop.f32.mrf.mxu0
      %v10185 = vadd.f32 0.0, %v10184
      %10186 = vmatmul.bf16.gmra.mxu0 %v10156
      %v10187 = vpop.f32.mrf.mxu0
      %v10188 = vadd.f32 0.0, %v10187
      %v10189 = vpop.f32.mrf.mxu0
      %v10190 = vadd.f32 0.0, %v10189
      %10191 = vmatmul.bf16.gmra.mxu0 %v10159
      %v10192 = vpop.f32.mrf.mxu0
      %v10193 = vadd.f32 0.0, %v10192
      %v10194 = vpop.f32.mrf.mxu0
      %v10195 = vadd.f32 0.0, %v10194
      %10196 = vmatmul.bf16.gmra.mxu0 %v10162
      %v10197 = vpop.f32.mrf.mxu0
      %v10198 = vadd.f32 0.0, %v10197
      %v10199 = vpop.f32.mrf.mxu0
      %v10200 = vadd.f32 0.0, %v10199
      %10201 = vmatmul.bf16.gmra.mxu0 %v10165
      %v10202 = vpop.f32.mrf.mxu0
      %v10203 = vadd.f32 0.0, %v10202
      %v10204 = vpop.f32.mrf.mxu0
      %v10205 = vadd.f32 0.0, %v10204
      %10206 = vmatmul.bf16.gmra.mxu0 %v10168
      %v10207 = vpop.f32.mrf.mxu0
      %v10208 = vadd.f32 0.0, %v10207
      %v10209 = vpop.f32.mrf.mxu0
      %v10210 = vadd.f32 0.0, %v10209
      %10211 = vmatmul.bf16.gmra.mxu0 %v10171
      %v10212 = vpop.f32.mrf.mxu0
      %v10213 = vadd.f32 0.0, %v10212
      %v10214 = vpop.f32.mrf.mxu0
      %10215 = vdwg.mxu0
      %v10216 = vadd.f32 %v10005, %v10183
      %v10217 = vadd.f32 %v10006, %v10185
      %v10218 = vadd.f32 %v10007, %v10188
      %v10219 = vadd.f32 %v10008, %v10190
      %v10220 = vadd.f32 %v10009, %v10193
      %v10221 = vadd.f32 %v10010, %v10195
      %v10222 = vadd.f32 %v10011, %v10198
      %v10223 = vadd.f32 %v10012, %v10200
      %v10224 = vadd.f32 %v10013, %v10203
      %v10225 = vadd.f32 %v10014, %v10205
      %v10226 = vadd.f32 %v10015, %v10208
      %v10227 = vadd.f32 %v10016, %v10210
      %v10228 = vadd.f32 %v10017, %v10213
      %v10229 = vld [vmem:[#allocation2 + $0xc] sm:$0xe]
      %s10230 = scalar_lea.vmem %s17, 224
      %v10231 = vld [vmem:[%s10230] sm:$0xf]
      %v10232 = vld [vmem:[%s10230 + $0x4] sm:$0xf]
      %v10233 = vld [vmem:[%s10230 + $0x8] sm:$0xf]
      %v10234 = vld [vmem:[%s10230 + $0xc] sm:$0xf]
      %v10235 = vld [vmem:[%s10230 + $0x10] sm:$0xf]
      %v10236 = vld [vmem:[%s10230 + $0x14] sm:$0xf]
      %v10237 = vld [vmem:[%s10230 + $0x18] sm:$0xf]
      %v10238 = vld [vmem:[%s10230 + $0x1c] sm:$0xf]
      %v10240 = vunpack.c.l.b16 %v10229
      %v10241 = vpack.c.b16 %v10054, %v10240
      %v10242 = vrot.slane %v10241, 1
      %v10243 = vrot.slane %v10067, 1
      %v10244 = vsel %vm1963, %v10242, %v10243
      %v10245 = vrot.slane %v10068, 1
      %v10246 = vsel %vm1963, %v10243, %v10245
      %v10247 = vrot.slane %v10069, 1
      %v10248 = vsel %vm1963, %v10245, %v10247
      %v10249 = vrot.slane %v10070, 1
      %v10250 = vsel %vm1963, %v10247, %v10249
      %v10251 = vrot.slane %v10071, 1
      %v10252 = vsel %vm1963, %v10249, %v10251
      %v10253 = vrot.slane %v10072, 1
      %v10254 = vsel %vm1963, %v10251, %v10253
      %v10263 = vunpack.c.l.b16 %v10231
      %v10264 = vunpack.c.l.b16 %v10232
      %v10265 = vunpack.c.l.b16 %v10233
      %v10266 = vunpack.c.l.b16 %v10234
      %v10267 = vunpack.c.l.b16 %v10235
      %v10268 = vunpack.c.l.b16 %v10236
      %v10269 = vunpack.c.l.b16 %v10237
      %v10270 = vunpack.c.l.b16 %v10238
      %v10271 = vpack.c.b16 %v10264, %v10263
      %v10272 = vpack.c.b16 %v10266, %v10265
      %v10273 = vpack.c.b16 %v10268, %v10267
      %v10274 = vpack.c.b16 %v10270, %v10269
      %v10280 = vsel %vm863, %v10244, 0
      %v10283 = vsel %vm863, %v10246, 0
      %v10286 = vsel %vm863, %v10248, 0
      %v10289 = vsel %vm863, %v10250, 0
      %v10292 = vsel %vm863, %v10252, 0
      %v10295 = vsel %vm863, %v10254, 0
      %v10298 = vsel %vm863, %v10253, 0
      %10300 = vmatpush.bf16.msra.mxu0 0
      %10301 = vmatpush.bf16.msra.mxu0 0
      %10302 = vmatpush.bf16.msra.mxu0 0
      %10303 = vmatpush.bf16.msra.mxu0 0
      %10304 = vmatpush.bf16.msra.mxu0 %v10274
      %10305 = vmatpush.bf16.msra.mxu0 %v10273
      %10306 = vmatpush.bf16.msra.mxu0 %v10272
      %10307 = vmatpush.bf16.msra.mxu0 %v10271
      %10308 = vmatmul.bf16.gmra.mxu0 %v10280
      %v10309 = vpop.f32.mrf.mxu0
      %v10310 = vadd.f32 0.0, %v10309
      %v10311 = vpop.f32.mrf.mxu0
      %v10312 = vadd.f32 0.0, %v10311
      %10313 = vmatmul.bf16.gmra.mxu0 %v10283
      %v10314 = vpop.f32.mrf.mxu0
      %v10315 = vadd.f32 0.0, %v10314
      %v10316 = vpop.f32.mrf.mxu0
      %v10317 = vadd.f32 0.0, %v10316
      %10318 = vmatmul.bf16.gmra.mxu0 %v10286
      %v10319 = vpop.f32.mrf.mxu0
      %v10320 = vadd.f32 0.0, %v10319
      %v10321 = vpop.f32.mrf.mxu0
      %v10322 = vadd.f32 0.0, %v10321
      %10323 = vmatmul.bf16.gmra.mxu0 %v10289
      %v10324 = vpop.f32.mrf.mxu0
      %v10325 = vadd.f32 0.0, %v10324
      %v10326 = vpop.f32.mrf.mxu0
      %v10327 = vadd.f32 0.0, %v10326
      %10328 = vmatmul.bf16.gmra.mxu0 %v10292
      %v10329 = vpop.f32.mrf.mxu0
      %v10330 = vadd.f32 0.0, %v10329
      %v10331 = vpop.f32.mrf.mxu0
      %v10332 = vadd.f32 0.0, %v10331
      %10333 = vmatmul.bf16.gmra.mxu0 %v10295
      %v10334 = vpop.f32.mrf.mxu0
      %v10335 = vadd.f32 0.0, %v10334
      %v10336 = vpop.f32.mrf.mxu0
      %v10337 = vadd.f32 0.0, %v10336
      %10338 = vmatmul.bf16.gmra.mxu0 %v10298
      %v10339 = vpop.f32.mrf.mxu0
      %v10340 = vadd.f32 0.0, %v10339
      %v10341 = vpop.f32.mrf.mxu0
      %10342 = vdwg.mxu0
      %v10343 = vadd.f32 %v10216, %v10310
      %v10344 = vadd.f32 %v10217, %v10312
      %v10345 = vadd.f32 %v10218, %v10315
      %v10346 = vadd.f32 %v10219, %v10317
      %v10347 = vadd.f32 %v10220, %v10320
      %v10348 = vadd.f32 %v10221, %v10322
      %v10349 = vadd.f32 %v10222, %v10325
      %v10350 = vadd.f32 %v10223, %v10327
      %v10351 = vadd.f32 %v10224, %v10330
      %v10352 = vadd.f32 %v10225, %v10332
      %v10353 = vadd.f32 %v10226, %v10335
      %v10354 = vadd.f32 %v10227, %v10337
      %v10355 = vadd.f32 %v10228, %v10340
      %v10356 = vld [vmem:[#allocation2 + $0x3c] sm:$0xf]
      %s10357 = scalar_lea.vmem %s17, 256
      %v10358 = vld [vmem:[%s10357] sm:$0xf]
      %v10359 = vld [vmem:[%s10357 + $0x4] sm:$0xf]
      %v10360 = vld [vmem:[%s10357 + $0x8] sm:$0xf]
      %v10361 = vld [vmem:[%s10357 + $0xc] sm:$0xf]
      %v10362 = vld [vmem:[%s10357 + $0x10] sm:$0xf]
      %v10363 = vld [vmem:[%s10357 + $0x14] sm:$0xf]
      %v10364 = vld [vmem:[%s10357 + $0x18] sm:$0xf]
      %v10365 = vld [vmem:[%s10357 + $0x1c] sm:$0xf]
      %v10367 = vunpack.c.l.b16 %v10356
      %v10368 = vpack.c.b16 %v10367, %v10367
      %v10370 = vshrl.u32 %v10241, 16
      %v10372 = vrot.slane %v10370, 1
      %v10373 = vshll.u32 %v10241, 16
      %v10375 = vrot.slane %v10373, 2
      %v10376 = vor.u32 %v10372, %v10375
      %v10377 = vrot.slane %v10085, 1
      %v10378 = vrot.slane %v10081, 2
      %v10379 = vor.u32 %v10377, %v10378
      %v10380 = vsel %vm2075, %v10376, %v10379
      %v10381 = vrot.slane %v10093, 1
      %v10382 = vrot.slane %v10089, 2
      %v10383 = vor.u32 %v10381, %v10382
      %v10384 = vsel %vm2075, %v10379, %v10383
      %v10385 = vrot.slane %v10101, 1
      %v10386 = vrot.slane %v10097, 2
      %v10387 = vor.u32 %v10385, %v10386
      %v10388 = vsel %vm2075, %v10383, %v10387
      %v10389 = vrot.slane %v10109, 1
      %v10390 = vrot.slane %v10105, 2
      %v10391 = vor.u32 %v10389, %v10390
      %v10392 = vsel %vm2075, %v10387, %v10391
      %v10393 = vrot.slane %v10117, 1
      %v10394 = vrot.slane %v10113, 2
      %v10395 = vor.u32 %v10393, %v10394
      %v10396 = vsel %vm2075, %v10391, %v10395
      %v10398 = vshrl.u32 %v10368, 16
      %v10400 = vrot.slane %v10398, 1
      %v10401 = vshll.u32 %v10368, 16
      %v10403 = vrot.slane %v10401, 2
      %v10404 = vor.u32 %v10400, %v10403
      %v10405 = vsel %vm2075, %v10395, %v10404
      %v10414 = vunpack.c.l.b16 %v10358
      %v10415 = vunpack.c.l.b16 %v10359
      %v10416 = vunpack.c.l.b16 %v10360
      %v10417 = vunpack.c.l.b16 %v10361
      %v10418 = vunpack.c.l.b16 %v10362
      %v10419 = vunpack.c.l.b16 %v10363
      %v10420 = vunpack.c.l.b16 %v10364
      %v10421 = vunpack.c.l.b16 %v10365
      %v10422 = vpack.c.b16 %v10415, %v10414
      %v10423 = vpack.c.b16 %v10417, %v10416
      %v10424 = vpack.c.b16 %v10419, %v10418
      %v10425 = vpack.c.b16 %v10421, %v10420
      %v10431 = vsel %vm863, %v10380, 0
      %v10434 = vsel %vm863, %v10384, 0
      %v10437 = vsel %vm863, %v10388, 0
      %v10440 = vsel %vm863, %v10392, 0
      %v10443 = vsel %vm863, %v10396, 0
      %v10446 = vsel %vm863, %v10405, 0
      %v10449 = vsel %vm863, %v10404, 0
      %10451 = vmatpush.bf16.msra.mxu0 0
      %10452 = vmatpush.bf16.msra.mxu0 0
      %10453 = vmatpush.bf16.msra.mxu0 0
      %10454 = vmatpush.bf16.msra.mxu0 0
      %10455 = vmatpush.bf16.msra.mxu0 %v10425
      %10456 = vmatpush.bf16.msra.mxu0 %v10424
      %10457 = vmatpush.bf16.msra.mxu0 %v10423
      %10458 = vmatpush.bf16.msra.mxu0 %v10422
      %10459 = vmatmul.bf16.gmra.mxu0 %v10431
      %v10460 = vpop.f32.mrf.mxu0
      %v10461 = vadd.f32 0.0, %v10460
      %v10462 = vpop.f32.mrf.mxu0
      %v10463 = vadd.f32 0.0, %v10462
      %10464 = vmatmul.bf16.gmra.mxu0 %v10434
      %v10465 = vpop.f32.mrf.mxu0
      %v10466 = vadd.f32 0.0, %v10465
      %v10467 = vpop.f32.mrf.mxu0
      %v10468 = vadd.f32 0.0, %v10467
      %10469 = vmatmul.bf16.gmra.mxu0 %v10437
      %v10470 = vpop.f32.mrf.mxu0
      %v10471 = vadd.f32 0.0, %v10470
      %v10472 = vpop.f32.mrf.mxu0
      %v10473 = vadd.f32 0.0, %v10472
      %10474 = vmatmul.bf16.gmra.mxu0 %v10440
      %v10475 = vpop.f32.mrf.mxu0
      %v10476 = vadd.f32 0.0, %v10475
      %v10477 = vpop.f32.mrf.mxu0
      %v10478 = vadd.f32 0.0, %v10477
      %10479 = vmatmul.bf16.gmra.mxu0 %v10443
      %v10480 = vpop.f32.mrf.mxu0
      %v10481 = vadd.f32 0.0, %v10480
      %v10482 = vpop.f32.mrf.mxu0
      %v10483 = vadd.f32 0.0, %v10482
      %10484 = vmatmul.bf16.gmra.mxu0 %v10446
      %v10485 = vpop.f32.mrf.mxu0
      %v10486 = vadd.f32 0.0, %v10485
      %v10487 = vpop.f32.mrf.mxu0
      %v10488 = vadd.f32 0.0, %v10487
      %10489 = vmatmul.bf16.gmra.mxu0 %v10449
      %v10490 = vpop.f32.mrf.mxu0
      %v10491 = vadd.f32 0.0, %v10490
      %v10492 = vpop.f32.mrf.mxu0
      %10493 = vdwg.mxu0
      %v10494 = vadd.f32 %v10343, %v10461
      %v10495 = vadd.f32 %v10344, %v10463
      %v10496 = vadd.f32 %v10345, %v10466
      %v10497 = vadd.f32 %v10346, %v10468
      %v10498 = vadd.f32 %v10347, %v10471
      %v10499 = vadd.f32 %v10348, %v10473
      %v10500 = vadd.f32 %v10349, %v10476
      %v10501 = vadd.f32 %v10350, %v10478
      %v10502 = vadd.f32 %v10351, %v10481
      %v10503 = vadd.f32 %v10352, %v10483
      %v10504 = vadd.f32 %v10353, %v10486
      %v10505 = vadd.f32 %v10354, %v10488
      %v10506 = vadd.f32 %v10355, %v10491
      %v10507 = vld [vmem:[%s612 + $0x10] sm:$0xff]
      %v10508 = vld [vmem:[%s612 + $0x18] sm:$0xff]
      %v10509 = vld [vmem:[%s612 + $0x20] sm:$0xff]
      %v10510 = vld [vmem:[%s612 + $0x28] sm:$0xff]
      %v10511 = vld [vmem:[%s612 + $0x30] sm:$0xff]
      %v10512 = vld [vmem:[%s612 + $0x38] sm:$0xff]
      %v10513 = vld [vmem:[%s612 + $0x40] sm:$0xff]
      %v10514 = vld [vmem:[%s612 + $0x48] sm:$0xff]
      %v10515 = vld [vmem:[%s612 + $0x50] sm:$0xff]
      %v10516 = vld [vmem:[%s612 + $0x58] sm:$0xff]
      %v10517 = vld [vmem:[%s612 + $0x60] sm:$0xff]
      %v10518 = vld [vmem:[%s612 + $0x68] sm:$0xff]
      %v10519 = vld [vmem:[%s612 + $0x70] sm:$0xf]
      %v10520 = vadd.f32 %v10507, %v10494
      %v10521 = vadd.f32 %v10508, %v10495
      %v10522 = vadd.f32 %v10509, %v10496
      %v10523 = vadd.f32 %v10510, %v10497
      %v10524 = vadd.f32 %v10511, %v10498
      %v10525 = vadd.f32 %v10512, %v10499
      %v10526 = vadd.f32 %v10513, %v10500
      %v10527 = vadd.f32 %v10514, %v10501
      %v10528 = vadd.f32 %v10515, %v10502
      %v10529 = vadd.f32 %v10516, %v10503
      %v10530 = vadd.f32 %v10517, %v10504
      %v10531 = vadd.f32 %v10518, %v10505
      %v10532 = vadd.f32 %v10519, %v10506
      %10533 = vst.msk [vmem:[%s622] sm:$0xff] %vm863, %v10520
      %10534 = vst.msk [vmem:[%s622 + $0x8] sm:$0xff] %vm863, %v10521
      %10535 = vst.msk [vmem:[%s622 + $0x10] sm:$0xff] %vm863, %v10522
      %10536 = vst.msk [vmem:[%s622 + $0x18] sm:$0xff] %vm863, %v10523
      %10537 = vst.msk [vmem:[%s622 + $0x20] sm:$0xff] %vm863, %v10524
      %10538 = vst.msk [vmem:[%s622 + $0x28] sm:$0xff] %vm863, %v10525
      %10539 = vst.msk [vmem:[%s622 + $0x30] sm:$0xff] %vm863, %v10526
      %10540 = vst.msk [vmem:[%s622 + $0x38] sm:$0xff] %vm863, %v10527
      %10541 = vst.msk [vmem:[%s622 + $0x40] sm:$0xff] %vm863, %v10528
      %10542 = vst.msk [vmem:[%s622 + $0x48] sm:$0xff] %vm863, %v10529
      %10543 = vst.msk [vmem:[%s622 + $0x50] sm:$0xff] %vm863, %v10530
      %10544 = vst.msk [vmem:[%s622 + $0x58] sm:$0xff] %vm863, %v10531
      %10545 = vst.msk [vmem:[%s622 + $0x60] sm:$0xf] %vm624, %v10532
      %p10546 = scmp.lt.s32.totalorder %s30, 1
      %s10547 = scalar_select %p10546, %s30, 1
      %s10548 = smul.addr %s10547, 13
      %s10549 = smul.addr %s10548, 8
      %s10550 = scalar_lea.vmem %s19, %s10549
      // Predicated region
      $region97: #{resblock_sft.1} parent=95 // pred_check
        %p10551 = pneg %p457
      $region98: #{resblock_sft.1} parent=95 // pred_check_branch
        %10553 = sbr.rel (%p10551) target = $region100
      $region99: #{resblock_sft.1} parent=95 // pred_region
        _
      $region100: #{resblock_sft.1} parent=95 // pred_fallthru
        _
    $region96: #{resblock_sft.1} parent=5 // pred_fallthru
      _
    %p10554 = scmp.le.s32.totalorder 2, %s25
    // Predicated region
    $region101: #{resblock_sft.1} parent=5 // pred_check
      %p10555 = pneg %p10554
    $region102: #{resblock_sft.1} parent=5 // pred_check_branch
      %10557 = sbr.rel (%p10555) target = $region104
    $region103: #{resblock_sft.1} parent=5 // pred_region
      %s10558 = ssub.s32 %s25, 2
      // Predicated region
      $region105: #{resblock_sft.1} parent=103 // pred_check
        %p10559 = pneg %p463
      $region106: #{resblock_sft.1} parent=103 // pred_check_branch
        %10561 = sbr.rel (%p10559) target = $region108
      $region107: #{resblock_sft.1} parent=103 // pred_region
        %p10562 = scmp.lt.s32.totalorder %s31, 1
        %s10563 = scalar_select %p10562, %s31, 1
        %s10564 = smul.addr %s10563, 13
        %s10565 = smul.addr %s10564, 8
        %s10566 = scalar_lea.vmem %s19, %s10565
      $region108: #{resblock_sft.1} parent=103 // pred_fallthru
        _
    $region104: #{resblock_sft.1} parent=5 // pred_fallthru
      _
  $region6: #{resblock_sft.1} parent=0 // loop_footer
    %s29 = sadd.s32 1, %s25
  $region7: #{resblock_sft.1} parent=0 // loop_footer_branch
    %24 = sbr.rel target = $region3
  $region8: #{resblock_sft.1} parent=0 // loop_exit
    _

</llo_original>
